<compile_context>
chip_gen: v6e
topology: v6e:2x2x1
jax: 0.10.0
libtpu: 0.0.40
codegen_flags: <defaults>
</compile_context>

<pallas_src>
import jax
import jax.numpy as jnp
from jax.experimental import pallas as pl
from jax.experimental.pallas import tpu as pltpu

NUM_CLASSES = 6
LANE = 128        # lane-dense width for the 6-wide classifier path
SUBLANE = 8


def _round_up(x, m):
    return (x + m - 1) // m * m


def _select_tiling():
    """Generation-aware K-tile and VMEM budget.

    v5e/v6e have 128 MiB VMEM -> big tiles (tk=4096) and a 64 MiB scoped limit.
    v7x has 64 MiB per-TC VMEM -> tk=2048 and ~48 MiB so pipelining keeps headroom.
    """
    try:
        vmem_cap = pltpu.get_tpu_info().vmem_capacity_bytes
    except Exception:
        vmem_cap = 64 * 1024 * 1024                      # conservative (v7x-sized) fallback
    if vmem_cap >= 96 * 1024 * 1024:                     # v5e / v6e class
        return 4096, 64 * 1024 * 1024
    return 2048, 48 * 1024 * 1024                        # v7x class


# ----------------------------------------------------------------------------
# Fused kernel: K-tiled backbone matmul + head/blend/softmax epilogue
# ----------------------------------------------------------------------------
def _fused_kernel(x_ref, w0_ref, b0_ref,
                  w1_ref, b1_ref, w2_ref, b2_ref, w3_ref, b3_ref, rgb_ref,
                  out_ref, feat_acc, cs_ref):
    k = pl.program_id(0)
    nk = pl.num_programs(0)

    @pl.when(k == 0)
    def _init():
        feat_acc[...] = jnp.zeros_like(feat_acc)

    # Backbone stand-in partial matmul: bf16 weight stream, f32 accumulation (MXU).
    feat_acc[...] += jnp.dot(x_ref[...].astype(jnp.bfloat16), w0_ref[...],
                             preferred_element_type=jnp.float32)

    @pl.when(k == nk - 1)
    def _epilogue():
        # ---- backbone finalize ----
        feat = jnp.maximum(feat_acc[...] + b0_ref[...], 0.0)                  # (Bp, 2048)

        # ---- terrain head (Dropout -> identity at inference) ----
        h1 = jnp.maximum(
            jnp.dot(feat.astype(jnp.bfloat16), w1_ref[...],
                    preferred_element_type=jnp.float32) + b1_ref[...], 0.0)   # (Bp, 512)
        h2 = jnp.maximum(
            jnp.dot(h1.astype(jnp.bfloat16), w2_ref[...],
                    preferred_element_type=jnp.float32) + b2_ref[...], 0.0)   # (Bp, 256)
        logits = jnp.dot(h2, w3_ref[...],
                         preferred_element_type=jnp.float32) + b3_ref[...]    # (Bp, 128)

        col = jax.lax.broadcasted_iota(jnp.int32, logits.shape, 1)
        valid = col < NUM_CLASSES
        neg = jnp.float32(-1e30)

        # nn.Softmax(dim=1) over the 6 real classes (padding lanes masked out).
        lm = jnp.where(valid, logits, neg)
        m1 = jnp.max(lm, axis=-1, keepdims=True)
        e1 = jnp.exp(lm - m1)
        terrain_probs = e1 / jnp.sum(e1, axis=-1, keepdims=True)

        # ---- rule-based color scores from exact f32 per-channel means (resident input) ----
        rgb = rgb_ref[...]                                                    # cols 0..2 = means
        r = rgb[:, 0:1]
        g = rgb[:, 1:2]
        b = rgb[:, 2:3]
        mu = (r + g + b) * (1.0 / 3.0)
        var = ((r - mu) ** 2 + (g - mu) ** 2 + (b - mu) ** 2) * (1.0 / 3.0)   # np.var, ddof=0

        def score(cond, val):
            return jnp.where(cond, jnp.float32(val), jnp.float32(0.0))

        cs_ref[...] = jnp.zeros_like(cs_ref)
        cs_ref[:, 0:1] = score(var < 0.05, 0.2)                               # urban
        cs_ref[:, 1:2] = score((b > r) & (b > g), 0.3)                        # water
        cs_ref[:, 2:3] = score((g > r) & (g > b), 0.3)                        # forest
        cs_ref[:, 3:4] = score((g > 0.3) & (g < 0.7) & (g > b), 0.2)          # grassland
        cs_ref[:, 4:5] = score((r > 0.3) & (g > 0.3) & (b > 0.3)
                               & (r < 0.7) & (g < 0.7) & (b < 0.7), 0.2)      # mountain
        cs_ref[:, 5:6] = score(mu > 0.6, 0.2)                                 # beach
        color = cs_ref[...]                                                   # (Bp, 128)

        # ---- blend + final softmax (masked to the 6 real classes) ----
        combined = 0.8 * terrain_probs + 0.2 * color
        cm = jnp.where(valid, combined, neg)
        m2 = jnp.max(cm, axis=-1, keepdims=True)
        e2 = jnp.exp(cm - m2)
        out_ref[...] = e2 / jnp.sum(e2, axis=-1, keepdims=True)


# ----------------------------------------------------------------------------
# Wrapper: padding, bf16 weight streams, BlockSpecs / grid
# ----------------------------------------------------------------------------
def terrain_classifier_forward(x, params, *, tk=None):
    B, C, H, W = x.shape
    K = C * H * W
    NF = params["w0"].shape[1]                     # 2048 backbone features

    tk_sel, vmem_limit = _select_tiling()
    if tk is None:
        tk = tk_sel
    Bp = _round_up(max(B, SUBLANE), SUBLANE)       # pad batch to a sublane multiple
    tk = min(tk, _round_up(K, LANE))               # K-tile (multiple of 128)
    Kp = _round_up(K, tk)
    nK = Kp // tk

    # Flatten NCHW row-major: columns [c*HW, (c+1)*HW) belong to channel c.
    x_flat = jnp.pad(x.reshape(B, K), ((0, Bp - B), (0, Kp - K)))

    # Exact f32 per-channel means computed once in the wrapper (tiny resident input).
    mean_rgb = jnp.mean(x, axis=(2, 3))                                   # (B, C) f32, exact
    rgb_pad = jnp.pad(mean_rgb, ((0, Bp - B), (0, LANE - C)))             # (Bp, 128)

    # bf16 weight streams (HBM-bandwidth bound at small batch); biases stay f32.
    w0 = jnp.pad(params["w0"], ((0, Kp - K), (0, 0))).astype(jnp.bfloat16)
    w1 = params["w1"].astype(jnp.bfloat16)
    w2 = params["w2"].astype(jnp.bfloat16)
    w3 = jnp.pad(params["w3"], ((0, 0), (0, LANE - NUM_CLASSES)))         # lane-padded, f32
    b3 = jnp.pad(params["b3"], ((0, 0), (0, LANE - NUM_CLASSES)))

    # Advisory cost for XLA's scheduler (long, memory-bound custom call).
    flops = 2 * Bp * (Kp * NF + NF * 512 + 512 * 256 + 256 * LANE)
    bytes_accessed = (x_flat.size * 4 + w0.size * 2 + w1.size * 2 + w2.size * 2
                      + (params["b0"].size + params["b1"].size + params["b2"].size) * 4
                      + (w3.size + b3.size + rgb_pad.size) * 4
                      + Bp * LANE * 4)
    cost = pl.CostEstimate(flops=int(flops), transcendentals=int(2 * Bp * LANE),
                           bytes_accessed=int(bytes_accessed))

    out = pl.pallas_call(
        _fused_kernel,
        out_shape=jax.ShapeDtypeStruct((Bp, LANE), jnp.float32),
        grid_spec=pltpu.PrefetchScalarGridSpec(
            num_scalar_prefetch=0,
            grid=(nK,),
            in_specs=[
                pl.BlockSpec((Bp, tk), lambda k: (0, k)),        # x stream (f32)
                pl.BlockSpec((tk, NF), lambda k: (k, 0)),        # w0 stream (bf16)
                pl.BlockSpec((1, NF), lambda k: (0, 0)),         # b0 (resident)
                pl.BlockSpec((NF, 512), lambda k: (0, 0)),       # w1 (resident, bf16)
                pl.BlockSpec((1, 512), lambda k: (0, 0)),        # b1
                pl.BlockSpec((512, 256), lambda k: (0, 0)),      # w2 (resident, bf16)
                pl.BlockSpec((1, 256), lambda k: (0, 0)),        # b2
                pl.BlockSpec((256, LANE), lambda k: (0, 0)),     # w3 (lane-padded)
                pl.BlockSpec((1, LANE), lambda k: (0, 0)),       # b3 (lane-padded)
                pl.BlockSpec((Bp, LANE), lambda k: (0, 0)),      # per-image RGB means
            ],
            out_specs=pl.BlockSpec((Bp, LANE), lambda k: (0, 0)),
            scratch_shapes=[
                pltpu.VMEM((Bp, NF), jnp.float32),     # backbone feature accumulator
                pltpu.VMEM((Bp, LANE), jnp.float32),   # color-score assembly buffer
            ],
        ),
        compiler_params=pltpu.CompilerParams(
            dimension_semantics=("arbitrary",),        # single reduction axis
            vmem_limit_bytes=vmem_limit,
        ),
        cost_estimate=cost,
    )(x_flat, w0, params["b0"], w1, params["b1"], w2, params["b2"], w3, b3, rgb_pad)

    return out[:B, :NUM_CLASSES]


# ----------------------------------------------------------------------------
# Params / pure-JAX reference
# ----------------------------------------------------------------------------
def init_params(key, in_dim, num_features=2048):
    ks = jax.random.split(key, 8)

    def lin(kw, kb, fan_in, fan_out):
        bound = 1.0 / jnp.sqrt(fan_in)
        w = jax.random.uniform(kw, (fan_in, fan_out), jnp.float32, -bound, bound)
        b = jax.random.uniform(kb, (1, fan_out), jnp.float32, -bound, bound)
        return w, b

    w0, b0 = lin(ks[0], ks[1], in_dim, num_features)      # backbone stand-in
    w1, b1 = lin(ks[2], ks[3], num_features, 512)         # Linear(2048, 512)
    w2, b2 = lin(ks[4], ks[5], 512, 256)                  # Linear(512, 256)
    w3, b3 = lin(ks[6], ks[7], 256, 6)                    # Linear(256, 6)
    return dict(w0=w0, b0=b0, w1=w1, b1=b1, w2=w2, b2=b2, w3=w3, b3=b3)


def _reference_forward(x, params):
    """Pure-JAX reference mirroring the kernel's bf16 casts / f32 accumulation exactly."""
    B = x.shape[0]
    xf = x.reshape(B, -1)

    def mm(a, b):
        return jnp.dot(a.astype(jnp.bfloat16), b.astype(jnp.bfloat16),
                       preferred_element_type=jnp.float32)

    feat = jnp.maximum(mm(xf, params["w0"]) + params["b0"], 0.0)
    h1 = jnp.maximum(mm(feat, params["w1"]) + params["b1"], 0.0)
    h2 = jnp.maximum(mm(h1, params["w2"]) + params["b2"], 0.0)
    logits = h2 @ params["w3"] + params["b3"]
    terrain = jax.nn.softmax(logits, axis=-1)

    mean_rgb = jnp.mean(x, axis=(2, 3))                   # (B, 3)
    r, g, b = mean_rgb[:, 0], mean_rgb[:, 1], mean_rgb[:, 2]
    mu = jnp.mean(mean_rgb, axis=-1)
    var = jnp.var(mean_rgb, axis=-1)
    scores = jnp.stack([
        jnp.where(var < 0.05, 0.2, 0.0),
        jnp.where((b > r) & (b > g), 0.3, 0.0),
        jnp.where((g > r) & (g > b), 0.3, 0.0),
        jnp.where((g > 0.3) & (g < 0.7) & (g > b), 0.2, 0.0),
        jnp.where((r > 0.3) & (g > 0.3) & (b > 0.3)
                  & (r < 0.7) & (g < 0.7) & (b < 0.7), 0.2, 0.0),
        jnp.where(mu > 0.6, 0.2, 0.0),
    ], axis=-1)
    combined = 0.8 * terrain + 0.2 * scores
    return jax.nn.softmax(combined, axis=-1)


if __name__ == "__main__":
    B, C, H, W = 2, 3, 16, 16
    key = jax.random.PRNGKey(0)
    k_x, k_p = jax.random.split(key)

    x = jax.random.uniform(k_x, (B, C, H, W), jnp.float32)    # image in [0, 1], NCHW
    params = init_params(k_p, in_dim=C * H * W, num_features=2048)

    probs = terrain_classifier_forward(x, params)
    probs = jax.block_until_ready(probs)

    ref = _reference_forward(x, params)

    assert probs.shape == (B, NUM_CLASSES)
    assert bool(jnp.all(jnp.isfinite(probs)))
    assert bool(jnp.all(jnp.abs(jnp.sum(probs, axis=1) - 1.0) < 1e-5))
    assert bool(jnp.all(jnp.abs(probs - ref) < 1e-2))
    print("KERNEL_OK")
</pallas_src>

<mosaic_0001>
module attributes {stable_mosaic.version = 11 : i64} {
  func.func @_fused_kernel(%arg0: i32, %arg1: memref<8x768xf32, #tpu.memory_space<vmem>>, %arg2: memref<768x2048xbf16, #tpu.memory_space<vmem>>, %arg3: memref<1x2048xf32, #tpu.memory_space<vmem>>, %arg4: memref<2048x512xbf16, #tpu.memory_space<vmem>>, %arg5: memref<1x512xf32, #tpu.memory_space<vmem>>, %arg6: memref<512x256xbf16, #tpu.memory_space<vmem>>, %arg7: memref<1x256xf32, #tpu.memory_space<vmem>>, %arg8: memref<256x128xf32, #tpu.memory_space<vmem>>, %arg9: memref<1x128xf32, #tpu.memory_space<vmem>>, %arg10: memref<8x128xf32, #tpu.memory_space<vmem>>, %arg11: memref<8x128xf32, #tpu.memory_space<vmem>>, %arg12: memref<8x2048xf32, #tpu.memory_space<vmem>>, %arg13: memref<8x128xf32, #tpu.memory_space<vmem>>) attributes {dimension_semantics = [#tpu.dimension_semantics<arbitrary>], iteration_bounds = array<i64: 1>, scalar_prefetch = 0 : i64, scratch_operands = 2 : i64, tpu.core_type = #tpu.core_type<tc>, window_params = [{transform_indices = @transform_0, window_bounds = array<i64: 8, 768>}, {transform_indices = @transform_1, window_bounds = array<i64: 768, 2048>}, {pipeline_mode = #tpu.pipeline_mode<synchronous>, transform_indices = @transform_2, window_bounds = array<i64: 1, 2048>}, {pipeline_mode = #tpu.pipeline_mode<synchronous>, transform_indices = @transform_3, window_bounds = array<i64: 2048, 512>}, {pipeline_mode = #tpu.pipeline_mode<synchronous>, transform_indices = @transform_4, window_bounds = array<i64: 1, 512>}, {pipeline_mode = #tpu.pipeline_mode<synchronous>, transform_indices = @transform_5, window_bounds = array<i64: 512, 256>}, {pipeline_mode = #tpu.pipeline_mode<synchronous>, transform_indices = @transform_6, window_bounds = array<i64: 1, 256>}, {pipeline_mode = #tpu.pipeline_mode<synchronous>, transform_indices = @transform_7, window_bounds = array<i64: 256, 128>}, {pipeline_mode = #tpu.pipeline_mode<synchronous>, transform_indices = @transform_8, window_bounds = array<i64: 1, 128>}, {pipeline_mode = #tpu.pipeline_mode<synchronous>, transform_indices = @transform_9, window_bounds = array<i64: 8, 128>}, {pipeline_mode = #tpu.pipeline_mode<synchronous>, transform_indices = @transform_10, window_bounds = array<i64: 8, 128>}]} {
    %c0_i32 = arith.constant 0 : i32
    %0 = arith.cmpi eq, %arg0, %c0_i32 : i32
    %1 = arith.extui %0 : i1 to i32
    %c0_i32_0 = arith.constant 0 : i32
    %2 = arith.cmpi ne, %1, %c0_i32_0 : i32
    scf.if %2 {
      %cst_10 = arith.constant 0.000000e+00 : f32
      %13 = vector.broadcast %cst_10 : f32 to vector<8x2048xf32>
      %c0_11 = arith.constant 0 : index
      %c0_12 = arith.constant 0 : index
      %14 = vector.load %arg12[%c0_11, %c0_12] : memref<8x2048xf32, #tpu.memory_space<vmem>>, vector<8x2048xf32>
      tpu.vector_store %arg12[%c0_11, %c0_12], %13 {strides = array<i32>} : memref<8x2048xf32, #tpu.memory_space<vmem>>, vector<8x2048xf32>,
    } else {
    }
    %c0 = arith.constant 0 : index
    %c0_1 = arith.constant 0 : index
    %3 = vector.load %arg12[%c0, %c0_1] : memref<8x2048xf32, #tpu.memory_space<vmem>>, vector<8x2048xf32>
    %c0_2 = arith.constant 0 : index
    %c0_3 = arith.constant 0 : index
    %4 = vector.load %arg1[%c0_2, %c0_3] : memref<8x768xf32, #tpu.memory_space<vmem>>, vector<8x768xf32>
    %5 = arith.truncf %4 : vector<8x768xf32> to vector<8x768xbf16>
    %c0_4 = arith.constant 0 : index
    %c0_5 = arith.constant 0 : index
    %6 = vector.load %arg2[%c0_4, %c0_5] : memref<768x2048xbf16, #tpu.memory_space<vmem>>, vector<768x2048xbf16>
    %cst = arith.constant dense<0.000000e+00> : vector<8x2048xf32>
    %7 = tpu.matmul %5, %6, %cst {dimension_numbers = #tpu.dot_dimension_numbers<[1], [0], [0], [1], [0, 0, 1, 1], [], []>} : vector<8x768xbf16>, vector<768x2048xbf16>, vector<8x2048xf32> -> vector<8x2048xf32>
    %8 = arith.addf %3, %7 : vector<8x2048xf32>
    %c0_6 = arith.constant 0 : index
    %c0_7 = arith.constant 0 : index
    %9 = vector.load %arg12[%c0_6, %c0_7] : memref<8x2048xf32, #tpu.memory_space<vmem>>, vector<8x2048xf32>
    tpu.vector_store %arg12[%c0_6, %c0_7], %8 {strides = array<i32>} : memref<8x2048xf32, #tpu.memory_space<vmem>>, vector<8x2048xf32>,
    %c0_i32_8 = arith.constant 0 : i32
    %10 = arith.cmpi eq, %arg0, %c0_i32_8 : i32
    %11 = arith.extui %10 : i1 to i32
    %c0_i32_9 = arith.constant 0 : i32
    %12 = arith.cmpi ne, %11, %c0_i32_9 : i32
    scf.if %12 {
      %c0_10 = arith.constant 0 : index
      %c0_11 = arith.constant 0 : index
      %13 = vector.load %arg12[%c0_10, %c0_11] : memref<8x2048xf32, #tpu.memory_space<vmem>>, vector<8x2048xf32>
      %c0_12 = arith.constant 0 : index
      %c0_13 = arith.constant 0 : index
      %14 = vector.load %arg3[%c0_12, %c0_13] : memref<1x2048xf32, #tpu.memory_space<vmem>>, vector<1x2048xf32>
      %15 = vector.broadcast %14 : vector<1x2048xf32> to vector<8x2048xf32>
      %16 = arith.addf %13, %15 : vector<8x2048xf32>
      %cst_14 = arith.constant 0.000000e+00 : f32
      %17 = vector.broadcast %cst_14 : f32 to vector<8x2048xf32>
      %18 = arith.maximumf %16, %17 : vector<8x2048xf32>
      %19 = arith.truncf %18 : vector<8x2048xf32> to vector<8x2048xbf16>
      %c0_15 = arith.constant 0 : index
      %c0_16 = arith.constant 0 : index
      %20 = vector.load %arg4[%c0_15, %c0_16] : memref<2048x512xbf16, #tpu.memory_space<vmem>>, vector<2048x512xbf16>
      %cst_17 = arith.constant dense<0.000000e+00> : vector<8x512xf32>
      %21 = tpu.matmul %19, %20, %cst_17 {dimension_numbers = #tpu.dot_dimension_numbers<[1], [0], [0], [1], [0, 0, 1, 1], [], []>} : vector<8x2048xbf16>, vector<2048x512xbf16>, vector<8x512xf32> -> vector<8x512xf32>
      %c0_18 = arith.constant 0 : index
      %c0_19 = arith.constant 0 : index
      %22 = vector.load %arg5[%c0_18, %c0_19] : memref<1x512xf32, #tpu.memory_space<vmem>>, vector<1x512xf32>
      %23 = vector.broadcast %22 : vector<1x512xf32> to vector<8x512xf32>
      %24 = arith.addf %21, %23 : vector<8x512xf32>
      %cst_20 = arith.constant 0.000000e+00 : f32
      %25 = vector.broadcast %cst_20 : f32 to vector<8x512xf32>
      %26 = arith.maximumf %24, %25 : vector<8x512xf32>
      %27 = arith.truncf %26 : vector<8x512xf32> to vector<8x512xbf16>
      %c0_21 = arith.constant 0 : index
      %c0_22 = arith.constant 0 : index
      %28 = vector.load %arg6[%c0_21, %c0_22] : memref<512x256xbf16, #tpu.memory_space<vmem>>, vector<512x256xbf16>
      %cst_23 = arith.constant dense<0.000000e+00> : vector<8x256xf32>
      %29 = tpu.matmul %27, %28, %cst_23 {dimension_numbers = #tpu.dot_dimension_numbers<[1], [0], [0], [1], [0, 0, 1, 1], [], []>} : vector<8x512xbf16>, vector<512x256xbf16>, vector<8x256xf32> -> vector<8x256xf32>
      %c0_24 = arith.constant 0 : index
      %c0_25 = arith.constant 0 : index
      %30 = vector.load %arg7[%c0_24, %c0_25] : memref<1x256xf32, #tpu.memory_space<vmem>>, vector<1x256xf32>
      %31 = vector.broadcast %30 : vector<1x256xf32> to vector<8x256xf32>
      %32 = arith.addf %29, %31 : vector<8x256xf32>
      %cst_26 = arith.constant 0.000000e+00 : f32
      %33 = vector.broadcast %cst_26 : f32 to vector<8x256xf32>
      %34 = arith.maximumf %32, %33 : vector<8x256xf32>
      %c0_27 = arith.constant 0 : index
      %c0_28 = arith.constant 0 : index
      %35 = vector.load %arg8[%c0_27, %c0_28] : memref<256x128xf32, #tpu.memory_space<vmem>>, vector<256x128xf32>
      %cst_29 = arith.constant dense<0.000000e+00> : vector<8x128xf32>
      %36 = tpu.matmul %34, %35, %cst_29 {dimension_numbers = #tpu.dot_dimension_numbers<[1], [0], [0], [1], [0, 0, 1, 1], [], []>} : vector<8x256xf32>, vector<256x128xf32>, vector<8x128xf32> -> vector<8x128xf32>
      %c0_30 = arith.constant 0 : index
      %c0_31 = arith.constant 0 : index
      %37 = vector.load %arg9[%c0_30, %c0_31] : memref<1x128xf32, #tpu.memory_space<vmem>>, vector<1x128xf32>
      %38 = vector.broadcast %37 : vector<1x128xf32> to vector<8x128xf32>
      %39 = arith.addf %36, %38 : vector<8x128xf32>
      %40 = tpu.iota {dimensions = array<i32: 1>} : vector<8x128xi32>
      %c6_i32 = arith.constant 6 : i32
      %41 = vector.broadcast %c6_i32 : i32 to vector<8x128xi32>
      %42 = arith.cmpi slt, %40, %41 : vector<8x128xi32>
      %cst_32 = arith.constant -1.000000e+30 : f32
      %43 = vector.broadcast %cst_32 : f32 to vector<8x128xf32>
      %44 = arith.select %42, %39, %43 : vector<8x128xi1>, vector<8x128xf32>
      %cst_33 = arith.constant dense<0xFF800000> : vector<8xf32>
      %45 = vector.multi_reduction <maximumf>, %44, %cst_33 [1] : vector<8x128xf32> to vector<8xf32>
      %46 = vector.shape_cast %45 : vector<8xf32> to vector<8x1xf32>
      %47 = vector.broadcast %46 : vector<8x1xf32> to vector<8x128xf32>
      %48 = arith.subf %44, %47 : vector<8x128xf32>
      %49 = math.exp %48 : vector<8x128xf32>
      %cst_34 = arith.constant dense<0.000000e+00> : vector<8xf32>
      %50 = vector.multi_reduction <add>, %49, %cst_34 [1] : vector<8x128xf32> to vector<8xf32>
      %51 = vector.shape_cast %50 : vector<8xf32> to vector<8x1xf32>
      %52 = vector.broadcast %51 : vector<8x1xf32> to vector<8x128xf32>
      %53 = arith.divf %49, %52 : vector<8x128xf32>
      %c0_35 = arith.constant 0 : index
      %c0_36 = arith.constant 0 : index
      %54 = vector.load %arg10[%c0_35, %c0_36] : memref<8x128xf32, #tpu.memory_space<vmem>>, vector<8x128xf32>
      %55 = vector.extract_strided_slice %54 {offsets = [0, 0], sizes = [8, 1], strides = [1, 1]} : vector<8x128xf32> to vector<8x1xf32>
      %56 = vector.extract_strided_slice %54 {offsets = [0, 1], sizes = [8, 1], strides = [1, 1]} : vector<8x128xf32> to vector<8x1xf32>
      %57 = vector.extract_strided_slice %54 {offsets = [0, 2], sizes = [8, 1], strides = [1, 1]} : vector<8x128xf32> to vector<8x1xf32>
      %58 = arith.addf %55, %56 : vector<8x1xf32>
      %59 = arith.addf %58, %57 : vector<8x1xf32>
      %cst_37 = arith.constant 0.333333343 : f32
      %60 = vector.broadcast %cst_37 : f32 to vector<8x1xf32>
      %61 = arith.mulf %59, %60 : vector<8x1xf32>
      %62 = arith.subf %55, %61 : vector<8x1xf32>
      %63 = arith.mulf %62, %62 : vector<8x1xf32>
      %64 = arith.subf %56, %61 : vector<8x1xf32>
      %65 = arith.mulf %64, %64 : vector<8x1xf32>
      %66 = arith.addf %63, %65 : vector<8x1xf32>
      %67 = arith.subf %57, %61 : vector<8x1xf32>
      %68 = arith.mulf %67, %67 : vector<8x1xf32>
      %69 = arith.addf %66, %68 : vector<8x1xf32>
      %cst_38 = arith.constant 0.333333343 : f32
      %70 = vector.broadcast %cst_38 : f32 to vector<8x1xf32>
      %71 = arith.mulf %69, %70 : vector<8x1xf32>
      %cst_39 = arith.constant 0.000000e+00 : f32
      %72 = vector.broadcast %cst_39 : f32 to vector<8x128xf32>
      %c0_40 = arith.constant 0 : index
      %c0_41 = arith.constant 0 : index
      %73 = vector.load %arg13[%c0_40, %c0_41] : memref<8x128xf32, #tpu.memory_space<vmem>>, vector<8x128xf32>
      tpu.vector_store %arg13[%c0_40, %c0_41], %72 {strides = array<i32>} : memref<8x128xf32, #tpu.memory_space<vmem>>, vector<8x128xf32>,
      %cst_42 = arith.constant 5.000000e-02 : f32
      %74 = vector.broadcast %cst_42 : f32 to vector<8x1xf32>
      %75 = arith.cmpf olt, %71, %74 : vector<8x1xf32>
      %cst_43 = arith.constant 2.000000e-01 : f32
      %cst_44 = arith.constant 0.000000e+00 : f32
      %76 = vector.broadcast %cst_43 : f32 to vector<8x1xf32>
      %77 = vector.broadcast %cst_44 : f32 to vector<8x1xf32>
      %78 = arith.select %75, %76, %77 : vector<8x1xi1>, vector<8x1xf32>
      %c0_45 = arith.constant 0 : index
      %c0_46 = arith.constant 0 : index
      %79 = vector.load %arg13[%c0_45, %c0_46] : memref<8x128xf32, #tpu.memory_space<vmem>>, vector<8x1xf32>
      tpu.vector_store %arg13[%c0_45, %c0_46], %78 {strides = array<i32>} : memref<8x128xf32, #tpu.memory_space<vmem>>, vector<8x1xf32>,
      %80 = arith.cmpf ogt, %57, %55 : vector<8x1xf32>
      %81 = arith.cmpf ogt, %57, %56 : vector<8x1xf32>
      %82 = arith.andi %80, %81 : vector<8x1xi1>
      %cst_47 = arith.constant 3.000000e-01 : f32
      %cst_48 = arith.constant 0.000000e+00 : f32
      %83 = vector.broadcast %cst_47 : f32 to vector<8x1xf32>
      %84 = vector.broadcast %cst_48 : f32 to vector<8x1xf32>
      %85 = arith.select %82, %83, %84 : vector<8x1xi1>, vector<8x1xf32>
      %c0_49 = arith.constant 0 : index
      %c1 = arith.constant 1 : index
      %86 = vector.load %arg13[%c0_49, %c1] : memref<8x128xf32, #tpu.memory_space<vmem>>, vector<8x1xf32>
      tpu.vector_store %arg13[%c0_49, %c1], %85 {strides = array<i32>} : memref<8x128xf32, #tpu.memory_space<vmem>>, vector<8x1xf32>,
      %87 = arith.cmpf ogt, %56, %55 : vector<8x1xf32>
      %88 = arith.cmpf ogt, %56, %57 : vector<8x1xf32>
      %89 = arith.andi %87, %88 : vector<8x1xi1>
      %cst_50 = arith.constant 3.000000e-01 : f32
      %cst_51 = arith.constant 0.000000e+00 : f32
      %90 = vector.broadcast %cst_50 : f32 to vector<8x1xf32>
      %91 = vector.broadcast %cst_51 : f32 to vector<8x1xf32>
      %92 = arith.select %89, %90, %91 : vector<8x1xi1>, vector<8x1xf32>
      %c0_52 = arith.constant 0 : index
      %c2 = arith.constant 2 : index
      %93 = vector.load %arg13[%c0_52, %c2] : memref<8x128xf32, #tpu.memory_space<vmem>>, vector<8x1xf32>
      tpu.vector_store %arg13[%c0_52, %c2], %92 {strides = array<i32>} : memref<8x128xf32, #tpu.memory_space<vmem>>, vector<8x1xf32>,
      %cst_53 = arith.constant 3.000000e-01 : f32
      %94 = vector.broadcast %cst_53 : f32 to vector<8x1xf32>
      %95 = arith.cmpf ogt, %56, %94 : vector<8x1xf32>
      %cst_54 = arith.constant 0.699999988 : f32
      %96 = vector.broadcast %cst_54 : f32 to vector<8x1xf32>
      %97 = arith.cmpf olt, %56, %96 : vector<8x1xf32>
      %98 = arith.andi %95, %97 : vector<8x1xi1>
      %99 = arith.cmpf ogt, %56, %57 : vector<8x1xf32>
      %100 = arith.andi %98, %99 : vector<8x1xi1>
      %cst_55 = arith.constant 2.000000e-01 : f32
      %cst_56 = arith.constant 0.000000e+00 : f32
      %101 = vector.broadcast %cst_55 : f32 to vector<8x1xf32>
      %102 = vector.broadcast %cst_56 : f32 to vector<8x1xf32>
      %103 = arith.select %100, %101, %102 : vector<8x1xi1>, vector<8x1xf32>
      %c0_57 = arith.constant 0 : index
      %c3 = arith.constant 3 : index
      %104 = vector.load %arg13[%c0_57, %c3] : memref<8x128xf32, #tpu.memory_space<vmem>>, vector<8x1xf32>
      tpu.vector_store %arg13[%c0_57, %c3], %103 {strides = array<i32>} : memref<8x128xf32, #tpu.memory_space<vmem>>, vector<8x1xf32>,
      %cst_58 = arith.constant 3.000000e-01 : f32
      %105 = vector.broadcast %cst_58 : f32 to vector<8x1xf32>
      %106 = arith.cmpf ogt, %55, %105 : vector<8x1xf32>
      %cst_59 = arith.constant 3.000000e-01 : f32
      %107 = vector.broadcast %cst_59 : f32 to vector<8x1xf32>
      %108 = arith.cmpf ogt, %56, %107 : vector<8x1xf32>
      %109 = arith.andi %106, %108 : vector<8x1xi1>
      %cst_60 = arith.constant 3.000000e-01 : f32
      %110 = vector.broadcast %cst_60 : f32 to vector<8x1xf32>
      %111 = arith.cmpf ogt, %57, %110 : vector<8x1xf32>
      %112 = arith.andi %109, %111 : vector<8x1xi1>
      %cst_61 = arith.constant 0.699999988 : f32
      %113 = vector.broadcast %cst_61 : f32 to vector<8x1xf32>
      %114 = arith.cmpf olt, %55, %113 : vector<8x1xf32>
      %115 = arith.andi %112, %114 : vector<8x1xi1>
      %cst_62 = arith.constant 0.699999988 : f32
      %116 = vector.broadcast %cst_62 : f32 to vector<8x1xf32>
      %117 = arith.cmpf olt, %56, %116 : vector<8x1xf32>
      %118 = arith.andi %115, %117 : vector<8x1xi1>
      %cst_63 = arith.constant 0.699999988 : f32
      %119 = vector.broadcast %cst_63 : f32 to vector<8x1xf32>
      %120 = arith.cmpf olt, %57, %119 : vector<8x1xf32>
      %121 = arith.andi %118, %120 : vector<8x1xi1>
      %cst_64 = arith.constant 2.000000e-01 : f32
      %cst_65 = arith.constant 0.000000e+00 : f32
      %122 = vector.broadcast %cst_64 : f32 to vector<8x1xf32>
      %123 = vector.broadcast %cst_65 : f32 to vector<8x1xf32>
      %124 = arith.select %121, %122, %123 : vector<8x1xi1>, vector<8x1xf32>
      %c0_66 = arith.constant 0 : index
      %c4 = arith.constant 4 : index
      %125 = vector.load %arg13[%c0_66, %c4] : memref<8x128xf32, #tpu.memory_space<vmem>>, vector<8x1xf32>
      tpu.vector_store %arg13[%c0_66, %c4], %124 {strides = array<i32>} : memref<8x128xf32, #tpu.memory_space<vmem>>, vector<8x1xf32>,
      %cst_67 = arith.constant 6.000000e-01 : f32
      %126 = vector.broadcast %cst_67 : f32 to vector<8x1xf32>
      %127 = arith.cmpf ogt, %61, %126 : vector<8x1xf32>
      %cst_68 = arith.constant 2.000000e-01 : f32
      %cst_69 = arith.constant 0.000000e+00 : f32
      %128 = vector.broadcast %cst_68 : f32 to vector<8x1xf32>
      %129 = vector.broadcast %cst_69 : f32 to vector<8x1xf32>
      %130 = arith.select %127, %128, %129 : vector<8x1xi1>, vector<8x1xf32>
      %c0_70 = arith.constant 0 : index
      %c5 = arith.constant 5 : index
      %131 = vector.load %arg13[%c0_70, %c5] : memref<8x128xf32, #tpu.memory_space<vmem>>, vector<8x1xf32>
      tpu.vector_store %arg13[%c0_70, %c5], %130 {strides = array<i32>} : memref<8x128xf32, #tpu.memory_space<vmem>>, vector<8x1xf32>,
      %c0_71 = arith.constant 0 : index
      %c0_72 = arith.constant 0 : index
      %132 = vector.load %arg13[%c0_71, %c0_72] : memref<8x128xf32, #tpu.memory_space<vmem>>, vector<8x128xf32>
      %cst_73 = arith.constant 8.000000e-01 : f32
      %133 = vector.broadcast %cst_73 : f32 to vector<8x128xf32>
      %134 = arith.mulf %133, %53 : vector<8x128xf32>
      %cst_74 = arith.constant 2.000000e-01 : f32
      %135 = vector.broadcast %cst_74 : f32 to vector<8x128xf32>
      %136 = arith.mulf %135, %132 : vector<8x128xf32>
      %137 = arith.addf %134, %136 : vector<8x128xf32>
      %cst_75 = arith.constant -1.000000e+30 : f32
      %138 = vector.broadcast %cst_75 : f32 to vector<8x128xf32>
      %139 = arith.select %42, %137, %138 : vector<8x128xi1>, vector<8x128xf32>
      %cst_76 = arith.constant dense<0xFF800000> : vector<8xf32>
      %140 = vector.multi_reduction <maximumf>, %139, %cst_76 [1] : vector<8x128xf32> to vector<8xf32>
      %141 = vector.shape_cast %140 : vector<8xf32> to vector<8x1xf32>
      %142 = vector.broadcast %141 : vector<8x1xf32> to vector<8x128xf32>
      %143 = arith.subf %139, %142 : vector<8x128xf32>
      %144 = math.exp %143 : vector<8x128xf32>
      %cst_77 = arith.constant dense<0.000000e+00> : vector<8xf32>
      %145 = vector.multi_reduction <add>, %144, %cst_77 [1] : vector<8x128xf32> to vector<8xf32>
      %146 = vector.shape_cast %145 : vector<8xf32> to vector<8x1xf32>
      %147 = vector.broadcast %146 : vector<8x1xf32> to vector<8x128xf32>
      %148 = arith.divf %144, %147 : vector<8x128xf32>
      %c0_78 = arith.constant 0 : index
      %c0_79 = arith.constant 0 : index
      %149 = vector.load %arg11[%c0_78, %c0_79] : memref<8x128xf32, #tpu.memory_space<vmem>>, vector<8x128xf32>
      tpu.vector_store %arg11[%c0_78, %c0_79], %148 {strides = array<i32>} : memref<8x128xf32, #tpu.memory_space<vmem>>, vector<8x128xf32>,
    } else {
    }
    return
  }
  func.func @transform_0(%arg0: i32) -> (i32, i32) {
    %c0_i32 = arith.constant 0 : i32
    %c0_i32_0 = arith.constant 0 : i32
    return %c0_i32, %arg0 : i32, i32
  }
  func.func @transform_1(%arg0: i32) -> (i32, i32) {
    %c0_i32 = arith.constant 0 : i32
    %c0_i32_0 = arith.constant 0 : i32
    return %arg0, %c0_i32 : i32, i32
  }
  func.func @transform_2(%arg0: i32) -> (i32, i32) {
    %c0_i32 = arith.constant 0 : i32
    %c0_i32_0 = arith.constant 0 : i32
    %c0_i32_1 = arith.constant 0 : i32
    return %c0_i32, %c0_i32_0 : i32, i32
  }
  func.func @transform_3(%arg0: i32) -> (i32, i32) {
    %c0_i32 = arith.constant 0 : i32
    %c0_i32_0 = arith.constant 0 : i32
    %c0_i32_1 = arith.constant 0 : i32
    return %c0_i32, %c0_i32_0 : i32, i32
  }
  func.func @transform_4(%arg0: i32) -> (i32, i32) {
    %c0_i32 = arith.constant 0 : i32
    %c0_i32_0 = arith.constant 0 : i32
    %c0_i32_1 = arith.constant 0 : i32
    return %c0_i32, %c0_i32_0 : i32, i32
  }
  func.func @transform_5(%arg0: i32) -> (i32, i32) {
    %c0_i32 = arith.constant 0 : i32
    %c0_i32_0 = arith.constant 0 : i32
    %c0_i32_1 = arith.constant 0 : i32
    return %c0_i32, %c0_i32_0 : i32, i32
  }
  func.func @transform_6(%arg0: i32) -> (i32, i32) {
    %c0_i32 = arith.constant 0 : i32
    %c0_i32_0 = arith.constant 0 : i32
    %c0_i32_1 = arith.constant 0 : i32
    return %c0_i32, %c0_i32_0 : i32, i32
  }
  func.func @transform_7(%arg0: i32) -> (i32, i32) {
    %c0_i32 = arith.constant 0 : i32
    %c0_i32_0 = arith.constant 0 : i32
    %c0_i32_1 = arith.constant 0 : i32
    return %c0_i32, %c0_i32_0 : i32, i32
  }
  func.func @transform_8(%arg0: i32) -> (i32, i32) {
    %c0_i32 = arith.constant 0 : i32
    %c0_i32_0 = arith.constant 0 : i32
    %c0_i32_1 = arith.constant 0 : i32
    return %c0_i32, %c0_i32_0 : i32, i32
  }
  func.func @transform_9(%arg0: i32) -> (i32, i32) {
    %c0_i32 = arith.constant 0 : i32
    %c0_i32_0 = arith.constant 0 : i32
    %c0_i32_1 = arith.constant 0 : i32
    return %c0_i32, %c0_i32_0 : i32, i32
  }
  func.func @transform_10(%arg0: i32) -> (i32, i32) {
    %c0_i32 = arith.constant 0 : i32
    %c0_i32_0 = arith.constant 0 : i32
    %c0_i32_1 = arith.constant 0 : i32
    return %c0_i32, %c0_i32_0 : i32, i32
  }
}

</mosaic_0001>

<llo_original>
// kernel: tpu_custom_call.1
$region0: #{tpu_custom_call.1}
  #allocation0 [shape = 'u32[]', space=smem, size = 0x4, offset = 0x4, fixed_abs, tag = 'smem constant byte address 0x4 - core index']
  #allocation1 [shape = 'u32[144,128]{1,0:T(1,128)}', space=vmem, size = 0x12000, scoped, tag = 'internal scratch']
  #allocation2 [shape = 'f32[8,2048]{1,0:T(8,128)}', space=vmem, size = 0x10000, scoped, tag = 'scratch operand']
  #allocation3 [shape = 'f32[8,128]{1,0:T(8,128)}', space=vmem, size = 0x1000, scoped, tag = 'scratch operand']
  %s0 = inlined_call_operand.hbm [shape: f32[8,768], index: 0, kind: input, shape index: {}]
  %s1 = inlined_call_operand.hbm [shape: bf16[768,2048], index: 1, kind: input, shape index: {}]
  %s2 = inlined_call_operand.hbm [shape: f32[1,2048], index: 2, kind: input, shape index: {}]
  %s3 = inlined_call_operand.hbm [shape: bf16[2048,512], index: 3, kind: input, shape index: {}]
  %s4 = inlined_call_operand.hbm [shape: f32[1,512], index: 4, kind: input, shape index: {}]
  %s5 = inlined_call_operand.hbm [shape: bf16[512,256], index: 5, kind: input, shape index: {}]
  %s6 = inlined_call_operand.hbm [shape: f32[1,256], index: 6, kind: input, shape index: {}]
  %s7 = inlined_call_operand.hbm [shape: f32[256,128], index: 7, kind: input, shape index: {}]
  %s8 = inlined_call_operand.hbm [shape: f32[1,128], index: 8, kind: input, shape index: {}]
  %s9 = inlined_call_operand.hbm [shape: f32[8,128], index: 9, kind: input, shape index: {}]
  %s10 = inlined_call_operand.hbm [shape: f32[8,128], index: 10, kind: output, shape index: {}]
  %s11 = sld [smem:[#allocation0]]
  $region98: #{tpu_custom_call.1} parent=0
    _
  %s13 = ssub.s32 1, %s11
  %s14 = scalar_select 0, %s13, %s11
  $region1: #{tpu_custom_call.1} parent=0
    #allocation4 [shape = 'u8[24576]{0}', space=vmem, size = 0x6000, scoped, tag = 'input window, operand 0, single buffered']
    #allocation5 [shape = 's32[1]{0}', space=sflag, size = 0x4, scoped, tag = 'scoped memory for tpu_custom_call.1']
    #allocation6 [shape = 's32[1]{0}', space=sflag, size = 0x4, scoped, tag = 'scoped memory for tpu_custom_call.1']
    #allocation7 [shape = 'u8[3145728]{0}', space=vmem, size = 0x300000, scoped, tag = 'input window, operand 1, single buffered']
    #allocation8 [shape = 's32[1]{0}', space=sflag, size = 0x4, scoped, tag = 'scoped memory for tpu_custom_call.1']
    #allocation9 [shape = 'u8[8192]{0}', space=vmem, size = 0x2000, scoped, tag = 'input window, operand 2, single buffered']
    #allocation10 [shape = 'u8[2097152]{0}', space=vmem, size = 0x200000, scoped, tag = 'input window, operand 3, single buffered']
    #allocation11 [shape = 's32[1]{0}', space=sflag, size = 0x4, scoped, tag = 'scoped memory for tpu_custom_call.1']
    #allocation12 [shape = 'u8[2048]{0}', space=vmem, size = 0x800, scoped, tag = 'input window, operand 4, single buffered']
    #allocation13 [shape = 'u8[262144]{0}', space=vmem, size = 0x40000, scoped, tag = 'input window, operand 5, single buffered']
    #allocation14 [shape = 's32[1]{0}', space=sflag, size = 0x4, scoped, tag = 'scoped memory for tpu_custom_call.1']
    #allocation15 [shape = 'u8[1024]{0}', space=vmem, size = 0x400, scoped, tag = 'input window, operand 6, single buffered']
    #allocation16 [shape = 'u8[131072]{0}', space=vmem, size = 0x20000, scoped, tag = 'input window, operand 7, single buffered']
    #allocation17 [shape = 's32[1]{0}', space=sflag, size = 0x4, scoped, tag = 'scoped memory for tpu_custom_call.1']
    #allocation18 [shape = 'u8[512]{0}', space=vmem, size = 0x400, scoped, tag = 'input window, operand 8, single buffered']
    #allocation19 [shape = 'u8[4096]{0}', space=vmem, size = 0x1000, scoped, tag = 'input window, operand 9, single buffered']
    #allocation20 [shape = 's32[1]{0}', space=sflag, size = 0x4, scoped, tag = 'scoped memory for tpu_custom_call.1']
    #allocation21 [shape = 'u8[4096]{0}', space=vmem, size = 0x1000, scoped, tag = 'output window, operand 0, single buffered']
    %15 = vsyncpa [#allocation5], 0
    %16 = vsyncpa [#allocation8], 0
    %17 = vsyncpa [#allocation11], 0
    %18 = vsyncpa [#allocation14], 0
    %19 = vsyncpa [#allocation17], 0
    %20 = vsyncpa [#allocation20], 0
    %21 = vsyncpa [#allocation6], 0
    // Predicated region
    $region2: #{tpu_custom_call.1} parent=1 // pred_check
      _
    $region3: #{tpu_custom_call.1} parent=1 // pred_check_branch
      %23 = sbr.rel (0) target = $region5
    $region4: #{tpu_custom_call.1} parent=1 // pred_region
      %s25 = ssub.s32 768, 768
      %26 = vsyncadd [#allocation5], %s25
      %s28 = sshll.u32 [#allocation4], 4
      %s29 = int_to_ptr.vmem [resolvable:$true] %s28
      %31 = dma.hbm_to_vmem [thread:$0]  %s0, 768, %s29, [#allocation5]
    $region5: #{tpu_custom_call.1} parent=1 // pred_fallthru
      _
    // Predicated region
    $region6: #{tpu_custom_call.1} parent=1 // pred_check
      _
    $region7: #{tpu_custom_call.1} parent=1 // pred_check_branch
      %33 = sbr.rel (0) target = $region9
    $region8: #{tpu_custom_call.1} parent=1 // pred_region
      %s35 = ssub.s32 98304, 98304
      %36 = vsyncadd [#allocation8], %s35
      %s37 = sshll.u32 [#allocation7], 4
      %s38 = int_to_ptr.vmem [resolvable:$true] %s37
      %43 = dma.hbm_to_vmem [thread:$0]  %s1, 98304, %s38, [#allocation8], 1024, 1024, 64
    $region9: #{tpu_custom_call.1} parent=1 // pred_fallthru
      _
    // Predicated region
    $region10: #{tpu_custom_call.1} parent=1 // pred_check
      _
    $region11: #{tpu_custom_call.1} parent=1 // pred_check_branch
      %45 = sbr.rel (0) target = $region13
    $region12: #{tpu_custom_call.1} parent=1 // pred_region
      %s47 = ssub.s32 256, 256
      %48 = vsyncadd [#allocation8], %s47
      %s50 = sshll.u32 [#allocation9], 4
      %s51 = int_to_ptr.vmem [resolvable:$true] %s50
      %53 = dma.hbm_to_vmem [thread:$0]  %s2, 256, %s51, [#allocation8]
    $region13: #{tpu_custom_call.1} parent=1 // pred_fallthru
      _
    // Predicated region
    $region14: #{tpu_custom_call.1} parent=1 // pred_check
      _
    $region15: #{tpu_custom_call.1} parent=1 // pred_check_branch
      %55 = sbr.rel (0) target = $region17
    $region16: #{tpu_custom_call.1} parent=1 // pred_region
      %s57 = ssub.s32 65536, 65536
      %58 = vsyncadd [#allocation11], %s57
      %s59 = sshll.u32 [#allocation10], 4
      %s60 = int_to_ptr.vmem [resolvable:$true] %s59
      %65 = dma.hbm_to_vmem [thread:$0]  %s3, 65536, %s60, [#allocation11], 256, 256, 16
    $region17: #{tpu_custom_call.1} parent=1 // pred_fallthru
      _
    // Predicated region
    $region18: #{tpu_custom_call.1} parent=1 // pred_check
      _
    $region19: #{tpu_custom_call.1} parent=1 // pred_check_branch
      %67 = sbr.rel (0) target = $region21
    $region20: #{tpu_custom_call.1} parent=1 // pred_region
      %s69 = ssub.s32 64, 64
      %70 = vsyncadd [#allocation11], %s69
      %s72 = sshll.u32 [#allocation12], 4
      %s73 = int_to_ptr.vmem [resolvable:$true] %s72
      %75 = dma.hbm_to_vmem [thread:$0]  %s4, 64, %s73, [#allocation11]
    $region21: #{tpu_custom_call.1} parent=1 // pred_fallthru
      _
    // Predicated region
    $region22: #{tpu_custom_call.1} parent=1 // pred_check
      _
    $region23: #{tpu_custom_call.1} parent=1 // pred_check_branch
      %77 = sbr.rel (0) target = $region25
    $region24: #{tpu_custom_call.1} parent=1 // pred_region
      %s79 = ssub.s32 8192, 8192
      %80 = vsyncadd [#allocation14], %s79
      %s81 = sshll.u32 [#allocation13], 4
      %s82 = int_to_ptr.vmem [resolvable:$true] %s81
      %87 = dma.hbm_to_vmem [thread:$0]  %s5, 8192, %s82, [#allocation14], 128, 128, 8
    $region25: #{tpu_custom_call.1} parent=1 // pred_fallthru
      _
    // Predicated region
    $region26: #{tpu_custom_call.1} parent=1 // pred_check
      _
    $region27: #{tpu_custom_call.1} parent=1 // pred_check_branch
      %89 = sbr.rel (0) target = $region29
    $region28: #{tpu_custom_call.1} parent=1 // pred_region
      %s91 = ssub.s32 32, 32
      %92 = vsyncadd [#allocation14], %s91
      %s94 = sshll.u32 [#allocation15], 4
      %s95 = int_to_ptr.vmem [resolvable:$true] %s94
      %97 = dma.hbm_to_vmem [thread:$0]  %s6, 32, %s95, [#allocation14]
    $region29: #{tpu_custom_call.1} parent=1 // pred_fallthru
      _
    // Predicated region
    $region30: #{tpu_custom_call.1} parent=1 // pred_check
      _
    $region31: #{tpu_custom_call.1} parent=1 // pred_check_branch
      %99 = sbr.rel (0) target = $region33
    $region32: #{tpu_custom_call.1} parent=1 // pred_region
      %s101 = ssub.s32 4096, 4096
      %102 = vsyncadd [#allocation17], %s101
      %s103 = sshll.u32 [#allocation16], 4
      %s104 = int_to_ptr.vmem [resolvable:$true] %s103
      %109 = dma.hbm_to_vmem [thread:$0]  %s7, 4096, %s104, [#allocation17], 128, 128, 8
    $region33: #{tpu_custom_call.1} parent=1 // pred_fallthru
      _
    // Predicated region
    $region34: #{tpu_custom_call.1} parent=1 // pred_check
      _
    $region35: #{tpu_custom_call.1} parent=1 // pred_check_branch
      %111 = sbr.rel (0) target = $region37
    $region36: #{tpu_custom_call.1} parent=1 // pred_region
      %s113 = ssub.s32 16, 16
      %114 = vsyncadd [#allocation17], %s113
      %s116 = sshll.u32 [#allocation18], 4
      %s117 = int_to_ptr.vmem [resolvable:$true] %s116
      %119 = dma.hbm_to_vmem [thread:$0]  %s8, 16, %s117, [#allocation17]
    $region37: #{tpu_custom_call.1} parent=1 // pred_fallthru
      _
    // Predicated region
    $region38: #{tpu_custom_call.1} parent=1 // pred_check
      _
    $region39: #{tpu_custom_call.1} parent=1 // pred_check_branch
      %121 = sbr.rel (0) target = $region41
    $region40: #{tpu_custom_call.1} parent=1 // pred_region
      %s123 = ssub.s32 128, 128
      %124 = vsyncadd [#allocation20], %s123
      %s126 = sshll.u32 [#allocation19], 4
      %s127 = int_to_ptr.vmem [resolvable:$true] %s126
      %129 = dma.hbm_to_vmem [thread:$0]  %s9, 128, %s127, [#allocation20]
    $region41: #{tpu_custom_call.1} parent=1 // pred_fallthru
      _
    // Predicated region
    $region42: #{tpu_custom_call.1} parent=1 // pred_check
      _
    $region43: #{tpu_custom_call.1} parent=1 // pred_check_branch
      %131 = sbr.rel (0) target = $region45
    $region44: #{tpu_custom_call.1} parent=1 // pred_region
      %132 = dma.done [#allocation5], 768
    $region45: #{tpu_custom_call.1} parent=1 // pred_fallthru
      _
    // Predicated region
    $region46: #{tpu_custom_call.1} parent=1 // pred_check
      _
    $region47: #{tpu_custom_call.1} parent=1 // pred_check_branch
      %134 = sbr.rel (0) target = $region49
    $region48: #{tpu_custom_call.1} parent=1 // pred_region
      %135 = dma.done [#allocation8], 98304
    $region49: #{tpu_custom_call.1} parent=1 // pred_fallthru
      _
    // Predicated region
    $region50: #{tpu_custom_call.1} parent=1 // pred_check
      _
    $region51: #{tpu_custom_call.1} parent=1 // pred_check_branch
      %137 = sbr.rel (0) target = $region53
    $region52: #{tpu_custom_call.1} parent=1 // pred_region
      %138 = dma.done [#allocation8], 256
    $region53: #{tpu_custom_call.1} parent=1 // pred_fallthru
      _
    // Predicated region
    $region54: #{tpu_custom_call.1} parent=1 // pred_check
      _
    $region55: #{tpu_custom_call.1} parent=1 // pred_check_branch
      %140 = sbr.rel (0) target = $region57
    $region56: #{tpu_custom_call.1} parent=1 // pred_region
      %141 = dma.done [#allocation11], 65536
    $region57: #{tpu_custom_call.1} parent=1 // pred_fallthru
      _
    // Predicated region
    $region58: #{tpu_custom_call.1} parent=1 // pred_check
      _
    $region59: #{tpu_custom_call.1} parent=1 // pred_check_branch
      %143 = sbr.rel (0) target = $region61
    $region60: #{tpu_custom_call.1} parent=1 // pred_region
      %144 = dma.done [#allocation11], 64
    $region61: #{tpu_custom_call.1} parent=1 // pred_fallthru
      _
    // Predicated region
    $region62: #{tpu_custom_call.1} parent=1 // pred_check
      _
    $region63: #{tpu_custom_call.1} parent=1 // pred_check_branch
      %146 = sbr.rel (0) target = $region65
    $region64: #{tpu_custom_call.1} parent=1 // pred_region
      %147 = dma.done [#allocation14], 8192
    $region65: #{tpu_custom_call.1} parent=1 // pred_fallthru
      _
    // Predicated region
    $region66: #{tpu_custom_call.1} parent=1 // pred_check
      _
    $region67: #{tpu_custom_call.1} parent=1 // pred_check_branch
      %149 = sbr.rel (0) target = $region69
    $region68: #{tpu_custom_call.1} parent=1 // pred_region
      %150 = dma.done [#allocation14], 32
    $region69: #{tpu_custom_call.1} parent=1 // pred_fallthru
      _
    // Predicated region
    $region70: #{tpu_custom_call.1} parent=1 // pred_check
      _
    $region71: #{tpu_custom_call.1} parent=1 // pred_check_branch
      %152 = sbr.rel (0) target = $region73
    $region72: #{tpu_custom_call.1} parent=1 // pred_region
      %153 = dma.done [#allocation17], 4096
    $region73: #{tpu_custom_call.1} parent=1 // pred_fallthru
      _
    // Predicated region
    $region74: #{tpu_custom_call.1} parent=1 // pred_check
      _
    $region75: #{tpu_custom_call.1} parent=1 // pred_check_branch
      %155 = sbr.rel (0) target = $region77
    $region76: #{tpu_custom_call.1} parent=1 // pred_region
      %156 = dma.done [#allocation17], 16
    $region77: #{tpu_custom_call.1} parent=1 // pred_fallthru
      _
    // Predicated region
    $region78: #{tpu_custom_call.1} parent=1 // pred_check
      _
    $region79: #{tpu_custom_call.1} parent=1 // pred_check_branch
      %158 = sbr.rel (0) target = $region81
    $region80: #{tpu_custom_call.1} parent=1 // pred_region
      %159 = dma.done [#allocation20], 128
    $region81: #{tpu_custom_call.1} parent=1 // pred_fallthru
      _
    %p160 = scmp.eq.s32.totalorder 0, 0
    // Predicated region
    $region82: #{tpu_custom_call.1} parent=1 // pred_check
      %p161 = pneg %p160
    $region83: #{tpu_custom_call.1} parent=1 // pred_check_branch
      %163 = sbr.rel (%p161) target = $region85
    $region84: #{tpu_custom_call.1} parent=1 // pred_region
      %164 = vst [vmem:[#allocation2] sm:$0xff] 0.0
      %165 = vst [vmem:[#allocation2 + $0x8] sm:$0xff] 0.0
      %166 = vst [vmem:[#allocation2 + $0x10] sm:$0xff] 0.0
      %167 = vst [vmem:[#allocation2 + $0x18] sm:$0xff] 0.0
      %168 = vst [vmem:[#allocation2 + $0x20] sm:$0xff] 0.0
      %169 = vst [vmem:[#allocation2 + $0x28] sm:$0xff] 0.0
      %170 = vst [vmem:[#allocation2 + $0x30] sm:$0xff] 0.0
      %171 = vst [vmem:[#allocation2 + $0x38] sm:$0xff] 0.0
      %172 = vst [vmem:[#allocation2 + $0x40] sm:$0xff] 0.0
      %173 = vst [vmem:[#allocation2 + $0x48] sm:$0xff] 0.0
      %174 = vst [vmem:[#allocation2 + $0x50] sm:$0xff] 0.0
      %175 = vst [vmem:[#allocation2 + $0x58] sm:$0xff] 0.0
      %176 = vst [vmem:[#allocation2 + $0x60] sm:$0xff] 0.0
      %177 = vst [vmem:[#allocation2 + $0x68] sm:$0xff] 0.0
      %178 = vst [vmem:[#allocation2 + $0x70] sm:$0xff] 0.0
      %179 = vst [vmem:[#allocation2 + $0x78] sm:$0xff] 0.0
    $region85: #{tpu_custom_call.1} parent=1 // pred_fallthru
      _
    %v180 = vld [vmem:[#allocation2] sm:$0xff]
    %v181 = vld [vmem:[#allocation2 + $0x8] sm:$0xff]
    %v182 = vld [vmem:[#allocation2 + $0x10] sm:$0xff]
    %v183 = vld [vmem:[#allocation2 + $0x18] sm:$0xff]
    %v184 = vld [vmem:[#allocation2 + $0x20] sm:$0xff]
    %v185 = vld [vmem:[#allocation2 + $0x28] sm:$0xff]
    %v186 = vld [vmem:[#allocation2 + $0x30] sm:$0xff]
    %v187 = vld [vmem:[#allocation2 + $0x38] sm:$0xff]
    %v188 = vld [vmem:[#allocation2 + $0x40] sm:$0xff]
    %v189 = vld [vmem:[#allocation2 + $0x48] sm:$0xff]
    %v190 = vld [vmem:[#allocation2 + $0x50] sm:$0xff]
    %v191 = vld [vmem:[#allocation2 + $0x58] sm:$0xff]
    %v192 = vld [vmem:[#allocation2 + $0x60] sm:$0xff]
    %v193 = vld [vmem:[#allocation2 + $0x68] sm:$0xff]
    %v194 = vld [vmem:[#allocation2 + $0x70] sm:$0xff]
    %v195 = vld [vmem:[#allocation2 + $0x78] sm:$0xff]
    %v196 = vld [vmem:[#allocation4] sm:$0xff]
    %v197 = vld [vmem:[#allocation4 + $0x8] sm:$0xff]
    %v198 = vld [vmem:[#allocation4 + $0x10] sm:$0xff]
    %v199 = vld [vmem:[#allocation4 + $0x18] sm:$0xff]
    %v200 = vld [vmem:[#allocation4 + $0x20] sm:$0xff]
    %v201 = vld [vmem:[#allocation4 + $0x28] sm:$0xff]
    %v202 = vpack.c.bf16 %v196, %v196
    %v203 = vpack.c.bf16 %v197, %v197
    %v204 = vpack.c.bf16 %v198, %v198
    %v205 = vpack.c.bf16 %v199, %v199
    %v206 = vpack.c.bf16 %v200, %v200
    %v207 = vpack.c.bf16 %v201, %v201
    %v208 = vld [vmem:[#allocation7] sm:$0xff]
    %v209 = vld [vmem:[#allocation7 + $0x8] sm:$0xff]
    %v210 = vld [vmem:[#allocation7 + $0x10] sm:$0xff]
    %v211 = vld [vmem:[#allocation7 + $0x18] sm:$0xff]
    %v212 = vld [vmem:[#allocation7 + $0x20] sm:$0xff]
    %v213 = vld [vmem:[#allocation7 + $0x28] sm:$0xff]
    %v214 = vld [vmem:[#allocation7 + $0x30] sm:$0xff]
    %v215 = vld [vmem:[#allocation7 + $0x38] sm:$0xff]
    %v216 = vld [vmem:[#allocation7 + $0x40] sm:$0xff]
    %v217 = vld [vmem:[#allocation7 + $0x48] sm:$0xff]
    %v218 = vld [vmem:[#allocation7 + $0x50] sm:$0xff]
    %v219 = vld [vmem:[#allocation7 + $0x58] sm:$0xff]
    %v220 = vld [vmem:[#allocation7 + $0x60] sm:$0xff]
    %v221 = vld [vmem:[#allocation7 + $0x68] sm:$0xff]
    %v222 = vld [vmem:[#allocation7 + $0x70] sm:$0xff]
    %v223 = vld [vmem:[#allocation7 + $0x78] sm:$0xff]
    %v224 = vld [vmem:[#allocation7 + $0x80] sm:$0xff]
    %v225 = vld [vmem:[#allocation7 + $0x88] sm:$0xff]
    %v226 = vld [vmem:[#allocation7 + $0x90] sm:$0xff]
    %v227 = vld [vmem:[#allocation7 + $0x98] sm:$0xff]
    %v228 = vld [vmem:[#allocation7 + $0xa0] sm:$0xff]
    %v229 = vld [vmem:[#allocation7 + $0xa8] sm:$0xff]
    %v230 = vld [vmem:[#allocation7 + $0xb0] sm:$0xff]
    %v231 = vld [vmem:[#allocation7 + $0xb8] sm:$0xff]
    %v232 = vld [vmem:[#allocation7 + $0xc0] sm:$0xff]
    %v233 = vld [vmem:[#allocation7 + $0xc8] sm:$0xff]
    %v234 = vld [vmem:[#allocation7 + $0xd0] sm:$0xff]
    %v235 = vld [vmem:[#allocation7 + $0xd8] sm:$0xff]
    %v236 = vld [vmem:[#allocation7 + $0xe0] sm:$0xff]
    %v237 = vld [vmem:[#allocation7 + $0xe8] sm:$0xff]
    %v238 = vld [vmem:[#allocation7 + $0xf0] sm:$0xff]
    %v239 = vld [vmem:[#allocation7 + $0xf8] sm:$0xff]
    %v240 = vld [vmem:[#allocation7 + $0x100] sm:$0xff]
    %v241 = vld [vmem:[#allocation7 + $0x108] sm:$0xff]
    %v242 = vld [vmem:[#allocation7 + $0x110] sm:$0xff]
    %v243 = vld [vmem:[#allocation7 + $0x118] sm:$0xff]
    %v244 = vld [vmem:[#allocation7 + $0x120] sm:$0xff]
    %v245 = vld [vmem:[#allocation7 + $0x128] sm:$0xff]
    %v246 = vld [vmem:[#allocation7 + $0x130] sm:$0xff]
    %v247 = vld [vmem:[#allocation7 + $0x138] sm:$0xff]
    %v248 = vld [vmem:[#allocation7 + $0x140] sm:$0xff]
    %v249 = vld [vmem:[#allocation7 + $0x148] sm:$0xff]
    %v250 = vld [vmem:[#allocation7 + $0x150] sm:$0xff]
    %v251 = vld [vmem:[#allocation7 + $0x158] sm:$0xff]
    %v252 = vld [vmem:[#allocation7 + $0x160] sm:$0xff]
    %v253 = vld [vmem:[#allocation7 + $0x168] sm:$0xff]
    %v254 = vld [vmem:[#allocation7 + $0x170] sm:$0xff]
    %v255 = vld [vmem:[#allocation7 + $0x178] sm:$0xff]
    %v256 = vld [vmem:[#allocation7 + $0x180] sm:$0xff]
    %v257 = vld [vmem:[#allocation7 + $0x188] sm:$0xff]
    %v258 = vld [vmem:[#allocation7 + $0x190] sm:$0xff]
    %v259 = vld [vmem:[#allocation7 + $0x198] sm:$0xff]
    %v260 = vld [vmem:[#allocation7 + $0x1a0] sm:$0xff]
    %v261 = vld [vmem:[#allocation7 + $0x1a8] sm:$0xff]
    %v262 = vld [vmem:[#allocation7 + $0x1b0] sm:$0xff]
    %v263 = vld [vmem:[#allocation7 + $0x1b8] sm:$0xff]
    %v264 = vld [vmem:[#allocation7 + $0x1c0] sm:$0xff]
    %v265 = vld [vmem:[#allocation7 + $0x1c8] sm:$0xff]
    %v266 = vld [vmem:[#allocation7 + $0x1d0] sm:$0xff]
    %v267 = vld [vmem:[#allocation7 + $0x1d8] sm:$0xff]
    %v268 = vld [vmem:[#allocation7 + $0x1e0] sm:$0xff]
    %v269 = vld [vmem:[#allocation7 + $0x1e8] sm:$0xff]
    %v270 = vld [vmem:[#allocation7 + $0x1f0] sm:$0xff]
    %v271 = vld [vmem:[#allocation7 + $0x1f8] sm:$0xff]
    %v272 = vld [vmem:[#allocation7 + $0x200] sm:$0xff]
    %v273 = vld [vmem:[#allocation7 + $0x208] sm:$0xff]
    %v274 = vld [vmem:[#allocation7 + $0x210] sm:$0xff]
    %v275 = vld [vmem:[#allocation7 + $0x218] sm:$0xff]
    %v276 = vld [vmem:[#allocation7 + $0x220] sm:$0xff]
    %v277 = vld [vmem:[#allocation7 + $0x228] sm:$0xff]
    %v278 = vld [vmem:[#allocation7 + $0x230] sm:$0xff]
    %v279 = vld [vmem:[#allocation7 + $0x238] sm:$0xff]
    %v280 = vld [vmem:[#allocation7 + $0x240] sm:$0xff]
    %v281 = vld [vmem:[#allocation7 + $0x248] sm:$0xff]
    %v282 = vld [vmem:[#allocation7 + $0x250] sm:$0xff]
    %v283 = vld [vmem:[#allocation7 + $0x258] sm:$0xff]
    %v284 = vld [vmem:[#allocation7 + $0x260] sm:$0xff]
    %v285 = vld [vmem:[#allocation7 + $0x268] sm:$0xff]
    %v286 = vld [vmem:[#allocation7 + $0x270] sm:$0xff]
    %v287 = vld [vmem:[#allocation7 + $0x278] sm:$0xff]
    %v288 = vld [vmem:[#allocation7 + $0x280] sm:$0xff]
    %v289 = vld [vmem:[#allocation7 + $0x288] sm:$0xff]
    %v290 = vld [vmem:[#allocation7 + $0x290] sm:$0xff]
    %v291 = vld [vmem:[#allocation7 + $0x298] sm:$0xff]
    %v292 = vld [vmem:[#allocation7 + $0x2a0] sm:$0xff]
    %v293 = vld [vmem:[#allocation7 + $0x2a8] sm:$0xff]
    %v294 = vld [vmem:[#allocation7 + $0x2b0] sm:$0xff]
    %v295 = vld [vmem:[#allocation7 + $0x2b8] sm:$0xff]
    %v296 = vld [vmem:[#allocation7 + $0x2c0] sm:$0xff]
    %v297 = vld [vmem:[#allocation7 + $0x2c8] sm:$0xff]
    %v298 = vld [vmem:[#allocation7 + $0x2d0] sm:$0xff]
    %v299 = vld [vmem:[#allocation7 + $0x2d8] sm:$0xff]
    %v300 = vld [vmem:[#allocation7 + $0x2e0] sm:$0xff]
    %v301 = vld [vmem:[#allocation7 + $0x2e8] sm:$0xff]
    %v302 = vld [vmem:[#allocation7 + $0x2f0] sm:$0xff]
    %v303 = vld [vmem:[#allocation7 + $0x2f8] sm:$0xff]
    %v304 = vld [vmem:[#allocation7 + $0x300] sm:$0xff]
    %v305 = vld [vmem:[#allocation7 + $0x308] sm:$0xff]
    %v306 = vld [vmem:[#allocation7 + $0x310] sm:$0xff]
    %v307 = vld [vmem:[#allocation7 + $0x318] sm:$0xff]
    %v308 = vld [vmem:[#allocation7 + $0x320] sm:$0xff]
    %v309 = vld [vmem:[#allocation7 + $0x328] sm:$0xff]
    %v310 = vld [vmem:[#allocation7 + $0x330] sm:$0xff]
    %v311 = vld [vmem:[#allocation7 + $0x338] sm:$0xff]
    %v312 = vld [vmem:[#allocation7 + $0x340] sm:$0xff]
    %v313 = vld [vmem:[#allocation7 + $0x348] sm:$0xff]
    %v314 = vld [vmem:[#allocation7 + $0x350] sm:$0xff]
    %v315 = vld [vmem:[#allocation7 + $0x358] sm:$0xff]
    %v316 = vld [vmem:[#allocation7 + $0x360] sm:$0xff]
    %v317 = vld [vmem:[#allocation7 + $0x368] sm:$0xff]
    %v318 = vld [vmem:[#allocation7 + $0x370] sm:$0xff]
    %v319 = vld [vmem:[#allocation7 + $0x378] sm:$0xff]
    %v320 = vld [vmem:[#allocation7 + $0x380] sm:$0xff]
    %v321 = vld [vmem:[#allocation7 + $0x388] sm:$0xff]
    %v322 = vld [vmem:[#allocation7 + $0x390] sm:$0xff]
    %v323 = vld [vmem:[#allocation7 + $0x398] sm:$0xff]
    %v324 = vld [vmem:[#allocation7 + $0x3a0] sm:$0xff]
    %v325 = vld [vmem:[#allocation7 + $0x3a8] sm:$0xff]
    %v326 = vld [vmem:[#allocation7 + $0x3b0] sm:$0xff]
    %v327 = vld [vmem:[#allocation7 + $0x3b8] sm:$0xff]
    %v328 = vld [vmem:[#allocation7 + $0x3c0] sm:$0xff]
    %v329 = vld [vmem:[#allocation7 + $0x3c8] sm:$0xff]
    %v330 = vld [vmem:[#allocation7 + $0x3d0] sm:$0xff]
    %v331 = vld [vmem:[#allocation7 + $0x3d8] sm:$0xff]
    %v332 = vld [vmem:[#allocation7 + $0x3e0] sm:$0xff]
    %v333 = vld [vmem:[#allocation7 + $0x3e8] sm:$0xff]
    %v334 = vld [vmem:[#allocation7 + $0x3f0] sm:$0xff]
    %v335 = vld [vmem:[#allocation7 + $0x3f8] sm:$0xff]
    %v336 = vld [vmem:[#allocation7 + $0x400] sm:$0xff]
    %v337 = vld [vmem:[#allocation7 + $0x408] sm:$0xff]
    %v338 = vld [vmem:[#allocation7 + $0x410] sm:$0xff]
    %v339 = vld [vmem:[#allocation7 + $0x418] sm:$0xff]
    %v340 = vld [vmem:[#allocation7 + $0x420] sm:$0xff]
    %v341 = vld [vmem:[#allocation7 + $0x428] sm:$0xff]
    %v342 = vld [vmem:[#allocation7 + $0x430] sm:$0xff]
    %v343 = vld [vmem:[#allocation7 + $0x438] sm:$0xff]
    %v344 = vld [vmem:[#allocation7 + $0x440] sm:$0xff]
    %v345 = vld [vmem:[#allocation7 + $0x448] sm:$0xff]
    %v346 = vld [vmem:[#allocation7 + $0x450] sm:$0xff]
    %v347 = vld [vmem:[#allocation7 + $0x458] sm:$0xff]
    %v348 = vld [vmem:[#allocation7 + $0x460] sm:$0xff]
    %v349 = vld [vmem:[#allocation7 + $0x468] sm:$0xff]
    %v350 = vld [vmem:[#allocation7 + $0x470] sm:$0xff]
    %v351 = vld [vmem:[#allocation7 + $0x478] sm:$0xff]
    %v352 = vld [vmem:[#allocation7 + $0x480] sm:$0xff]
    %v353 = vld [vmem:[#allocation7 + $0x488] sm:$0xff]
    %v354 = vld [vmem:[#allocation7 + $0x490] sm:$0xff]
    %v355 = vld [vmem:[#allocation7 + $0x498] sm:$0xff]
    %v356 = vld [vmem:[#allocation7 + $0x4a0] sm:$0xff]
    %v357 = vld [vmem:[#allocation7 + $0x4a8] sm:$0xff]
    %v358 = vld [vmem:[#allocation7 + $0x4b0] sm:$0xff]
    %v359 = vld [vmem:[#allocation7 + $0x4b8] sm:$0xff]
    %v360 = vld [vmem:[#allocation7 + $0x4c0] sm:$0xff]
    %v361 = vld [vmem:[#allocation7 + $0x4c8] sm:$0xff]
    %v362 = vld [vmem:[#allocation7 + $0x4d0] sm:$0xff]
    %v363 = vld [vmem:[#allocation7 + $0x4d8] sm:$0xff]
    %v364 = vld [vmem:[#allocation7 + $0x4e0] sm:$0xff]
    %v365 = vld [vmem:[#allocation7 + $0x4e8] sm:$0xff]
    %v366 = vld [vmem:[#allocation7 + $0x4f0] sm:$0xff]
    %v367 = vld [vmem:[#allocation7 + $0x4f8] sm:$0xff]
    %v368 = vld [vmem:[#allocation7 + $0x500] sm:$0xff]
    %v369 = vld [vmem:[#allocation7 + $0x508] sm:$0xff]
    %v370 = vld [vmem:[#allocation7 + $0x510] sm:$0xff]
    %v371 = vld [vmem:[#allocation7 + $0x518] sm:$0xff]
    %v372 = vld [vmem:[#allocation7 + $0x520] sm:$0xff]
    %v373 = vld [vmem:[#allocation7 + $0x528] sm:$0xff]
    %v374 = vld [vmem:[#allocation7 + $0x530] sm:$0xff]
    %v375 = vld [vmem:[#allocation7 + $0x538] sm:$0xff]
    %v376 = vld [vmem:[#allocation7 + $0x540] sm:$0xff]
    %v377 = vld [vmem:[#allocation7 + $0x548] sm:$0xff]
    %v378 = vld [vmem:[#allocation7 + $0x550] sm:$0xff]
    %v379 = vld [vmem:[#allocation7 + $0x558] sm:$0xff]
    %v380 = vld [vmem:[#allocation7 + $0x560] sm:$0xff]
    %v381 = vld [vmem:[#allocation7 + $0x568] sm:$0xff]
    %v382 = vld [vmem:[#allocation7 + $0x570] sm:$0xff]
    %v383 = vld [vmem:[#allocation7 + $0x578] sm:$0xff]
    %v384 = vld [vmem:[#allocation7 + $0x580] sm:$0xff]
    %v385 = vld [vmem:[#allocation7 + $0x588] sm:$0xff]
    %v386 = vld [vmem:[#allocation7 + $0x590] sm:$0xff]
    %v387 = vld [vmem:[#allocation7 + $0x598] sm:$0xff]
    %v388 = vld [vmem:[#allocation7 + $0x5a0] sm:$0xff]
    %v389 = vld [vmem:[#allocation7 + $0x5a8] sm:$0xff]
    %v390 = vld [vmem:[#allocation7 + $0x5b0] sm:$0xff]
    %v391 = vld [vmem:[#allocation7 + $0x5b8] sm:$0xff]
    %v392 = vld [vmem:[#allocation7 + $0x5c0] sm:$0xff]
    %v393 = vld [vmem:[#allocation7 + $0x5c8] sm:$0xff]
    %v394 = vld [vmem:[#allocation7 + $0x5d0] sm:$0xff]
    %v395 = vld [vmem:[#allocation7 + $0x5d8] sm:$0xff]
    %v396 = vld [vmem:[#allocation7 + $0x5e0] sm:$0xff]
    %v397 = vld [vmem:[#allocation7 + $0x5e8] sm:$0xff]
    %v398 = vld [vmem:[#allocation7 + $0x5f0] sm:$0xff]
    %v399 = vld [vmem:[#allocation7 + $0x5f8] sm:$0xff]
    %v400 = vld [vmem:[#allocation7 + $0x600] sm:$0xff]
    %v401 = vld [vmem:[#allocation7 + $0x608] sm:$0xff]
    %v402 = vld [vmem:[#allocation7 + $0x610] sm:$0xff]
    %v403 = vld [vmem:[#allocation7 + $0x618] sm:$0xff]
    %v404 = vld [vmem:[#allocation7 + $0x620] sm:$0xff]
    %v405 = vld [vmem:[#allocation7 + $0x628] sm:$0xff]
    %v406 = vld [vmem:[#allocation7 + $0x630] sm:$0xff]
    %v407 = vld [vmem:[#allocation7 + $0x638] sm:$0xff]
    %v408 = vld [vmem:[#allocation7 + $0x640] sm:$0xff]
    %v409 = vld [vmem:[#allocation7 + $0x648] sm:$0xff]
    %v410 = vld [vmem:[#allocation7 + $0x650] sm:$0xff]
    %v411 = vld [vmem:[#allocation7 + $0x658] sm:$0xff]
    %v412 = vld [vmem:[#allocation7 + $0x660] sm:$0xff]
    %v413 = vld [vmem:[#allocation7 + $0x668] sm:$0xff]
    %v414 = vld [vmem:[#allocation7 + $0x670] sm:$0xff]
    %v415 = vld [vmem:[#allocation7 + $0x678] sm:$0xff]
    %v416 = vld [vmem:[#allocation7 + $0x680] sm:$0xff]
    %v417 = vld [vmem:[#allocation7 + $0x688] sm:$0xff]
    %v418 = vld [vmem:[#allocation7 + $0x690] sm:$0xff]
    %v419 = vld [vmem:[#allocation7 + $0x698] sm:$0xff]
    %v420 = vld [vmem:[#allocation7 + $0x6a0] sm:$0xff]
    %v421 = vld [vmem:[#allocation7 + $0x6a8] sm:$0xff]
    %v422 = vld [vmem:[#allocation7 + $0x6b0] sm:$0xff]
    %v423 = vld [vmem:[#allocation7 + $0x6b8] sm:$0xff]
    %v424 = vld [vmem:[#allocation7 + $0x6c0] sm:$0xff]
    %v425 = vld [vmem:[#allocation7 + $0x6c8] sm:$0xff]
    %v426 = vld [vmem:[#allocation7 + $0x6d0] sm:$0xff]
    %v427 = vld [vmem:[#allocation7 + $0x6d8] sm:$0xff]
    %v428 = vld [vmem:[#allocation7 + $0x6e0] sm:$0xff]
    %v429 = vld [vmem:[#allocation7 + $0x6e8] sm:$0xff]
    %v430 = vld [vmem:[#allocation7 + $0x6f0] sm:$0xff]
    %v431 = vld [vmem:[#allocation7 + $0x6f8] sm:$0xff]
    %v432 = vld [vmem:[#allocation7 + $0x700] sm:$0xff]
    %v433 = vld [vmem:[#allocation7 + $0x708] sm:$0xff]
    %v434 = vld [vmem:[#allocation7 + $0x710] sm:$0xff]
    %v435 = vld [vmem:[#allocation7 + $0x718] sm:$0xff]
    %v436 = vld [vmem:[#allocation7 + $0x720] sm:$0xff]
    %v437 = vld [vmem:[#allocation7 + $0x728] sm:$0xff]
    %v438 = vld [vmem:[#allocation7 + $0x730] sm:$0xff]
    %v439 = vld [vmem:[#allocation7 + $0x738] sm:$0xff]
    %v440 = vld [vmem:[#allocation7 + $0x740] sm:$0xff]
    %v441 = vld [vmem:[#allocation7 + $0x748] sm:$0xff]
    %v442 = vld [vmem:[#allocation7 + $0x750] sm:$0xff]
    %v443 = vld [vmem:[#allocation7 + $0x758] sm:$0xff]
    %v444 = vld [vmem:[#allocation7 + $0x760] sm:$0xff]
    %v445 = vld [vmem:[#allocation7 + $0x768] sm:$0xff]
    %v446 = vld [vmem:[#allocation7 + $0x770] sm:$0xff]
    %v447 = vld [vmem:[#allocation7 + $0x778] sm:$0xff]
    %v448 = vld [vmem:[#allocation7 + $0x780] sm:$0xff]
    %v449 = vld [vmem:[#allocation7 + $0x788] sm:$0xff]
    %v450 = vld [vmem:[#allocation7 + $0x790] sm:$0xff]
    %v451 = vld [vmem:[#allocation7 + $0x798] sm:$0xff]
    %v452 = vld [vmem:[#allocation7 + $0x7a0] sm:$0xff]
    %v453 = vld [vmem:[#allocation7 + $0x7a8] sm:$0xff]
    %v454 = vld [vmem:[#allocation7 + $0x7b0] sm:$0xff]
    %v455 = vld [vmem:[#allocation7 + $0x7b8] sm:$0xff]
    %v456 = vld [vmem:[#allocation7 + $0x7c0] sm:$0xff]
    %v457 = vld [vmem:[#allocation7 + $0x7c8] sm:$0xff]
    %v458 = vld [vmem:[#allocation7 + $0x7d0] sm:$0xff]
    %v459 = vld [vmem:[#allocation7 + $0x7d8] sm:$0xff]
    %v460 = vld [vmem:[#allocation7 + $0x7e0] sm:$0xff]
    %v461 = vld [vmem:[#allocation7 + $0x7e8] sm:$0xff]
    %v462 = vld [vmem:[#allocation7 + $0x7f0] sm:$0xff]
    %v463 = vld [vmem:[#allocation7 + $0x7f8] sm:$0xff]
    %v464 = vld [vmem:[#allocation7 + $0x800] sm:$0xff]
    %v465 = vld [vmem:[#allocation7 + $0x808] sm:$0xff]
    %v466 = vld [vmem:[#allocation7 + $0x810] sm:$0xff]
    %v467 = vld [vmem:[#allocation7 + $0x818] sm:$0xff]
    %v468 = vld [vmem:[#allocation7 + $0x820] sm:$0xff]
    %v469 = vld [vmem:[#allocation7 + $0x828] sm:$0xff]
    %v470 = vld [vmem:[#allocation7 + $0x830] sm:$0xff]
    %v471 = vld [vmem:[#allocation7 + $0x838] sm:$0xff]
    %v472 = vld [vmem:[#allocation7 + $0x840] sm:$0xff]
    %v473 = vld [vmem:[#allocation7 + $0x848] sm:$0xff]
    %v474 = vld [vmem:[#allocation7 + $0x850] sm:$0xff]
    %v475 = vld [vmem:[#allocation7 + $0x858] sm:$0xff]
    %v476 = vld [vmem:[#allocation7 + $0x860] sm:$0xff]
    %v477 = vld [vmem:[#allocation7 + $0x868] sm:$0xff]
    %v478 = vld [vmem:[#allocation7 + $0x870] sm:$0xff]
    %v479 = vld [vmem:[#allocation7 + $0x878] sm:$0xff]
    %v480 = vld [vmem:[#allocation7 + $0x880] sm:$0xff]
    %v481 = vld [vmem:[#allocation7 + $0x888] sm:$0xff]
    %v482 = vld [vmem:[#allocation7 + $0x890] sm:$0xff]
    %v483 = vld [vmem:[#allocation7 + $0x898] sm:$0xff]
    %v484 = vld [vmem:[#allocation7 + $0x8a0] sm:$0xff]
    %v485 = vld [vmem:[#allocation7 + $0x8a8] sm:$0xff]
    %v486 = vld [vmem:[#allocation7 + $0x8b0] sm:$0xff]
    %v487 = vld [vmem:[#allocation7 + $0x8b8] sm:$0xff]
    %v488 = vld [vmem:[#allocation7 + $0x8c0] sm:$0xff]
    %v489 = vld [vmem:[#allocation7 + $0x8c8] sm:$0xff]
    %v490 = vld [vmem:[#allocation7 + $0x8d0] sm:$0xff]
    %v491 = vld [vmem:[#allocation7 + $0x8d8] sm:$0xff]
    %v492 = vld [vmem:[#allocation7 + $0x8e0] sm:$0xff]
    %v493 = vld [vmem:[#allocation7 + $0x8e8] sm:$0xff]
    %v494 = vld [vmem:[#allocation7 + $0x8f0] sm:$0xff]
    %v495 = vld [vmem:[#allocation7 + $0x8f8] sm:$0xff]
    %v496 = vld [vmem:[#allocation7 + $0x900] sm:$0xff]
    %v497 = vld [vmem:[#allocation7 + $0x908] sm:$0xff]
    %v498 = vld [vmem:[#allocation7 + $0x910] sm:$0xff]
    %v499 = vld [vmem:[#allocation7 + $0x918] sm:$0xff]
    %v500 = vld [vmem:[#allocation7 + $0x920] sm:$0xff]
    %v501 = vld [vmem:[#allocation7 + $0x928] sm:$0xff]
    %v502 = vld [vmem:[#allocation7 + $0x930] sm:$0xff]
    %v503 = vld [vmem:[#allocation7 + $0x938] sm:$0xff]
    %v504 = vld [vmem:[#allocation7 + $0x940] sm:$0xff]
    %v505 = vld [vmem:[#allocation7 + $0x948] sm:$0xff]
    %v506 = vld [vmem:[#allocation7 + $0x950] sm:$0xff]
    %v507 = vld [vmem:[#allocation7 + $0x958] sm:$0xff]
    %v508 = vld [vmem:[#allocation7 + $0x960] sm:$0xff]
    %v509 = vld [vmem:[#allocation7 + $0x968] sm:$0xff]
    %v510 = vld [vmem:[#allocation7 + $0x970] sm:$0xff]
    %v511 = vld [vmem:[#allocation7 + $0x978] sm:$0xff]
    %v512 = vld [vmem:[#allocation7 + $0x980] sm:$0xff]
    %v513 = vld [vmem:[#allocation7 + $0x988] sm:$0xff]
    %v514 = vld [vmem:[#allocation7 + $0x990] sm:$0xff]
    %v515 = vld [vmem:[#allocation7 + $0x998] sm:$0xff]
    %v516 = vld [vmem:[#allocation7 + $0x9a0] sm:$0xff]
    %v517 = vld [vmem:[#allocation7 + $0x9a8] sm:$0xff]
    %v518 = vld [vmem:[#allocation7 + $0x9b0] sm:$0xff]
    %v519 = vld [vmem:[#allocation7 + $0x9b8] sm:$0xff]
    %v520 = vld [vmem:[#allocation7 + $0x9c0] sm:$0xff]
    %v521 = vld [vmem:[#allocation7 + $0x9c8] sm:$0xff]
    %v522 = vld [vmem:[#allocation7 + $0x9d0] sm:$0xff]
    %v523 = vld [vmem:[#allocation7 + $0x9d8] sm:$0xff]
    %v524 = vld [vmem:[#allocation7 + $0x9e0] sm:$0xff]
    %v525 = vld [vmem:[#allocation7 + $0x9e8] sm:$0xff]
    %v526 = vld [vmem:[#allocation7 + $0x9f0] sm:$0xff]
    %v527 = vld [vmem:[#allocation7 + $0x9f8] sm:$0xff]
    %v528 = vld [vmem:[#allocation7 + $0xa00] sm:$0xff]
    %v529 = vld [vmem:[#allocation7 + $0xa08] sm:$0xff]
    %v530 = vld [vmem:[#allocation7 + $0xa10] sm:$0xff]
    %v531 = vld [vmem:[#allocation7 + $0xa18] sm:$0xff]
    %v532 = vld [vmem:[#allocation7 + $0xa20] sm:$0xff]
    %v533 = vld [vmem:[#allocation7 + $0xa28] sm:$0xff]
    %v534 = vld [vmem:[#allocation7 + $0xa30] sm:$0xff]
    %v535 = vld [vmem:[#allocation7 + $0xa38] sm:$0xff]
    %v536 = vld [vmem:[#allocation7 + $0xa40] sm:$0xff]
    %v537 = vld [vmem:[#allocation7 + $0xa48] sm:$0xff]
    %v538 = vld [vmem:[#allocation7 + $0xa50] sm:$0xff]
    %v539 = vld [vmem:[#allocation7 + $0xa58] sm:$0xff]
    %v540 = vld [vmem:[#allocation7 + $0xa60] sm:$0xff]
    %v541 = vld [vmem:[#allocation7 + $0xa68] sm:$0xff]
    %v542 = vld [vmem:[#allocation7 + $0xa70] sm:$0xff]
    %v543 = vld [vmem:[#allocation7 + $0xa78] sm:$0xff]
    %v544 = vld [vmem:[#allocation7 + $0xa80] sm:$0xff]
    %v545 = vld [vmem:[#allocation7 + $0xa88] sm:$0xff]
    %v546 = vld [vmem:[#allocation7 + $0xa90] sm:$0xff]
    %v547 = vld [vmem:[#allocation7 + $0xa98] sm:$0xff]
    %v548 = vld [vmem:[#allocation7 + $0xaa0] sm:$0xff]
    %v549 = vld [vmem:[#allocation7 + $0xaa8] sm:$0xff]
    %v550 = vld [vmem:[#allocation7 + $0xab0] sm:$0xff]
    %v551 = vld [vmem:[#allocation7 + $0xab8] sm:$0xff]
    %v552 = vld [vmem:[#allocation7 + $0xac0] sm:$0xff]
    %v553 = vld [vmem:[#allocation7 + $0xac8] sm:$0xff]
    %v554 = vld [vmem:[#allocation7 + $0xad0] sm:$0xff]
    %v555 = vld [vmem:[#allocation7 + $0xad8] sm:$0xff]
    %v556 = vld [vmem:[#allocation7 + $0xae0] sm:$0xff]
    %v557 = vld [vmem:[#allocation7 + $0xae8] sm:$0xff]
    %v558 = vld [vmem:[#allocation7 + $0xaf0] sm:$0xff]
    %v559 = vld [vmem:[#allocation7 + $0xaf8] sm:$0xff]
    %v560 = vld [vmem:[#allocation7 + $0xb00] sm:$0xff]
    %v561 = vld [vmem:[#allocation7 + $0xb08] sm:$0xff]
    %v562 = vld [vmem:[#allocation7 + $0xb10] sm:$0xff]
    %v563 = vld [vmem:[#allocation7 + $0xb18] sm:$0xff]
    %v564 = vld [vmem:[#allocation7 + $0xb20] sm:$0xff]
    %v565 = vld [vmem:[#allocation7 + $0xb28] sm:$0xff]
    %v566 = vld [vmem:[#allocation7 + $0xb30] sm:$0xff]
    %v567 = vld [vmem:[#allocation7 + $0xb38] sm:$0xff]
    %v568 = vld [vmem:[#allocation7 + $0xb40] sm:$0xff]
    %v569 = vld [vmem:[#allocation7 + $0xb48] sm:$0xff]
    %v570 = vld [vmem:[#allocation7 + $0xb50] sm:$0xff]
    %v571 = vld [vmem:[#allocation7 + $0xb58] sm:$0xff]
    %v572 = vld [vmem:[#allocation7 + $0xb60] sm:$0xff]
    %v573 = vld [vmem:[#allocation7 + $0xb68] sm:$0xff]
    %v574 = vld [vmem:[#allocation7 + $0xb70] sm:$0xff]
    %v575 = vld [vmem:[#allocation7 + $0xb78] sm:$0xff]
    %v576 = vld [vmem:[#allocation7 + $0xb80] sm:$0xff]
    %v577 = vld [vmem:[#allocation7 + $0xb88] sm:$0xff]
    %v578 = vld [vmem:[#allocation7 + $0xb90] sm:$0xff]
    %v579 = vld [vmem:[#allocation7 + $0xb98] sm:$0xff]
    %v580 = vld [vmem:[#allocation7 + $0xba0] sm:$0xff]
    %v581 = vld [vmem:[#allocation7 + $0xba8] sm:$0xff]
    %v582 = vld [vmem:[#allocation7 + $0xbb0] sm:$0xff]
    %v583 = vld [vmem:[#allocation7 + $0xbb8] sm:$0xff]
    %v584 = vld [vmem:[#allocation7 + $0xbc0] sm:$0xff]
    %v585 = vld [vmem:[#allocation7 + $0xbc8] sm:$0xff]
    %v586 = vld [vmem:[#allocation7 + $0xbd0] sm:$0xff]
    %v587 = vld [vmem:[#allocation7 + $0xbd8] sm:$0xff]
    %v588 = vld [vmem:[#allocation7 + $0xbe0] sm:$0xff]
    %v589 = vld [vmem:[#allocation7 + $0xbe8] sm:$0xff]
    %v590 = vld [vmem:[#allocation7 + $0xbf0] sm:$0xff]
    %v591 = vld [vmem:[#allocation7 + $0xbf8] sm:$0xff]
    %v592 = vld [vmem:[#allocation7 + $0xc00] sm:$0xff]
    %v593 = vld [vmem:[#allocation7 + $0xc08] sm:$0xff]
    %v594 = vld [vmem:[#allocation7 + $0xc10] sm:$0xff]
    %v595 = vld [vmem:[#allocation7 + $0xc18] sm:$0xff]
    %v596 = vld [vmem:[#allocation7 + $0xc20] sm:$0xff]
    %v597 = vld [vmem:[#allocation7 + $0xc28] sm:$0xff]
    %v598 = vld [vmem:[#allocation7 + $0xc30] sm:$0xff]
    %v599 = vld [vmem:[#allocation7 + $0xc38] sm:$0xff]
    %v600 = vld [vmem:[#allocation7 + $0xc40] sm:$0xff]
    %v601 = vld [vmem:[#allocation7 + $0xc48] sm:$0xff]
    %v602 = vld [vmem:[#allocation7 + $0xc50] sm:$0xff]
    %v603 = vld [vmem:[#allocation7 + $0xc58] sm:$0xff]
    %v604 = vld [vmem:[#allocation7 + $0xc60] sm:$0xff]
    %v605 = vld [vmem:[#allocation7 + $0xc68] sm:$0xff]
    %v606 = vld [vmem:[#allocation7 + $0xc70] sm:$0xff]
    %v607 = vld [vmem:[#allocation7 + $0xc78] sm:$0xff]
    %v608 = vld [vmem:[#allocation7 + $0xc80] sm:$0xff]
    %v609 = vld [vmem:[#allocation7 + $0xc88] sm:$0xff]
    %v610 = vld [vmem:[#allocation7 + $0xc90] sm:$0xff]
    %v611 = vld [vmem:[#allocation7 + $0xc98] sm:$0xff]
    %v612 = vld [vmem:[#allocation7 + $0xca0] sm:$0xff]
    %v613 = vld [vmem:[#allocation7 + $0xca8] sm:$0xff]
    %v614 = vld [vmem:[#allocation7 + $0xcb0] sm:$0xff]
    %v615 = vld [vmem:[#allocation7 + $0xcb8] sm:$0xff]
    %v616 = vld [vmem:[#allocation7 + $0xcc0] sm:$0xff]
    %v617 = vld [vmem:[#allocation7 + $0xcc8] sm:$0xff]
    %v618 = vld [vmem:[#allocation7 + $0xcd0] sm:$0xff]
    %v619 = vld [vmem:[#allocation7 + $0xcd8] sm:$0xff]
    %v620 = vld [vmem:[#allocation7 + $0xce0] sm:$0xff]
    %v621 = vld [vmem:[#allocation7 + $0xce8] sm:$0xff]
    %v622 = vld [vmem:[#allocation7 + $0xcf0] sm:$0xff]
    %v623 = vld [vmem:[#allocation7 + $0xcf8] sm:$0xff]
    %v624 = vld [vmem:[#allocation7 + $0xd00] sm:$0xff]
    %v625 = vld [vmem:[#allocation7 + $0xd08] sm:$0xff]
    %v626 = vld [vmem:[#allocation7 + $0xd10] sm:$0xff]
    %v627 = vld [vmem:[#allocation7 + $0xd18] sm:$0xff]
    %v628 = vld [vmem:[#allocation7 + $0xd20] sm:$0xff]
    %v629 = vld [vmem:[#allocation7 + $0xd28] sm:$0xff]
    %v630 = vld [vmem:[#allocation7 + $0xd30] sm:$0xff]
    %v631 = vld [vmem:[#allocation7 + $0xd38] sm:$0xff]
    %v632 = vld [vmem:[#allocation7 + $0xd40] sm:$0xff]
    %v633 = vld [vmem:[#allocation7 + $0xd48] sm:$0xff]
    %v634 = vld [vmem:[#allocation7 + $0xd50] sm:$0xff]
    %v635 = vld [vmem:[#allocation7 + $0xd58] sm:$0xff]
    %v636 = vld [vmem:[#allocation7 + $0xd60] sm:$0xff]
    %v637 = vld [vmem:[#allocation7 + $0xd68] sm:$0xff]
    %v638 = vld [vmem:[#allocation7 + $0xd70] sm:$0xff]
    %v639 = vld [vmem:[#allocation7 + $0xd78] sm:$0xff]
    %v640 = vld [vmem:[#allocation7 + $0xd80] sm:$0xff]
    %v641 = vld [vmem:[#allocation7 + $0xd88] sm:$0xff]
    %v642 = vld [vmem:[#allocation7 + $0xd90] sm:$0xff]
    %v643 = vld [vmem:[#allocation7 + $0xd98] sm:$0xff]
    %v644 = vld [vmem:[#allocation7 + $0xda0] sm:$0xff]
    %v645 = vld [vmem:[#allocation7 + $0xda8] sm:$0xff]
    %v646 = vld [vmem:[#allocation7 + $0xdb0] sm:$0xff]
    %v647 = vld [vmem:[#allocation7 + $0xdb8] sm:$0xff]
    %v648 = vld [vmem:[#allocation7 + $0xdc0] sm:$0xff]
    %v649 = vld [vmem:[#allocation7 + $0xdc8] sm:$0xff]
    %v650 = vld [vmem:[#allocation7 + $0xdd0] sm:$0xff]
    %v651 = vld [vmem:[#allocation7 + $0xdd8] sm:$0xff]
    %v652 = vld [vmem:[#allocation7 + $0xde0] sm:$0xff]
    %v653 = vld [vmem:[#allocation7 + $0xde8] sm:$0xff]
    %v654 = vld [vmem:[#allocation7 + $0xdf0] sm:$0xff]
    %v655 = vld [vmem:[#allocation7 + $0xdf8] sm:$0xff]
    %v656 = vld [vmem:[#allocation7 + $0xe00] sm:$0xff]
    %v657 = vld [vmem:[#allocation7 + $0xe08] sm:$0xff]
    %v658 = vld [vmem:[#allocation7 + $0xe10] sm:$0xff]
    %v659 = vld [vmem:[#allocation7 + $0xe18] sm:$0xff]
    %v660 = vld [vmem:[#allocation7 + $0xe20] sm:$0xff]
    %v661 = vld [vmem:[#allocation7 + $0xe28] sm:$0xff]
    %v662 = vld [vmem:[#allocation7 + $0xe30] sm:$0xff]
    %v663 = vld [vmem:[#allocation7 + $0xe38] sm:$0xff]
    %v664 = vld [vmem:[#allocation7 + $0xe40] sm:$0xff]
    %v665 = vld [vmem:[#allocation7 + $0xe48] sm:$0xff]
    %v666 = vld [vmem:[#allocation7 + $0xe50] sm:$0xff]
    %v667 = vld [vmem:[#allocation7 + $0xe58] sm:$0xff]
    %v668 = vld [vmem:[#allocation7 + $0xe60] sm:$0xff]
    %v669 = vld [vmem:[#allocation7 + $0xe68] sm:$0xff]
    %v670 = vld [vmem:[#allocation7 + $0xe70] sm:$0xff]
    %v671 = vld [vmem:[#allocation7 + $0xe78] sm:$0xff]
    %v672 = vld [vmem:[#allocation7 + $0xe80] sm:$0xff]
    %v673 = vld [vmem:[#allocation7 + $0xe88] sm:$0xff]
    %v674 = vld [vmem:[#allocation7 + $0xe90] sm:$0xff]
    %v675 = vld [vmem:[#allocation7 + $0xe98] sm:$0xff]
    %v676 = vld [vmem:[#allocation7 + $0xea0] sm:$0xff]
    %v677 = vld [vmem:[#allocation7 + $0xea8] sm:$0xff]
    %v678 = vld [vmem:[#allocation7 + $0xeb0] sm:$0xff]
    %v679 = vld [vmem:[#allocation7 + $0xeb8] sm:$0xff]
    %v680 = vld [vmem:[#allocation7 + $0xec0] sm:$0xff]
    %v681 = vld [vmem:[#allocation7 + $0xec8] sm:$0xff]
    %v682 = vld [vmem:[#allocation7 + $0xed0] sm:$0xff]
    %v683 = vld [vmem:[#allocation7 + $0xed8] sm:$0xff]
    %v684 = vld [vmem:[#allocation7 + $0xee0] sm:$0xff]
    %v685 = vld [vmem:[#allocation7 + $0xee8] sm:$0xff]
    %v686 = vld [vmem:[#allocation7 + $0xef0] sm:$0xff]
    %v687 = vld [vmem:[#allocation7 + $0xef8] sm:$0xff]
    %v688 = vld [vmem:[#allocation7 + $0xf00] sm:$0xff]
    %v689 = vld [vmem:[#allocation7 + $0xf08] sm:$0xff]
    %v690 = vld [vmem:[#allocation7 + $0xf10] sm:$0xff]
    %v691 = vld [vmem:[#allocation7 + $0xf18] sm:$0xff]
    %v692 = vld [vmem:[#allocation7 + $0xf20] sm:$0xff]
    %v693 = vld [vmem:[#allocation7 + $0xf28] sm:$0xff]
    %v694 = vld [vmem:[#allocation7 + $0xf30] sm:$0xff]
    %v695 = vld [vmem:[#allocation7 + $0xf38] sm:$0xff]
    %v696 = vld [vmem:[#allocation7 + $0xf40] sm:$0xff]
    %v697 = vld [vmem:[#allocation7 + $0xf48] sm:$0xff]
    %v698 = vld [vmem:[#allocation7 + $0xf50] sm:$0xff]
    %v699 = vld [vmem:[#allocation7 + $0xf58] sm:$0xff]
    %v700 = vld [vmem:[#allocation7 + $0xf60] sm:$0xff]
    %v701 = vld [vmem:[#allocation7 + $0xf68] sm:$0xff]
    %v702 = vld [vmem:[#allocation7 + $0xf70] sm:$0xff]
    %v703 = vld [vmem:[#allocation7 + $0xf78] sm:$0xff]
    %v704 = vld [vmem:[#allocation7 + $0xf80] sm:$0xff]
    %v705 = vld [vmem:[#allocation7 + $0xf88] sm:$0xff]
    %v706 = vld [vmem:[#allocation7 + $0xf90] sm:$0xff]
    %v707 = vld [vmem:[#allocation7 + $0xf98] sm:$0xff]
    %v708 = vld [vmem:[#allocation7 + $0xfa0] sm:$0xff]
    %v709 = vld [vmem:[#allocation7 + $0xfa8] sm:$0xff]
    %v710 = vld [vmem:[#allocation7 + $0xfb0] sm:$0xff]
    %v711 = vld [vmem:[#allocation7 + $0xfb8] sm:$0xff]
    %v712 = vld [vmem:[#allocation7 + $0xfc0] sm:$0xff]
    %v713 = vld [vmem:[#allocation7 + $0xfc8] sm:$0xff]
    %v714 = vld [vmem:[#allocation7 + $0xfd0] sm:$0xff]
    %v715 = vld [vmem:[#allocation7 + $0xfd8] sm:$0xff]
    %v716 = vld [vmem:[#allocation7 + $0xfe0] sm:$0xff]
    %v717 = vld [vmem:[#allocation7 + $0xfe8] sm:$0xff]
    %v718 = vld [vmem:[#allocation7 + $0xff0] sm:$0xff]
    %v719 = vld [vmem:[#allocation7 + $0xff8] sm:$0xff]
    %v720 = vld [vmem:[#allocation7 + $0x1000] sm:$0xff]
    %v721 = vld [vmem:[#allocation7 + $0x1008] sm:$0xff]
    %v722 = vld [vmem:[#allocation7 + $0x1010] sm:$0xff]
    %v723 = vld [vmem:[#allocation7 + $0x1018] sm:$0xff]
    %v724 = vld [vmem:[#allocation7 + $0x1020] sm:$0xff]
    %v725 = vld [vmem:[#allocation7 + $0x1028] sm:$0xff]
    %v726 = vld [vmem:[#allocation7 + $0x1030] sm:$0xff]
    %v727 = vld [vmem:[#allocation7 + $0x1038] sm:$0xff]
    %v728 = vld [vmem:[#allocation7 + $0x1040] sm:$0xff]
    %v729 = vld [vmem:[#allocation7 + $0x1048] sm:$0xff]
    %v730 = vld [vmem:[#allocation7 + $0x1050] sm:$0xff]
    %v731 = vld [vmem:[#allocation7 + $0x1058] sm:$0xff]
    %v732 = vld [vmem:[#allocation7 + $0x1060] sm:$0xff]
    %v733 = vld [vmem:[#allocation7 + $0x1068] sm:$0xff]
    %v734 = vld [vmem:[#allocation7 + $0x1070] sm:$0xff]
    %v735 = vld [vmem:[#allocation7 + $0x1078] sm:$0xff]
    %v736 = vld [vmem:[#allocation7 + $0x1080] sm:$0xff]
    %v737 = vld [vmem:[#allocation7 + $0x1088] sm:$0xff]
    %v738 = vld [vmem:[#allocation7 + $0x1090] sm:$0xff]
    %v739 = vld [vmem:[#allocation7 + $0x1098] sm:$0xff]
    %v740 = vld [vmem:[#allocation7 + $0x10a0] sm:$0xff]
    %v741 = vld [vmem:[#allocation7 + $0x10a8] sm:$0xff]
    %v742 = vld [vmem:[#allocation7 + $0x10b0] sm:$0xff]
    %v743 = vld [vmem:[#allocation7 + $0x10b8] sm:$0xff]
    %v744 = vld [vmem:[#allocation7 + $0x10c0] sm:$0xff]
    %v745 = vld [vmem:[#allocation7 + $0x10c8] sm:$0xff]
    %v746 = vld [vmem:[#allocation7 + $0x10d0] sm:$0xff]
    %v747 = vld [vmem:[#allocation7 + $0x10d8] sm:$0xff]
    %v748 = vld [vmem:[#allocation7 + $0x10e0] sm:$0xff]
    %v749 = vld [vmem:[#allocation7 + $0x10e8] sm:$0xff]
    %v750 = vld [vmem:[#allocation7 + $0x10f0] sm:$0xff]
    %v751 = vld [vmem:[#allocation7 + $0x10f8] sm:$0xff]
    %v752 = vld [vmem:[#allocation7 + $0x1100] sm:$0xff]
    %v753 = vld [vmem:[#allocation7 + $0x1108] sm:$0xff]
    %v754 = vld [vmem:[#allocation7 + $0x1110] sm:$0xff]
    %v755 = vld [vmem:[#allocation7 + $0x1118] sm:$0xff]
    %v756 = vld [vmem:[#allocation7 + $0x1120] sm:$0xff]
    %v757 = vld [vmem:[#allocation7 + $0x1128] sm:$0xff]
    %v758 = vld [vmem:[#allocation7 + $0x1130] sm:$0xff]
    %v759 = vld [vmem:[#allocation7 + $0x1138] sm:$0xff]
    %v760 = vld [vmem:[#allocation7 + $0x1140] sm:$0xff]
    %v761 = vld [vmem:[#allocation7 + $0x1148] sm:$0xff]
    %v762 = vld [vmem:[#allocation7 + $0x1150] sm:$0xff]
    %v763 = vld [vmem:[#allocation7 + $0x1158] sm:$0xff]
    %v764 = vld [vmem:[#allocation7 + $0x1160] sm:$0xff]
    %v765 = vld [vmem:[#allocation7 + $0x1168] sm:$0xff]
    %v766 = vld [vmem:[#allocation7 + $0x1170] sm:$0xff]
    %v767 = vld [vmem:[#allocation7 + $0x1178] sm:$0xff]
    %v768 = vld [vmem:[#allocation7 + $0x1180] sm:$0xff]
    %v769 = vld [vmem:[#allocation7 + $0x1188] sm:$0xff]
    %v770 = vld [vmem:[#allocation7 + $0x1190] sm:$0xff]
    %v771 = vld [vmem:[#allocation7 + $0x1198] sm:$0xff]
    %v772 = vld [vmem:[#allocation7 + $0x11a0] sm:$0xff]
    %v773 = vld [vmem:[#allocation7 + $0x11a8] sm:$0xff]
    %v774 = vld [vmem:[#allocation7 + $0x11b0] sm:$0xff]
    %v775 = vld [vmem:[#allocation7 + $0x11b8] sm:$0xff]
    %v776 = vld [vmem:[#allocation7 + $0x11c0] sm:$0xff]
    %v777 = vld [vmem:[#allocation7 + $0x11c8] sm:$0xff]
    %v778 = vld [vmem:[#allocation7 + $0x11d0] sm:$0xff]
    %v779 = vld [vmem:[#allocation7 + $0x11d8] sm:$0xff]
    %v780 = vld [vmem:[#allocation7 + $0x11e0] sm:$0xff]
    %v781 = vld [vmem:[#allocation7 + $0x11e8] sm:$0xff]
    %v782 = vld [vmem:[#allocation7 + $0x11f0] sm:$0xff]
    %v783 = vld [vmem:[#allocation7 + $0x11f8] sm:$0xff]
    %v784 = vld [vmem:[#allocation7 + $0x1200] sm:$0xff]
    %v785 = vld [vmem:[#allocation7 + $0x1208] sm:$0xff]
    %v786 = vld [vmem:[#allocation7 + $0x1210] sm:$0xff]
    %v787 = vld [vmem:[#allocation7 + $0x1218] sm:$0xff]
    %v788 = vld [vmem:[#allocation7 + $0x1220] sm:$0xff]
    %v789 = vld [vmem:[#allocation7 + $0x1228] sm:$0xff]
    %v790 = vld [vmem:[#allocation7 + $0x1230] sm:$0xff]
    %v791 = vld [vmem:[#allocation7 + $0x1238] sm:$0xff]
    %v792 = vld [vmem:[#allocation7 + $0x1240] sm:$0xff]
    %v793 = vld [vmem:[#allocation7 + $0x1248] sm:$0xff]
    %v794 = vld [vmem:[#allocation7 + $0x1250] sm:$0xff]
    %v795 = vld [vmem:[#allocation7 + $0x1258] sm:$0xff]
    %v796 = vld [vmem:[#allocation7 + $0x1260] sm:$0xff]
    %v797 = vld [vmem:[#allocation7 + $0x1268] sm:$0xff]
    %v798 = vld [vmem:[#allocation7 + $0x1270] sm:$0xff]
    %v799 = vld [vmem:[#allocation7 + $0x1278] sm:$0xff]
    %v800 = vld [vmem:[#allocation7 + $0x1280] sm:$0xff]
    %v801 = vld [vmem:[#allocation7 + $0x1288] sm:$0xff]
    %v802 = vld [vmem:[#allocation7 + $0x1290] sm:$0xff]
    %v803 = vld [vmem:[#allocation7 + $0x1298] sm:$0xff]
    %v804 = vld [vmem:[#allocation7 + $0x12a0] sm:$0xff]
    %v805 = vld [vmem:[#allocation7 + $0x12a8] sm:$0xff]
    %v806 = vld [vmem:[#allocation7 + $0x12b0] sm:$0xff]
    %v807 = vld [vmem:[#allocation7 + $0x12b8] sm:$0xff]
    %v808 = vld [vmem:[#allocation7 + $0x12c0] sm:$0xff]
    %v809 = vld [vmem:[#allocation7 + $0x12c8] sm:$0xff]
    %v810 = vld [vmem:[#allocation7 + $0x12d0] sm:$0xff]
    %v811 = vld [vmem:[#allocation7 + $0x12d8] sm:$0xff]
    %v812 = vld [vmem:[#allocation7 + $0x12e0] sm:$0xff]
    %v813 = vld [vmem:[#allocation7 + $0x12e8] sm:$0xff]
    %v814 = vld [vmem:[#allocation7 + $0x12f0] sm:$0xff]
    %v815 = vld [vmem:[#allocation7 + $0x12f8] sm:$0xff]
    %v816 = vld [vmem:[#allocation7 + $0x1300] sm:$0xff]
    %v817 = vld [vmem:[#allocation7 + $0x1308] sm:$0xff]
    %v818 = vld [vmem:[#allocation7 + $0x1310] sm:$0xff]
    %v819 = vld [vmem:[#allocation7 + $0x1318] sm:$0xff]
    %v820 = vld [vmem:[#allocation7 + $0x1320] sm:$0xff]
    %v821 = vld [vmem:[#allocation7 + $0x1328] sm:$0xff]
    %v822 = vld [vmem:[#allocation7 + $0x1330] sm:$0xff]
    %v823 = vld [vmem:[#allocation7 + $0x1338] sm:$0xff]
    %v824 = vld [vmem:[#allocation7 + $0x1340] sm:$0xff]
    %v825 = vld [vmem:[#allocation7 + $0x1348] sm:$0xff]
    %v826 = vld [vmem:[#allocation7 + $0x1350] sm:$0xff]
    %v827 = vld [vmem:[#allocation7 + $0x1358] sm:$0xff]
    %v828 = vld [vmem:[#allocation7 + $0x1360] sm:$0xff]
    %v829 = vld [vmem:[#allocation7 + $0x1368] sm:$0xff]
    %v830 = vld [vmem:[#allocation7 + $0x1370] sm:$0xff]
    %v831 = vld [vmem:[#allocation7 + $0x1378] sm:$0xff]
    %v832 = vld [vmem:[#allocation7 + $0x1380] sm:$0xff]
    %v833 = vld [vmem:[#allocation7 + $0x1388] sm:$0xff]
    %v834 = vld [vmem:[#allocation7 + $0x1390] sm:$0xff]
    %v835 = vld [vmem:[#allocation7 + $0x1398] sm:$0xff]
    %v836 = vld [vmem:[#allocation7 + $0x13a0] sm:$0xff]
    %v837 = vld [vmem:[#allocation7 + $0x13a8] sm:$0xff]
    %v838 = vld [vmem:[#allocation7 + $0x13b0] sm:$0xff]
    %v839 = vld [vmem:[#allocation7 + $0x13b8] sm:$0xff]
    %v840 = vld [vmem:[#allocation7 + $0x13c0] sm:$0xff]
    %v841 = vld [vmem:[#allocation7 + $0x13c8] sm:$0xff]
    %v842 = vld [vmem:[#allocation7 + $0x13d0] sm:$0xff]
    %v843 = vld [vmem:[#allocation7 + $0x13d8] sm:$0xff]
    %v844 = vld [vmem:[#allocation7 + $0x13e0] sm:$0xff]
    %v845 = vld [vmem:[#allocation7 + $0x13e8] sm:$0xff]
    %v846 = vld [vmem:[#allocation7 + $0x13f0] sm:$0xff]
    %v847 = vld [vmem:[#allocation7 + $0x13f8] sm:$0xff]
    %v848 = vld [vmem:[#allocation7 + $0x1400] sm:$0xff]
    %v849 = vld [vmem:[#allocation7 + $0x1408] sm:$0xff]
    %v850 = vld [vmem:[#allocation7 + $0x1410] sm:$0xff]
    %v851 = vld [vmem:[#allocation7 + $0x1418] sm:$0xff]
    %v852 = vld [vmem:[#allocation7 + $0x1420] sm:$0xff]
    %v853 = vld [vmem:[#allocation7 + $0x1428] sm:$0xff]
    %v854 = vld [vmem:[#allocation7 + $0x1430] sm:$0xff]
    %v855 = vld [vmem:[#allocation7 + $0x1438] sm:$0xff]
    %v856 = vld [vmem:[#allocation7 + $0x1440] sm:$0xff]
    %v857 = vld [vmem:[#allocation7 + $0x1448] sm:$0xff]
    %v858 = vld [vmem:[#allocation7 + $0x1450] sm:$0xff]
    %v859 = vld [vmem:[#allocation7 + $0x1458] sm:$0xff]
    %v860 = vld [vmem:[#allocation7 + $0x1460] sm:$0xff]
    %v861 = vld [vmem:[#allocation7 + $0x1468] sm:$0xff]
    %v862 = vld [vmem:[#allocation7 + $0x1470] sm:$0xff]
    %v863 = vld [vmem:[#allocation7 + $0x1478] sm:$0xff]
    %v864 = vld [vmem:[#allocation7 + $0x1480] sm:$0xff]
    %v865 = vld [vmem:[#allocation7 + $0x1488] sm:$0xff]
    %v866 = vld [vmem:[#allocation7 + $0x1490] sm:$0xff]
    %v867 = vld [vmem:[#allocation7 + $0x1498] sm:$0xff]
    %v868 = vld [vmem:[#allocation7 + $0x14a0] sm:$0xff]
    %v869 = vld [vmem:[#allocation7 + $0x14a8] sm:$0xff]
    %v870 = vld [vmem:[#allocation7 + $0x14b0] sm:$0xff]
    %v871 = vld [vmem:[#allocation7 + $0x14b8] sm:$0xff]
    %v872 = vld [vmem:[#allocation7 + $0x14c0] sm:$0xff]
    %v873 = vld [vmem:[#allocation7 + $0x14c8] sm:$0xff]
    %v874 = vld [vmem:[#allocation7 + $0x14d0] sm:$0xff]
    %v875 = vld [vmem:[#allocation7 + $0x14d8] sm:$0xff]
    %v876 = vld [vmem:[#allocation7 + $0x14e0] sm:$0xff]
    %v877 = vld [vmem:[#allocation7 + $0x14e8] sm:$0xff]
    %v878 = vld [vmem:[#allocation7 + $0x14f0] sm:$0xff]
    %v879 = vld [vmem:[#allocation7 + $0x14f8] sm:$0xff]
    %v880 = vld [vmem:[#allocation7 + $0x1500] sm:$0xff]
    %v881 = vld [vmem:[#allocation7 + $0x1508] sm:$0xff]
    %v882 = vld [vmem:[#allocation7 + $0x1510] sm:$0xff]
    %v883 = vld [vmem:[#allocation7 + $0x1518] sm:$0xff]
    %v884 = vld [vmem:[#allocation7 + $0x1520] sm:$0xff]
    %v885 = vld [vmem:[#allocation7 + $0x1528] sm:$0xff]
    %v886 = vld [vmem:[#allocation7 + $0x1530] sm:$0xff]
    %v887 = vld [vmem:[#allocation7 + $0x1538] sm:$0xff]
    %v888 = vld [vmem:[#allocation7 + $0x1540] sm:$0xff]
    %v889 = vld [vmem:[#allocation7 + $0x1548] sm:$0xff]
    %v890 = vld [vmem:[#allocation7 + $0x1550] sm:$0xff]
    %v891 = vld [vmem:[#allocation7 + $0x1558] sm:$0xff]
    %v892 = vld [vmem:[#allocation7 + $0x1560] sm:$0xff]
    %v893 = vld [vmem:[#allocation7 + $0x1568] sm:$0xff]
    %v894 = vld [vmem:[#allocation7 + $0x1570] sm:$0xff]
    %v895 = vld [vmem:[#allocation7 + $0x1578] sm:$0xff]
    %v896 = vld [vmem:[#allocation7 + $0x1580] sm:$0xff]
    %v897 = vld [vmem:[#allocation7 + $0x1588] sm:$0xff]
    %v898 = vld [vmem:[#allocation7 + $0x1590] sm:$0xff]
    %v899 = vld [vmem:[#allocation7 + $0x1598] sm:$0xff]
    %v900 = vld [vmem:[#allocation7 + $0x15a0] sm:$0xff]
    %v901 = vld [vmem:[#allocation7 + $0x15a8] sm:$0xff]
    %v902 = vld [vmem:[#allocation7 + $0x15b0] sm:$0xff]
    %v903 = vld [vmem:[#allocation7 + $0x15b8] sm:$0xff]
    %v904 = vld [vmem:[#allocation7 + $0x15c0] sm:$0xff]
    %v905 = vld [vmem:[#allocation7 + $0x15c8] sm:$0xff]
    %v906 = vld [vmem:[#allocation7 + $0x15d0] sm:$0xff]
    %v907 = vld [vmem:[#allocation7 + $0x15d8] sm:$0xff]
    %v908 = vld [vmem:[#allocation7 + $0x15e0] sm:$0xff]
    %v909 = vld [vmem:[#allocation7 + $0x15e8] sm:$0xff]
    %v910 = vld [vmem:[#allocation7 + $0x15f0] sm:$0xff]
    %v911 = vld [vmem:[#allocation7 + $0x15f8] sm:$0xff]
    %v912 = vld [vmem:[#allocation7 + $0x1600] sm:$0xff]
    %v913 = vld [vmem:[#allocation7 + $0x1608] sm:$0xff]
    %v914 = vld [vmem:[#allocation7 + $0x1610] sm:$0xff]
    %v915 = vld [vmem:[#allocation7 + $0x1618] sm:$0xff]
    %v916 = vld [vmem:[#allocation7 + $0x1620] sm:$0xff]
    %v917 = vld [vmem:[#allocation7 + $0x1628] sm:$0xff]
    %v918 = vld [vmem:[#allocation7 + $0x1630] sm:$0xff]
    %v919 = vld [vmem:[#allocation7 + $0x1638] sm:$0xff]
    %v920 = vld [vmem:[#allocation7 + $0x1640] sm:$0xff]
    %v921 = vld [vmem:[#allocation7 + $0x1648] sm:$0xff]
    %v922 = vld [vmem:[#allocation7 + $0x1650] sm:$0xff]
    %v923 = vld [vmem:[#allocation7 + $0x1658] sm:$0xff]
    %v924 = vld [vmem:[#allocation7 + $0x1660] sm:$0xff]
    %v925 = vld [vmem:[#allocation7 + $0x1668] sm:$0xff]
    %v926 = vld [vmem:[#allocation7 + $0x1670] sm:$0xff]
    %v927 = vld [vmem:[#allocation7 + $0x1678] sm:$0xff]
    %v928 = vld [vmem:[#allocation7 + $0x1680] sm:$0xff]
    %v929 = vld [vmem:[#allocation7 + $0x1688] sm:$0xff]
    %v930 = vld [vmem:[#allocation7 + $0x1690] sm:$0xff]
    %v931 = vld [vmem:[#allocation7 + $0x1698] sm:$0xff]
    %v932 = vld [vmem:[#allocation7 + $0x16a0] sm:$0xff]
    %v933 = vld [vmem:[#allocation7 + $0x16a8] sm:$0xff]
    %v934 = vld [vmem:[#allocation7 + $0x16b0] sm:$0xff]
    %v935 = vld [vmem:[#allocation7 + $0x16b8] sm:$0xff]
    %v936 = vld [vmem:[#allocation7 + $0x16c0] sm:$0xff]
    %v937 = vld [vmem:[#allocation7 + $0x16c8] sm:$0xff]
    %v938 = vld [vmem:[#allocation7 + $0x16d0] sm:$0xff]
    %v939 = vld [vmem:[#allocation7 + $0x16d8] sm:$0xff]
    %v940 = vld [vmem:[#allocation7 + $0x16e0] sm:$0xff]
    %v941 = vld [vmem:[#allocation7 + $0x16e8] sm:$0xff]
    %v942 = vld [vmem:[#allocation7 + $0x16f0] sm:$0xff]
    %v943 = vld [vmem:[#allocation7 + $0x16f8] sm:$0xff]
    %v944 = vld [vmem:[#allocation7 + $0x1700] sm:$0xff]
    %v945 = vld [vmem:[#allocation7 + $0x1708] sm:$0xff]
    %v946 = vld [vmem:[#allocation7 + $0x1710] sm:$0xff]
    %v947 = vld [vmem:[#allocation7 + $0x1718] sm:$0xff]
    %v948 = vld [vmem:[#allocation7 + $0x1720] sm:$0xff]
    %v949 = vld [vmem:[#allocation7 + $0x1728] sm:$0xff]
    %v950 = vld [vmem:[#allocation7 + $0x1730] sm:$0xff]
    %v951 = vld [vmem:[#allocation7 + $0x1738] sm:$0xff]
    %v952 = vld [vmem:[#allocation7 + $0x1740] sm:$0xff]
    %v953 = vld [vmem:[#allocation7 + $0x1748] sm:$0xff]
    %v954 = vld [vmem:[#allocation7 + $0x1750] sm:$0xff]
    %v955 = vld [vmem:[#allocation7 + $0x1758] sm:$0xff]
    %v956 = vld [vmem:[#allocation7 + $0x1760] sm:$0xff]
    %v957 = vld [vmem:[#allocation7 + $0x1768] sm:$0xff]
    %v958 = vld [vmem:[#allocation7 + $0x1770] sm:$0xff]
    %v959 = vld [vmem:[#allocation7 + $0x1778] sm:$0xff]
    %v960 = vld [vmem:[#allocation7 + $0x1780] sm:$0xff]
    %v961 = vld [vmem:[#allocation7 + $0x1788] sm:$0xff]
    %v962 = vld [vmem:[#allocation7 + $0x1790] sm:$0xff]
    %v963 = vld [vmem:[#allocation7 + $0x1798] sm:$0xff]
    %v964 = vld [vmem:[#allocation7 + $0x17a0] sm:$0xff]
    %v965 = vld [vmem:[#allocation7 + $0x17a8] sm:$0xff]
    %v966 = vld [vmem:[#allocation7 + $0x17b0] sm:$0xff]
    %v967 = vld [vmem:[#allocation7 + $0x17b8] sm:$0xff]
    %v968 = vld [vmem:[#allocation7 + $0x17c0] sm:$0xff]
    %v969 = vld [vmem:[#allocation7 + $0x17c8] sm:$0xff]
    %v970 = vld [vmem:[#allocation7 + $0x17d0] sm:$0xff]
    %v971 = vld [vmem:[#allocation7 + $0x17d8] sm:$0xff]
    %v972 = vld [vmem:[#allocation7 + $0x17e0] sm:$0xff]
    %v973 = vld [vmem:[#allocation7 + $0x17e8] sm:$0xff]
    %v974 = vld [vmem:[#allocation7 + $0x17f0] sm:$0xff]
    %v975 = vld [vmem:[#allocation7 + $0x17f8] sm:$0xff]
    %v1744 = vunpack.c.l.b16 %v208
    %v1745 = vunpack.c.h.b16 %v208
    %v1746 = vunpack.c.l.b16 %v209
    %v1747 = vunpack.c.h.b16 %v209
    %v1748 = vunpack.c.l.b16 %v210
    %v1749 = vunpack.c.h.b16 %v210
    %v1750 = vunpack.c.l.b16 %v211
    %v1751 = vunpack.c.h.b16 %v211
    %v1752 = vunpack.c.l.b16 %v212
    %v1753 = vunpack.c.h.b16 %v212
    %v1754 = vunpack.c.l.b16 %v213
    %v1755 = vunpack.c.h.b16 %v213
    %v1756 = vunpack.c.l.b16 %v214
    %v1757 = vunpack.c.h.b16 %v214
    %v1758 = vunpack.c.l.b16 %v215
    %v1759 = vunpack.c.h.b16 %v215
    %v1760 = vunpack.c.l.b16 %v216
    %v1761 = vunpack.c.h.b16 %v216
    %v1762 = vunpack.c.l.b16 %v217
    %v1763 = vunpack.c.h.b16 %v217
    %v1764 = vunpack.c.l.b16 %v218
    %v1765 = vunpack.c.h.b16 %v218
    %v1766 = vunpack.c.l.b16 %v219
    %v1767 = vunpack.c.h.b16 %v219
    %v1768 = vunpack.c.l.b16 %v220
    %v1769 = vunpack.c.h.b16 %v220
    %v1770 = vunpack.c.l.b16 %v221
    %v1771 = vunpack.c.h.b16 %v221
    %v1772 = vunpack.c.l.b16 %v222
    %v1773 = vunpack.c.h.b16 %v222
    %v1774 = vunpack.c.l.b16 %v223
    %v1775 = vunpack.c.h.b16 %v223
    %v1776 = vunpack.c.l.b16 %v224
    %v1777 = vunpack.c.h.b16 %v224
    %v1778 = vunpack.c.l.b16 %v225
    %v1779 = vunpack.c.h.b16 %v225
    %v1780 = vunpack.c.l.b16 %v226
    %v1781 = vunpack.c.h.b16 %v226
    %v1782 = vunpack.c.l.b16 %v227
    %v1783 = vunpack.c.h.b16 %v227
    %v1784 = vunpack.c.l.b16 %v228
    %v1785 = vunpack.c.h.b16 %v228
    %v1786 = vunpack.c.l.b16 %v229
    %v1787 = vunpack.c.h.b16 %v229
    %v1788 = vunpack.c.l.b16 %v230
    %v1789 = vunpack.c.h.b16 %v230
    %v1790 = vunpack.c.l.b16 %v231
    %v1791 = vunpack.c.h.b16 %v231
    %v1792 = vunpack.c.l.b16 %v232
    %v1793 = vunpack.c.h.b16 %v232
    %v1794 = vunpack.c.l.b16 %v233
    %v1795 = vunpack.c.h.b16 %v233
    %v1796 = vunpack.c.l.b16 %v234
    %v1797 = vunpack.c.h.b16 %v234
    %v1798 = vunpack.c.l.b16 %v235
    %v1799 = vunpack.c.h.b16 %v235
    %v1800 = vunpack.c.l.b16 %v236
    %v1801 = vunpack.c.h.b16 %v236
    %v1802 = vunpack.c.l.b16 %v237
    %v1803 = vunpack.c.h.b16 %v237
    %v1804 = vunpack.c.l.b16 %v238
    %v1805 = vunpack.c.h.b16 %v238
    %v1806 = vunpack.c.l.b16 %v239
    %v1807 = vunpack.c.h.b16 %v239
    %v1808 = vunpack.c.l.b16 %v240
    %v1809 = vunpack.c.h.b16 %v240
    %v1810 = vunpack.c.l.b16 %v241
    %v1811 = vunpack.c.h.b16 %v241
    %v1812 = vunpack.c.l.b16 %v242
    %v1813 = vunpack.c.h.b16 %v242
    %v1814 = vunpack.c.l.b16 %v243
    %v1815 = vunpack.c.h.b16 %v243
    %v1816 = vunpack.c.l.b16 %v244
    %v1817 = vunpack.c.h.b16 %v244
    %v1818 = vunpack.c.l.b16 %v245
    %v1819 = vunpack.c.h.b16 %v245
    %v1820 = vunpack.c.l.b16 %v246
    %v1821 = vunpack.c.h.b16 %v246
    %v1822 = vunpack.c.l.b16 %v247
    %v1823 = vunpack.c.h.b16 %v247
    %v1824 = vunpack.c.l.b16 %v248
    %v1825 = vunpack.c.h.b16 %v248
    %v1826 = vunpack.c.l.b16 %v249
    %v1827 = vunpack.c.h.b16 %v249
    %v1828 = vunpack.c.l.b16 %v250
    %v1829 = vunpack.c.h.b16 %v250
    %v1830 = vunpack.c.l.b16 %v251
    %v1831 = vunpack.c.h.b16 %v251
    %v1832 = vunpack.c.l.b16 %v252
    %v1833 = vunpack.c.h.b16 %v252
    %v1834 = vunpack.c.l.b16 %v253
    %v1835 = vunpack.c.h.b16 %v253
    %v1836 = vunpack.c.l.b16 %v254
    %v1837 = vunpack.c.h.b16 %v254
    %v1838 = vunpack.c.l.b16 %v255
    %v1839 = vunpack.c.h.b16 %v255
    %v1840 = vunpack.c.l.b16 %v256
    %v1841 = vunpack.c.h.b16 %v256
    %v1842 = vunpack.c.l.b16 %v257
    %v1843 = vunpack.c.h.b16 %v257
    %v1844 = vunpack.c.l.b16 %v258
    %v1845 = vunpack.c.h.b16 %v258
    %v1846 = vunpack.c.l.b16 %v259
    %v1847 = vunpack.c.h.b16 %v259
    %v1848 = vunpack.c.l.b16 %v260
    %v1849 = vunpack.c.h.b16 %v260
    %v1850 = vunpack.c.l.b16 %v261
    %v1851 = vunpack.c.h.b16 %v261
    %v1852 = vunpack.c.l.b16 %v262
    %v1853 = vunpack.c.h.b16 %v262
    %v1854 = vunpack.c.l.b16 %v263
    %v1855 = vunpack.c.h.b16 %v263
    %v1856 = vunpack.c.l.b16 %v264
    %v1857 = vunpack.c.h.b16 %v264
    %v1858 = vunpack.c.l.b16 %v265
    %v1859 = vunpack.c.h.b16 %v265
    %v1860 = vunpack.c.l.b16 %v266
    %v1861 = vunpack.c.h.b16 %v266
    %v1862 = vunpack.c.l.b16 %v267
    %v1863 = vunpack.c.h.b16 %v267
    %v1864 = vunpack.c.l.b16 %v268
    %v1865 = vunpack.c.h.b16 %v268
    %v1866 = vunpack.c.l.b16 %v269
    %v1867 = vunpack.c.h.b16 %v269
    %v1868 = vunpack.c.l.b16 %v270
    %v1869 = vunpack.c.h.b16 %v270
    %v1870 = vunpack.c.l.b16 %v271
    %v1871 = vunpack.c.h.b16 %v271
    %v1872 = vunpack.c.l.b16 %v272
    %v1873 = vunpack.c.h.b16 %v272
    %v1874 = vunpack.c.l.b16 %v273
    %v1875 = vunpack.c.h.b16 %v273
    %v1876 = vunpack.c.l.b16 %v274
    %v1877 = vunpack.c.h.b16 %v274
    %v1878 = vunpack.c.l.b16 %v275
    %v1879 = vunpack.c.h.b16 %v275
    %v1880 = vunpack.c.l.b16 %v276
    %v1881 = vunpack.c.h.b16 %v276
    %v1882 = vunpack.c.l.b16 %v277
    %v1883 = vunpack.c.h.b16 %v277
    %v1884 = vunpack.c.l.b16 %v278
    %v1885 = vunpack.c.h.b16 %v278
    %v1886 = vunpack.c.l.b16 %v279
    %v1887 = vunpack.c.h.b16 %v279
    %v1888 = vunpack.c.l.b16 %v280
    %v1889 = vunpack.c.h.b16 %v280
    %v1890 = vunpack.c.l.b16 %v281
    %v1891 = vunpack.c.h.b16 %v281
    %v1892 = vunpack.c.l.b16 %v282
    %v1893 = vunpack.c.h.b16 %v282
    %v1894 = vunpack.c.l.b16 %v283
    %v1895 = vunpack.c.h.b16 %v283
    %v1896 = vunpack.c.l.b16 %v284
    %v1897 = vunpack.c.h.b16 %v284
    %v1898 = vunpack.c.l.b16 %v285
    %v1899 = vunpack.c.h.b16 %v285
    %v1900 = vunpack.c.l.b16 %v286
    %v1901 = vunpack.c.h.b16 %v286
    %v1902 = vunpack.c.l.b16 %v287
    %v1903 = vunpack.c.h.b16 %v287
    %v1904 = vunpack.c.l.b16 %v288
    %v1905 = vunpack.c.h.b16 %v288
    %v1906 = vunpack.c.l.b16 %v289
    %v1907 = vunpack.c.h.b16 %v289
    %v1908 = vunpack.c.l.b16 %v290
    %v1909 = vunpack.c.h.b16 %v290
    %v1910 = vunpack.c.l.b16 %v291
    %v1911 = vunpack.c.h.b16 %v291
    %v1912 = vunpack.c.l.b16 %v292
    %v1913 = vunpack.c.h.b16 %v292
    %v1914 = vunpack.c.l.b16 %v293
    %v1915 = vunpack.c.h.b16 %v293
    %v1916 = vunpack.c.l.b16 %v294
    %v1917 = vunpack.c.h.b16 %v294
    %v1918 = vunpack.c.l.b16 %v295
    %v1919 = vunpack.c.h.b16 %v295
    %v1920 = vunpack.c.l.b16 %v296
    %v1921 = vunpack.c.h.b16 %v296
    %v1922 = vunpack.c.l.b16 %v297
    %v1923 = vunpack.c.h.b16 %v297
    %v1924 = vunpack.c.l.b16 %v298
    %v1925 = vunpack.c.h.b16 %v298
    %v1926 = vunpack.c.l.b16 %v299
    %v1927 = vunpack.c.h.b16 %v299
    %v1928 = vunpack.c.l.b16 %v300
    %v1929 = vunpack.c.h.b16 %v300
    %v1930 = vunpack.c.l.b16 %v301
    %v1931 = vunpack.c.h.b16 %v301
    %v1932 = vunpack.c.l.b16 %v302
    %v1933 = vunpack.c.h.b16 %v302
    %v1934 = vunpack.c.l.b16 %v303
    %v1935 = vunpack.c.h.b16 %v303
    %v1936 = vunpack.c.l.b16 %v304
    %v1937 = vunpack.c.h.b16 %v304
    %v1938 = vunpack.c.l.b16 %v305
    %v1939 = vunpack.c.h.b16 %v305
    %v1940 = vunpack.c.l.b16 %v306
    %v1941 = vunpack.c.h.b16 %v306
    %v1942 = vunpack.c.l.b16 %v307
    %v1943 = vunpack.c.h.b16 %v307
    %v1944 = vunpack.c.l.b16 %v308
    %v1945 = vunpack.c.h.b16 %v308
    %v1946 = vunpack.c.l.b16 %v309
    %v1947 = vunpack.c.h.b16 %v309
    %v1948 = vunpack.c.l.b16 %v310
    %v1949 = vunpack.c.h.b16 %v310
    %v1950 = vunpack.c.l.b16 %v311
    %v1951 = vunpack.c.h.b16 %v311
    %v1952 = vunpack.c.l.b16 %v312
    %v1953 = vunpack.c.h.b16 %v312
    %v1954 = vunpack.c.l.b16 %v313
    %v1955 = vunpack.c.h.b16 %v313
    %v1956 = vunpack.c.l.b16 %v314
    %v1957 = vunpack.c.h.b16 %v314
    %v1958 = vunpack.c.l.b16 %v315
    %v1959 = vunpack.c.h.b16 %v315
    %v1960 = vunpack.c.l.b16 %v316
    %v1961 = vunpack.c.h.b16 %v316
    %v1962 = vunpack.c.l.b16 %v317
    %v1963 = vunpack.c.h.b16 %v317
    %v1964 = vunpack.c.l.b16 %v318
    %v1965 = vunpack.c.h.b16 %v318
    %v1966 = vunpack.c.l.b16 %v319
    %v1967 = vunpack.c.h.b16 %v319
    %v1968 = vunpack.c.l.b16 %v320
    %v1969 = vunpack.c.h.b16 %v320
    %v1970 = vunpack.c.l.b16 %v321
    %v1971 = vunpack.c.h.b16 %v321
    %v1972 = vunpack.c.l.b16 %v322
    %v1973 = vunpack.c.h.b16 %v322
    %v1974 = vunpack.c.l.b16 %v323
    %v1975 = vunpack.c.h.b16 %v323
    %v1976 = vunpack.c.l.b16 %v324
    %v1977 = vunpack.c.h.b16 %v324
    %v1978 = vunpack.c.l.b16 %v325
    %v1979 = vunpack.c.h.b16 %v325
    %v1980 = vunpack.c.l.b16 %v326
    %v1981 = vunpack.c.h.b16 %v326
    %v1982 = vunpack.c.l.b16 %v327
    %v1983 = vunpack.c.h.b16 %v327
    %v1984 = vunpack.c.l.b16 %v328
    %v1985 = vunpack.c.h.b16 %v328
    %v1986 = vunpack.c.l.b16 %v329
    %v1987 = vunpack.c.h.b16 %v329
    %v1988 = vunpack.c.l.b16 %v330
    %v1989 = vunpack.c.h.b16 %v330
    %v1990 = vunpack.c.l.b16 %v331
    %v1991 = vunpack.c.h.b16 %v331
    %v1992 = vunpack.c.l.b16 %v332
    %v1993 = vunpack.c.h.b16 %v332
    %v1994 = vunpack.c.l.b16 %v333
    %v1995 = vunpack.c.h.b16 %v333
    %v1996 = vunpack.c.l.b16 %v334
    %v1997 = vunpack.c.h.b16 %v334
    %v1998 = vunpack.c.l.b16 %v335
    %v1999 = vunpack.c.h.b16 %v335
    %v2000 = vunpack.c.l.b16 %v336
    %v2001 = vunpack.c.h.b16 %v336
    %v2002 = vunpack.c.l.b16 %v337
    %v2003 = vunpack.c.h.b16 %v337
    %v2004 = vunpack.c.l.b16 %v338
    %v2005 = vunpack.c.h.b16 %v338
    %v2006 = vunpack.c.l.b16 %v339
    %v2007 = vunpack.c.h.b16 %v339
    %v2008 = vunpack.c.l.b16 %v340
    %v2009 = vunpack.c.h.b16 %v340
    %v2010 = vunpack.c.l.b16 %v341
    %v2011 = vunpack.c.h.b16 %v341
    %v2012 = vunpack.c.l.b16 %v342
    %v2013 = vunpack.c.h.b16 %v342
    %v2014 = vunpack.c.l.b16 %v343
    %v2015 = vunpack.c.h.b16 %v343
    %v2016 = vunpack.c.l.b16 %v344
    %v2017 = vunpack.c.h.b16 %v344
    %v2018 = vunpack.c.l.b16 %v345
    %v2019 = vunpack.c.h.b16 %v345
    %v2020 = vunpack.c.l.b16 %v346
    %v2021 = vunpack.c.h.b16 %v346
    %v2022 = vunpack.c.l.b16 %v347
    %v2023 = vunpack.c.h.b16 %v347
    %v2024 = vunpack.c.l.b16 %v348
    %v2025 = vunpack.c.h.b16 %v348
    %v2026 = vunpack.c.l.b16 %v349
    %v2027 = vunpack.c.h.b16 %v349
    %v2028 = vunpack.c.l.b16 %v350
    %v2029 = vunpack.c.h.b16 %v350
    %v2030 = vunpack.c.l.b16 %v351
    %v2031 = vunpack.c.h.b16 %v351
    %v2032 = vunpack.c.l.b16 %v352
    %v2033 = vunpack.c.h.b16 %v352
    %v2034 = vunpack.c.l.b16 %v353
    %v2035 = vunpack.c.h.b16 %v353
    %v2036 = vunpack.c.l.b16 %v354
    %v2037 = vunpack.c.h.b16 %v354
    %v2038 = vunpack.c.l.b16 %v355
    %v2039 = vunpack.c.h.b16 %v355
    %v2040 = vunpack.c.l.b16 %v356
    %v2041 = vunpack.c.h.b16 %v356
    %v2042 = vunpack.c.l.b16 %v357
    %v2043 = vunpack.c.h.b16 %v357
    %v2044 = vunpack.c.l.b16 %v358
    %v2045 = vunpack.c.h.b16 %v358
    %v2046 = vunpack.c.l.b16 %v359
    %v2047 = vunpack.c.h.b16 %v359
    %v2048 = vunpack.c.l.b16 %v360
    %v2049 = vunpack.c.h.b16 %v360
    %v2050 = vunpack.c.l.b16 %v361
    %v2051 = vunpack.c.h.b16 %v361
    %v2052 = vunpack.c.l.b16 %v362
    %v2053 = vunpack.c.h.b16 %v362
    %v2054 = vunpack.c.l.b16 %v363
    %v2055 = vunpack.c.h.b16 %v363
    %v2056 = vunpack.c.l.b16 %v364
    %v2057 = vunpack.c.h.b16 %v364
    %v2058 = vunpack.c.l.b16 %v365
    %v2059 = vunpack.c.h.b16 %v365
    %v2060 = vunpack.c.l.b16 %v366
    %v2061 = vunpack.c.h.b16 %v366
    %v2062 = vunpack.c.l.b16 %v367
    %v2063 = vunpack.c.h.b16 %v367
    %v2064 = vunpack.c.l.b16 %v368
    %v2065 = vunpack.c.h.b16 %v368
    %v2066 = vunpack.c.l.b16 %v369
    %v2067 = vunpack.c.h.b16 %v369
    %v2068 = vunpack.c.l.b16 %v370
    %v2069 = vunpack.c.h.b16 %v370
    %v2070 = vunpack.c.l.b16 %v371
    %v2071 = vunpack.c.h.b16 %v371
    %v2072 = vunpack.c.l.b16 %v372
    %v2073 = vunpack.c.h.b16 %v372
    %v2074 = vunpack.c.l.b16 %v373
    %v2075 = vunpack.c.h.b16 %v373
    %v2076 = vunpack.c.l.b16 %v374
    %v2077 = vunpack.c.h.b16 %v374
    %v2078 = vunpack.c.l.b16 %v375
    %v2079 = vunpack.c.h.b16 %v375
    %v2080 = vunpack.c.l.b16 %v376
    %v2081 = vunpack.c.h.b16 %v376
    %v2082 = vunpack.c.l.b16 %v377
    %v2083 = vunpack.c.h.b16 %v377
    %v2084 = vunpack.c.l.b16 %v378
    %v2085 = vunpack.c.h.b16 %v378
    %v2086 = vunpack.c.l.b16 %v379
    %v2087 = vunpack.c.h.b16 %v379
    %v2088 = vunpack.c.l.b16 %v380
    %v2089 = vunpack.c.h.b16 %v380
    %v2090 = vunpack.c.l.b16 %v381
    %v2091 = vunpack.c.h.b16 %v381
    %v2092 = vunpack.c.l.b16 %v382
    %v2093 = vunpack.c.h.b16 %v382
    %v2094 = vunpack.c.l.b16 %v383
    %v2095 = vunpack.c.h.b16 %v383
    %v2096 = vunpack.c.l.b16 %v384
    %v2097 = vunpack.c.h.b16 %v384
    %v2098 = vunpack.c.l.b16 %v385
    %v2099 = vunpack.c.h.b16 %v385
    %v2100 = vunpack.c.l.b16 %v386
    %v2101 = vunpack.c.h.b16 %v386
    %v2102 = vunpack.c.l.b16 %v387
    %v2103 = vunpack.c.h.b16 %v387
    %v2104 = vunpack.c.l.b16 %v388
    %v2105 = vunpack.c.h.b16 %v388
    %v2106 = vunpack.c.l.b16 %v389
    %v2107 = vunpack.c.h.b16 %v389
    %v2108 = vunpack.c.l.b16 %v390
    %v2109 = vunpack.c.h.b16 %v390
    %v2110 = vunpack.c.l.b16 %v391
    %v2111 = vunpack.c.h.b16 %v391
    %v2112 = vunpack.c.l.b16 %v392
    %v2113 = vunpack.c.h.b16 %v392
    %v2114 = vunpack.c.l.b16 %v393
    %v2115 = vunpack.c.h.b16 %v393
    %v2116 = vunpack.c.l.b16 %v394
    %v2117 = vunpack.c.h.b16 %v394
    %v2118 = vunpack.c.l.b16 %v395
    %v2119 = vunpack.c.h.b16 %v395
    %v2120 = vunpack.c.l.b16 %v396
    %v2121 = vunpack.c.h.b16 %v396
    %v2122 = vunpack.c.l.b16 %v397
    %v2123 = vunpack.c.h.b16 %v397
    %v2124 = vunpack.c.l.b16 %v398
    %v2125 = vunpack.c.h.b16 %v398
    %v2126 = vunpack.c.l.b16 %v399
    %v2127 = vunpack.c.h.b16 %v399
    %v2128 = vunpack.c.l.b16 %v400
    %v2129 = vunpack.c.h.b16 %v400
    %v2130 = vunpack.c.l.b16 %v401
    %v2131 = vunpack.c.h.b16 %v401
    %v2132 = vunpack.c.l.b16 %v402
    %v2133 = vunpack.c.h.b16 %v402
    %v2134 = vunpack.c.l.b16 %v403
    %v2135 = vunpack.c.h.b16 %v403
    %v2136 = vunpack.c.l.b16 %v404
    %v2137 = vunpack.c.h.b16 %v404
    %v2138 = vunpack.c.l.b16 %v405
    %v2139 = vunpack.c.h.b16 %v405
    %v2140 = vunpack.c.l.b16 %v406
    %v2141 = vunpack.c.h.b16 %v406
    %v2142 = vunpack.c.l.b16 %v407
    %v2143 = vunpack.c.h.b16 %v407
    %v2144 = vunpack.c.l.b16 %v408
    %v2145 = vunpack.c.h.b16 %v408
    %v2146 = vunpack.c.l.b16 %v409
    %v2147 = vunpack.c.h.b16 %v409
    %v2148 = vunpack.c.l.b16 %v410
    %v2149 = vunpack.c.h.b16 %v410
    %v2150 = vunpack.c.l.b16 %v411
    %v2151 = vunpack.c.h.b16 %v411
    %v2152 = vunpack.c.l.b16 %v412
    %v2153 = vunpack.c.h.b16 %v412
    %v2154 = vunpack.c.l.b16 %v413
    %v2155 = vunpack.c.h.b16 %v413
    %v2156 = vunpack.c.l.b16 %v414
    %v2157 = vunpack.c.h.b16 %v414
    %v2158 = vunpack.c.l.b16 %v415
    %v2159 = vunpack.c.h.b16 %v415
    %v2160 = vunpack.c.l.b16 %v416
    %v2161 = vunpack.c.h.b16 %v416
    %v2162 = vunpack.c.l.b16 %v417
    %v2163 = vunpack.c.h.b16 %v417
    %v2164 = vunpack.c.l.b16 %v418
    %v2165 = vunpack.c.h.b16 %v418
    %v2166 = vunpack.c.l.b16 %v419
    %v2167 = vunpack.c.h.b16 %v419
    %v2168 = vunpack.c.l.b16 %v420
    %v2169 = vunpack.c.h.b16 %v420
    %v2170 = vunpack.c.l.b16 %v421
    %v2171 = vunpack.c.h.b16 %v421
    %v2172 = vunpack.c.l.b16 %v422
    %v2173 = vunpack.c.h.b16 %v422
    %v2174 = vunpack.c.l.b16 %v423
    %v2175 = vunpack.c.h.b16 %v423
    %v2176 = vunpack.c.l.b16 %v424
    %v2177 = vunpack.c.h.b16 %v424
    %v2178 = vunpack.c.l.b16 %v425
    %v2179 = vunpack.c.h.b16 %v425
    %v2180 = vunpack.c.l.b16 %v426
    %v2181 = vunpack.c.h.b16 %v426
    %v2182 = vunpack.c.l.b16 %v427
    %v2183 = vunpack.c.h.b16 %v427
    %v2184 = vunpack.c.l.b16 %v428
    %v2185 = vunpack.c.h.b16 %v428
    %v2186 = vunpack.c.l.b16 %v429
    %v2187 = vunpack.c.h.b16 %v429
    %v2188 = vunpack.c.l.b16 %v430
    %v2189 = vunpack.c.h.b16 %v430
    %v2190 = vunpack.c.l.b16 %v431
    %v2191 = vunpack.c.h.b16 %v431
    %v2192 = vunpack.c.l.b16 %v432
    %v2193 = vunpack.c.h.b16 %v432
    %v2194 = vunpack.c.l.b16 %v433
    %v2195 = vunpack.c.h.b16 %v433
    %v2196 = vunpack.c.l.b16 %v434
    %v2197 = vunpack.c.h.b16 %v434
    %v2198 = vunpack.c.l.b16 %v435
    %v2199 = vunpack.c.h.b16 %v435
    %v2200 = vunpack.c.l.b16 %v436
    %v2201 = vunpack.c.h.b16 %v436
    %v2202 = vunpack.c.l.b16 %v437
    %v2203 = vunpack.c.h.b16 %v437
    %v2204 = vunpack.c.l.b16 %v438
    %v2205 = vunpack.c.h.b16 %v438
    %v2206 = vunpack.c.l.b16 %v439
    %v2207 = vunpack.c.h.b16 %v439
    %v2208 = vunpack.c.l.b16 %v440
    %v2209 = vunpack.c.h.b16 %v440
    %v2210 = vunpack.c.l.b16 %v441
    %v2211 = vunpack.c.h.b16 %v441
    %v2212 = vunpack.c.l.b16 %v442
    %v2213 = vunpack.c.h.b16 %v442
    %v2214 = vunpack.c.l.b16 %v443
    %v2215 = vunpack.c.h.b16 %v443
    %v2216 = vunpack.c.l.b16 %v444
    %v2217 = vunpack.c.h.b16 %v444
    %v2218 = vunpack.c.l.b16 %v445
    %v2219 = vunpack.c.h.b16 %v445
    %v2220 = vunpack.c.l.b16 %v446
    %v2221 = vunpack.c.h.b16 %v446
    %v2222 = vunpack.c.l.b16 %v447
    %v2223 = vunpack.c.h.b16 %v447
    %v2224 = vunpack.c.l.b16 %v448
    %v2225 = vunpack.c.h.b16 %v448
    %v2226 = vunpack.c.l.b16 %v449
    %v2227 = vunpack.c.h.b16 %v449
    %v2228 = vunpack.c.l.b16 %v450
    %v2229 = vunpack.c.h.b16 %v450
    %v2230 = vunpack.c.l.b16 %v451
    %v2231 = vunpack.c.h.b16 %v451
    %v2232 = vunpack.c.l.b16 %v452
    %v2233 = vunpack.c.h.b16 %v452
    %v2234 = vunpack.c.l.b16 %v453
    %v2235 = vunpack.c.h.b16 %v453
    %v2236 = vunpack.c.l.b16 %v454
    %v2237 = vunpack.c.h.b16 %v454
    %v2238 = vunpack.c.l.b16 %v455
    %v2239 = vunpack.c.h.b16 %v455
    %v2240 = vunpack.c.l.b16 %v456
    %v2241 = vunpack.c.h.b16 %v456
    %v2242 = vunpack.c.l.b16 %v457
    %v2243 = vunpack.c.h.b16 %v457
    %v2244 = vunpack.c.l.b16 %v458
    %v2245 = vunpack.c.h.b16 %v458
    %v2246 = vunpack.c.l.b16 %v459
    %v2247 = vunpack.c.h.b16 %v459
    %v2248 = vunpack.c.l.b16 %v460
    %v2249 = vunpack.c.h.b16 %v460
    %v2250 = vunpack.c.l.b16 %v461
    %v2251 = vunpack.c.h.b16 %v461
    %v2252 = vunpack.c.l.b16 %v462
    %v2253 = vunpack.c.h.b16 %v462
    %v2254 = vunpack.c.l.b16 %v463
    %v2255 = vunpack.c.h.b16 %v463
    %v2256 = vunpack.c.l.b16 %v464
    %v2257 = vunpack.c.h.b16 %v464
    %v2258 = vunpack.c.l.b16 %v465
    %v2259 = vunpack.c.h.b16 %v465
    %v2260 = vunpack.c.l.b16 %v466
    %v2261 = vunpack.c.h.b16 %v466
    %v2262 = vunpack.c.l.b16 %v467
    %v2263 = vunpack.c.h.b16 %v467
    %v2264 = vunpack.c.l.b16 %v468
    %v2265 = vunpack.c.h.b16 %v468
    %v2266 = vunpack.c.l.b16 %v469
    %v2267 = vunpack.c.h.b16 %v469
    %v2268 = vunpack.c.l.b16 %v470
    %v2269 = vunpack.c.h.b16 %v470
    %v2270 = vunpack.c.l.b16 %v471
    %v2271 = vunpack.c.h.b16 %v471
    %v2272 = vunpack.c.l.b16 %v472
    %v2273 = vunpack.c.h.b16 %v472
    %v2274 = vunpack.c.l.b16 %v473
    %v2275 = vunpack.c.h.b16 %v473
    %v2276 = vunpack.c.l.b16 %v474
    %v2277 = vunpack.c.h.b16 %v474
    %v2278 = vunpack.c.l.b16 %v475
    %v2279 = vunpack.c.h.b16 %v475
    %v2280 = vunpack.c.l.b16 %v476
    %v2281 = vunpack.c.h.b16 %v476
    %v2282 = vunpack.c.l.b16 %v477
    %v2283 = vunpack.c.h.b16 %v477
    %v2284 = vunpack.c.l.b16 %v478
    %v2285 = vunpack.c.h.b16 %v478
    %v2286 = vunpack.c.l.b16 %v479
    %v2287 = vunpack.c.h.b16 %v479
    %v2288 = vunpack.c.l.b16 %v480
    %v2289 = vunpack.c.h.b16 %v480
    %v2290 = vunpack.c.l.b16 %v481
    %v2291 = vunpack.c.h.b16 %v481
    %v2292 = vunpack.c.l.b16 %v482
    %v2293 = vunpack.c.h.b16 %v482
    %v2294 = vunpack.c.l.b16 %v483
    %v2295 = vunpack.c.h.b16 %v483
    %v2296 = vunpack.c.l.b16 %v484
    %v2297 = vunpack.c.h.b16 %v484
    %v2298 = vunpack.c.l.b16 %v485
    %v2299 = vunpack.c.h.b16 %v485
    %v2300 = vunpack.c.l.b16 %v486
    %v2301 = vunpack.c.h.b16 %v486
    %v2302 = vunpack.c.l.b16 %v487
    %v2303 = vunpack.c.h.b16 %v487
    %v2304 = vunpack.c.l.b16 %v488
    %v2305 = vunpack.c.h.b16 %v488
    %v2306 = vunpack.c.l.b16 %v489
    %v2307 = vunpack.c.h.b16 %v489
    %v2308 = vunpack.c.l.b16 %v490
    %v2309 = vunpack.c.h.b16 %v490
    %v2310 = vunpack.c.l.b16 %v491
    %v2311 = vunpack.c.h.b16 %v491
    %v2312 = vunpack.c.l.b16 %v492
    %v2313 = vunpack.c.h.b16 %v492
    %v2314 = vunpack.c.l.b16 %v493
    %v2315 = vunpack.c.h.b16 %v493
    %v2316 = vunpack.c.l.b16 %v494
    %v2317 = vunpack.c.h.b16 %v494
    %v2318 = vunpack.c.l.b16 %v495
    %v2319 = vunpack.c.h.b16 %v495
    %v2320 = vunpack.c.l.b16 %v496
    %v2321 = vunpack.c.h.b16 %v496
    %v2322 = vunpack.c.l.b16 %v497
    %v2323 = vunpack.c.h.b16 %v497
    %v2324 = vunpack.c.l.b16 %v498
    %v2325 = vunpack.c.h.b16 %v498
    %v2326 = vunpack.c.l.b16 %v499
    %v2327 = vunpack.c.h.b16 %v499
    %v2328 = vunpack.c.l.b16 %v500
    %v2329 = vunpack.c.h.b16 %v500
    %v2330 = vunpack.c.l.b16 %v501
    %v2331 = vunpack.c.h.b16 %v501
    %v2332 = vunpack.c.l.b16 %v502
    %v2333 = vunpack.c.h.b16 %v502
    %v2334 = vunpack.c.l.b16 %v503
    %v2335 = vunpack.c.h.b16 %v503
    %v2336 = vunpack.c.l.b16 %v504
    %v2337 = vunpack.c.h.b16 %v504
    %v2338 = vunpack.c.l.b16 %v505
    %v2339 = vunpack.c.h.b16 %v505
    %v2340 = vunpack.c.l.b16 %v506
    %v2341 = vunpack.c.h.b16 %v506
    %v2342 = vunpack.c.l.b16 %v507
    %v2343 = vunpack.c.h.b16 %v507
    %v2344 = vunpack.c.l.b16 %v508
    %v2345 = vunpack.c.h.b16 %v508
    %v2346 = vunpack.c.l.b16 %v509
    %v2347 = vunpack.c.h.b16 %v509
    %v2348 = vunpack.c.l.b16 %v510
    %v2349 = vunpack.c.h.b16 %v510
    %v2350 = vunpack.c.l.b16 %v511
    %v2351 = vunpack.c.h.b16 %v511
    %v2352 = vunpack.c.l.b16 %v512
    %v2353 = vunpack.c.h.b16 %v512
    %v2354 = vunpack.c.l.b16 %v513
    %v2355 = vunpack.c.h.b16 %v513
    %v2356 = vunpack.c.l.b16 %v514
    %v2357 = vunpack.c.h.b16 %v514
    %v2358 = vunpack.c.l.b16 %v515
    %v2359 = vunpack.c.h.b16 %v515
    %v2360 = vunpack.c.l.b16 %v516
    %v2361 = vunpack.c.h.b16 %v516
    %v2362 = vunpack.c.l.b16 %v517
    %v2363 = vunpack.c.h.b16 %v517
    %v2364 = vunpack.c.l.b16 %v518
    %v2365 = vunpack.c.h.b16 %v518
    %v2366 = vunpack.c.l.b16 %v519
    %v2367 = vunpack.c.h.b16 %v519
    %v2368 = vunpack.c.l.b16 %v520
    %v2369 = vunpack.c.h.b16 %v520
    %v2370 = vunpack.c.l.b16 %v521
    %v2371 = vunpack.c.h.b16 %v521
    %v2372 = vunpack.c.l.b16 %v522
    %v2373 = vunpack.c.h.b16 %v522
    %v2374 = vunpack.c.l.b16 %v523
    %v2375 = vunpack.c.h.b16 %v523
    %v2376 = vunpack.c.l.b16 %v524
    %v2377 = vunpack.c.h.b16 %v524
    %v2378 = vunpack.c.l.b16 %v525
    %v2379 = vunpack.c.h.b16 %v525
    %v2380 = vunpack.c.l.b16 %v526
    %v2381 = vunpack.c.h.b16 %v526
    %v2382 = vunpack.c.l.b16 %v527
    %v2383 = vunpack.c.h.b16 %v527
    %v2384 = vunpack.c.l.b16 %v528
    %v2385 = vunpack.c.h.b16 %v528
    %v2386 = vunpack.c.l.b16 %v529
    %v2387 = vunpack.c.h.b16 %v529
    %v2388 = vunpack.c.l.b16 %v530
    %v2389 = vunpack.c.h.b16 %v530
    %v2390 = vunpack.c.l.b16 %v531
    %v2391 = vunpack.c.h.b16 %v531
    %v2392 = vunpack.c.l.b16 %v532
    %v2393 = vunpack.c.h.b16 %v532
    %v2394 = vunpack.c.l.b16 %v533
    %v2395 = vunpack.c.h.b16 %v533
    %v2396 = vunpack.c.l.b16 %v534
    %v2397 = vunpack.c.h.b16 %v534
    %v2398 = vunpack.c.l.b16 %v535
    %v2399 = vunpack.c.h.b16 %v535
    %v2400 = vunpack.c.l.b16 %v536
    %v2401 = vunpack.c.h.b16 %v536
    %v2402 = vunpack.c.l.b16 %v537
    %v2403 = vunpack.c.h.b16 %v537
    %v2404 = vunpack.c.l.b16 %v538
    %v2405 = vunpack.c.h.b16 %v538
    %v2406 = vunpack.c.l.b16 %v539
    %v2407 = vunpack.c.h.b16 %v539
    %v2408 = vunpack.c.l.b16 %v540
    %v2409 = vunpack.c.h.b16 %v540
    %v2410 = vunpack.c.l.b16 %v541
    %v2411 = vunpack.c.h.b16 %v541
    %v2412 = vunpack.c.l.b16 %v542
    %v2413 = vunpack.c.h.b16 %v542
    %v2414 = vunpack.c.l.b16 %v543
    %v2415 = vunpack.c.h.b16 %v543
    %v2416 = vunpack.c.l.b16 %v544
    %v2417 = vunpack.c.h.b16 %v544
    %v2418 = vunpack.c.l.b16 %v545
    %v2419 = vunpack.c.h.b16 %v545
    %v2420 = vunpack.c.l.b16 %v546
    %v2421 = vunpack.c.h.b16 %v546
    %v2422 = vunpack.c.l.b16 %v547
    %v2423 = vunpack.c.h.b16 %v547
    %v2424 = vunpack.c.l.b16 %v548
    %v2425 = vunpack.c.h.b16 %v548
    %v2426 = vunpack.c.l.b16 %v549
    %v2427 = vunpack.c.h.b16 %v549
    %v2428 = vunpack.c.l.b16 %v550
    %v2429 = vunpack.c.h.b16 %v550
    %v2430 = vunpack.c.l.b16 %v551
    %v2431 = vunpack.c.h.b16 %v551
    %v2432 = vunpack.c.l.b16 %v552
    %v2433 = vunpack.c.h.b16 %v552
    %v2434 = vunpack.c.l.b16 %v553
    %v2435 = vunpack.c.h.b16 %v553
    %v2436 = vunpack.c.l.b16 %v554
    %v2437 = vunpack.c.h.b16 %v554
    %v2438 = vunpack.c.l.b16 %v555
    %v2439 = vunpack.c.h.b16 %v555
    %v2440 = vunpack.c.l.b16 %v556
    %v2441 = vunpack.c.h.b16 %v556
    %v2442 = vunpack.c.l.b16 %v557
    %v2443 = vunpack.c.h.b16 %v557
    %v2444 = vunpack.c.l.b16 %v558
    %v2445 = vunpack.c.h.b16 %v558
    %v2446 = vunpack.c.l.b16 %v559
    %v2447 = vunpack.c.h.b16 %v559
    %v2448 = vunpack.c.l.b16 %v560
    %v2449 = vunpack.c.h.b16 %v560
    %v2450 = vunpack.c.l.b16 %v561
    %v2451 = vunpack.c.h.b16 %v561
    %v2452 = vunpack.c.l.b16 %v562
    %v2453 = vunpack.c.h.b16 %v562
    %v2454 = vunpack.c.l.b16 %v563
    %v2455 = vunpack.c.h.b16 %v563
    %v2456 = vunpack.c.l.b16 %v564
    %v2457 = vunpack.c.h.b16 %v564
    %v2458 = vunpack.c.l.b16 %v565
    %v2459 = vunpack.c.h.b16 %v565
    %v2460 = vunpack.c.l.b16 %v566
    %v2461 = vunpack.c.h.b16 %v566
    %v2462 = vunpack.c.l.b16 %v567
    %v2463 = vunpack.c.h.b16 %v567
    %v2464 = vunpack.c.l.b16 %v568
    %v2465 = vunpack.c.h.b16 %v568
    %v2466 = vunpack.c.l.b16 %v569
    %v2467 = vunpack.c.h.b16 %v569
    %v2468 = vunpack.c.l.b16 %v570
    %v2469 = vunpack.c.h.b16 %v570
    %v2470 = vunpack.c.l.b16 %v571
    %v2471 = vunpack.c.h.b16 %v571
    %v2472 = vunpack.c.l.b16 %v572
    %v2473 = vunpack.c.h.b16 %v572
    %v2474 = vunpack.c.l.b16 %v573
    %v2475 = vunpack.c.h.b16 %v573
    %v2476 = vunpack.c.l.b16 %v574
    %v2477 = vunpack.c.h.b16 %v574
    %v2478 = vunpack.c.l.b16 %v575
    %v2479 = vunpack.c.h.b16 %v575
    %v2480 = vunpack.c.l.b16 %v576
    %v2481 = vunpack.c.h.b16 %v576
    %v2482 = vunpack.c.l.b16 %v577
    %v2483 = vunpack.c.h.b16 %v577
    %v2484 = vunpack.c.l.b16 %v578
    %v2485 = vunpack.c.h.b16 %v578
    %v2486 = vunpack.c.l.b16 %v579
    %v2487 = vunpack.c.h.b16 %v579
    %v2488 = vunpack.c.l.b16 %v580
    %v2489 = vunpack.c.h.b16 %v580
    %v2490 = vunpack.c.l.b16 %v581
    %v2491 = vunpack.c.h.b16 %v581
    %v2492 = vunpack.c.l.b16 %v582
    %v2493 = vunpack.c.h.b16 %v582
    %v2494 = vunpack.c.l.b16 %v583
    %v2495 = vunpack.c.h.b16 %v583
    %v2496 = vunpack.c.l.b16 %v584
    %v2497 = vunpack.c.h.b16 %v584
    %v2498 = vunpack.c.l.b16 %v585
    %v2499 = vunpack.c.h.b16 %v585
    %v2500 = vunpack.c.l.b16 %v586
    %v2501 = vunpack.c.h.b16 %v586
    %v2502 = vunpack.c.l.b16 %v587
    %v2503 = vunpack.c.h.b16 %v587
    %v2504 = vunpack.c.l.b16 %v588
    %v2505 = vunpack.c.h.b16 %v588
    %v2506 = vunpack.c.l.b16 %v589
    %v2507 = vunpack.c.h.b16 %v589
    %v2508 = vunpack.c.l.b16 %v590
    %v2509 = vunpack.c.h.b16 %v590
    %v2510 = vunpack.c.l.b16 %v591
    %v2511 = vunpack.c.h.b16 %v591
    %v2512 = vunpack.c.l.b16 %v592
    %v2513 = vunpack.c.h.b16 %v592
    %v2514 = vunpack.c.l.b16 %v593
    %v2515 = vunpack.c.h.b16 %v593
    %v2516 = vunpack.c.l.b16 %v594
    %v2517 = vunpack.c.h.b16 %v594
    %v2518 = vunpack.c.l.b16 %v595
    %v2519 = vunpack.c.h.b16 %v595
    %v2520 = vunpack.c.l.b16 %v596
    %v2521 = vunpack.c.h.b16 %v596
    %v2522 = vunpack.c.l.b16 %v597
    %v2523 = vunpack.c.h.b16 %v597
    %v2524 = vunpack.c.l.b16 %v598
    %v2525 = vunpack.c.h.b16 %v598
    %v2526 = vunpack.c.l.b16 %v599
    %v2527 = vunpack.c.h.b16 %v599
    %v2528 = vunpack.c.l.b16 %v600
    %v2529 = vunpack.c.h.b16 %v600
    %v2530 = vunpack.c.l.b16 %v601
    %v2531 = vunpack.c.h.b16 %v601
    %v2532 = vunpack.c.l.b16 %v602
    %v2533 = vunpack.c.h.b16 %v602
    %v2534 = vunpack.c.l.b16 %v603
    %v2535 = vunpack.c.h.b16 %v603
    %v2536 = vunpack.c.l.b16 %v604
    %v2537 = vunpack.c.h.b16 %v604
    %v2538 = vunpack.c.l.b16 %v605
    %v2539 = vunpack.c.h.b16 %v605
    %v2540 = vunpack.c.l.b16 %v606
    %v2541 = vunpack.c.h.b16 %v606
    %v2542 = vunpack.c.l.b16 %v607
    %v2543 = vunpack.c.h.b16 %v607
    %v2544 = vunpack.c.l.b16 %v608
    %v2545 = vunpack.c.h.b16 %v608
    %v2546 = vunpack.c.l.b16 %v609
    %v2547 = vunpack.c.h.b16 %v609
    %v2548 = vunpack.c.l.b16 %v610
    %v2549 = vunpack.c.h.b16 %v610
    %v2550 = vunpack.c.l.b16 %v611
    %v2551 = vunpack.c.h.b16 %v611
    %v2552 = vunpack.c.l.b16 %v612
    %v2553 = vunpack.c.h.b16 %v612
    %v2554 = vunpack.c.l.b16 %v613
    %v2555 = vunpack.c.h.b16 %v613
    %v2556 = vunpack.c.l.b16 %v614
    %v2557 = vunpack.c.h.b16 %v614
    %v2558 = vunpack.c.l.b16 %v615
    %v2559 = vunpack.c.h.b16 %v615
    %v2560 = vunpack.c.l.b16 %v616
    %v2561 = vunpack.c.h.b16 %v616
    %v2562 = vunpack.c.l.b16 %v617
    %v2563 = vunpack.c.h.b16 %v617
    %v2564 = vunpack.c.l.b16 %v618
    %v2565 = vunpack.c.h.b16 %v618
    %v2566 = vunpack.c.l.b16 %v619
    %v2567 = vunpack.c.h.b16 %v619
    %v2568 = vunpack.c.l.b16 %v620
    %v2569 = vunpack.c.h.b16 %v620
    %v2570 = vunpack.c.l.b16 %v621
    %v2571 = vunpack.c.h.b16 %v621
    %v2572 = vunpack.c.l.b16 %v622
    %v2573 = vunpack.c.h.b16 %v622
    %v2574 = vunpack.c.l.b16 %v623
    %v2575 = vunpack.c.h.b16 %v623
    %v2576 = vunpack.c.l.b16 %v624
    %v2577 = vunpack.c.h.b16 %v624
    %v2578 = vunpack.c.l.b16 %v625
    %v2579 = vunpack.c.h.b16 %v625
    %v2580 = vunpack.c.l.b16 %v626
    %v2581 = vunpack.c.h.b16 %v626
    %v2582 = vunpack.c.l.b16 %v627
    %v2583 = vunpack.c.h.b16 %v627
    %v2584 = vunpack.c.l.b16 %v628
    %v2585 = vunpack.c.h.b16 %v628
    %v2586 = vunpack.c.l.b16 %v629
    %v2587 = vunpack.c.h.b16 %v629
    %v2588 = vunpack.c.l.b16 %v630
    %v2589 = vunpack.c.h.b16 %v630
    %v2590 = vunpack.c.l.b16 %v631
    %v2591 = vunpack.c.h.b16 %v631
    %v2592 = vunpack.c.l.b16 %v632
    %v2593 = vunpack.c.h.b16 %v632
    %v2594 = vunpack.c.l.b16 %v633
    %v2595 = vunpack.c.h.b16 %v633
    %v2596 = vunpack.c.l.b16 %v634
    %v2597 = vunpack.c.h.b16 %v634
    %v2598 = vunpack.c.l.b16 %v635
    %v2599 = vunpack.c.h.b16 %v635
    %v2600 = vunpack.c.l.b16 %v636
    %v2601 = vunpack.c.h.b16 %v636
    %v2602 = vunpack.c.l.b16 %v637
    %v2603 = vunpack.c.h.b16 %v637
    %v2604 = vunpack.c.l.b16 %v638
    %v2605 = vunpack.c.h.b16 %v638
    %v2606 = vunpack.c.l.b16 %v639
    %v2607 = vunpack.c.h.b16 %v639
    %v2608 = vunpack.c.l.b16 %v640
    %v2609 = vunpack.c.h.b16 %v640
    %v2610 = vunpack.c.l.b16 %v641
    %v2611 = vunpack.c.h.b16 %v641
    %v2612 = vunpack.c.l.b16 %v642
    %v2613 = vunpack.c.h.b16 %v642
    %v2614 = vunpack.c.l.b16 %v643
    %v2615 = vunpack.c.h.b16 %v643
    %v2616 = vunpack.c.l.b16 %v644
    %v2617 = vunpack.c.h.b16 %v644
    %v2618 = vunpack.c.l.b16 %v645
    %v2619 = vunpack.c.h.b16 %v645
    %v2620 = vunpack.c.l.b16 %v646
    %v2621 = vunpack.c.h.b16 %v646
    %v2622 = vunpack.c.l.b16 %v647
    %v2623 = vunpack.c.h.b16 %v647
    %v2624 = vunpack.c.l.b16 %v648
    %v2625 = vunpack.c.h.b16 %v648
    %v2626 = vunpack.c.l.b16 %v649
    %v2627 = vunpack.c.h.b16 %v649
    %v2628 = vunpack.c.l.b16 %v650
    %v2629 = vunpack.c.h.b16 %v650
    %v2630 = vunpack.c.l.b16 %v651
    %v2631 = vunpack.c.h.b16 %v651
    %v2632 = vunpack.c.l.b16 %v652
    %v2633 = vunpack.c.h.b16 %v652
    %v2634 = vunpack.c.l.b16 %v653
    %v2635 = vunpack.c.h.b16 %v653
    %v2636 = vunpack.c.l.b16 %v654
    %v2637 = vunpack.c.h.b16 %v654
    %v2638 = vunpack.c.l.b16 %v655
    %v2639 = vunpack.c.h.b16 %v655
    %v2640 = vunpack.c.l.b16 %v656
    %v2641 = vunpack.c.h.b16 %v656
    %v2642 = vunpack.c.l.b16 %v657
    %v2643 = vunpack.c.h.b16 %v657
    %v2644 = vunpack.c.l.b16 %v658
    %v2645 = vunpack.c.h.b16 %v658
    %v2646 = vunpack.c.l.b16 %v659
    %v2647 = vunpack.c.h.b16 %v659
    %v2648 = vunpack.c.l.b16 %v660
    %v2649 = vunpack.c.h.b16 %v660
    %v2650 = vunpack.c.l.b16 %v661
    %v2651 = vunpack.c.h.b16 %v661
    %v2652 = vunpack.c.l.b16 %v662
    %v2653 = vunpack.c.h.b16 %v662
    %v2654 = vunpack.c.l.b16 %v663
    %v2655 = vunpack.c.h.b16 %v663
    %v2656 = vunpack.c.l.b16 %v664
    %v2657 = vunpack.c.h.b16 %v664
    %v2658 = vunpack.c.l.b16 %v665
    %v2659 = vunpack.c.h.b16 %v665
    %v2660 = vunpack.c.l.b16 %v666
    %v2661 = vunpack.c.h.b16 %v666
    %v2662 = vunpack.c.l.b16 %v667
    %v2663 = vunpack.c.h.b16 %v667
    %v2664 = vunpack.c.l.b16 %v668
    %v2665 = vunpack.c.h.b16 %v668
    %v2666 = vunpack.c.l.b16 %v669
    %v2667 = vunpack.c.h.b16 %v669
    %v2668 = vunpack.c.l.b16 %v670
    %v2669 = vunpack.c.h.b16 %v670
    %v2670 = vunpack.c.l.b16 %v671
    %v2671 = vunpack.c.h.b16 %v671
    %v2672 = vunpack.c.l.b16 %v672
    %v2673 = vunpack.c.h.b16 %v672
    %v2674 = vunpack.c.l.b16 %v673
    %v2675 = vunpack.c.h.b16 %v673
    %v2676 = vunpack.c.l.b16 %v674
    %v2677 = vunpack.c.h.b16 %v674
    %v2678 = vunpack.c.l.b16 %v675
    %v2679 = vunpack.c.h.b16 %v675
    %v2680 = vunpack.c.l.b16 %v676
    %v2681 = vunpack.c.h.b16 %v676
    %v2682 = vunpack.c.l.b16 %v677
    %v2683 = vunpack.c.h.b16 %v677
    %v2684 = vunpack.c.l.b16 %v678
    %v2685 = vunpack.c.h.b16 %v678
    %v2686 = vunpack.c.l.b16 %v679
    %v2687 = vunpack.c.h.b16 %v679
    %v2688 = vunpack.c.l.b16 %v680
    %v2689 = vunpack.c.h.b16 %v680
    %v2690 = vunpack.c.l.b16 %v681
    %v2691 = vunpack.c.h.b16 %v681
    %v2692 = vunpack.c.l.b16 %v682
    %v2693 = vunpack.c.h.b16 %v682
    %v2694 = vunpack.c.l.b16 %v683
    %v2695 = vunpack.c.h.b16 %v683
    %v2696 = vunpack.c.l.b16 %v684
    %v2697 = vunpack.c.h.b16 %v684
    %v2698 = vunpack.c.l.b16 %v685
    %v2699 = vunpack.c.h.b16 %v685
    %v2700 = vunpack.c.l.b16 %v686
    %v2701 = vunpack.c.h.b16 %v686
    %v2702 = vunpack.c.l.b16 %v687
    %v2703 = vunpack.c.h.b16 %v687
    %v2704 = vunpack.c.l.b16 %v688
    %v2705 = vunpack.c.h.b16 %v688
    %v2706 = vunpack.c.l.b16 %v689
    %v2707 = vunpack.c.h.b16 %v689
    %v2708 = vunpack.c.l.b16 %v690
    %v2709 = vunpack.c.h.b16 %v690
    %v2710 = vunpack.c.l.b16 %v691
    %v2711 = vunpack.c.h.b16 %v691
    %v2712 = vunpack.c.l.b16 %v692
    %v2713 = vunpack.c.h.b16 %v692
    %v2714 = vunpack.c.l.b16 %v693
    %v2715 = vunpack.c.h.b16 %v693
    %v2716 = vunpack.c.l.b16 %v694
    %v2717 = vunpack.c.h.b16 %v694
    %v2718 = vunpack.c.l.b16 %v695
    %v2719 = vunpack.c.h.b16 %v695
    %v2720 = vunpack.c.l.b16 %v696
    %v2721 = vunpack.c.h.b16 %v696
    %v2722 = vunpack.c.l.b16 %v697
    %v2723 = vunpack.c.h.b16 %v697
    %v2724 = vunpack.c.l.b16 %v698
    %v2725 = vunpack.c.h.b16 %v698
    %v2726 = vunpack.c.l.b16 %v699
    %v2727 = vunpack.c.h.b16 %v699
    %v2728 = vunpack.c.l.b16 %v700
    %v2729 = vunpack.c.h.b16 %v700
    %v2730 = vunpack.c.l.b16 %v701
    %v2731 = vunpack.c.h.b16 %v701
    %v2732 = vunpack.c.l.b16 %v702
    %v2733 = vunpack.c.h.b16 %v702
    %v2734 = vunpack.c.l.b16 %v703
    %v2735 = vunpack.c.h.b16 %v703
    %v2736 = vunpack.c.l.b16 %v704
    %v2737 = vunpack.c.h.b16 %v704
    %v2738 = vunpack.c.l.b16 %v705
    %v2739 = vunpack.c.h.b16 %v705
    %v2740 = vunpack.c.l.b16 %v706
    %v2741 = vunpack.c.h.b16 %v706
    %v2742 = vunpack.c.l.b16 %v707
    %v2743 = vunpack.c.h.b16 %v707
    %v2744 = vunpack.c.l.b16 %v708
    %v2745 = vunpack.c.h.b16 %v708
    %v2746 = vunpack.c.l.b16 %v709
    %v2747 = vunpack.c.h.b16 %v709
    %v2748 = vunpack.c.l.b16 %v710
    %v2749 = vunpack.c.h.b16 %v710
    %v2750 = vunpack.c.l.b16 %v711
    %v2751 = vunpack.c.h.b16 %v711
    %v2752 = vunpack.c.l.b16 %v712
    %v2753 = vunpack.c.h.b16 %v712
    %v2754 = vunpack.c.l.b16 %v713
    %v2755 = vunpack.c.h.b16 %v713
    %v2756 = vunpack.c.l.b16 %v714
    %v2757 = vunpack.c.h.b16 %v714
    %v2758 = vunpack.c.l.b16 %v715
    %v2759 = vunpack.c.h.b16 %v715
    %v2760 = vunpack.c.l.b16 %v716
    %v2761 = vunpack.c.h.b16 %v716
    %v2762 = vunpack.c.l.b16 %v717
    %v2763 = vunpack.c.h.b16 %v717
    %v2764 = vunpack.c.l.b16 %v718
    %v2765 = vunpack.c.h.b16 %v718
    %v2766 = vunpack.c.l.b16 %v719
    %v2767 = vunpack.c.h.b16 %v719
    %v2768 = vunpack.c.l.b16 %v720
    %v2769 = vunpack.c.h.b16 %v720
    %v2770 = vunpack.c.l.b16 %v721
    %v2771 = vunpack.c.h.b16 %v721
    %v2772 = vunpack.c.l.b16 %v722
    %v2773 = vunpack.c.h.b16 %v722
    %v2774 = vunpack.c.l.b16 %v723
    %v2775 = vunpack.c.h.b16 %v723
    %v2776 = vunpack.c.l.b16 %v724
    %v2777 = vunpack.c.h.b16 %v724
    %v2778 = vunpack.c.l.b16 %v725
    %v2779 = vunpack.c.h.b16 %v725
    %v2780 = vunpack.c.l.b16 %v726
    %v2781 = vunpack.c.h.b16 %v726
    %v2782 = vunpack.c.l.b16 %v727
    %v2783 = vunpack.c.h.b16 %v727
    %v2784 = vunpack.c.l.b16 %v728
    %v2785 = vunpack.c.h.b16 %v728
    %v2786 = vunpack.c.l.b16 %v729
    %v2787 = vunpack.c.h.b16 %v729
    %v2788 = vunpack.c.l.b16 %v730
    %v2789 = vunpack.c.h.b16 %v730
    %v2790 = vunpack.c.l.b16 %v731
    %v2791 = vunpack.c.h.b16 %v731
    %v2792 = vunpack.c.l.b16 %v732
    %v2793 = vunpack.c.h.b16 %v732
    %v2794 = vunpack.c.l.b16 %v733
    %v2795 = vunpack.c.h.b16 %v733
    %v2796 = vunpack.c.l.b16 %v734
    %v2797 = vunpack.c.h.b16 %v734
    %v2798 = vunpack.c.l.b16 %v735
    %v2799 = vunpack.c.h.b16 %v735
    %v2800 = vunpack.c.l.b16 %v736
    %v2801 = vunpack.c.h.b16 %v736
    %v2802 = vunpack.c.l.b16 %v737
    %v2803 = vunpack.c.h.b16 %v737
    %v2804 = vunpack.c.l.b16 %v738
    %v2805 = vunpack.c.h.b16 %v738
    %v2806 = vunpack.c.l.b16 %v739
    %v2807 = vunpack.c.h.b16 %v739
    %v2808 = vunpack.c.l.b16 %v740
    %v2809 = vunpack.c.h.b16 %v740
    %v2810 = vunpack.c.l.b16 %v741
    %v2811 = vunpack.c.h.b16 %v741
    %v2812 = vunpack.c.l.b16 %v742
    %v2813 = vunpack.c.h.b16 %v742
    %v2814 = vunpack.c.l.b16 %v743
    %v2815 = vunpack.c.h.b16 %v743
    %v2816 = vunpack.c.l.b16 %v744
    %v2817 = vunpack.c.h.b16 %v744
    %v2818 = vunpack.c.l.b16 %v745
    %v2819 = vunpack.c.h.b16 %v745
    %v2820 = vunpack.c.l.b16 %v746
    %v2821 = vunpack.c.h.b16 %v746
    %v2822 = vunpack.c.l.b16 %v747
    %v2823 = vunpack.c.h.b16 %v747
    %v2824 = vunpack.c.l.b16 %v748
    %v2825 = vunpack.c.h.b16 %v748
    %v2826 = vunpack.c.l.b16 %v749
    %v2827 = vunpack.c.h.b16 %v749
    %v2828 = vunpack.c.l.b16 %v750
    %v2829 = vunpack.c.h.b16 %v750
    %v2830 = vunpack.c.l.b16 %v751
    %v2831 = vunpack.c.h.b16 %v751
    %v2832 = vunpack.c.l.b16 %v752
    %v2833 = vunpack.c.h.b16 %v752
    %v2834 = vunpack.c.l.b16 %v753
    %v2835 = vunpack.c.h.b16 %v753
    %v2836 = vunpack.c.l.b16 %v754
    %v2837 = vunpack.c.h.b16 %v754
    %v2838 = vunpack.c.l.b16 %v755
    %v2839 = vunpack.c.h.b16 %v755
    %v2840 = vunpack.c.l.b16 %v756
    %v2841 = vunpack.c.h.b16 %v756
    %v2842 = vunpack.c.l.b16 %v757
    %v2843 = vunpack.c.h.b16 %v757
    %v2844 = vunpack.c.l.b16 %v758
    %v2845 = vunpack.c.h.b16 %v758
    %v2846 = vunpack.c.l.b16 %v759
    %v2847 = vunpack.c.h.b16 %v759
    %v2848 = vunpack.c.l.b16 %v760
    %v2849 = vunpack.c.h.b16 %v760
    %v2850 = vunpack.c.l.b16 %v761
    %v2851 = vunpack.c.h.b16 %v761
    %v2852 = vunpack.c.l.b16 %v762
    %v2853 = vunpack.c.h.b16 %v762
    %v2854 = vunpack.c.l.b16 %v763
    %v2855 = vunpack.c.h.b16 %v763
    %v2856 = vunpack.c.l.b16 %v764
    %v2857 = vunpack.c.h.b16 %v764
    %v2858 = vunpack.c.l.b16 %v765
    %v2859 = vunpack.c.h.b16 %v765
    %v2860 = vunpack.c.l.b16 %v766
    %v2861 = vunpack.c.h.b16 %v766
    %v2862 = vunpack.c.l.b16 %v767
    %v2863 = vunpack.c.h.b16 %v767
    %v2864 = vunpack.c.l.b16 %v768
    %v2865 = vunpack.c.h.b16 %v768
    %v2866 = vunpack.c.l.b16 %v769
    %v2867 = vunpack.c.h.b16 %v769
    %v2868 = vunpack.c.l.b16 %v770
    %v2869 = vunpack.c.h.b16 %v770
    %v2870 = vunpack.c.l.b16 %v771
    %v2871 = vunpack.c.h.b16 %v771
    %v2872 = vunpack.c.l.b16 %v772
    %v2873 = vunpack.c.h.b16 %v772
    %v2874 = vunpack.c.l.b16 %v773
    %v2875 = vunpack.c.h.b16 %v773
    %v2876 = vunpack.c.l.b16 %v774
    %v2877 = vunpack.c.h.b16 %v774
    %v2878 = vunpack.c.l.b16 %v775
    %v2879 = vunpack.c.h.b16 %v775
    %v2880 = vunpack.c.l.b16 %v776
    %v2881 = vunpack.c.h.b16 %v776
    %v2882 = vunpack.c.l.b16 %v777
    %v2883 = vunpack.c.h.b16 %v777
    %v2884 = vunpack.c.l.b16 %v778
    %v2885 = vunpack.c.h.b16 %v778
    %v2886 = vunpack.c.l.b16 %v779
    %v2887 = vunpack.c.h.b16 %v779
    %v2888 = vunpack.c.l.b16 %v780
    %v2889 = vunpack.c.h.b16 %v780
    %v2890 = vunpack.c.l.b16 %v781
    %v2891 = vunpack.c.h.b16 %v781
    %v2892 = vunpack.c.l.b16 %v782
    %v2893 = vunpack.c.h.b16 %v782
    %v2894 = vunpack.c.l.b16 %v783
    %v2895 = vunpack.c.h.b16 %v783
    %v2896 = vunpack.c.l.b16 %v784
    %v2897 = vunpack.c.h.b16 %v784
    %v2898 = vunpack.c.l.b16 %v785
    %v2899 = vunpack.c.h.b16 %v785
    %v2900 = vunpack.c.l.b16 %v786
    %v2901 = vunpack.c.h.b16 %v786
    %v2902 = vunpack.c.l.b16 %v787
    %v2903 = vunpack.c.h.b16 %v787
    %v2904 = vunpack.c.l.b16 %v788
    %v2905 = vunpack.c.h.b16 %v788
    %v2906 = vunpack.c.l.b16 %v789
    %v2907 = vunpack.c.h.b16 %v789
    %v2908 = vunpack.c.l.b16 %v790
    %v2909 = vunpack.c.h.b16 %v790
    %v2910 = vunpack.c.l.b16 %v791
    %v2911 = vunpack.c.h.b16 %v791
    %v2912 = vunpack.c.l.b16 %v792
    %v2913 = vunpack.c.h.b16 %v792
    %v2914 = vunpack.c.l.b16 %v793
    %v2915 = vunpack.c.h.b16 %v793
    %v2916 = vunpack.c.l.b16 %v794
    %v2917 = vunpack.c.h.b16 %v794
    %v2918 = vunpack.c.l.b16 %v795
    %v2919 = vunpack.c.h.b16 %v795
    %v2920 = vunpack.c.l.b16 %v796
    %v2921 = vunpack.c.h.b16 %v796
    %v2922 = vunpack.c.l.b16 %v797
    %v2923 = vunpack.c.h.b16 %v797
    %v2924 = vunpack.c.l.b16 %v798
    %v2925 = vunpack.c.h.b16 %v798
    %v2926 = vunpack.c.l.b16 %v799
    %v2927 = vunpack.c.h.b16 %v799
    %v2928 = vunpack.c.l.b16 %v800
    %v2929 = vunpack.c.h.b16 %v800
    %v2930 = vunpack.c.l.b16 %v801
    %v2931 = vunpack.c.h.b16 %v801
    %v2932 = vunpack.c.l.b16 %v802
    %v2933 = vunpack.c.h.b16 %v802
    %v2934 = vunpack.c.l.b16 %v803
    %v2935 = vunpack.c.h.b16 %v803
    %v2936 = vunpack.c.l.b16 %v804
    %v2937 = vunpack.c.h.b16 %v804
    %v2938 = vunpack.c.l.b16 %v805
    %v2939 = vunpack.c.h.b16 %v805
    %v2940 = vunpack.c.l.b16 %v806
    %v2941 = vunpack.c.h.b16 %v806
    %v2942 = vunpack.c.l.b16 %v807
    %v2943 = vunpack.c.h.b16 %v807
    %v2944 = vunpack.c.l.b16 %v808
    %v2945 = vunpack.c.h.b16 %v808
    %v2946 = vunpack.c.l.b16 %v809
    %v2947 = vunpack.c.h.b16 %v809
    %v2948 = vunpack.c.l.b16 %v810
    %v2949 = vunpack.c.h.b16 %v810
    %v2950 = vunpack.c.l.b16 %v811
    %v2951 = vunpack.c.h.b16 %v811
    %v2952 = vunpack.c.l.b16 %v812
    %v2953 = vunpack.c.h.b16 %v812
    %v2954 = vunpack.c.l.b16 %v813
    %v2955 = vunpack.c.h.b16 %v813
    %v2956 = vunpack.c.l.b16 %v814
    %v2957 = vunpack.c.h.b16 %v814
    %v2958 = vunpack.c.l.b16 %v815
    %v2959 = vunpack.c.h.b16 %v815
    %v2960 = vunpack.c.l.b16 %v816
    %v2961 = vunpack.c.h.b16 %v816
    %v2962 = vunpack.c.l.b16 %v817
    %v2963 = vunpack.c.h.b16 %v817
    %v2964 = vunpack.c.l.b16 %v818
    %v2965 = vunpack.c.h.b16 %v818
    %v2966 = vunpack.c.l.b16 %v819
    %v2967 = vunpack.c.h.b16 %v819
    %v2968 = vunpack.c.l.b16 %v820
    %v2969 = vunpack.c.h.b16 %v820
    %v2970 = vunpack.c.l.b16 %v821
    %v2971 = vunpack.c.h.b16 %v821
    %v2972 = vunpack.c.l.b16 %v822
    %v2973 = vunpack.c.h.b16 %v822
    %v2974 = vunpack.c.l.b16 %v823
    %v2975 = vunpack.c.h.b16 %v823
    %v2976 = vunpack.c.l.b16 %v824
    %v2977 = vunpack.c.h.b16 %v824
    %v2978 = vunpack.c.l.b16 %v825
    %v2979 = vunpack.c.h.b16 %v825
    %v2980 = vunpack.c.l.b16 %v826
    %v2981 = vunpack.c.h.b16 %v826
    %v2982 = vunpack.c.l.b16 %v827
    %v2983 = vunpack.c.h.b16 %v827
    %v2984 = vunpack.c.l.b16 %v828
    %v2985 = vunpack.c.h.b16 %v828
    %v2986 = vunpack.c.l.b16 %v829
    %v2987 = vunpack.c.h.b16 %v829
    %v2988 = vunpack.c.l.b16 %v830
    %v2989 = vunpack.c.h.b16 %v830
    %v2990 = vunpack.c.l.b16 %v831
    %v2991 = vunpack.c.h.b16 %v831
    %v2992 = vunpack.c.l.b16 %v832
    %v2993 = vunpack.c.h.b16 %v832
    %v2994 = vunpack.c.l.b16 %v833
    %v2995 = vunpack.c.h.b16 %v833
    %v2996 = vunpack.c.l.b16 %v834
    %v2997 = vunpack.c.h.b16 %v834
    %v2998 = vunpack.c.l.b16 %v835
    %v2999 = vunpack.c.h.b16 %v835
    %v3000 = vunpack.c.l.b16 %v836
    %v3001 = vunpack.c.h.b16 %v836
    %v3002 = vunpack.c.l.b16 %v837
    %v3003 = vunpack.c.h.b16 %v837
    %v3004 = vunpack.c.l.b16 %v838
    %v3005 = vunpack.c.h.b16 %v838
    %v3006 = vunpack.c.l.b16 %v839
    %v3007 = vunpack.c.h.b16 %v839
    %v3008 = vunpack.c.l.b16 %v840
    %v3009 = vunpack.c.h.b16 %v840
    %v3010 = vunpack.c.l.b16 %v841
    %v3011 = vunpack.c.h.b16 %v841
    %v3012 = vunpack.c.l.b16 %v842
    %v3013 = vunpack.c.h.b16 %v842
    %v3014 = vunpack.c.l.b16 %v843
    %v3015 = vunpack.c.h.b16 %v843
    %v3016 = vunpack.c.l.b16 %v844
    %v3017 = vunpack.c.h.b16 %v844
    %v3018 = vunpack.c.l.b16 %v845
    %v3019 = vunpack.c.h.b16 %v845
    %v3020 = vunpack.c.l.b16 %v846
    %v3021 = vunpack.c.h.b16 %v846
    %v3022 = vunpack.c.l.b16 %v847
    %v3023 = vunpack.c.h.b16 %v847
    %v3024 = vunpack.c.l.b16 %v848
    %v3025 = vunpack.c.h.b16 %v848
    %v3026 = vunpack.c.l.b16 %v849
    %v3027 = vunpack.c.h.b16 %v849
    %v3028 = vunpack.c.l.b16 %v850
    %v3029 = vunpack.c.h.b16 %v850
    %v3030 = vunpack.c.l.b16 %v851
    %v3031 = vunpack.c.h.b16 %v851
    %v3032 = vunpack.c.l.b16 %v852
    %v3033 = vunpack.c.h.b16 %v852
    %v3034 = vunpack.c.l.b16 %v853
    %v3035 = vunpack.c.h.b16 %v853
    %v3036 = vunpack.c.l.b16 %v854
    %v3037 = vunpack.c.h.b16 %v854
    %v3038 = vunpack.c.l.b16 %v855
    %v3039 = vunpack.c.h.b16 %v855
    %v3040 = vunpack.c.l.b16 %v856
    %v3041 = vunpack.c.h.b16 %v856
    %v3042 = vunpack.c.l.b16 %v857
    %v3043 = vunpack.c.h.b16 %v857
    %v3044 = vunpack.c.l.b16 %v858
    %v3045 = vunpack.c.h.b16 %v858
    %v3046 = vunpack.c.l.b16 %v859
    %v3047 = vunpack.c.h.b16 %v859
    %v3048 = vunpack.c.l.b16 %v860
    %v3049 = vunpack.c.h.b16 %v860
    %v3050 = vunpack.c.l.b16 %v861
    %v3051 = vunpack.c.h.b16 %v861
    %v3052 = vunpack.c.l.b16 %v862
    %v3053 = vunpack.c.h.b16 %v862
    %v3054 = vunpack.c.l.b16 %v863
    %v3055 = vunpack.c.h.b16 %v863
    %v3056 = vunpack.c.l.b16 %v864
    %v3057 = vunpack.c.h.b16 %v864
    %v3058 = vunpack.c.l.b16 %v865
    %v3059 = vunpack.c.h.b16 %v865
    %v3060 = vunpack.c.l.b16 %v866
    %v3061 = vunpack.c.h.b16 %v866
    %v3062 = vunpack.c.l.b16 %v867
    %v3063 = vunpack.c.h.b16 %v867
    %v3064 = vunpack.c.l.b16 %v868
    %v3065 = vunpack.c.h.b16 %v868
    %v3066 = vunpack.c.l.b16 %v869
    %v3067 = vunpack.c.h.b16 %v869
    %v3068 = vunpack.c.l.b16 %v870
    %v3069 = vunpack.c.h.b16 %v870
    %v3070 = vunpack.c.l.b16 %v871
    %v3071 = vunpack.c.h.b16 %v871
    %v3072 = vunpack.c.l.b16 %v872
    %v3073 = vunpack.c.h.b16 %v872
    %v3074 = vunpack.c.l.b16 %v873
    %v3075 = vunpack.c.h.b16 %v873
    %v3076 = vunpack.c.l.b16 %v874
    %v3077 = vunpack.c.h.b16 %v874
    %v3078 = vunpack.c.l.b16 %v875
    %v3079 = vunpack.c.h.b16 %v875
    %v3080 = vunpack.c.l.b16 %v876
    %v3081 = vunpack.c.h.b16 %v876
    %v3082 = vunpack.c.l.b16 %v877
    %v3083 = vunpack.c.h.b16 %v877
    %v3084 = vunpack.c.l.b16 %v878
    %v3085 = vunpack.c.h.b16 %v878
    %v3086 = vunpack.c.l.b16 %v879
    %v3087 = vunpack.c.h.b16 %v879
    %v3088 = vunpack.c.l.b16 %v880
    %v3089 = vunpack.c.h.b16 %v880
    %v3090 = vunpack.c.l.b16 %v881
    %v3091 = vunpack.c.h.b16 %v881
    %v3092 = vunpack.c.l.b16 %v882
    %v3093 = vunpack.c.h.b16 %v882
    %v3094 = vunpack.c.l.b16 %v883
    %v3095 = vunpack.c.h.b16 %v883
    %v3096 = vunpack.c.l.b16 %v884
    %v3097 = vunpack.c.h.b16 %v884
    %v3098 = vunpack.c.l.b16 %v885
    %v3099 = vunpack.c.h.b16 %v885
    %v3100 = vunpack.c.l.b16 %v886
    %v3101 = vunpack.c.h.b16 %v886
    %v3102 = vunpack.c.l.b16 %v887
    %v3103 = vunpack.c.h.b16 %v887
    %v3104 = vunpack.c.l.b16 %v888
    %v3105 = vunpack.c.h.b16 %v888
    %v3106 = vunpack.c.l.b16 %v889
    %v3107 = vunpack.c.h.b16 %v889
    %v3108 = vunpack.c.l.b16 %v890
    %v3109 = vunpack.c.h.b16 %v890
    %v3110 = vunpack.c.l.b16 %v891
    %v3111 = vunpack.c.h.b16 %v891
    %v3112 = vunpack.c.l.b16 %v892
    %v3113 = vunpack.c.h.b16 %v892
    %v3114 = vunpack.c.l.b16 %v893
    %v3115 = vunpack.c.h.b16 %v893
    %v3116 = vunpack.c.l.b16 %v894
    %v3117 = vunpack.c.h.b16 %v894
    %v3118 = vunpack.c.l.b16 %v895
    %v3119 = vunpack.c.h.b16 %v895
    %v3120 = vunpack.c.l.b16 %v896
    %v3121 = vunpack.c.h.b16 %v896
    %v3122 = vunpack.c.l.b16 %v897
    %v3123 = vunpack.c.h.b16 %v897
    %v3124 = vunpack.c.l.b16 %v898
    %v3125 = vunpack.c.h.b16 %v898
    %v3126 = vunpack.c.l.b16 %v899
    %v3127 = vunpack.c.h.b16 %v899
    %v3128 = vunpack.c.l.b16 %v900
    %v3129 = vunpack.c.h.b16 %v900
    %v3130 = vunpack.c.l.b16 %v901
    %v3131 = vunpack.c.h.b16 %v901
    %v3132 = vunpack.c.l.b16 %v902
    %v3133 = vunpack.c.h.b16 %v902
    %v3134 = vunpack.c.l.b16 %v903
    %v3135 = vunpack.c.h.b16 %v903
    %v3136 = vunpack.c.l.b16 %v904
    %v3137 = vunpack.c.h.b16 %v904
    %v3138 = vunpack.c.l.b16 %v905
    %v3139 = vunpack.c.h.b16 %v905
    %v3140 = vunpack.c.l.b16 %v906
    %v3141 = vunpack.c.h.b16 %v906
    %v3142 = vunpack.c.l.b16 %v907
    %v3143 = vunpack.c.h.b16 %v907
    %v3144 = vunpack.c.l.b16 %v908
    %v3145 = vunpack.c.h.b16 %v908
    %v3146 = vunpack.c.l.b16 %v909
    %v3147 = vunpack.c.h.b16 %v909
    %v3148 = vunpack.c.l.b16 %v910
    %v3149 = vunpack.c.h.b16 %v910
    %v3150 = vunpack.c.l.b16 %v911
    %v3151 = vunpack.c.h.b16 %v911
    %v3152 = vunpack.c.l.b16 %v912
    %v3153 = vunpack.c.h.b16 %v912
    %v3154 = vunpack.c.l.b16 %v913
    %v3155 = vunpack.c.h.b16 %v913
    %v3156 = vunpack.c.l.b16 %v914
    %v3157 = vunpack.c.h.b16 %v914
    %v3158 = vunpack.c.l.b16 %v915
    %v3159 = vunpack.c.h.b16 %v915
    %v3160 = vunpack.c.l.b16 %v916
    %v3161 = vunpack.c.h.b16 %v916
    %v3162 = vunpack.c.l.b16 %v917
    %v3163 = vunpack.c.h.b16 %v917
    %v3164 = vunpack.c.l.b16 %v918
    %v3165 = vunpack.c.h.b16 %v918
    %v3166 = vunpack.c.l.b16 %v919
    %v3167 = vunpack.c.h.b16 %v919
    %v3168 = vunpack.c.l.b16 %v920
    %v3169 = vunpack.c.h.b16 %v920
    %v3170 = vunpack.c.l.b16 %v921
    %v3171 = vunpack.c.h.b16 %v921
    %v3172 = vunpack.c.l.b16 %v922
    %v3173 = vunpack.c.h.b16 %v922
    %v3174 = vunpack.c.l.b16 %v923
    %v3175 = vunpack.c.h.b16 %v923
    %v3176 = vunpack.c.l.b16 %v924
    %v3177 = vunpack.c.h.b16 %v924
    %v3178 = vunpack.c.l.b16 %v925
    %v3179 = vunpack.c.h.b16 %v925
    %v3180 = vunpack.c.l.b16 %v926
    %v3181 = vunpack.c.h.b16 %v926
    %v3182 = vunpack.c.l.b16 %v927
    %v3183 = vunpack.c.h.b16 %v927
    %v3184 = vunpack.c.l.b16 %v928
    %v3185 = vunpack.c.h.b16 %v928
    %v3186 = vunpack.c.l.b16 %v929
    %v3187 = vunpack.c.h.b16 %v929
    %v3188 = vunpack.c.l.b16 %v930
    %v3189 = vunpack.c.h.b16 %v930
    %v3190 = vunpack.c.l.b16 %v931
    %v3191 = vunpack.c.h.b16 %v931
    %v3192 = vunpack.c.l.b16 %v932
    %v3193 = vunpack.c.h.b16 %v932
    %v3194 = vunpack.c.l.b16 %v933
    %v3195 = vunpack.c.h.b16 %v933
    %v3196 = vunpack.c.l.b16 %v934
    %v3197 = vunpack.c.h.b16 %v934
    %v3198 = vunpack.c.l.b16 %v935
    %v3199 = vunpack.c.h.b16 %v935
    %v3200 = vunpack.c.l.b16 %v936
    %v3201 = vunpack.c.h.b16 %v936
    %v3202 = vunpack.c.l.b16 %v937
    %v3203 = vunpack.c.h.b16 %v937
    %v3204 = vunpack.c.l.b16 %v938
    %v3205 = vunpack.c.h.b16 %v938
    %v3206 = vunpack.c.l.b16 %v939
    %v3207 = vunpack.c.h.b16 %v939
    %v3208 = vunpack.c.l.b16 %v940
    %v3209 = vunpack.c.h.b16 %v940
    %v3210 = vunpack.c.l.b16 %v941
    %v3211 = vunpack.c.h.b16 %v941
    %v3212 = vunpack.c.l.b16 %v942
    %v3213 = vunpack.c.h.b16 %v942
    %v3214 = vunpack.c.l.b16 %v943
    %v3215 = vunpack.c.h.b16 %v943
    %v3216 = vunpack.c.l.b16 %v944
    %v3217 = vunpack.c.h.b16 %v944
    %v3218 = vunpack.c.l.b16 %v945
    %v3219 = vunpack.c.h.b16 %v945
    %v3220 = vunpack.c.l.b16 %v946
    %v3221 = vunpack.c.h.b16 %v946
    %v3222 = vunpack.c.l.b16 %v947
    %v3223 = vunpack.c.h.b16 %v947
    %v3224 = vunpack.c.l.b16 %v948
    %v3225 = vunpack.c.h.b16 %v948
    %v3226 = vunpack.c.l.b16 %v949
    %v3227 = vunpack.c.h.b16 %v949
    %v3228 = vunpack.c.l.b16 %v950
    %v3229 = vunpack.c.h.b16 %v950
    %v3230 = vunpack.c.l.b16 %v951
    %v3231 = vunpack.c.h.b16 %v951
    %v3232 = vunpack.c.l.b16 %v952
    %v3233 = vunpack.c.h.b16 %v952
    %v3234 = vunpack.c.l.b16 %v953
    %v3235 = vunpack.c.h.b16 %v953
    %v3236 = vunpack.c.l.b16 %v954
    %v3237 = vunpack.c.h.b16 %v954
    %v3238 = vunpack.c.l.b16 %v955
    %v3239 = vunpack.c.h.b16 %v955
    %v3240 = vunpack.c.l.b16 %v956
    %v3241 = vunpack.c.h.b16 %v956
    %v3242 = vunpack.c.l.b16 %v957
    %v3243 = vunpack.c.h.b16 %v957
    %v3244 = vunpack.c.l.b16 %v958
    %v3245 = vunpack.c.h.b16 %v958
    %v3246 = vunpack.c.l.b16 %v959
    %v3247 = vunpack.c.h.b16 %v959
    %v3248 = vunpack.c.l.b16 %v960
    %v3249 = vunpack.c.h.b16 %v960
    %v3250 = vunpack.c.l.b16 %v961
    %v3251 = vunpack.c.h.b16 %v961
    %v3252 = vunpack.c.l.b16 %v962
    %v3253 = vunpack.c.h.b16 %v962
    %v3254 = vunpack.c.l.b16 %v963
    %v3255 = vunpack.c.h.b16 %v963
    %v3256 = vunpack.c.l.b16 %v964
    %v3257 = vunpack.c.h.b16 %v964
    %v3258 = vunpack.c.l.b16 %v965
    %v3259 = vunpack.c.h.b16 %v965
    %v3260 = vunpack.c.l.b16 %v966
    %v3261 = vunpack.c.h.b16 %v966
    %v3262 = vunpack.c.l.b16 %v967
    %v3263 = vunpack.c.h.b16 %v967
    %v3264 = vunpack.c.l.b16 %v968
    %v3265 = vunpack.c.h.b16 %v968
    %v3266 = vunpack.c.l.b16 %v969
    %v3267 = vunpack.c.h.b16 %v969
    %v3268 = vunpack.c.l.b16 %v970
    %v3269 = vunpack.c.h.b16 %v970
    %v3270 = vunpack.c.l.b16 %v971
    %v3271 = vunpack.c.h.b16 %v971
    %v3272 = vunpack.c.l.b16 %v972
    %v3273 = vunpack.c.h.b16 %v972
    %v3274 = vunpack.c.l.b16 %v973
    %v3275 = vunpack.c.h.b16 %v973
    %v3276 = vunpack.c.l.b16 %v974
    %v3277 = vunpack.c.h.b16 %v974
    %v3278 = vunpack.c.l.b16 %v975
    %v3279 = vunpack.c.h.b16 %v975
    %v3280 = vpack.c.b16 %v1760, %v1744
    %v3281 = vpack.c.b16 %v1761, %v1745
    %v3282 = vpack.c.b16 %v1762, %v1746
    %v3283 = vpack.c.b16 %v1763, %v1747
    %v3284 = vpack.c.b16 %v1764, %v1748
    %v3285 = vpack.c.b16 %v1765, %v1749
    %v3286 = vpack.c.b16 %v1766, %v1750
    %v3287 = vpack.c.b16 %v1767, %v1751
    %v3288 = vpack.c.b16 %v1768, %v1752
    %v3289 = vpack.c.b16 %v1769, %v1753
    %v3290 = vpack.c.b16 %v1770, %v1754
    %v3291 = vpack.c.b16 %v1771, %v1755
    %v3292 = vpack.c.b16 %v1772, %v1756
    %v3293 = vpack.c.b16 %v1773, %v1757
    %v3294 = vpack.c.b16 %v1774, %v1758
    %v3295 = vpack.c.b16 %v1775, %v1759
    %v3296 = vpack.c.b16 %v1792, %v1776
    %v3297 = vpack.c.b16 %v1793, %v1777
    %v3298 = vpack.c.b16 %v1794, %v1778
    %v3299 = vpack.c.b16 %v1795, %v1779
    %v3300 = vpack.c.b16 %v1796, %v1780
    %v3301 = vpack.c.b16 %v1797, %v1781
    %v3302 = vpack.c.b16 %v1798, %v1782
    %v3303 = vpack.c.b16 %v1799, %v1783
    %v3304 = vpack.c.b16 %v1800, %v1784
    %v3305 = vpack.c.b16 %v1801, %v1785
    %v3306 = vpack.c.b16 %v1802, %v1786
    %v3307 = vpack.c.b16 %v1803, %v1787
    %v3308 = vpack.c.b16 %v1804, %v1788
    %v3309 = vpack.c.b16 %v1805, %v1789
    %v3310 = vpack.c.b16 %v1806, %v1790
    %v3311 = vpack.c.b16 %v1807, %v1791
    %v3312 = vpack.c.b16 %v1824, %v1808
    %v3313 = vpack.c.b16 %v1825, %v1809
    %v3314 = vpack.c.b16 %v1826, %v1810
    %v3315 = vpack.c.b16 %v1827, %v1811
    %v3316 = vpack.c.b16 %v1828, %v1812
    %v3317 = vpack.c.b16 %v1829, %v1813
    %v3318 = vpack.c.b16 %v1830, %v1814
    %v3319 = vpack.c.b16 %v1831, %v1815
    %v3320 = vpack.c.b16 %v1832, %v1816
    %v3321 = vpack.c.b16 %v1833, %v1817
    %v3322 = vpack.c.b16 %v1834, %v1818
    %v3323 = vpack.c.b16 %v1835, %v1819
    %v3324 = vpack.c.b16 %v1836, %v1820
    %v3325 = vpack.c.b16 %v1837, %v1821
    %v3326 = vpack.c.b16 %v1838, %v1822
    %v3327 = vpack.c.b16 %v1839, %v1823
    %v3328 = vpack.c.b16 %v1856, %v1840
    %v3329 = vpack.c.b16 %v1857, %v1841
    %v3330 = vpack.c.b16 %v1858, %v1842
    %v3331 = vpack.c.b16 %v1859, %v1843
    %v3332 = vpack.c.b16 %v1860, %v1844
    %v3333 = vpack.c.b16 %v1861, %v1845
    %v3334 = vpack.c.b16 %v1862, %v1846
    %v3335 = vpack.c.b16 %v1863, %v1847
    %v3336 = vpack.c.b16 %v1864, %v1848
    %v3337 = vpack.c.b16 %v1865, %v1849
    %v3338 = vpack.c.b16 %v1866, %v1850
    %v3339 = vpack.c.b16 %v1867, %v1851
    %v3340 = vpack.c.b16 %v1868, %v1852
    %v3341 = vpack.c.b16 %v1869, %v1853
    %v3342 = vpack.c.b16 %v1870, %v1854
    %v3343 = vpack.c.b16 %v1871, %v1855
    %v3344 = vpack.c.b16 %v1888, %v1872
    %v3345 = vpack.c.b16 %v1889, %v1873
    %v3346 = vpack.c.b16 %v1890, %v1874
    %v3347 = vpack.c.b16 %v1891, %v1875
    %v3348 = vpack.c.b16 %v1892, %v1876
    %v3349 = vpack.c.b16 %v1893, %v1877
    %v3350 = vpack.c.b16 %v1894, %v1878
    %v3351 = vpack.c.b16 %v1895, %v1879
    %v3352 = vpack.c.b16 %v1896, %v1880
    %v3353 = vpack.c.b16 %v1897, %v1881
    %v3354 = vpack.c.b16 %v1898, %v1882
    %v3355 = vpack.c.b16 %v1899, %v1883
    %v3356 = vpack.c.b16 %v1900, %v1884
    %v3357 = vpack.c.b16 %v1901, %v1885
    %v3358 = vpack.c.b16 %v1902, %v1886
    %v3359 = vpack.c.b16 %v1903, %v1887
    %v3360 = vpack.c.b16 %v1920, %v1904
    %v3361 = vpack.c.b16 %v1921, %v1905
    %v3362 = vpack.c.b16 %v1922, %v1906
    %v3363 = vpack.c.b16 %v1923, %v1907
    %v3364 = vpack.c.b16 %v1924, %v1908
    %v3365 = vpack.c.b16 %v1925, %v1909
    %v3366 = vpack.c.b16 %v1926, %v1910
    %v3367 = vpack.c.b16 %v1927, %v1911
    %v3368 = vpack.c.b16 %v1928, %v1912
    %v3369 = vpack.c.b16 %v1929, %v1913
    %v3370 = vpack.c.b16 %v1930, %v1914
    %v3371 = vpack.c.b16 %v1931, %v1915
    %v3372 = vpack.c.b16 %v1932, %v1916
    %v3373 = vpack.c.b16 %v1933, %v1917
    %v3374 = vpack.c.b16 %v1934, %v1918
    %v3375 = vpack.c.b16 %v1935, %v1919
    %v3376 = vpack.c.b16 %v1952, %v1936
    %v3377 = vpack.c.b16 %v1953, %v1937
    %v3378 = vpack.c.b16 %v1954, %v1938
    %v3379 = vpack.c.b16 %v1955, %v1939
    %v3380 = vpack.c.b16 %v1956, %v1940
    %v3381 = vpack.c.b16 %v1957, %v1941
    %v3382 = vpack.c.b16 %v1958, %v1942
    %v3383 = vpack.c.b16 %v1959, %v1943
    %v3384 = vpack.c.b16 %v1960, %v1944
    %v3385 = vpack.c.b16 %v1961, %v1945
    %v3386 = vpack.c.b16 %v1962, %v1946
    %v3387 = vpack.c.b16 %v1963, %v1947
    %v3388 = vpack.c.b16 %v1964, %v1948
    %v3389 = vpack.c.b16 %v1965, %v1949
    %v3390 = vpack.c.b16 %v1966, %v1950
    %v3391 = vpack.c.b16 %v1967, %v1951
    %v3392 = vpack.c.b16 %v1984, %v1968
    %v3393 = vpack.c.b16 %v1985, %v1969
    %v3394 = vpack.c.b16 %v1986, %v1970
    %v3395 = vpack.c.b16 %v1987, %v1971
    %v3396 = vpack.c.b16 %v1988, %v1972
    %v3397 = vpack.c.b16 %v1989, %v1973
    %v3398 = vpack.c.b16 %v1990, %v1974
    %v3399 = vpack.c.b16 %v1991, %v1975
    %v3400 = vpack.c.b16 %v1992, %v1976
    %v3401 = vpack.c.b16 %v1993, %v1977
    %v3402 = vpack.c.b16 %v1994, %v1978
    %v3403 = vpack.c.b16 %v1995, %v1979
    %v3404 = vpack.c.b16 %v1996, %v1980
    %v3405 = vpack.c.b16 %v1997, %v1981
    %v3406 = vpack.c.b16 %v1998, %v1982
    %v3407 = vpack.c.b16 %v1999, %v1983
    %v3408 = vpack.c.b16 %v2016, %v2000
    %v3409 = vpack.c.b16 %v2017, %v2001
    %v3410 = vpack.c.b16 %v2018, %v2002
    %v3411 = vpack.c.b16 %v2019, %v2003
    %v3412 = vpack.c.b16 %v2020, %v2004
    %v3413 = vpack.c.b16 %v2021, %v2005
    %v3414 = vpack.c.b16 %v2022, %v2006
    %v3415 = vpack.c.b16 %v2023, %v2007
    %v3416 = vpack.c.b16 %v2024, %v2008
    %v3417 = vpack.c.b16 %v2025, %v2009
    %v3418 = vpack.c.b16 %v2026, %v2010
    %v3419 = vpack.c.b16 %v2027, %v2011
    %v3420 = vpack.c.b16 %v2028, %v2012
    %v3421 = vpack.c.b16 %v2029, %v2013
    %v3422 = vpack.c.b16 %v2030, %v2014
    %v3423 = vpack.c.b16 %v2031, %v2015
    %v3424 = vpack.c.b16 %v2048, %v2032
    %v3425 = vpack.c.b16 %v2049, %v2033
    %v3426 = vpack.c.b16 %v2050, %v2034
    %v3427 = vpack.c.b16 %v2051, %v2035
    %v3428 = vpack.c.b16 %v2052, %v2036
    %v3429 = vpack.c.b16 %v2053, %v2037
    %v3430 = vpack.c.b16 %v2054, %v2038
    %v3431 = vpack.c.b16 %v2055, %v2039
    %v3432 = vpack.c.b16 %v2056, %v2040
    %v3433 = vpack.c.b16 %v2057, %v2041
    %v3434 = vpack.c.b16 %v2058, %v2042
    %v3435 = vpack.c.b16 %v2059, %v2043
    %v3436 = vpack.c.b16 %v2060, %v2044
    %v3437 = vpack.c.b16 %v2061, %v2045
    %v3438 = vpack.c.b16 %v2062, %v2046
    %v3439 = vpack.c.b16 %v2063, %v2047
    %v3440 = vpack.c.b16 %v2080, %v2064
    %v3441 = vpack.c.b16 %v2081, %v2065
    %v3442 = vpack.c.b16 %v2082, %v2066
    %v3443 = vpack.c.b16 %v2083, %v2067
    %v3444 = vpack.c.b16 %v2084, %v2068
    %v3445 = vpack.c.b16 %v2085, %v2069
    %v3446 = vpack.c.b16 %v2086, %v2070
    %v3447 = vpack.c.b16 %v2087, %v2071
    %v3448 = vpack.c.b16 %v2088, %v2072
    %v3449 = vpack.c.b16 %v2089, %v2073
    %v3450 = vpack.c.b16 %v2090, %v2074
    %v3451 = vpack.c.b16 %v2091, %v2075
    %v3452 = vpack.c.b16 %v2092, %v2076
    %v3453 = vpack.c.b16 %v2093, %v2077
    %v3454 = vpack.c.b16 %v2094, %v2078
    %v3455 = vpack.c.b16 %v2095, %v2079
    %v3456 = vpack.c.b16 %v2112, %v2096
    %v3457 = vpack.c.b16 %v2113, %v2097
    %v3458 = vpack.c.b16 %v2114, %v2098
    %v3459 = vpack.c.b16 %v2115, %v2099
    %v3460 = vpack.c.b16 %v2116, %v2100
    %v3461 = vpack.c.b16 %v2117, %v2101
    %v3462 = vpack.c.b16 %v2118, %v2102
    %v3463 = vpack.c.b16 %v2119, %v2103
    %v3464 = vpack.c.b16 %v2120, %v2104
    %v3465 = vpack.c.b16 %v2121, %v2105
    %v3466 = vpack.c.b16 %v2122, %v2106
    %v3467 = vpack.c.b16 %v2123, %v2107
    %v3468 = vpack.c.b16 %v2124, %v2108
    %v3469 = vpack.c.b16 %v2125, %v2109
    %v3470 = vpack.c.b16 %v2126, %v2110
    %v3471 = vpack.c.b16 %v2127, %v2111
    %v3472 = vpack.c.b16 %v2144, %v2128
    %v3473 = vpack.c.b16 %v2145, %v2129
    %v3474 = vpack.c.b16 %v2146, %v2130
    %v3475 = vpack.c.b16 %v2147, %v2131
    %v3476 = vpack.c.b16 %v2148, %v2132
    %v3477 = vpack.c.b16 %v2149, %v2133
    %v3478 = vpack.c.b16 %v2150, %v2134
    %v3479 = vpack.c.b16 %v2151, %v2135
    %v3480 = vpack.c.b16 %v2152, %v2136
    %v3481 = vpack.c.b16 %v2153, %v2137
    %v3482 = vpack.c.b16 %v2154, %v2138
    %v3483 = vpack.c.b16 %v2155, %v2139
    %v3484 = vpack.c.b16 %v2156, %v2140
    %v3485 = vpack.c.b16 %v2157, %v2141
    %v3486 = vpack.c.b16 %v2158, %v2142
    %v3487 = vpack.c.b16 %v2159, %v2143
    %v3488 = vpack.c.b16 %v2176, %v2160
    %v3489 = vpack.c.b16 %v2177, %v2161
    %v3490 = vpack.c.b16 %v2178, %v2162
    %v3491 = vpack.c.b16 %v2179, %v2163
    %v3492 = vpack.c.b16 %v2180, %v2164
    %v3493 = vpack.c.b16 %v2181, %v2165
    %v3494 = vpack.c.b16 %v2182, %v2166
    %v3495 = vpack.c.b16 %v2183, %v2167
    %v3496 = vpack.c.b16 %v2184, %v2168
    %v3497 = vpack.c.b16 %v2185, %v2169
    %v3498 = vpack.c.b16 %v2186, %v2170
    %v3499 = vpack.c.b16 %v2187, %v2171
    %v3500 = vpack.c.b16 %v2188, %v2172
    %v3501 = vpack.c.b16 %v2189, %v2173
    %v3502 = vpack.c.b16 %v2190, %v2174
    %v3503 = vpack.c.b16 %v2191, %v2175
    %v3504 = vpack.c.b16 %v2208, %v2192
    %v3505 = vpack.c.b16 %v2209, %v2193
    %v3506 = vpack.c.b16 %v2210, %v2194
    %v3507 = vpack.c.b16 %v2211, %v2195
    %v3508 = vpack.c.b16 %v2212, %v2196
    %v3509 = vpack.c.b16 %v2213, %v2197
    %v3510 = vpack.c.b16 %v2214, %v2198
    %v3511 = vpack.c.b16 %v2215, %v2199
    %v3512 = vpack.c.b16 %v2216, %v2200
    %v3513 = vpack.c.b16 %v2217, %v2201
    %v3514 = vpack.c.b16 %v2218, %v2202
    %v3515 = vpack.c.b16 %v2219, %v2203
    %v3516 = vpack.c.b16 %v2220, %v2204
    %v3517 = vpack.c.b16 %v2221, %v2205
    %v3518 = vpack.c.b16 %v2222, %v2206
    %v3519 = vpack.c.b16 %v2223, %v2207
    %v3520 = vpack.c.b16 %v2240, %v2224
    %v3521 = vpack.c.b16 %v2241, %v2225
    %v3522 = vpack.c.b16 %v2242, %v2226
    %v3523 = vpack.c.b16 %v2243, %v2227
    %v3524 = vpack.c.b16 %v2244, %v2228
    %v3525 = vpack.c.b16 %v2245, %v2229
    %v3526 = vpack.c.b16 %v2246, %v2230
    %v3527 = vpack.c.b16 %v2247, %v2231
    %v3528 = vpack.c.b16 %v2248, %v2232
    %v3529 = vpack.c.b16 %v2249, %v2233
    %v3530 = vpack.c.b16 %v2250, %v2234
    %v3531 = vpack.c.b16 %v2251, %v2235
    %v3532 = vpack.c.b16 %v2252, %v2236
    %v3533 = vpack.c.b16 %v2253, %v2237
    %v3534 = vpack.c.b16 %v2254, %v2238
    %v3535 = vpack.c.b16 %v2255, %v2239
    %v3536 = vpack.c.b16 %v2272, %v2256
    %v3537 = vpack.c.b16 %v2273, %v2257
    %v3538 = vpack.c.b16 %v2274, %v2258
    %v3539 = vpack.c.b16 %v2275, %v2259
    %v3540 = vpack.c.b16 %v2276, %v2260
    %v3541 = vpack.c.b16 %v2277, %v2261
    %v3542 = vpack.c.b16 %v2278, %v2262
    %v3543 = vpack.c.b16 %v2279, %v2263
    %v3544 = vpack.c.b16 %v2280, %v2264
    %v3545 = vpack.c.b16 %v2281, %v2265
    %v3546 = vpack.c.b16 %v2282, %v2266
    %v3547 = vpack.c.b16 %v2283, %v2267
    %v3548 = vpack.c.b16 %v2284, %v2268
    %v3549 = vpack.c.b16 %v2285, %v2269
    %v3550 = vpack.c.b16 %v2286, %v2270
    %v3551 = vpack.c.b16 %v2287, %v2271
    %v3552 = vpack.c.b16 %v2304, %v2288
    %v3553 = vpack.c.b16 %v2305, %v2289
    %v3554 = vpack.c.b16 %v2306, %v2290
    %v3555 = vpack.c.b16 %v2307, %v2291
    %v3556 = vpack.c.b16 %v2308, %v2292
    %v3557 = vpack.c.b16 %v2309, %v2293
    %v3558 = vpack.c.b16 %v2310, %v2294
    %v3559 = vpack.c.b16 %v2311, %v2295
    %v3560 = vpack.c.b16 %v2312, %v2296
    %v3561 = vpack.c.b16 %v2313, %v2297
    %v3562 = vpack.c.b16 %v2314, %v2298
    %v3563 = vpack.c.b16 %v2315, %v2299
    %v3564 = vpack.c.b16 %v2316, %v2300
    %v3565 = vpack.c.b16 %v2317, %v2301
    %v3566 = vpack.c.b16 %v2318, %v2302
    %v3567 = vpack.c.b16 %v2319, %v2303
    %v3568 = vpack.c.b16 %v2336, %v2320
    %v3569 = vpack.c.b16 %v2337, %v2321
    %v3570 = vpack.c.b16 %v2338, %v2322
    %v3571 = vpack.c.b16 %v2339, %v2323
    %v3572 = vpack.c.b16 %v2340, %v2324
    %v3573 = vpack.c.b16 %v2341, %v2325
    %v3574 = vpack.c.b16 %v2342, %v2326
    %v3575 = vpack.c.b16 %v2343, %v2327
    %v3576 = vpack.c.b16 %v2344, %v2328
    %v3577 = vpack.c.b16 %v2345, %v2329
    %v3578 = vpack.c.b16 %v2346, %v2330
    %v3579 = vpack.c.b16 %v2347, %v2331
    %v3580 = vpack.c.b16 %v2348, %v2332
    %v3581 = vpack.c.b16 %v2349, %v2333
    %v3582 = vpack.c.b16 %v2350, %v2334
    %v3583 = vpack.c.b16 %v2351, %v2335
    %v3584 = vpack.c.b16 %v2368, %v2352
    %v3585 = vpack.c.b16 %v2369, %v2353
    %v3586 = vpack.c.b16 %v2370, %v2354
    %v3587 = vpack.c.b16 %v2371, %v2355
    %v3588 = vpack.c.b16 %v2372, %v2356
    %v3589 = vpack.c.b16 %v2373, %v2357
    %v3590 = vpack.c.b16 %v2374, %v2358
    %v3591 = vpack.c.b16 %v2375, %v2359
    %v3592 = vpack.c.b16 %v2376, %v2360
    %v3593 = vpack.c.b16 %v2377, %v2361
    %v3594 = vpack.c.b16 %v2378, %v2362
    %v3595 = vpack.c.b16 %v2379, %v2363
    %v3596 = vpack.c.b16 %v2380, %v2364
    %v3597 = vpack.c.b16 %v2381, %v2365
    %v3598 = vpack.c.b16 %v2382, %v2366
    %v3599 = vpack.c.b16 %v2383, %v2367
    %v3600 = vpack.c.b16 %v2400, %v2384
    %v3601 = vpack.c.b16 %v2401, %v2385
    %v3602 = vpack.c.b16 %v2402, %v2386
    %v3603 = vpack.c.b16 %v2403, %v2387
    %v3604 = vpack.c.b16 %v2404, %v2388
    %v3605 = vpack.c.b16 %v2405, %v2389
    %v3606 = vpack.c.b16 %v2406, %v2390
    %v3607 = vpack.c.b16 %v2407, %v2391
    %v3608 = vpack.c.b16 %v2408, %v2392
    %v3609 = vpack.c.b16 %v2409, %v2393
    %v3610 = vpack.c.b16 %v2410, %v2394
    %v3611 = vpack.c.b16 %v2411, %v2395
    %v3612 = vpack.c.b16 %v2412, %v2396
    %v3613 = vpack.c.b16 %v2413, %v2397
    %v3614 = vpack.c.b16 %v2414, %v2398
    %v3615 = vpack.c.b16 %v2415, %v2399
    %v3616 = vpack.c.b16 %v2432, %v2416
    %v3617 = vpack.c.b16 %v2433, %v2417
    %v3618 = vpack.c.b16 %v2434, %v2418
    %v3619 = vpack.c.b16 %v2435, %v2419
    %v3620 = vpack.c.b16 %v2436, %v2420
    %v3621 = vpack.c.b16 %v2437, %v2421
    %v3622 = vpack.c.b16 %v2438, %v2422
    %v3623 = vpack.c.b16 %v2439, %v2423
    %v3624 = vpack.c.b16 %v2440, %v2424
    %v3625 = vpack.c.b16 %v2441, %v2425
    %v3626 = vpack.c.b16 %v2442, %v2426
    %v3627 = vpack.c.b16 %v2443, %v2427
    %v3628 = vpack.c.b16 %v2444, %v2428
    %v3629 = vpack.c.b16 %v2445, %v2429
    %v3630 = vpack.c.b16 %v2446, %v2430
    %v3631 = vpack.c.b16 %v2447, %v2431
    %v3632 = vpack.c.b16 %v2464, %v2448
    %v3633 = vpack.c.b16 %v2465, %v2449
    %v3634 = vpack.c.b16 %v2466, %v2450
    %v3635 = vpack.c.b16 %v2467, %v2451
    %v3636 = vpack.c.b16 %v2468, %v2452
    %v3637 = vpack.c.b16 %v2469, %v2453
    %v3638 = vpack.c.b16 %v2470, %v2454
    %v3639 = vpack.c.b16 %v2471, %v2455
    %v3640 = vpack.c.b16 %v2472, %v2456
    %v3641 = vpack.c.b16 %v2473, %v2457
    %v3642 = vpack.c.b16 %v2474, %v2458
    %v3643 = vpack.c.b16 %v2475, %v2459
    %v3644 = vpack.c.b16 %v2476, %v2460
    %v3645 = vpack.c.b16 %v2477, %v2461
    %v3646 = vpack.c.b16 %v2478, %v2462
    %v3647 = vpack.c.b16 %v2479, %v2463
    %v3648 = vpack.c.b16 %v2496, %v2480
    %v3649 = vpack.c.b16 %v2497, %v2481
    %v3650 = vpack.c.b16 %v2498, %v2482
    %v3651 = vpack.c.b16 %v2499, %v2483
    %v3652 = vpack.c.b16 %v2500, %v2484
    %v3653 = vpack.c.b16 %v2501, %v2485
    %v3654 = vpack.c.b16 %v2502, %v2486
    %v3655 = vpack.c.b16 %v2503, %v2487
    %v3656 = vpack.c.b16 %v2504, %v2488
    %v3657 = vpack.c.b16 %v2505, %v2489
    %v3658 = vpack.c.b16 %v2506, %v2490
    %v3659 = vpack.c.b16 %v2507, %v2491
    %v3660 = vpack.c.b16 %v2508, %v2492
    %v3661 = vpack.c.b16 %v2509, %v2493
    %v3662 = vpack.c.b16 %v2510, %v2494
    %v3663 = vpack.c.b16 %v2511, %v2495
    %v3664 = vpack.c.b16 %v2528, %v2512
    %v3665 = vpack.c.b16 %v2529, %v2513
    %v3666 = vpack.c.b16 %v2530, %v2514
    %v3667 = vpack.c.b16 %v2531, %v2515
    %v3668 = vpack.c.b16 %v2532, %v2516
    %v3669 = vpack.c.b16 %v2533, %v2517
    %v3670 = vpack.c.b16 %v2534, %v2518
    %v3671 = vpack.c.b16 %v2535, %v2519
    %v3672 = vpack.c.b16 %v2536, %v2520
    %v3673 = vpack.c.b16 %v2537, %v2521
    %v3674 = vpack.c.b16 %v2538, %v2522
    %v3675 = vpack.c.b16 %v2539, %v2523
    %v3676 = vpack.c.b16 %v2540, %v2524
    %v3677 = vpack.c.b16 %v2541, %v2525
    %v3678 = vpack.c.b16 %v2542, %v2526
    %v3679 = vpack.c.b16 %v2543, %v2527
    %v3680 = vpack.c.b16 %v2560, %v2544
    %v3681 = vpack.c.b16 %v2561, %v2545
    %v3682 = vpack.c.b16 %v2562, %v2546
    %v3683 = vpack.c.b16 %v2563, %v2547
    %v3684 = vpack.c.b16 %v2564, %v2548
    %v3685 = vpack.c.b16 %v2565, %v2549
    %v3686 = vpack.c.b16 %v2566, %v2550
    %v3687 = vpack.c.b16 %v2567, %v2551
    %v3688 = vpack.c.b16 %v2568, %v2552
    %v3689 = vpack.c.b16 %v2569, %v2553
    %v3690 = vpack.c.b16 %v2570, %v2554
    %v3691 = vpack.c.b16 %v2571, %v2555
    %v3692 = vpack.c.b16 %v2572, %v2556
    %v3693 = vpack.c.b16 %v2573, %v2557
    %v3694 = vpack.c.b16 %v2574, %v2558
    %v3695 = vpack.c.b16 %v2575, %v2559
    %v3696 = vpack.c.b16 %v2592, %v2576
    %v3697 = vpack.c.b16 %v2593, %v2577
    %v3698 = vpack.c.b16 %v2594, %v2578
    %v3699 = vpack.c.b16 %v2595, %v2579
    %v3700 = vpack.c.b16 %v2596, %v2580
    %v3701 = vpack.c.b16 %v2597, %v2581
    %v3702 = vpack.c.b16 %v2598, %v2582
    %v3703 = vpack.c.b16 %v2599, %v2583
    %v3704 = vpack.c.b16 %v2600, %v2584
    %v3705 = vpack.c.b16 %v2601, %v2585
    %v3706 = vpack.c.b16 %v2602, %v2586
    %v3707 = vpack.c.b16 %v2603, %v2587
    %v3708 = vpack.c.b16 %v2604, %v2588
    %v3709 = vpack.c.b16 %v2605, %v2589
    %v3710 = vpack.c.b16 %v2606, %v2590
    %v3711 = vpack.c.b16 %v2607, %v2591
    %v3712 = vpack.c.b16 %v2624, %v2608
    %v3713 = vpack.c.b16 %v2625, %v2609
    %v3714 = vpack.c.b16 %v2626, %v2610
    %v3715 = vpack.c.b16 %v2627, %v2611
    %v3716 = vpack.c.b16 %v2628, %v2612
    %v3717 = vpack.c.b16 %v2629, %v2613
    %v3718 = vpack.c.b16 %v2630, %v2614
    %v3719 = vpack.c.b16 %v2631, %v2615
    %v3720 = vpack.c.b16 %v2632, %v2616
    %v3721 = vpack.c.b16 %v2633, %v2617
    %v3722 = vpack.c.b16 %v2634, %v2618
    %v3723 = vpack.c.b16 %v2635, %v2619
    %v3724 = vpack.c.b16 %v2636, %v2620
    %v3725 = vpack.c.b16 %v2637, %v2621
    %v3726 = vpack.c.b16 %v2638, %v2622
    %v3727 = vpack.c.b16 %v2639, %v2623
    %v3728 = vpack.c.b16 %v2656, %v2640
    %v3729 = vpack.c.b16 %v2657, %v2641
    %v3730 = vpack.c.b16 %v2658, %v2642
    %v3731 = vpack.c.b16 %v2659, %v2643
    %v3732 = vpack.c.b16 %v2660, %v2644
    %v3733 = vpack.c.b16 %v2661, %v2645
    %v3734 = vpack.c.b16 %v2662, %v2646
    %v3735 = vpack.c.b16 %v2663, %v2647
    %v3736 = vpack.c.b16 %v2664, %v2648
    %v3737 = vpack.c.b16 %v2665, %v2649
    %v3738 = vpack.c.b16 %v2666, %v2650
    %v3739 = vpack.c.b16 %v2667, %v2651
    %v3740 = vpack.c.b16 %v2668, %v2652
    %v3741 = vpack.c.b16 %v2669, %v2653
    %v3742 = vpack.c.b16 %v2670, %v2654
    %v3743 = vpack.c.b16 %v2671, %v2655
    %v3744 = vpack.c.b16 %v2688, %v2672
    %v3745 = vpack.c.b16 %v2689, %v2673
    %v3746 = vpack.c.b16 %v2690, %v2674
    %v3747 = vpack.c.b16 %v2691, %v2675
    %v3748 = vpack.c.b16 %v2692, %v2676
    %v3749 = vpack.c.b16 %v2693, %v2677
    %v3750 = vpack.c.b16 %v2694, %v2678
    %v3751 = vpack.c.b16 %v2695, %v2679
    %v3752 = vpack.c.b16 %v2696, %v2680
    %v3753 = vpack.c.b16 %v2697, %v2681
    %v3754 = vpack.c.b16 %v2698, %v2682
    %v3755 = vpack.c.b16 %v2699, %v2683
    %v3756 = vpack.c.b16 %v2700, %v2684
    %v3757 = vpack.c.b16 %v2701, %v2685
    %v3758 = vpack.c.b16 %v2702, %v2686
    %v3759 = vpack.c.b16 %v2703, %v2687
    %v3760 = vpack.c.b16 %v2720, %v2704
    %v3761 = vpack.c.b16 %v2721, %v2705
    %v3762 = vpack.c.b16 %v2722, %v2706
    %v3763 = vpack.c.b16 %v2723, %v2707
    %v3764 = vpack.c.b16 %v2724, %v2708
    %v3765 = vpack.c.b16 %v2725, %v2709
    %v3766 = vpack.c.b16 %v2726, %v2710
    %v3767 = vpack.c.b16 %v2727, %v2711
    %v3768 = vpack.c.b16 %v2728, %v2712
    %v3769 = vpack.c.b16 %v2729, %v2713
    %v3770 = vpack.c.b16 %v2730, %v2714
    %v3771 = vpack.c.b16 %v2731, %v2715
    %v3772 = vpack.c.b16 %v2732, %v2716
    %v3773 = vpack.c.b16 %v2733, %v2717
    %v3774 = vpack.c.b16 %v2734, %v2718
    %v3775 = vpack.c.b16 %v2735, %v2719
    %v3776 = vpack.c.b16 %v2752, %v2736
    %v3777 = vpack.c.b16 %v2753, %v2737
    %v3778 = vpack.c.b16 %v2754, %v2738
    %v3779 = vpack.c.b16 %v2755, %v2739
    %v3780 = vpack.c.b16 %v2756, %v2740
    %v3781 = vpack.c.b16 %v2757, %v2741
    %v3782 = vpack.c.b16 %v2758, %v2742
    %v3783 = vpack.c.b16 %v2759, %v2743
    %v3784 = vpack.c.b16 %v2760, %v2744
    %v3785 = vpack.c.b16 %v2761, %v2745
    %v3786 = vpack.c.b16 %v2762, %v2746
    %v3787 = vpack.c.b16 %v2763, %v2747
    %v3788 = vpack.c.b16 %v2764, %v2748
    %v3789 = vpack.c.b16 %v2765, %v2749
    %v3790 = vpack.c.b16 %v2766, %v2750
    %v3791 = vpack.c.b16 %v2767, %v2751
    %v3792 = vpack.c.b16 %v2784, %v2768
    %v3793 = vpack.c.b16 %v2785, %v2769
    %v3794 = vpack.c.b16 %v2786, %v2770
    %v3795 = vpack.c.b16 %v2787, %v2771
    %v3796 = vpack.c.b16 %v2788, %v2772
    %v3797 = vpack.c.b16 %v2789, %v2773
    %v3798 = vpack.c.b16 %v2790, %v2774
    %v3799 = vpack.c.b16 %v2791, %v2775
    %v3800 = vpack.c.b16 %v2792, %v2776
    %v3801 = vpack.c.b16 %v2793, %v2777
    %v3802 = vpack.c.b16 %v2794, %v2778
    %v3803 = vpack.c.b16 %v2795, %v2779
    %v3804 = vpack.c.b16 %v2796, %v2780
    %v3805 = vpack.c.b16 %v2797, %v2781
    %v3806 = vpack.c.b16 %v2798, %v2782
    %v3807 = vpack.c.b16 %v2799, %v2783
    %v3808 = vpack.c.b16 %v2816, %v2800
    %v3809 = vpack.c.b16 %v2817, %v2801
    %v3810 = vpack.c.b16 %v2818, %v2802
    %v3811 = vpack.c.b16 %v2819, %v2803
    %v3812 = vpack.c.b16 %v2820, %v2804
    %v3813 = vpack.c.b16 %v2821, %v2805
    %v3814 = vpack.c.b16 %v2822, %v2806
    %v3815 = vpack.c.b16 %v2823, %v2807
    %v3816 = vpack.c.b16 %v2824, %v2808
    %v3817 = vpack.c.b16 %v2825, %v2809
    %v3818 = vpack.c.b16 %v2826, %v2810
    %v3819 = vpack.c.b16 %v2827, %v2811
    %v3820 = vpack.c.b16 %v2828, %v2812
    %v3821 = vpack.c.b16 %v2829, %v2813
    %v3822 = vpack.c.b16 %v2830, %v2814
    %v3823 = vpack.c.b16 %v2831, %v2815
    %v3824 = vpack.c.b16 %v2848, %v2832
    %v3825 = vpack.c.b16 %v2849, %v2833
    %v3826 = vpack.c.b16 %v2850, %v2834
    %v3827 = vpack.c.b16 %v2851, %v2835
    %v3828 = vpack.c.b16 %v2852, %v2836
    %v3829 = vpack.c.b16 %v2853, %v2837
    %v3830 = vpack.c.b16 %v2854, %v2838
    %v3831 = vpack.c.b16 %v2855, %v2839
    %v3832 = vpack.c.b16 %v2856, %v2840
    %v3833 = vpack.c.b16 %v2857, %v2841
    %v3834 = vpack.c.b16 %v2858, %v2842
    %v3835 = vpack.c.b16 %v2859, %v2843
    %v3836 = vpack.c.b16 %v2860, %v2844
    %v3837 = vpack.c.b16 %v2861, %v2845
    %v3838 = vpack.c.b16 %v2862, %v2846
    %v3839 = vpack.c.b16 %v2863, %v2847
    %v3840 = vpack.c.b16 %v2880, %v2864
    %v3841 = vpack.c.b16 %v2881, %v2865
    %v3842 = vpack.c.b16 %v2882, %v2866
    %v3843 = vpack.c.b16 %v2883, %v2867
    %v3844 = vpack.c.b16 %v2884, %v2868
    %v3845 = vpack.c.b16 %v2885, %v2869
    %v3846 = vpack.c.b16 %v2886, %v2870
    %v3847 = vpack.c.b16 %v2887, %v2871
    %v3848 = vpack.c.b16 %v2888, %v2872
    %v3849 = vpack.c.b16 %v2889, %v2873
    %v3850 = vpack.c.b16 %v2890, %v2874
    %v3851 = vpack.c.b16 %v2891, %v2875
    %v3852 = vpack.c.b16 %v2892, %v2876
    %v3853 = vpack.c.b16 %v2893, %v2877
    %v3854 = vpack.c.b16 %v2894, %v2878
    %v3855 = vpack.c.b16 %v2895, %v2879
    %v3856 = vpack.c.b16 %v2912, %v2896
    %v3857 = vpack.c.b16 %v2913, %v2897
    %v3858 = vpack.c.b16 %v2914, %v2898
    %v3859 = vpack.c.b16 %v2915, %v2899
    %v3860 = vpack.c.b16 %v2916, %v2900
    %v3861 = vpack.c.b16 %v2917, %v2901
    %v3862 = vpack.c.b16 %v2918, %v2902
    %v3863 = vpack.c.b16 %v2919, %v2903
    %v3864 = vpack.c.b16 %v2920, %v2904
    %v3865 = vpack.c.b16 %v2921, %v2905
    %v3866 = vpack.c.b16 %v2922, %v2906
    %v3867 = vpack.c.b16 %v2923, %v2907
    %v3868 = vpack.c.b16 %v2924, %v2908
    %v3869 = vpack.c.b16 %v2925, %v2909
    %v3870 = vpack.c.b16 %v2926, %v2910
    %v3871 = vpack.c.b16 %v2927, %v2911
    %v3872 = vpack.c.b16 %v2944, %v2928
    %v3873 = vpack.c.b16 %v2945, %v2929
    %v3874 = vpack.c.b16 %v2946, %v2930
    %v3875 = vpack.c.b16 %v2947, %v2931
    %v3876 = vpack.c.b16 %v2948, %v2932
    %v3877 = vpack.c.b16 %v2949, %v2933
    %v3878 = vpack.c.b16 %v2950, %v2934
    %v3879 = vpack.c.b16 %v2951, %v2935
    %v3880 = vpack.c.b16 %v2952, %v2936
    %v3881 = vpack.c.b16 %v2953, %v2937
    %v3882 = vpack.c.b16 %v2954, %v2938
    %v3883 = vpack.c.b16 %v2955, %v2939
    %v3884 = vpack.c.b16 %v2956, %v2940
    %v3885 = vpack.c.b16 %v2957, %v2941
    %v3886 = vpack.c.b16 %v2958, %v2942
    %v3887 = vpack.c.b16 %v2959, %v2943
    %v3888 = vpack.c.b16 %v2976, %v2960
    %v3889 = vpack.c.b16 %v2977, %v2961
    %v3890 = vpack.c.b16 %v2978, %v2962
    %v3891 = vpack.c.b16 %v2979, %v2963
    %v3892 = vpack.c.b16 %v2980, %v2964
    %v3893 = vpack.c.b16 %v2981, %v2965
    %v3894 = vpack.c.b16 %v2982, %v2966
    %v3895 = vpack.c.b16 %v2983, %v2967
    %v3896 = vpack.c.b16 %v2984, %v2968
    %v3897 = vpack.c.b16 %v2985, %v2969
    %v3898 = vpack.c.b16 %v2986, %v2970
    %v3899 = vpack.c.b16 %v2987, %v2971
    %v3900 = vpack.c.b16 %v2988, %v2972
    %v3901 = vpack.c.b16 %v2989, %v2973
    %v3902 = vpack.c.b16 %v2990, %v2974
    %v3903 = vpack.c.b16 %v2991, %v2975
    %v3904 = vpack.c.b16 %v3008, %v2992
    %v3905 = vpack.c.b16 %v3009, %v2993
    %v3906 = vpack.c.b16 %v3010, %v2994
    %v3907 = vpack.c.b16 %v3011, %v2995
    %v3908 = vpack.c.b16 %v3012, %v2996
    %v3909 = vpack.c.b16 %v3013, %v2997
    %v3910 = vpack.c.b16 %v3014, %v2998
    %v3911 = vpack.c.b16 %v3015, %v2999
    %v3912 = vpack.c.b16 %v3016, %v3000
    %v3913 = vpack.c.b16 %v3017, %v3001
    %v3914 = vpack.c.b16 %v3018, %v3002
    %v3915 = vpack.c.b16 %v3019, %v3003
    %v3916 = vpack.c.b16 %v3020, %v3004
    %v3917 = vpack.c.b16 %v3021, %v3005
    %v3918 = vpack.c.b16 %v3022, %v3006
    %v3919 = vpack.c.b16 %v3023, %v3007
    %v3920 = vpack.c.b16 %v3040, %v3024
    %v3921 = vpack.c.b16 %v3041, %v3025
    %v3922 = vpack.c.b16 %v3042, %v3026
    %v3923 = vpack.c.b16 %v3043, %v3027
    %v3924 = vpack.c.b16 %v3044, %v3028
    %v3925 = vpack.c.b16 %v3045, %v3029
    %v3926 = vpack.c.b16 %v3046, %v3030
    %v3927 = vpack.c.b16 %v3047, %v3031
    %v3928 = vpack.c.b16 %v3048, %v3032
    %v3929 = vpack.c.b16 %v3049, %v3033
    %v3930 = vpack.c.b16 %v3050, %v3034
    %v3931 = vpack.c.b16 %v3051, %v3035
    %v3932 = vpack.c.b16 %v3052, %v3036
    %v3933 = vpack.c.b16 %v3053, %v3037
    %v3934 = vpack.c.b16 %v3054, %v3038
    %v3935 = vpack.c.b16 %v3055, %v3039
    %v3936 = vpack.c.b16 %v3072, %v3056
    %v3937 = vpack.c.b16 %v3073, %v3057
    %v3938 = vpack.c.b16 %v3074, %v3058
    %v3939 = vpack.c.b16 %v3075, %v3059
    %v3940 = vpack.c.b16 %v3076, %v3060
    %v3941 = vpack.c.b16 %v3077, %v3061
    %v3942 = vpack.c.b16 %v3078, %v3062
    %v3943 = vpack.c.b16 %v3079, %v3063
    %v3944 = vpack.c.b16 %v3080, %v3064
    %v3945 = vpack.c.b16 %v3081, %v3065
    %v3946 = vpack.c.b16 %v3082, %v3066
    %v3947 = vpack.c.b16 %v3083, %v3067
    %v3948 = vpack.c.b16 %v3084, %v3068
    %v3949 = vpack.c.b16 %v3085, %v3069
    %v3950 = vpack.c.b16 %v3086, %v3070
    %v3951 = vpack.c.b16 %v3087, %v3071
    %v3952 = vpack.c.b16 %v3104, %v3088
    %v3953 = vpack.c.b16 %v3105, %v3089
    %v3954 = vpack.c.b16 %v3106, %v3090
    %v3955 = vpack.c.b16 %v3107, %v3091
    %v3956 = vpack.c.b16 %v3108, %v3092
    %v3957 = vpack.c.b16 %v3109, %v3093
    %v3958 = vpack.c.b16 %v3110, %v3094
    %v3959 = vpack.c.b16 %v3111, %v3095
    %v3960 = vpack.c.b16 %v3112, %v3096
    %v3961 = vpack.c.b16 %v3113, %v3097
    %v3962 = vpack.c.b16 %v3114, %v3098
    %v3963 = vpack.c.b16 %v3115, %v3099
    %v3964 = vpack.c.b16 %v3116, %v3100
    %v3965 = vpack.c.b16 %v3117, %v3101
    %v3966 = vpack.c.b16 %v3118, %v3102
    %v3967 = vpack.c.b16 %v3119, %v3103
    %v3968 = vpack.c.b16 %v3136, %v3120
    %v3969 = vpack.c.b16 %v3137, %v3121
    %v3970 = vpack.c.b16 %v3138, %v3122
    %v3971 = vpack.c.b16 %v3139, %v3123
    %v3972 = vpack.c.b16 %v3140, %v3124
    %v3973 = vpack.c.b16 %v3141, %v3125
    %v3974 = vpack.c.b16 %v3142, %v3126
    %v3975 = vpack.c.b16 %v3143, %v3127
    %v3976 = vpack.c.b16 %v3144, %v3128
    %v3977 = vpack.c.b16 %v3145, %v3129
    %v3978 = vpack.c.b16 %v3146, %v3130
    %v3979 = vpack.c.b16 %v3147, %v3131
    %v3980 = vpack.c.b16 %v3148, %v3132
    %v3981 = vpack.c.b16 %v3149, %v3133
    %v3982 = vpack.c.b16 %v3150, %v3134
    %v3983 = vpack.c.b16 %v3151, %v3135
    %v3984 = vpack.c.b16 %v3168, %v3152
    %v3985 = vpack.c.b16 %v3169, %v3153
    %v3986 = vpack.c.b16 %v3170, %v3154
    %v3987 = vpack.c.b16 %v3171, %v3155
    %v3988 = vpack.c.b16 %v3172, %v3156
    %v3989 = vpack.c.b16 %v3173, %v3157
    %v3990 = vpack.c.b16 %v3174, %v3158
    %v3991 = vpack.c.b16 %v3175, %v3159
    %v3992 = vpack.c.b16 %v3176, %v3160
    %v3993 = vpack.c.b16 %v3177, %v3161
    %v3994 = vpack.c.b16 %v3178, %v3162
    %v3995 = vpack.c.b16 %v3179, %v3163
    %v3996 = vpack.c.b16 %v3180, %v3164
    %v3997 = vpack.c.b16 %v3181, %v3165
    %v3998 = vpack.c.b16 %v3182, %v3166
    %v3999 = vpack.c.b16 %v3183, %v3167
    %v4000 = vpack.c.b16 %v3200, %v3184
    %v4001 = vpack.c.b16 %v3201, %v3185
    %v4002 = vpack.c.b16 %v3202, %v3186
    %v4003 = vpack.c.b16 %v3203, %v3187
    %v4004 = vpack.c.b16 %v3204, %v3188
    %v4005 = vpack.c.b16 %v3205, %v3189
    %v4006 = vpack.c.b16 %v3206, %v3190
    %v4007 = vpack.c.b16 %v3207, %v3191
    %v4008 = vpack.c.b16 %v3208, %v3192
    %v4009 = vpack.c.b16 %v3209, %v3193
    %v4010 = vpack.c.b16 %v3210, %v3194
    %v4011 = vpack.c.b16 %v3211, %v3195
    %v4012 = vpack.c.b16 %v3212, %v3196
    %v4013 = vpack.c.b16 %v3213, %v3197
    %v4014 = vpack.c.b16 %v3214, %v3198
    %v4015 = vpack.c.b16 %v3215, %v3199
    %v4016 = vpack.c.b16 %v3232, %v3216
    %v4017 = vpack.c.b16 %v3233, %v3217
    %v4018 = vpack.c.b16 %v3234, %v3218
    %v4019 = vpack.c.b16 %v3235, %v3219
    %v4020 = vpack.c.b16 %v3236, %v3220
    %v4021 = vpack.c.b16 %v3237, %v3221
    %v4022 = vpack.c.b16 %v3238, %v3222
    %v4023 = vpack.c.b16 %v3239, %v3223
    %v4024 = vpack.c.b16 %v3240, %v3224
    %v4025 = vpack.c.b16 %v3241, %v3225
    %v4026 = vpack.c.b16 %v3242, %v3226
    %v4027 = vpack.c.b16 %v3243, %v3227
    %v4028 = vpack.c.b16 %v3244, %v3228
    %v4029 = vpack.c.b16 %v3245, %v3229
    %v4030 = vpack.c.b16 %v3246, %v3230
    %v4031 = vpack.c.b16 %v3247, %v3231
    %v4032 = vpack.c.b16 %v3264, %v3248
    %v4033 = vpack.c.b16 %v3265, %v3249
    %v4034 = vpack.c.b16 %v3266, %v3250
    %v4035 = vpack.c.b16 %v3267, %v3251
    %v4036 = vpack.c.b16 %v3268, %v3252
    %v4037 = vpack.c.b16 %v3269, %v3253
    %v4038 = vpack.c.b16 %v3270, %v3254
    %v4039 = vpack.c.b16 %v3271, %v3255
    %v4040 = vpack.c.b16 %v3272, %v3256
    %v4041 = vpack.c.b16 %v3273, %v3257
    %v4042 = vpack.c.b16 %v3274, %v3258
    %v4043 = vpack.c.b16 %v3275, %v3259
    %v4044 = vpack.c.b16 %v3276, %v3260
    %v4045 = vpack.c.b16 %v3277, %v3261
    %v4046 = vpack.c.b16 %v3278, %v3262
    %v4047 = vpack.c.b16 %v3279, %v3263
    %4816 = vmatprep.subr.bf16.mxu0 %v3393
    %4817 = vmatpush1.bf16.msra.mxu0 %v3392
    %4818 = vmatprep.subr.bf16.mxu0 %v3377
    %4819 = vmatpush1.bf16.msra.mxu0 %v3376
    %4820 = vmatprep.subr.bf16.mxu0 %v3361
    %4821 = vmatpush1.bf16.msra.mxu0 %v3360
    %4822 = vmatprep.subr.bf16.mxu0 %v3345
    %4823 = vmatpush1.bf16.msra.mxu0 %v3344
    %4824 = vmatprep.subr.bf16.mxu0 %v3329
    %4825 = vmatpush1.bf16.msra.mxu0 %v3328
    %4826 = vmatprep.subr.bf16.mxu0 %v3313
    %4827 = vmatpush1.bf16.msra.mxu0 %v3312
    %4828 = vmatprep.subr.bf16.mxu0 %v3297
    %4829 = vmatpush1.bf16.msra.mxu0 %v3296
    %4830 = vmatprep.subr.bf16.mxu0 %v3281
    %4831 = vmatpush1.bf16.msra.mxu0 %v3280
    %4832 = vmatprep.subr.bf16.mxu0 %v3521
    %4833 = vmatpush2.bf16.msra.mxu0 %v3520
    %4834 = vmatprep.subr.bf16.mxu0 %v3505
    %4835 = vmatpush2.bf16.msra.mxu0 %v3504
    %4836 = vmatprep.subr.bf16.mxu0 %v3489
    %4837 = vmatpush2.bf16.msra.mxu0 %v3488
    %4838 = vmatprep.subr.bf16.mxu0 %v3473
    %4839 = vmatpush2.bf16.msra.mxu0 %v3472
    %4840 = vmatprep.subr.bf16.mxu0 %v3457
    %4841 = vmatpush2.bf16.msra.mxu0 %v3456
    %4842 = vmatprep.subr.bf16.mxu0 %v3441
    %4843 = vmatpush2.bf16.msra.mxu0 %v3440
    %4844 = vmatprep.subr.bf16.mxu0 %v3425
    %4845 = vmatpush2.bf16.msra.mxu0 %v3424
    %4846 = vmatprep.subr.bf16.mxu0 %v3409
    %4847 = vmatpush2.bf16.msra.mxu0 %v3408
    %4848 = vmatprep.mubr.bf16.mxu0 %v203
    %4849 = vmatmul.mubr.bf16.gmra.mxu0 %v202
    %v4850 = vpop.f32.mrf.mxu0
    %v4851 = vadd.f32 0.0, %v4850
    %v4852 = vpop.f32.mrf.mxu0
    %v4853 = vadd.f32 0.0, %v4852
    %v4854 = vpop.f32.mrf.mxu0
    %v4855 = vpop.f32.mrf.mxu0
    %4856 = vdwg.mxu0
    %4857 = vmatprep.subr.bf16.mxu0 %v3649
    %4858 = vmatpush1.bf16.msra.mxu0 %v3648
    %4859 = vmatprep.subr.bf16.mxu0 %v3633
    %4860 = vmatpush1.bf16.msra.mxu0 %v3632
    %4861 = vmatprep.subr.bf16.mxu0 %v3617
    %4862 = vmatpush1.bf16.msra.mxu0 %v3616
    %4863 = vmatprep.subr.bf16.mxu0 %v3601
    %4864 = vmatpush1.bf16.msra.mxu0 %v3600
    %4865 = vmatprep.subr.bf16.mxu0 %v3585
    %4866 = vmatpush1.bf16.msra.mxu0 %v3584
    %4867 = vmatprep.subr.bf16.mxu0 %v3569
    %4868 = vmatpush1.bf16.msra.mxu0 %v3568
    %4869 = vmatprep.subr.bf16.mxu0 %v3553
    %4870 = vmatpush1.bf16.msra.mxu0 %v3552
    %4871 = vmatprep.subr.bf16.mxu0 %v3537
    %4872 = vmatpush1.bf16.msra.mxu0 %v3536
    %4873 = vmatprep.subr.bf16.mxu0 %v3777
    %4874 = vmatpush2.bf16.msra.mxu0 %v3776
    %4875 = vmatprep.subr.bf16.mxu0 %v3761
    %4876 = vmatpush2.bf16.msra.mxu0 %v3760
    %4877 = vmatprep.subr.bf16.mxu0 %v3745
    %4878 = vmatpush2.bf16.msra.mxu0 %v3744
    %4879 = vmatprep.subr.bf16.mxu0 %v3729
    %4880 = vmatpush2.bf16.msra.mxu0 %v3728
    %4881 = vmatprep.subr.bf16.mxu0 %v3713
    %4882 = vmatpush2.bf16.msra.mxu0 %v3712
    %4883 = vmatprep.subr.bf16.mxu0 %v3697
    %4884 = vmatpush2.bf16.msra.mxu0 %v3696
    %4885 = vmatprep.subr.bf16.mxu0 %v3681
    %4886 = vmatpush2.bf16.msra.mxu0 %v3680
    %4887 = vmatprep.subr.bf16.mxu0 %v3665
    %4888 = vmatpush2.bf16.msra.mxu0 %v3664
    %4889 = vmatprep.mubr.bf16.mxu0 %v205
    %4890 = vmatmul.mubr.bf16.gmra.mxu0 %v204
    %v4891 = vpop.f32.mrf.mxu0
    %v4892 = vadd.f32 %v4851, %v4891
    %v4893 = vpop.f32.mrf.mxu0
    %v4894 = vadd.f32 %v4853, %v4893
    %v4895 = vpop.f32.mrf.mxu0
    %v4896 = vpop.f32.mrf.mxu0
    %4897 = vdwg.mxu0
    %4898 = vmatprep.subr.bf16.mxu0 %v3905
    %4899 = vmatpush1.bf16.msra.mxu0 %v3904
    %4900 = vmatprep.subr.bf16.mxu0 %v3889
    %4901 = vmatpush1.bf16.msra.mxu0 %v3888
    %4902 = vmatprep.subr.bf16.mxu0 %v3873
    %4903 = vmatpush1.bf16.msra.mxu0 %v3872
    %4904 = vmatprep.subr.bf16.mxu0 %v3857
    %4905 = vmatpush1.bf16.msra.mxu0 %v3856
    %4906 = vmatprep.subr.bf16.mxu0 %v3841
    %4907 = vmatpush1.bf16.msra.mxu0 %v3840
    %4908 = vmatprep.subr.bf16.mxu0 %v3825
    %4909 = vmatpush1.bf16.msra.mxu0 %v3824
    %4910 = vmatprep.subr.bf16.mxu0 %v3809
    %4911 = vmatpush1.bf16.msra.mxu0 %v3808
    %4912 = vmatprep.subr.bf16.mxu0 %v3793
    %4913 = vmatpush1.bf16.msra.mxu0 %v3792
    %4914 = vmatprep.subr.bf16.mxu0 %v4033
    %4915 = vmatpush2.bf16.msra.mxu0 %v4032
    %4916 = vmatprep.subr.bf16.mxu0 %v4017
    %4917 = vmatpush2.bf16.msra.mxu0 %v4016
    %4918 = vmatprep.subr.bf16.mxu0 %v4001
    %4919 = vmatpush2.bf16.msra.mxu0 %v4000
    %4920 = vmatprep.subr.bf16.mxu0 %v3985
    %4921 = vmatpush2.bf16.msra.mxu0 %v3984
    %4922 = vmatprep.subr.bf16.mxu0 %v3969
    %4923 = vmatpush2.bf16.msra.mxu0 %v3968
    %4924 = vmatprep.subr.bf16.mxu0 %v3953
    %4925 = vmatpush2.bf16.msra.mxu0 %v3952
    %4926 = vmatprep.subr.bf16.mxu0 %v3937
    %4927 = vmatpush2.bf16.msra.mxu0 %v3936
    %4928 = vmatprep.subr.bf16.mxu0 %v3921
    %4929 = vmatpush2.bf16.msra.mxu0 %v3920
    %4930 = vmatprep.mubr.bf16.mxu0 %v207
    %4931 = vmatmul.mubr.bf16.gmra.mxu0 %v206
    %v4932 = vpop.f32.mrf.mxu0
    %v4933 = vadd.f32 %v4892, %v4932
    %v4934 = vpop.f32.mrf.mxu0
    %v4935 = vadd.f32 %v4894, %v4934
    %v4936 = vpop.f32.mrf.mxu0
    %v4937 = vpop.f32.mrf.mxu0
    %4938 = vdwg.mxu0
    %4939 = vmatprep.subr.bf16.mxu0 %v3395
    %4940 = vmatpush1.bf16.msra.mxu0 %v3394
    %4941 = vmatprep.subr.bf16.mxu0 %v3379
    %4942 = vmatpush1.bf16.msra.mxu0 %v3378
    %4943 = vmatprep.subr.bf16.mxu0 %v3363
    %4944 = vmatpush1.bf16.msra.mxu0 %v3362
    %4945 = vmatprep.subr.bf16.mxu0 %v3347
    %4946 = vmatpush1.bf16.msra.mxu0 %v3346
    %4947 = vmatprep.subr.bf16.mxu0 %v3331
    %4948 = vmatpush1.bf16.msra.mxu0 %v3330
    %4949 = vmatprep.subr.bf16.mxu0 %v3315
    %4950 = vmatpush1.bf16.msra.mxu0 %v3314
    %4951 = vmatprep.subr.bf16.mxu0 %v3299
    %4952 = vmatpush1.bf16.msra.mxu0 %v3298
    %4953 = vmatprep.subr.bf16.mxu0 %v3283
    %4954 = vmatpush1.bf16.msra.mxu0 %v3282
    %4955 = vmatprep.subr.bf16.mxu0 %v3523
    %4956 = vmatpush2.bf16.msra.mxu0 %v3522
    %4957 = vmatprep.subr.bf16.mxu0 %v3507
    %4958 = vmatpush2.bf16.msra.mxu0 %v3506
    %4959 = vmatprep.subr.bf16.mxu0 %v3491
    %4960 = vmatpush2.bf16.msra.mxu0 %v3490
    %4961 = vmatprep.subr.bf16.mxu0 %v3475
    %4962 = vmatpush2.bf16.msra.mxu0 %v3474
    %4963 = vmatprep.subr.bf16.mxu0 %v3459
    %4964 = vmatpush2.bf16.msra.mxu0 %v3458
    %4965 = vmatprep.subr.bf16.mxu0 %v3443
    %4966 = vmatpush2.bf16.msra.mxu0 %v3442
    %4967 = vmatprep.subr.bf16.mxu0 %v3427
    %4968 = vmatpush2.bf16.msra.mxu0 %v3426
    %4969 = vmatprep.subr.bf16.mxu0 %v3411
    %4970 = vmatpush2.bf16.msra.mxu0 %v3410
    %4971 = vmatprep.mubr.bf16.mxu0 %v203
    %4972 = vmatmul.mubr.bf16.gmra.mxu0 %v202
    %v4973 = vpop.f32.mrf.mxu0
    %v4974 = vadd.f32 0.0, %v4973
    %v4975 = vpop.f32.mrf.mxu0
    %v4976 = vadd.f32 0.0, %v4975
    %v4977 = vpop.f32.mrf.mxu0
    %v4978 = vpop.f32.mrf.mxu0
    %4979 = vdwg.mxu0
    %4980 = vmatprep.subr.bf16.mxu0 %v3651
    %4981 = vmatpush1.bf16.msra.mxu0 %v3650
    %4982 = vmatprep.subr.bf16.mxu0 %v3635
    %4983 = vmatpush1.bf16.msra.mxu0 %v3634
    %4984 = vmatprep.subr.bf16.mxu0 %v3619
    %4985 = vmatpush1.bf16.msra.mxu0 %v3618
    %4986 = vmatprep.subr.bf16.mxu0 %v3603
    %4987 = vmatpush1.bf16.msra.mxu0 %v3602
    %4988 = vmatprep.subr.bf16.mxu0 %v3587
    %4989 = vmatpush1.bf16.msra.mxu0 %v3586
    %4990 = vmatprep.subr.bf16.mxu0 %v3571
    %4991 = vmatpush1.bf16.msra.mxu0 %v3570
    %4992 = vmatprep.subr.bf16.mxu0 %v3555
    %4993 = vmatpush1.bf16.msra.mxu0 %v3554
    %4994 = vmatprep.subr.bf16.mxu0 %v3539
    %4995 = vmatpush1.bf16.msra.mxu0 %v3538
    %4996 = vmatprep.subr.bf16.mxu0 %v3779
    %4997 = vmatpush2.bf16.msra.mxu0 %v3778
    %4998 = vmatprep.subr.bf16.mxu0 %v3763
    %4999 = vmatpush2.bf16.msra.mxu0 %v3762
    %5000 = vmatprep.subr.bf16.mxu0 %v3747
    %5001 = vmatpush2.bf16.msra.mxu0 %v3746
    %5002 = vmatprep.subr.bf16.mxu0 %v3731
    %5003 = vmatpush2.bf16.msra.mxu0 %v3730
    %5004 = vmatprep.subr.bf16.mxu0 %v3715
    %5005 = vmatpush2.bf16.msra.mxu0 %v3714
    %5006 = vmatprep.subr.bf16.mxu0 %v3699
    %5007 = vmatpush2.bf16.msra.mxu0 %v3698
    %5008 = vmatprep.subr.bf16.mxu0 %v3683
    %5009 = vmatpush2.bf16.msra.mxu0 %v3682
    %5010 = vmatprep.subr.bf16.mxu0 %v3667
    %5011 = vmatpush2.bf16.msra.mxu0 %v3666
    %5012 = vmatprep.mubr.bf16.mxu0 %v205
    %5013 = vmatmul.mubr.bf16.gmra.mxu0 %v204
    %v5014 = vpop.f32.mrf.mxu0
    %v5015 = vadd.f32 %v4974, %v5014
    %v5016 = vpop.f32.mrf.mxu0
    %v5017 = vadd.f32 %v4976, %v5016
    %v5018 = vpop.f32.mrf.mxu0
    %v5019 = vpop.f32.mrf.mxu0
    %5020 = vdwg.mxu0
    %5021 = vmatprep.subr.bf16.mxu0 %v3907
    %5022 = vmatpush1.bf16.msra.mxu0 %v3906
    %5023 = vmatprep.subr.bf16.mxu0 %v3891
    %5024 = vmatpush1.bf16.msra.mxu0 %v3890
    %5025 = vmatprep.subr.bf16.mxu0 %v3875
    %5026 = vmatpush1.bf16.msra.mxu0 %v3874
    %5027 = vmatprep.subr.bf16.mxu0 %v3859
    %5028 = vmatpush1.bf16.msra.mxu0 %v3858
    %5029 = vmatprep.subr.bf16.mxu0 %v3843
    %5030 = vmatpush1.bf16.msra.mxu0 %v3842
    %5031 = vmatprep.subr.bf16.mxu0 %v3827
    %5032 = vmatpush1.bf16.msra.mxu0 %v3826
    %5033 = vmatprep.subr.bf16.mxu0 %v3811
    %5034 = vmatpush1.bf16.msra.mxu0 %v3810
    %5035 = vmatprep.subr.bf16.mxu0 %v3795
    %5036 = vmatpush1.bf16.msra.mxu0 %v3794
    %5037 = vmatprep.subr.bf16.mxu0 %v4035
    %5038 = vmatpush2.bf16.msra.mxu0 %v4034
    %5039 = vmatprep.subr.bf16.mxu0 %v4019
    %5040 = vmatpush2.bf16.msra.mxu0 %v4018
    %5041 = vmatprep.subr.bf16.mxu0 %v4003
    %5042 = vmatpush2.bf16.msra.mxu0 %v4002
    %5043 = vmatprep.subr.bf16.mxu0 %v3987
    %5044 = vmatpush2.bf16.msra.mxu0 %v3986
    %5045 = vmatprep.subr.bf16.mxu0 %v3971
    %5046 = vmatpush2.bf16.msra.mxu0 %v3970
    %5047 = vmatprep.subr.bf16.mxu0 %v3955
    %5048 = vmatpush2.bf16.msra.mxu0 %v3954
    %5049 = vmatprep.subr.bf16.mxu0 %v3939
    %5050 = vmatpush2.bf16.msra.mxu0 %v3938
    %5051 = vmatprep.subr.bf16.mxu0 %v3923
    %5052 = vmatpush2.bf16.msra.mxu0 %v3922
    %5053 = vmatprep.mubr.bf16.mxu0 %v207
    %5054 = vmatmul.mubr.bf16.gmra.mxu0 %v206
    %v5055 = vpop.f32.mrf.mxu0
    %v5056 = vadd.f32 %v5015, %v5055
    %v5057 = vpop.f32.mrf.mxu0
    %v5058 = vadd.f32 %v5017, %v5057
    %v5059 = vpop.f32.mrf.mxu0
    %v5060 = vpop.f32.mrf.mxu0
    %5061 = vdwg.mxu0
    %5062 = vmatprep.subr.bf16.mxu0 %v3397
    %5063 = vmatpush1.bf16.msra.mxu0 %v3396
    %5064 = vmatprep.subr.bf16.mxu0 %v3381
    %5065 = vmatpush1.bf16.msra.mxu0 %v3380
    %5066 = vmatprep.subr.bf16.mxu0 %v3365
    %5067 = vmatpush1.bf16.msra.mxu0 %v3364
    %5068 = vmatprep.subr.bf16.mxu0 %v3349
    %5069 = vmatpush1.bf16.msra.mxu0 %v3348
    %5070 = vmatprep.subr.bf16.mxu0 %v3333
    %5071 = vmatpush1.bf16.msra.mxu0 %v3332
    %5072 = vmatprep.subr.bf16.mxu0 %v3317
    %5073 = vmatpush1.bf16.msra.mxu0 %v3316
    %5074 = vmatprep.subr.bf16.mxu0 %v3301
    %5075 = vmatpush1.bf16.msra.mxu0 %v3300
    %5076 = vmatprep.subr.bf16.mxu0 %v3285
    %5077 = vmatpush1.bf16.msra.mxu0 %v3284
    %5078 = vmatprep.subr.bf16.mxu0 %v3525
    %5079 = vmatpush2.bf16.msra.mxu0 %v3524
    %5080 = vmatprep.subr.bf16.mxu0 %v3509
    %5081 = vmatpush2.bf16.msra.mxu0 %v3508
    %5082 = vmatprep.subr.bf16.mxu0 %v3493
    %5083 = vmatpush2.bf16.msra.mxu0 %v3492
    %5084 = vmatprep.subr.bf16.mxu0 %v3477
    %5085 = vmatpush2.bf16.msra.mxu0 %v3476
    %5086 = vmatprep.subr.bf16.mxu0 %v3461
    %5087 = vmatpush2.bf16.msra.mxu0 %v3460
    %5088 = vmatprep.subr.bf16.mxu0 %v3445
    %5089 = vmatpush2.bf16.msra.mxu0 %v3444
    %5090 = vmatprep.subr.bf16.mxu0 %v3429
    %5091 = vmatpush2.bf16.msra.mxu0 %v3428
    %5092 = vmatprep.subr.bf16.mxu0 %v3413
    %5093 = vmatpush2.bf16.msra.mxu0 %v3412
    %5094 = vmatprep.mubr.bf16.mxu0 %v203
    %5095 = vmatmul.mubr.bf16.gmra.mxu0 %v202
    %v5096 = vpop.f32.mrf.mxu0
    %v5097 = vadd.f32 0.0, %v5096
    %v5098 = vpop.f32.mrf.mxu0
    %v5099 = vadd.f32 0.0, %v5098
    %v5100 = vpop.f32.mrf.mxu0
    %v5101 = vpop.f32.mrf.mxu0
    %5102 = vdwg.mxu0
    %5103 = vmatprep.subr.bf16.mxu0 %v3653
    %5104 = vmatpush1.bf16.msra.mxu0 %v3652
    %5105 = vmatprep.subr.bf16.mxu0 %v3637
    %5106 = vmatpush1.bf16.msra.mxu0 %v3636
    %5107 = vmatprep.subr.bf16.mxu0 %v3621
    %5108 = vmatpush1.bf16.msra.mxu0 %v3620
    %5109 = vmatprep.subr.bf16.mxu0 %v3605
    %5110 = vmatpush1.bf16.msra.mxu0 %v3604
    %5111 = vmatprep.subr.bf16.mxu0 %v3589
    %5112 = vmatpush1.bf16.msra.mxu0 %v3588
    %5113 = vmatprep.subr.bf16.mxu0 %v3573
    %5114 = vmatpush1.bf16.msra.mxu0 %v3572
    %5115 = vmatprep.subr.bf16.mxu0 %v3557
    %5116 = vmatpush1.bf16.msra.mxu0 %v3556
    %5117 = vmatprep.subr.bf16.mxu0 %v3541
    %5118 = vmatpush1.bf16.msra.mxu0 %v3540
    %5119 = vmatprep.subr.bf16.mxu0 %v3781
    %5120 = vmatpush2.bf16.msra.mxu0 %v3780
    %5121 = vmatprep.subr.bf16.mxu0 %v3765
    %5122 = vmatpush2.bf16.msra.mxu0 %v3764
    %5123 = vmatprep.subr.bf16.mxu0 %v3749
    %5124 = vmatpush2.bf16.msra.mxu0 %v3748
    %5125 = vmatprep.subr.bf16.mxu0 %v3733
    %5126 = vmatpush2.bf16.msra.mxu0 %v3732
    %5127 = vmatprep.subr.bf16.mxu0 %v3717
    %5128 = vmatpush2.bf16.msra.mxu0 %v3716
    %5129 = vmatprep.subr.bf16.mxu0 %v3701
    %5130 = vmatpush2.bf16.msra.mxu0 %v3700
    %5131 = vmatprep.subr.bf16.mxu0 %v3685
    %5132 = vmatpush2.bf16.msra.mxu0 %v3684
    %5133 = vmatprep.subr.bf16.mxu0 %v3669
    %5134 = vmatpush2.bf16.msra.mxu0 %v3668
    %5135 = vmatprep.mubr.bf16.mxu0 %v205
    %5136 = vmatmul.mubr.bf16.gmra.mxu0 %v204
    %v5137 = vpop.f32.mrf.mxu0
    %v5138 = vadd.f32 %v5097, %v5137
    %v5139 = vpop.f32.mrf.mxu0
    %v5140 = vadd.f32 %v5099, %v5139
    %v5141 = vpop.f32.mrf.mxu0
    %v5142 = vpop.f32.mrf.mxu0
    %5143 = vdwg.mxu0
    %5144 = vmatprep.subr.bf16.mxu0 %v3909
    %5145 = vmatpush1.bf16.msra.mxu0 %v3908
    %5146 = vmatprep.subr.bf16.mxu0 %v3893
    %5147 = vmatpush1.bf16.msra.mxu0 %v3892
    %5148 = vmatprep.subr.bf16.mxu0 %v3877
    %5149 = vmatpush1.bf16.msra.mxu0 %v3876
    %5150 = vmatprep.subr.bf16.mxu0 %v3861
    %5151 = vmatpush1.bf16.msra.mxu0 %v3860
    %5152 = vmatprep.subr.bf16.mxu0 %v3845
    %5153 = vmatpush1.bf16.msra.mxu0 %v3844
    %5154 = vmatprep.subr.bf16.mxu0 %v3829
    %5155 = vmatpush1.bf16.msra.mxu0 %v3828
    %5156 = vmatprep.subr.bf16.mxu0 %v3813
    %5157 = vmatpush1.bf16.msra.mxu0 %v3812
    %5158 = vmatprep.subr.bf16.mxu0 %v3797
    %5159 = vmatpush1.bf16.msra.mxu0 %v3796
    %5160 = vmatprep.subr.bf16.mxu0 %v4037
    %5161 = vmatpush2.bf16.msra.mxu0 %v4036
    %5162 = vmatprep.subr.bf16.mxu0 %v4021
    %5163 = vmatpush2.bf16.msra.mxu0 %v4020
    %5164 = vmatprep.subr.bf16.mxu0 %v4005
    %5165 = vmatpush2.bf16.msra.mxu0 %v4004
    %5166 = vmatprep.subr.bf16.mxu0 %v3989
    %5167 = vmatpush2.bf16.msra.mxu0 %v3988
    %5168 = vmatprep.subr.bf16.mxu0 %v3973
    %5169 = vmatpush2.bf16.msra.mxu0 %v3972
    %5170 = vmatprep.subr.bf16.mxu0 %v3957
    %5171 = vmatpush2.bf16.msra.mxu0 %v3956
    %5172 = vmatprep.subr.bf16.mxu0 %v3941
    %5173 = vmatpush2.bf16.msra.mxu0 %v3940
    %5174 = vmatprep.subr.bf16.mxu0 %v3925
    %5175 = vmatpush2.bf16.msra.mxu0 %v3924
    %5176 = vmatprep.mubr.bf16.mxu0 %v207
    %5177 = vmatmul.mubr.bf16.gmra.mxu0 %v206
    %v5178 = vpop.f32.mrf.mxu0
    %v5179 = vadd.f32 %v5138, %v5178
    %v5180 = vpop.f32.mrf.mxu0
    %v5181 = vadd.f32 %v5140, %v5180
    %v5182 = vpop.f32.mrf.mxu0
    %v5183 = vpop.f32.mrf.mxu0
    %5184 = vdwg.mxu0
    %5185 = vmatprep.subr.bf16.mxu0 %v3399
    %5186 = vmatpush1.bf16.msra.mxu0 %v3398
    %5187 = vmatprep.subr.bf16.mxu0 %v3383
    %5188 = vmatpush1.bf16.msra.mxu0 %v3382
    %5189 = vmatprep.subr.bf16.mxu0 %v3367
    %5190 = vmatpush1.bf16.msra.mxu0 %v3366
    %5191 = vmatprep.subr.bf16.mxu0 %v3351
    %5192 = vmatpush1.bf16.msra.mxu0 %v3350
    %5193 = vmatprep.subr.bf16.mxu0 %v3335
    %5194 = vmatpush1.bf16.msra.mxu0 %v3334
    %5195 = vmatprep.subr.bf16.mxu0 %v3319
    %5196 = vmatpush1.bf16.msra.mxu0 %v3318
    %5197 = vmatprep.subr.bf16.mxu0 %v3303
    %5198 = vmatpush1.bf16.msra.mxu0 %v3302
    %5199 = vmatprep.subr.bf16.mxu0 %v3287
    %5200 = vmatpush1.bf16.msra.mxu0 %v3286
    %5201 = vmatprep.subr.bf16.mxu0 %v3527
    %5202 = vmatpush2.bf16.msra.mxu0 %v3526
    %5203 = vmatprep.subr.bf16.mxu0 %v3511
    %5204 = vmatpush2.bf16.msra.mxu0 %v3510
    %5205 = vmatprep.subr.bf16.mxu0 %v3495
    %5206 = vmatpush2.bf16.msra.mxu0 %v3494
    %5207 = vmatprep.subr.bf16.mxu0 %v3479
    %5208 = vmatpush2.bf16.msra.mxu0 %v3478
    %5209 = vmatprep.subr.bf16.mxu0 %v3463
    %5210 = vmatpush2.bf16.msra.mxu0 %v3462
    %5211 = vmatprep.subr.bf16.mxu0 %v3447
    %5212 = vmatpush2.bf16.msra.mxu0 %v3446
    %5213 = vmatprep.subr.bf16.mxu0 %v3431
    %5214 = vmatpush2.bf16.msra.mxu0 %v3430
    %5215 = vmatprep.subr.bf16.mxu0 %v3415
    %5216 = vmatpush2.bf16.msra.mxu0 %v3414
    %5217 = vmatprep.mubr.bf16.mxu0 %v203
    %5218 = vmatmul.mubr.bf16.gmra.mxu0 %v202
    %v5219 = vpop.f32.mrf.mxu0
    %v5220 = vadd.f32 0.0, %v5219
    %v5221 = vpop.f32.mrf.mxu0
    %v5222 = vadd.f32 0.0, %v5221
    %v5223 = vpop.f32.mrf.mxu0
    %v5224 = vpop.f32.mrf.mxu0
    %5225 = vdwg.mxu0
    %5226 = vmatprep.subr.bf16.mxu0 %v3655
    %5227 = vmatpush1.bf16.msra.mxu0 %v3654
    %5228 = vmatprep.subr.bf16.mxu0 %v3639
    %5229 = vmatpush1.bf16.msra.mxu0 %v3638
    %5230 = vmatprep.subr.bf16.mxu0 %v3623
    %5231 = vmatpush1.bf16.msra.mxu0 %v3622
    %5232 = vmatprep.subr.bf16.mxu0 %v3607
    %5233 = vmatpush1.bf16.msra.mxu0 %v3606
    %5234 = vmatprep.subr.bf16.mxu0 %v3591
    %5235 = vmatpush1.bf16.msra.mxu0 %v3590
    %5236 = vmatprep.subr.bf16.mxu0 %v3575
    %5237 = vmatpush1.bf16.msra.mxu0 %v3574
    %5238 = vmatprep.subr.bf16.mxu0 %v3559
    %5239 = vmatpush1.bf16.msra.mxu0 %v3558
    %5240 = vmatprep.subr.bf16.mxu0 %v3543
    %5241 = vmatpush1.bf16.msra.mxu0 %v3542
    %5242 = vmatprep.subr.bf16.mxu0 %v3783
    %5243 = vmatpush2.bf16.msra.mxu0 %v3782
    %5244 = vmatprep.subr.bf16.mxu0 %v3767
    %5245 = vmatpush2.bf16.msra.mxu0 %v3766
    %5246 = vmatprep.subr.bf16.mxu0 %v3751
    %5247 = vmatpush2.bf16.msra.mxu0 %v3750
    %5248 = vmatprep.subr.bf16.mxu0 %v3735
    %5249 = vmatpush2.bf16.msra.mxu0 %v3734
    %5250 = vmatprep.subr.bf16.mxu0 %v3719
    %5251 = vmatpush2.bf16.msra.mxu0 %v3718
    %5252 = vmatprep.subr.bf16.mxu0 %v3703
    %5253 = vmatpush2.bf16.msra.mxu0 %v3702
    %5254 = vmatprep.subr.bf16.mxu0 %v3687
    %5255 = vmatpush2.bf16.msra.mxu0 %v3686
    %5256 = vmatprep.subr.bf16.mxu0 %v3671
    %5257 = vmatpush2.bf16.msra.mxu0 %v3670
    %5258 = vmatprep.mubr.bf16.mxu0 %v205
    %5259 = vmatmul.mubr.bf16.gmra.mxu0 %v204
    %v5260 = vpop.f32.mrf.mxu0
    %v5261 = vadd.f32 %v5220, %v5260
    %v5262 = vpop.f32.mrf.mxu0
    %v5263 = vadd.f32 %v5222, %v5262
    %v5264 = vpop.f32.mrf.mxu0
    %v5265 = vpop.f32.mrf.mxu0
    %5266 = vdwg.mxu0
    %5267 = vmatprep.subr.bf16.mxu0 %v3911
    %5268 = vmatpush1.bf16.msra.mxu0 %v3910
    %5269 = vmatprep.subr.bf16.mxu0 %v3895
    %5270 = vmatpush1.bf16.msra.mxu0 %v3894
    %5271 = vmatprep.subr.bf16.mxu0 %v3879
    %5272 = vmatpush1.bf16.msra.mxu0 %v3878
    %5273 = vmatprep.subr.bf16.mxu0 %v3863
    %5274 = vmatpush1.bf16.msra.mxu0 %v3862
    %5275 = vmatprep.subr.bf16.mxu0 %v3847
    %5276 = vmatpush1.bf16.msra.mxu0 %v3846
    %5277 = vmatprep.subr.bf16.mxu0 %v3831
    %5278 = vmatpush1.bf16.msra.mxu0 %v3830
    %5279 = vmatprep.subr.bf16.mxu0 %v3815
    %5280 = vmatpush1.bf16.msra.mxu0 %v3814
    %5281 = vmatprep.subr.bf16.mxu0 %v3799
    %5282 = vmatpush1.bf16.msra.mxu0 %v3798
    %5283 = vmatprep.subr.bf16.mxu0 %v4039
    %5284 = vmatpush2.bf16.msra.mxu0 %v4038
    %5285 = vmatprep.subr.bf16.mxu0 %v4023
    %5286 = vmatpush2.bf16.msra.mxu0 %v4022
    %5287 = vmatprep.subr.bf16.mxu0 %v4007
    %5288 = vmatpush2.bf16.msra.mxu0 %v4006
    %5289 = vmatprep.subr.bf16.mxu0 %v3991
    %5290 = vmatpush2.bf16.msra.mxu0 %v3990
    %5291 = vmatprep.subr.bf16.mxu0 %v3975
    %5292 = vmatpush2.bf16.msra.mxu0 %v3974
    %5293 = vmatprep.subr.bf16.mxu0 %v3959
    %5294 = vmatpush2.bf16.msra.mxu0 %v3958
    %5295 = vmatprep.subr.bf16.mxu0 %v3943
    %5296 = vmatpush2.bf16.msra.mxu0 %v3942
    %5297 = vmatprep.subr.bf16.mxu0 %v3927
    %5298 = vmatpush2.bf16.msra.mxu0 %v3926
    %5299 = vmatprep.mubr.bf16.mxu0 %v207
    %5300 = vmatmul.mubr.bf16.gmra.mxu0 %v206
    %v5301 = vpop.f32.mrf.mxu0
    %v5302 = vadd.f32 %v5261, %v5301
    %v5303 = vpop.f32.mrf.mxu0
    %v5304 = vadd.f32 %v5263, %v5303
    %v5305 = vpop.f32.mrf.mxu0
    %v5306 = vpop.f32.mrf.mxu0
    %5307 = vdwg.mxu0
    %5308 = vmatprep.subr.bf16.mxu0 %v3401
    %5309 = vmatpush1.bf16.msra.mxu0 %v3400
    %5310 = vmatprep.subr.bf16.mxu0 %v3385
    %5311 = vmatpush1.bf16.msra.mxu0 %v3384
    %5312 = vmatprep.subr.bf16.mxu0 %v3369
    %5313 = vmatpush1.bf16.msra.mxu0 %v3368
    %5314 = vmatprep.subr.bf16.mxu0 %v3353
    %5315 = vmatpush1.bf16.msra.mxu0 %v3352
    %5316 = vmatprep.subr.bf16.mxu0 %v3337
    %5317 = vmatpush1.bf16.msra.mxu0 %v3336
    %5318 = vmatprep.subr.bf16.mxu0 %v3321
    %5319 = vmatpush1.bf16.msra.mxu0 %v3320
    %5320 = vmatprep.subr.bf16.mxu0 %v3305
    %5321 = vmatpush1.bf16.msra.mxu0 %v3304
    %5322 = vmatprep.subr.bf16.mxu0 %v3289
    %5323 = vmatpush1.bf16.msra.mxu0 %v3288
    %5324 = vmatprep.subr.bf16.mxu0 %v3529
    %5325 = vmatpush2.bf16.msra.mxu0 %v3528
    %5326 = vmatprep.subr.bf16.mxu0 %v3513
    %5327 = vmatpush2.bf16.msra.mxu0 %v3512
    %5328 = vmatprep.subr.bf16.mxu0 %v3497
    %5329 = vmatpush2.bf16.msra.mxu0 %v3496
    %5330 = vmatprep.subr.bf16.mxu0 %v3481
    %5331 = vmatpush2.bf16.msra.mxu0 %v3480
    %5332 = vmatprep.subr.bf16.mxu0 %v3465
    %5333 = vmatpush2.bf16.msra.mxu0 %v3464
    %5334 = vmatprep.subr.bf16.mxu0 %v3449
    %5335 = vmatpush2.bf16.msra.mxu0 %v3448
    %5336 = vmatprep.subr.bf16.mxu0 %v3433
    %5337 = vmatpush2.bf16.msra.mxu0 %v3432
    %5338 = vmatprep.subr.bf16.mxu0 %v3417
    %5339 = vmatpush2.bf16.msra.mxu0 %v3416
    %5340 = vmatprep.mubr.bf16.mxu0 %v203
    %5341 = vmatmul.mubr.bf16.gmra.mxu0 %v202
    %v5342 = vpop.f32.mrf.mxu0
    %v5343 = vadd.f32 0.0, %v5342
    %v5344 = vpop.f32.mrf.mxu0
    %v5345 = vadd.f32 0.0, %v5344
    %v5346 = vpop.f32.mrf.mxu0
    %v5347 = vpop.f32.mrf.mxu0
    %5348 = vdwg.mxu0
    %5349 = vmatprep.subr.bf16.mxu0 %v3657
    %5350 = vmatpush1.bf16.msra.mxu0 %v3656
    %5351 = vmatprep.subr.bf16.mxu0 %v3641
    %5352 = vmatpush1.bf16.msra.mxu0 %v3640
    %5353 = vmatprep.subr.bf16.mxu0 %v3625
    %5354 = vmatpush1.bf16.msra.mxu0 %v3624
    %5355 = vmatprep.subr.bf16.mxu0 %v3609
    %5356 = vmatpush1.bf16.msra.mxu0 %v3608
    %5357 = vmatprep.subr.bf16.mxu0 %v3593
    %5358 = vmatpush1.bf16.msra.mxu0 %v3592
    %5359 = vmatprep.subr.bf16.mxu0 %v3577
    %5360 = vmatpush1.bf16.msra.mxu0 %v3576
    %5361 = vmatprep.subr.bf16.mxu0 %v3561
    %5362 = vmatpush1.bf16.msra.mxu0 %v3560
    %5363 = vmatprep.subr.bf16.mxu0 %v3545
    %5364 = vmatpush1.bf16.msra.mxu0 %v3544
    %5365 = vmatprep.subr.bf16.mxu0 %v3785
    %5366 = vmatpush2.bf16.msra.mxu0 %v3784
    %5367 = vmatprep.subr.bf16.mxu0 %v3769
    %5368 = vmatpush2.bf16.msra.mxu0 %v3768
    %5369 = vmatprep.subr.bf16.mxu0 %v3753
    %5370 = vmatpush2.bf16.msra.mxu0 %v3752
    %5371 = vmatprep.subr.bf16.mxu0 %v3737
    %5372 = vmatpush2.bf16.msra.mxu0 %v3736
    %5373 = vmatprep.subr.bf16.mxu0 %v3721
    %5374 = vmatpush2.bf16.msra.mxu0 %v3720
    %5375 = vmatprep.subr.bf16.mxu0 %v3705
    %5376 = vmatpush2.bf16.msra.mxu0 %v3704
    %5377 = vmatprep.subr.bf16.mxu0 %v3689
    %5378 = vmatpush2.bf16.msra.mxu0 %v3688
    %5379 = vmatprep.subr.bf16.mxu0 %v3673
    %5380 = vmatpush2.bf16.msra.mxu0 %v3672
    %5381 = vmatprep.mubr.bf16.mxu0 %v205
    %5382 = vmatmul.mubr.bf16.gmra.mxu0 %v204
    %v5383 = vpop.f32.mrf.mxu0
    %v5384 = vadd.f32 %v5343, %v5383
    %v5385 = vpop.f32.mrf.mxu0
    %v5386 = vadd.f32 %v5345, %v5385
    %v5387 = vpop.f32.mrf.mxu0
    %v5388 = vpop.f32.mrf.mxu0
    %5389 = vdwg.mxu0
    %5390 = vmatprep.subr.bf16.mxu0 %v3913
    %5391 = vmatpush1.bf16.msra.mxu0 %v3912
    %5392 = vmatprep.subr.bf16.mxu0 %v3897
    %5393 = vmatpush1.bf16.msra.mxu0 %v3896
    %5394 = vmatprep.subr.bf16.mxu0 %v3881
    %5395 = vmatpush1.bf16.msra.mxu0 %v3880
    %5396 = vmatprep.subr.bf16.mxu0 %v3865
    %5397 = vmatpush1.bf16.msra.mxu0 %v3864
    %5398 = vmatprep.subr.bf16.mxu0 %v3849
    %5399 = vmatpush1.bf16.msra.mxu0 %v3848
    %5400 = vmatprep.subr.bf16.mxu0 %v3833
    %5401 = vmatpush1.bf16.msra.mxu0 %v3832
    %5402 = vmatprep.subr.bf16.mxu0 %v3817
    %5403 = vmatpush1.bf16.msra.mxu0 %v3816
    %5404 = vmatprep.subr.bf16.mxu0 %v3801
    %5405 = vmatpush1.bf16.msra.mxu0 %v3800
    %5406 = vmatprep.subr.bf16.mxu0 %v4041
    %5407 = vmatpush2.bf16.msra.mxu0 %v4040
    %5408 = vmatprep.subr.bf16.mxu0 %v4025
    %5409 = vmatpush2.bf16.msra.mxu0 %v4024
    %5410 = vmatprep.subr.bf16.mxu0 %v4009
    %5411 = vmatpush2.bf16.msra.mxu0 %v4008
    %5412 = vmatprep.subr.bf16.mxu0 %v3993
    %5413 = vmatpush2.bf16.msra.mxu0 %v3992
    %5414 = vmatprep.subr.bf16.mxu0 %v3977
    %5415 = vmatpush2.bf16.msra.mxu0 %v3976
    %5416 = vmatprep.subr.bf16.mxu0 %v3961
    %5417 = vmatpush2.bf16.msra.mxu0 %v3960
    %5418 = vmatprep.subr.bf16.mxu0 %v3945
    %5419 = vmatpush2.bf16.msra.mxu0 %v3944
    %5420 = vmatprep.subr.bf16.mxu0 %v3929
    %5421 = vmatpush2.bf16.msra.mxu0 %v3928
    %5422 = vmatprep.mubr.bf16.mxu0 %v207
    %5423 = vmatmul.mubr.bf16.gmra.mxu0 %v206
    %v5424 = vpop.f32.mrf.mxu0
    %v5425 = vadd.f32 %v5384, %v5424
    %v5426 = vpop.f32.mrf.mxu0
    %v5427 = vadd.f32 %v5386, %v5426
    %v5428 = vpop.f32.mrf.mxu0
    %v5429 = vpop.f32.mrf.mxu0
    %5430 = vdwg.mxu0
    %5431 = vmatprep.subr.bf16.mxu0 %v3403
    %5432 = vmatpush1.bf16.msra.mxu0 %v3402
    %5433 = vmatprep.subr.bf16.mxu0 %v3387
    %5434 = vmatpush1.bf16.msra.mxu0 %v3386
    %5435 = vmatprep.subr.bf16.mxu0 %v3371
    %5436 = vmatpush1.bf16.msra.mxu0 %v3370
    %5437 = vmatprep.subr.bf16.mxu0 %v3355
    %5438 = vmatpush1.bf16.msra.mxu0 %v3354
    %5439 = vmatprep.subr.bf16.mxu0 %v3339
    %5440 = vmatpush1.bf16.msra.mxu0 %v3338
    %5441 = vmatprep.subr.bf16.mxu0 %v3323
    %5442 = vmatpush1.bf16.msra.mxu0 %v3322
    %5443 = vmatprep.subr.bf16.mxu0 %v3307
    %5444 = vmatpush1.bf16.msra.mxu0 %v3306
    %5445 = vmatprep.subr.bf16.mxu0 %v3291
    %5446 = vmatpush1.bf16.msra.mxu0 %v3290
    %5447 = vmatprep.subr.bf16.mxu0 %v3531
    %5448 = vmatpush2.bf16.msra.mxu0 %v3530
    %5449 = vmatprep.subr.bf16.mxu0 %v3515
    %5450 = vmatpush2.bf16.msra.mxu0 %v3514
    %5451 = vmatprep.subr.bf16.mxu0 %v3499
    %5452 = vmatpush2.bf16.msra.mxu0 %v3498
    %5453 = vmatprep.subr.bf16.mxu0 %v3483
    %5454 = vmatpush2.bf16.msra.mxu0 %v3482
    %5455 = vmatprep.subr.bf16.mxu0 %v3467
    %5456 = vmatpush2.bf16.msra.mxu0 %v3466
    %5457 = vmatprep.subr.bf16.mxu0 %v3451
    %5458 = vmatpush2.bf16.msra.mxu0 %v3450
    %5459 = vmatprep.subr.bf16.mxu0 %v3435
    %5460 = vmatpush2.bf16.msra.mxu0 %v3434
    %5461 = vmatprep.subr.bf16.mxu0 %v3419
    %5462 = vmatpush2.bf16.msra.mxu0 %v3418
    %5463 = vmatprep.mubr.bf16.mxu0 %v203
    %5464 = vmatmul.mubr.bf16.gmra.mxu0 %v202
    %v5465 = vpop.f32.mrf.mxu0
    %v5466 = vadd.f32 0.0, %v5465
    %v5467 = vpop.f32.mrf.mxu0
    %v5468 = vadd.f32 0.0, %v5467
    %v5469 = vpop.f32.mrf.mxu0
    %v5470 = vpop.f32.mrf.mxu0
    %5471 = vdwg.mxu0
    %5472 = vmatprep.subr.bf16.mxu0 %v3659
    %5473 = vmatpush1.bf16.msra.mxu0 %v3658
    %5474 = vmatprep.subr.bf16.mxu0 %v3643
    %5475 = vmatpush1.bf16.msra.mxu0 %v3642
    %5476 = vmatprep.subr.bf16.mxu0 %v3627
    %5477 = vmatpush1.bf16.msra.mxu0 %v3626
    %5478 = vmatprep.subr.bf16.mxu0 %v3611
    %5479 = vmatpush1.bf16.msra.mxu0 %v3610
    %5480 = vmatprep.subr.bf16.mxu0 %v3595
    %5481 = vmatpush1.bf16.msra.mxu0 %v3594
    %5482 = vmatprep.subr.bf16.mxu0 %v3579
    %5483 = vmatpush1.bf16.msra.mxu0 %v3578
    %5484 = vmatprep.subr.bf16.mxu0 %v3563
    %5485 = vmatpush1.bf16.msra.mxu0 %v3562
    %5486 = vmatprep.subr.bf16.mxu0 %v3547
    %5487 = vmatpush1.bf16.msra.mxu0 %v3546
    %5488 = vmatprep.subr.bf16.mxu0 %v3787
    %5489 = vmatpush2.bf16.msra.mxu0 %v3786
    %5490 = vmatprep.subr.bf16.mxu0 %v3771
    %5491 = vmatpush2.bf16.msra.mxu0 %v3770
    %5492 = vmatprep.subr.bf16.mxu0 %v3755
    %5493 = vmatpush2.bf16.msra.mxu0 %v3754
    %5494 = vmatprep.subr.bf16.mxu0 %v3739
    %5495 = vmatpush2.bf16.msra.mxu0 %v3738
    %5496 = vmatprep.subr.bf16.mxu0 %v3723
    %5497 = vmatpush2.bf16.msra.mxu0 %v3722
    %5498 = vmatprep.subr.bf16.mxu0 %v3707
    %5499 = vmatpush2.bf16.msra.mxu0 %v3706
    %5500 = vmatprep.subr.bf16.mxu0 %v3691
    %5501 = vmatpush2.bf16.msra.mxu0 %v3690
    %5502 = vmatprep.subr.bf16.mxu0 %v3675
    %5503 = vmatpush2.bf16.msra.mxu0 %v3674
    %5504 = vmatprep.mubr.bf16.mxu0 %v205
    %5505 = vmatmul.mubr.bf16.gmra.mxu0 %v204
    %v5506 = vpop.f32.mrf.mxu0
    %v5507 = vadd.f32 %v5466, %v5506
    %v5508 = vpop.f32.mrf.mxu0
    %v5509 = vadd.f32 %v5468, %v5508
    %v5510 = vpop.f32.mrf.mxu0
    %v5511 = vpop.f32.mrf.mxu0
    %5512 = vdwg.mxu0
    %5513 = vmatprep.subr.bf16.mxu0 %v3915
    %5514 = vmatpush1.bf16.msra.mxu0 %v3914
    %5515 = vmatprep.subr.bf16.mxu0 %v3899
    %5516 = vmatpush1.bf16.msra.mxu0 %v3898
    %5517 = vmatprep.subr.bf16.mxu0 %v3883
    %5518 = vmatpush1.bf16.msra.mxu0 %v3882
    %5519 = vmatprep.subr.bf16.mxu0 %v3867
    %5520 = vmatpush1.bf16.msra.mxu0 %v3866
    %5521 = vmatprep.subr.bf16.mxu0 %v3851
    %5522 = vmatpush1.bf16.msra.mxu0 %v3850
    %5523 = vmatprep.subr.bf16.mxu0 %v3835
    %5524 = vmatpush1.bf16.msra.mxu0 %v3834
    %5525 = vmatprep.subr.bf16.mxu0 %v3819
    %5526 = vmatpush1.bf16.msra.mxu0 %v3818
    %5527 = vmatprep.subr.bf16.mxu0 %v3803
    %5528 = vmatpush1.bf16.msra.mxu0 %v3802
    %5529 = vmatprep.subr.bf16.mxu0 %v4043
    %5530 = vmatpush2.bf16.msra.mxu0 %v4042
    %5531 = vmatprep.subr.bf16.mxu0 %v4027
    %5532 = vmatpush2.bf16.msra.mxu0 %v4026
    %5533 = vmatprep.subr.bf16.mxu0 %v4011
    %5534 = vmatpush2.bf16.msra.mxu0 %v4010
    %5535 = vmatprep.subr.bf16.mxu0 %v3995
    %5536 = vmatpush2.bf16.msra.mxu0 %v3994
    %5537 = vmatprep.subr.bf16.mxu0 %v3979
    %5538 = vmatpush2.bf16.msra.mxu0 %v3978
    %5539 = vmatprep.subr.bf16.mxu0 %v3963
    %5540 = vmatpush2.bf16.msra.mxu0 %v3962
    %5541 = vmatprep.subr.bf16.mxu0 %v3947
    %5542 = vmatpush2.bf16.msra.mxu0 %v3946
    %5543 = vmatprep.subr.bf16.mxu0 %v3931
    %5544 = vmatpush2.bf16.msra.mxu0 %v3930
    %5545 = vmatprep.mubr.bf16.mxu0 %v207
    %5546 = vmatmul.mubr.bf16.gmra.mxu0 %v206
    %v5547 = vpop.f32.mrf.mxu0
    %v5548 = vadd.f32 %v5507, %v5547
    %v5549 = vpop.f32.mrf.mxu0
    %v5550 = vadd.f32 %v5509, %v5549
    %v5551 = vpop.f32.mrf.mxu0
    %v5552 = vpop.f32.mrf.mxu0
    %5553 = vdwg.mxu0
    %5554 = vmatprep.subr.bf16.mxu0 %v3405
    %5555 = vmatpush1.bf16.msra.mxu0 %v3404
    %5556 = vmatprep.subr.bf16.mxu0 %v3389
    %5557 = vmatpush1.bf16.msra.mxu0 %v3388
    %5558 = vmatprep.subr.bf16.mxu0 %v3373
    %5559 = vmatpush1.bf16.msra.mxu0 %v3372
    %5560 = vmatprep.subr.bf16.mxu0 %v3357
    %5561 = vmatpush1.bf16.msra.mxu0 %v3356
    %5562 = vmatprep.subr.bf16.mxu0 %v3341
    %5563 = vmatpush1.bf16.msra.mxu0 %v3340
    %5564 = vmatprep.subr.bf16.mxu0 %v3325
    %5565 = vmatpush1.bf16.msra.mxu0 %v3324
    %5566 = vmatprep.subr.bf16.mxu0 %v3309
    %5567 = vmatpush1.bf16.msra.mxu0 %v3308
    %5568 = vmatprep.subr.bf16.mxu0 %v3293
    %5569 = vmatpush1.bf16.msra.mxu0 %v3292
    %5570 = vmatprep.subr.bf16.mxu0 %v3533
    %5571 = vmatpush2.bf16.msra.mxu0 %v3532
    %5572 = vmatprep.subr.bf16.mxu0 %v3517
    %5573 = vmatpush2.bf16.msra.mxu0 %v3516
    %5574 = vmatprep.subr.bf16.mxu0 %v3501
    %5575 = vmatpush2.bf16.msra.mxu0 %v3500
    %5576 = vmatprep.subr.bf16.mxu0 %v3485
    %5577 = vmatpush2.bf16.msra.mxu0 %v3484
    %5578 = vmatprep.subr.bf16.mxu0 %v3469
    %5579 = vmatpush2.bf16.msra.mxu0 %v3468
    %5580 = vmatprep.subr.bf16.mxu0 %v3453
    %5581 = vmatpush2.bf16.msra.mxu0 %v3452
    %5582 = vmatprep.subr.bf16.mxu0 %v3437
    %5583 = vmatpush2.bf16.msra.mxu0 %v3436
    %5584 = vmatprep.subr.bf16.mxu0 %v3421
    %5585 = vmatpush2.bf16.msra.mxu0 %v3420
    %5586 = vmatprep.mubr.bf16.mxu0 %v203
    %5587 = vmatmul.mubr.bf16.gmra.mxu0 %v202
    %v5588 = vpop.f32.mrf.mxu0
    %v5589 = vadd.f32 0.0, %v5588
    %v5590 = vpop.f32.mrf.mxu0
    %v5591 = vadd.f32 0.0, %v5590
    %v5592 = vpop.f32.mrf.mxu0
    %v5593 = vpop.f32.mrf.mxu0
    %5594 = vdwg.mxu0
    %5595 = vmatprep.subr.bf16.mxu0 %v3661
    %5596 = vmatpush1.bf16.msra.mxu0 %v3660
    %5597 = vmatprep.subr.bf16.mxu0 %v3645
    %5598 = vmatpush1.bf16.msra.mxu0 %v3644
    %5599 = vmatprep.subr.bf16.mxu0 %v3629
    %5600 = vmatpush1.bf16.msra.mxu0 %v3628
    %5601 = vmatprep.subr.bf16.mxu0 %v3613
    %5602 = vmatpush1.bf16.msra.mxu0 %v3612
    %5603 = vmatprep.subr.bf16.mxu0 %v3597
    %5604 = vmatpush1.bf16.msra.mxu0 %v3596
    %5605 = vmatprep.subr.bf16.mxu0 %v3581
    %5606 = vmatpush1.bf16.msra.mxu0 %v3580
    %5607 = vmatprep.subr.bf16.mxu0 %v3565
    %5608 = vmatpush1.bf16.msra.mxu0 %v3564
    %5609 = vmatprep.subr.bf16.mxu0 %v3549
    %5610 = vmatpush1.bf16.msra.mxu0 %v3548
    %5611 = vmatprep.subr.bf16.mxu0 %v3789
    %5612 = vmatpush2.bf16.msra.mxu0 %v3788
    %5613 = vmatprep.subr.bf16.mxu0 %v3773
    %5614 = vmatpush2.bf16.msra.mxu0 %v3772
    %5615 = vmatprep.subr.bf16.mxu0 %v3757
    %5616 = vmatpush2.bf16.msra.mxu0 %v3756
    %5617 = vmatprep.subr.bf16.mxu0 %v3741
    %5618 = vmatpush2.bf16.msra.mxu0 %v3740
    %5619 = vmatprep.subr.bf16.mxu0 %v3725
    %5620 = vmatpush2.bf16.msra.mxu0 %v3724
    %5621 = vmatprep.subr.bf16.mxu0 %v3709
    %5622 = vmatpush2.bf16.msra.mxu0 %v3708
    %5623 = vmatprep.subr.bf16.mxu0 %v3693
    %5624 = vmatpush2.bf16.msra.mxu0 %v3692
    %5625 = vmatprep.subr.bf16.mxu0 %v3677
    %5626 = vmatpush2.bf16.msra.mxu0 %v3676
    %5627 = vmatprep.mubr.bf16.mxu0 %v205
    %5628 = vmatmul.mubr.bf16.gmra.mxu0 %v204
    %v5629 = vpop.f32.mrf.mxu0
    %v5630 = vadd.f32 %v5589, %v5629
    %v5631 = vpop.f32.mrf.mxu0
    %v5632 = vadd.f32 %v5591, %v5631
    %v5633 = vpop.f32.mrf.mxu0
    %v5634 = vpop.f32.mrf.mxu0
    %5635 = vdwg.mxu0
    %5636 = vmatprep.subr.bf16.mxu0 %v3917
    %5637 = vmatpush1.bf16.msra.mxu0 %v3916
    %5638 = vmatprep.subr.bf16.mxu0 %v3901
    %5639 = vmatpush1.bf16.msra.mxu0 %v3900
    %5640 = vmatprep.subr.bf16.mxu0 %v3885
    %5641 = vmatpush1.bf16.msra.mxu0 %v3884
    %5642 = vmatprep.subr.bf16.mxu0 %v3869
    %5643 = vmatpush1.bf16.msra.mxu0 %v3868
    %5644 = vmatprep.subr.bf16.mxu0 %v3853
    %5645 = vmatpush1.bf16.msra.mxu0 %v3852
    %5646 = vmatprep.subr.bf16.mxu0 %v3837
    %5647 = vmatpush1.bf16.msra.mxu0 %v3836
    %5648 = vmatprep.subr.bf16.mxu0 %v3821
    %5649 = vmatpush1.bf16.msra.mxu0 %v3820
    %5650 = vmatprep.subr.bf16.mxu0 %v3805
    %5651 = vmatpush1.bf16.msra.mxu0 %v3804
    %5652 = vmatprep.subr.bf16.mxu0 %v4045
    %5653 = vmatpush2.bf16.msra.mxu0 %v4044
    %5654 = vmatprep.subr.bf16.mxu0 %v4029
    %5655 = vmatpush2.bf16.msra.mxu0 %v4028
    %5656 = vmatprep.subr.bf16.mxu0 %v4013
    %5657 = vmatpush2.bf16.msra.mxu0 %v4012
    %5658 = vmatprep.subr.bf16.mxu0 %v3997
    %5659 = vmatpush2.bf16.msra.mxu0 %v3996
    %5660 = vmatprep.subr.bf16.mxu0 %v3981
    %5661 = vmatpush2.bf16.msra.mxu0 %v3980
    %5662 = vmatprep.subr.bf16.mxu0 %v3965
    %5663 = vmatpush2.bf16.msra.mxu0 %v3964
    %5664 = vmatprep.subr.bf16.mxu0 %v3949
    %5665 = vmatpush2.bf16.msra.mxu0 %v3948
    %5666 = vmatprep.subr.bf16.mxu0 %v3933
    %5667 = vmatpush2.bf16.msra.mxu0 %v3932
    %5668 = vmatprep.mubr.bf16.mxu0 %v207
    %5669 = vmatmul.mubr.bf16.gmra.mxu0 %v206
    %v5670 = vpop.f32.mrf.mxu0
    %v5671 = vadd.f32 %v5630, %v5670
    %v5672 = vpop.f32.mrf.mxu0
    %v5673 = vadd.f32 %v5632, %v5672
    %v5674 = vpop.f32.mrf.mxu0
    %v5675 = vpop.f32.mrf.mxu0
    %5676 = vdwg.mxu0
    %5677 = vmatprep.subr.bf16.mxu0 %v3407
    %5678 = vmatpush1.bf16.msra.mxu0 %v3406
    %5679 = vmatprep.subr.bf16.mxu0 %v3391
    %5680 = vmatpush1.bf16.msra.mxu0 %v3390
    %5681 = vmatprep.subr.bf16.mxu0 %v3375
    %5682 = vmatpush1.bf16.msra.mxu0 %v3374
    %5683 = vmatprep.subr.bf16.mxu0 %v3359
    %5684 = vmatpush1.bf16.msra.mxu0 %v3358
    %5685 = vmatprep.subr.bf16.mxu0 %v3343
    %5686 = vmatpush1.bf16.msra.mxu0 %v3342
    %5687 = vmatprep.subr.bf16.mxu0 %v3327
    %5688 = vmatpush1.bf16.msra.mxu0 %v3326
    %5689 = vmatprep.subr.bf16.mxu0 %v3311
    %5690 = vmatpush1.bf16.msra.mxu0 %v3310
    %5691 = vmatprep.subr.bf16.mxu0 %v3295
    %5692 = vmatpush1.bf16.msra.mxu0 %v3294
    %5693 = vmatprep.subr.bf16.mxu0 %v3535
    %5694 = vmatpush2.bf16.msra.mxu0 %v3534
    %5695 = vmatprep.subr.bf16.mxu0 %v3519
    %5696 = vmatpush2.bf16.msra.mxu0 %v3518
    %5697 = vmatprep.subr.bf16.mxu0 %v3503
    %5698 = vmatpush2.bf16.msra.mxu0 %v3502
    %5699 = vmatprep.subr.bf16.mxu0 %v3487
    %5700 = vmatpush2.bf16.msra.mxu0 %v3486
    %5701 = vmatprep.subr.bf16.mxu0 %v3471
    %5702 = vmatpush2.bf16.msra.mxu0 %v3470
    %5703 = vmatprep.subr.bf16.mxu0 %v3455
    %5704 = vmatpush2.bf16.msra.mxu0 %v3454
    %5705 = vmatprep.subr.bf16.mxu0 %v3439
    %5706 = vmatpush2.bf16.msra.mxu0 %v3438
    %5707 = vmatprep.subr.bf16.mxu0 %v3423
    %5708 = vmatpush2.bf16.msra.mxu0 %v3422
    %5709 = vmatprep.mubr.bf16.mxu0 %v203
    %5710 = vmatmul.mubr.bf16.gmra.mxu0 %v202
    %v5711 = vpop.f32.mrf.mxu0
    %v5712 = vadd.f32 0.0, %v5711
    %v5713 = vpop.f32.mrf.mxu0
    %v5714 = vadd.f32 0.0, %v5713
    %v5715 = vpop.f32.mrf.mxu0
    %v5716 = vpop.f32.mrf.mxu0
    %5717 = vdwg.mxu0
    %5718 = vmatprep.subr.bf16.mxu0 %v3663
    %5719 = vmatpush1.bf16.msra.mxu0 %v3662
    %5720 = vmatprep.subr.bf16.mxu0 %v3647
    %5721 = vmatpush1.bf16.msra.mxu0 %v3646
    %5722 = vmatprep.subr.bf16.mxu0 %v3631
    %5723 = vmatpush1.bf16.msra.mxu0 %v3630
    %5724 = vmatprep.subr.bf16.mxu0 %v3615
    %5725 = vmatpush1.bf16.msra.mxu0 %v3614
    %5726 = vmatprep.subr.bf16.mxu0 %v3599
    %5727 = vmatpush1.bf16.msra.mxu0 %v3598
    %5728 = vmatprep.subr.bf16.mxu0 %v3583
    %5729 = vmatpush1.bf16.msra.mxu0 %v3582
    %5730 = vmatprep.subr.bf16.mxu0 %v3567
    %5731 = vmatpush1.bf16.msra.mxu0 %v3566
    %5732 = vmatprep.subr.bf16.mxu0 %v3551
    %5733 = vmatpush1.bf16.msra.mxu0 %v3550
    %5734 = vmatprep.subr.bf16.mxu0 %v3791
    %5735 = vmatpush2.bf16.msra.mxu0 %v3790
    %5736 = vmatprep.subr.bf16.mxu0 %v3775
    %5737 = vmatpush2.bf16.msra.mxu0 %v3774
    %5738 = vmatprep.subr.bf16.mxu0 %v3759
    %5739 = vmatpush2.bf16.msra.mxu0 %v3758
    %5740 = vmatprep.subr.bf16.mxu0 %v3743
    %5741 = vmatpush2.bf16.msra.mxu0 %v3742
    %5742 = vmatprep.subr.bf16.mxu0 %v3727
    %5743 = vmatpush2.bf16.msra.mxu0 %v3726
    %5744 = vmatprep.subr.bf16.mxu0 %v3711
    %5745 = vmatpush2.bf16.msra.mxu0 %v3710
    %5746 = vmatprep.subr.bf16.mxu0 %v3695
    %5747 = vmatpush2.bf16.msra.mxu0 %v3694
    %5748 = vmatprep.subr.bf16.mxu0 %v3679
    %5749 = vmatpush2.bf16.msra.mxu0 %v3678
    %5750 = vmatprep.mubr.bf16.mxu0 %v205
    %5751 = vmatmul.mubr.bf16.gmra.mxu0 %v204
    %v5752 = vpop.f32.mrf.mxu0
    %v5753 = vadd.f32 %v5712, %v5752
    %v5754 = vpop.f32.mrf.mxu0
    %v5755 = vadd.f32 %v5714, %v5754
    %v5756 = vpop.f32.mrf.mxu0
    %v5757 = vpop.f32.mrf.mxu0
    %5758 = vdwg.mxu0
    %5759 = vmatprep.subr.bf16.mxu0 %v3919
    %5760 = vmatpush1.bf16.msra.mxu0 %v3918
    %5761 = vmatprep.subr.bf16.mxu0 %v3903
    %5762 = vmatpush1.bf16.msra.mxu0 %v3902
    %5763 = vmatprep.subr.bf16.mxu0 %v3887
    %5764 = vmatpush1.bf16.msra.mxu0 %v3886
    %5765 = vmatprep.subr.bf16.mxu0 %v3871
    %5766 = vmatpush1.bf16.msra.mxu0 %v3870
    %5767 = vmatprep.subr.bf16.mxu0 %v3855
    %5768 = vmatpush1.bf16.msra.mxu0 %v3854
    %5769 = vmatprep.subr.bf16.mxu0 %v3839
    %5770 = vmatpush1.bf16.msra.mxu0 %v3838
    %5771 = vmatprep.subr.bf16.mxu0 %v3823
    %5772 = vmatpush1.bf16.msra.mxu0 %v3822
    %5773 = vmatprep.subr.bf16.mxu0 %v3807
    %5774 = vmatpush1.bf16.msra.mxu0 %v3806
    %5775 = vmatprep.subr.bf16.mxu0 %v4047
    %5776 = vmatpush2.bf16.msra.mxu0 %v4046
    %5777 = vmatprep.subr.bf16.mxu0 %v4031
    %5778 = vmatpush2.bf16.msra.mxu0 %v4030
    %5779 = vmatprep.subr.bf16.mxu0 %v4015
    %5780 = vmatpush2.bf16.msra.mxu0 %v4014
    %5781 = vmatprep.subr.bf16.mxu0 %v3999
    %5782 = vmatpush2.bf16.msra.mxu0 %v3998
    %5783 = vmatprep.subr.bf16.mxu0 %v3983
    %5784 = vmatpush2.bf16.msra.mxu0 %v3982
    %5785 = vmatprep.subr.bf16.mxu0 %v3967
    %5786 = vmatpush2.bf16.msra.mxu0 %v3966
    %5787 = vmatprep.subr.bf16.mxu0 %v3951
    %5788 = vmatpush2.bf16.msra.mxu0 %v3950
    %5789 = vmatprep.subr.bf16.mxu0 %v3935
    %5790 = vmatpush2.bf16.msra.mxu0 %v3934
    %5791 = vmatprep.mubr.bf16.mxu0 %v207
    %5792 = vmatmul.mubr.bf16.gmra.mxu0 %v206
    %v5793 = vpop.f32.mrf.mxu0
    %v5794 = vadd.f32 %v5753, %v5793
    %v5795 = vpop.f32.mrf.mxu0
    %v5796 = vadd.f32 %v5755, %v5795
    %v5797 = vpop.f32.mrf.mxu0
    %v5798 = vpop.f32.mrf.mxu0
    %5799 = vdwg.mxu0
    %v5800 = vadd.f32 %v180, %v4933
    %v5801 = vadd.f32 %v181, %v4935
    %v5802 = vadd.f32 %v182, %v5056
    %v5803 = vadd.f32 %v183, %v5058
    %v5804 = vadd.f32 %v184, %v5179
    %v5805 = vadd.f32 %v185, %v5181
    %v5806 = vadd.f32 %v186, %v5302
    %v5807 = vadd.f32 %v187, %v5304
    %v5808 = vadd.f32 %v188, %v5425
    %v5809 = vadd.f32 %v189, %v5427
    %v5810 = vadd.f32 %v190, %v5548
    %v5811 = vadd.f32 %v191, %v5550
    %v5812 = vadd.f32 %v192, %v5671
    %v5813 = vadd.f32 %v193, %v5673
    %v5814 = vadd.f32 %v194, %v5794
    %v5815 = vadd.f32 %v195, %v5796
    %5816 = vst [vmem:[#allocation2] sm:$0xff] %v5800
    %5817 = vst [vmem:[#allocation2 + $0x8] sm:$0xff] %v5801
    %5818 = vst [vmem:[#allocation2 + $0x10] sm:$0xff] %v5802
    %5819 = vst [vmem:[#allocation2 + $0x18] sm:$0xff] %v5803
    %5820 = vst [vmem:[#allocation2 + $0x20] sm:$0xff] %v5804
    %5821 = vst [vmem:[#allocation2 + $0x28] sm:$0xff] %v5805
    %5822 = vst [vmem:[#allocation2 + $0x30] sm:$0xff] %v5806
    %5823 = vst [vmem:[#allocation2 + $0x38] sm:$0xff] %v5807
    %5824 = vst [vmem:[#allocation2 + $0x40] sm:$0xff] %v5808
    %5825 = vst [vmem:[#allocation2 + $0x48] sm:$0xff] %v5809
    %5826 = vst [vmem:[#allocation2 + $0x50] sm:$0xff] %v5810
    %5827 = vst [vmem:[#allocation2 + $0x58] sm:$0xff] %v5811
    %5828 = vst [vmem:[#allocation2 + $0x60] sm:$0xff] %v5812
    %5829 = vst [vmem:[#allocation2 + $0x68] sm:$0xff] %v5813
    %5830 = vst [vmem:[#allocation2 + $0x70] sm:$0xff] %v5814
    %5831 = vst [vmem:[#allocation2 + $0x78] sm:$0xff] %v5815
    // Predicated region
    $region86: #{tpu_custom_call.1} parent=1 // pred_check
      %p5832 = pneg %p160
    $region87: #{tpu_custom_call.1} parent=1 // pred_check_branch
      %5834 = sbr.rel (%p5832) target = $region89
    $region88: #{tpu_custom_call.1} parent=1 // pred_region
      %v5835 = vld [vmem:[#allocation2] sm:$0xff]
      %v5836 = vld [vmem:[#allocation2 + $0x8] sm:$0xff]
      %v5837 = vld [vmem:[#allocation2 + $0x10] sm:$0xff]
      %v5838 = vld [vmem:[#allocation2 + $0x18] sm:$0xff]
      %v5839 = vld [vmem:[#allocation2 + $0x20] sm:$0xff]
      %v5840 = vld [vmem:[#allocation2 + $0x28] sm:$0xff]
      %v5841 = vld [vmem:[#allocation2 + $0x30] sm:$0xff]
      %v5842 = vld [vmem:[#allocation2 + $0x38] sm:$0xff]
      %v5843 = vld [vmem:[#allocation2 + $0x40] sm:$0xff]
      %v5844 = vld [vmem:[#allocation2 + $0x48] sm:$0xff]
      %v5845 = vld [vmem:[#allocation2 + $0x50] sm:$0xff]
      %v5846 = vld [vmem:[#allocation2 + $0x58] sm:$0xff]
      %v5847 = vld [vmem:[#allocation2 + $0x60] sm:$0xff]
      %v5848 = vld [vmem:[#allocation2 + $0x68] sm:$0xff]
      %v5849 = vld [vmem:[#allocation2 + $0x70] sm:$0xff]
      %v5850 = vld [vmem:[#allocation2 + $0x78] sm:$0xff]
      %v5851 = vld [vmem:[#allocation9] sm:$0xff]
      %v5852 = vld [vmem:[#allocation9 + $0x8] sm:$0xff]
      %v5855 = vlaneseq
      %v5856 = vshrl.u32 %v5855, 7
      %v5857 = vsub.s32 0, %v5856
      %v5858 = vrot.slane %v5851, %v5857
      %v5859 = vlaneseq
      %v5860 = vshrl.u32 %v5859, 7
      %v5861 = vsub.s32 1, %v5860
      %v5862 = vrot.slane %v5851, %v5861
      %v5863 = vlaneseq
      %v5864 = vshrl.u32 %v5863, 7
      %v5865 = vsub.s32 2, %v5864
      %v5866 = vrot.slane %v5851, %v5865
      %v5867 = vlaneseq
      %v5868 = vshrl.u32 %v5867, 7
      %v5869 = vsub.s32 3, %v5868
      %v5870 = vrot.slane %v5851, %v5869
      %v5871 = vlaneseq
      %v5872 = vshrl.u32 %v5871, 7
      %v5873 = vsub.s32 4, %v5872
      %v5874 = vrot.slane %v5851, %v5873
      %v5875 = vlaneseq
      %v5876 = vshrl.u32 %v5875, 7
      %v5877 = vsub.s32 5, %v5876
      %v5878 = vrot.slane %v5851, %v5877
      %v5879 = vlaneseq
      %v5880 = vshrl.u32 %v5879, 7
      %v5881 = vsub.s32 6, %v5880
      %v5882 = vrot.slane %v5851, %v5881
      %v5883 = vlaneseq
      %v5884 = vshrl.u32 %v5883, 7
      %v5885 = vsub.s32 7, %v5884
      %v5886 = vrot.slane %v5851, %v5885
      %v5887 = vlaneseq
      %v5888 = vshrl.u32 %v5887, 7
      %v5889 = vsub.s32 0, %v5888
      %v5890 = vrot.slane %v5852, %v5889
      %v5891 = vlaneseq
      %v5892 = vshrl.u32 %v5891, 7
      %v5893 = vsub.s32 1, %v5892
      %v5894 = vrot.slane %v5852, %v5893
      %v5895 = vlaneseq
      %v5896 = vshrl.u32 %v5895, 7
      %v5897 = vsub.s32 2, %v5896
      %v5898 = vrot.slane %v5852, %v5897
      %v5899 = vlaneseq
      %v5900 = vshrl.u32 %v5899, 7
      %v5901 = vsub.s32 3, %v5900
      %v5902 = vrot.slane %v5852, %v5901
      %v5903 = vlaneseq
      %v5904 = vshrl.u32 %v5903, 7
      %v5905 = vsub.s32 4, %v5904
      %v5906 = vrot.slane %v5852, %v5905
      %v5907 = vlaneseq
      %v5908 = vshrl.u32 %v5907, 7
      %v5909 = vsub.s32 5, %v5908
      %v5910 = vrot.slane %v5852, %v5909
      %v5911 = vlaneseq
      %v5912 = vshrl.u32 %v5911, 7
      %v5913 = vsub.s32 6, %v5912
      %v5914 = vrot.slane %v5852, %v5913
      %v5915 = vlaneseq
      %v5916 = vshrl.u32 %v5915, 7
      %v5917 = vsub.s32 7, %v5916
      %v5918 = vrot.slane %v5852, %v5917
      %v5935 = vadd.f32 %v5835, %v5858
      %v5936 = vadd.f32 %v5836, %v5862
      %v5937 = vadd.f32 %v5837, %v5866
      %v5938 = vadd.f32 %v5838, %v5870
      %v5939 = vadd.f32 %v5839, %v5874
      %v5940 = vadd.f32 %v5840, %v5878
      %v5941 = vadd.f32 %v5841, %v5882
      %v5942 = vadd.f32 %v5842, %v5886
      %v5943 = vadd.f32 %v5843, %v5890
      %v5944 = vadd.f32 %v5844, %v5894
      %v5945 = vadd.f32 %v5845, %v5898
      %v5946 = vadd.f32 %v5846, %v5902
      %v5947 = vadd.f32 %v5847, %v5906
      %v5948 = vadd.f32 %v5848, %v5910
      %v5949 = vadd.f32 %v5849, %v5914
      %v5950 = vadd.f32 %v5850, %v5918
      %v5951 = vmax.f32 %v5935, 0.0
      %v5952 = vmax.f32 %v5936, 0.0
      %v5953 = vmax.f32 %v5937, 0.0
      %v5954 = vmax.f32 %v5938, 0.0
      %v5955 = vmax.f32 %v5939, 0.0
      %v5956 = vmax.f32 %v5940, 0.0
      %v5957 = vmax.f32 %v5941, 0.0
      %v5958 = vmax.f32 %v5942, 0.0
      %v5959 = vmax.f32 %v5943, 0.0
      %v5960 = vmax.f32 %v5944, 0.0
      %v5961 = vmax.f32 %v5945, 0.0
      %v5962 = vmax.f32 %v5946, 0.0
      %v5963 = vmax.f32 %v5947, 0.0
      %v5964 = vmax.f32 %v5948, 0.0
      %v5965 = vmax.f32 %v5949, 0.0
      %v5966 = vmax.f32 %v5950, 0.0
      %v5967 = vpack.c.bf16 %v5951, %v5951
      %v5968 = vpack.c.bf16 %v5952, %v5952
      %v5969 = vpack.c.bf16 %v5953, %v5953
      %v5970 = vpack.c.bf16 %v5954, %v5954
      %v5971 = vpack.c.bf16 %v5955, %v5955
      %v5972 = vpack.c.bf16 %v5956, %v5956
      %v5973 = vpack.c.bf16 %v5957, %v5957
      %v5974 = vpack.c.bf16 %v5958, %v5958
      %v5975 = vpack.c.bf16 %v5959, %v5959
      %v5976 = vpack.c.bf16 %v5960, %v5960
      %v5977 = vpack.c.bf16 %v5961, %v5961
      %v5978 = vpack.c.bf16 %v5962, %v5962
      %v5979 = vpack.c.bf16 %v5963, %v5963
      %v5980 = vpack.c.bf16 %v5964, %v5964
      %v5981 = vpack.c.bf16 %v5965, %v5965
      %v5982 = vpack.c.bf16 %v5966, %v5966
      %v5983 = vld [vmem:[#allocation10] sm:$0xff]
      %v5984 = vld [vmem:[#allocation10 + $0x8] sm:$0xff]
      %v5985 = vld [vmem:[#allocation10 + $0x10] sm:$0xff]
      %v5986 = vld [vmem:[#allocation10 + $0x18] sm:$0xff]
      %v5987 = vld [vmem:[#allocation10 + $0x20] sm:$0xff]
      %v5988 = vld [vmem:[#allocation10 + $0x28] sm:$0xff]
      %v5989 = vld [vmem:[#allocation10 + $0x30] sm:$0xff]
      %v5990 = vld [vmem:[#allocation10 + $0x38] sm:$0xff]
      %v5991 = vld [vmem:[#allocation10 + $0x40] sm:$0xff]
      %v5992 = vld [vmem:[#allocation10 + $0x48] sm:$0xff]
      %v5993 = vld [vmem:[#allocation10 + $0x50] sm:$0xff]
      %v5994 = vld [vmem:[#allocation10 + $0x58] sm:$0xff]
      %v5995 = vld [vmem:[#allocation10 + $0x60] sm:$0xff]
      %v5996 = vld [vmem:[#allocation10 + $0x68] sm:$0xff]
      %v5997 = vld [vmem:[#allocation10 + $0x70] sm:$0xff]
      %v5998 = vld [vmem:[#allocation10 + $0x78] sm:$0xff]
      %v5999 = vld [vmem:[#allocation10 + $0x80] sm:$0xff]
      %v6000 = vld [vmem:[#allocation10 + $0x88] sm:$0xff]
      %v6001 = vld [vmem:[#allocation10 + $0x90] sm:$0xff]
      %v6002 = vld [vmem:[#allocation10 + $0x98] sm:$0xff]
      %v6003 = vld [vmem:[#allocation10 + $0xa0] sm:$0xff]
      %v6004 = vld [vmem:[#allocation10 + $0xa8] sm:$0xff]
      %v6005 = vld [vmem:[#allocation10 + $0xb0] sm:$0xff]
      %v6006 = vld [vmem:[#allocation10 + $0xb8] sm:$0xff]
      %v6007 = vld [vmem:[#allocation10 + $0xc0] sm:$0xff]
      %v6008 = vld [vmem:[#allocation10 + $0xc8] sm:$0xff]
      %v6009 = vld [vmem:[#allocation10 + $0xd0] sm:$0xff]
      %v6010 = vld [vmem:[#allocation10 + $0xd8] sm:$0xff]
      %v6011 = vld [vmem:[#allocation10 + $0xe0] sm:$0xff]
      %v6012 = vld [vmem:[#allocation10 + $0xe8] sm:$0xff]
      %v6013 = vld [vmem:[#allocation10 + $0xf0] sm:$0xff]
      %v6014 = vld [vmem:[#allocation10 + $0xf8] sm:$0xff]
      %v6015 = vld [vmem:[#allocation10 + $0x100] sm:$0xff]
      %v6016 = vld [vmem:[#allocation10 + $0x108] sm:$0xff]
      %v6017 = vld [vmem:[#allocation10 + $0x110] sm:$0xff]
      %v6018 = vld [vmem:[#allocation10 + $0x118] sm:$0xff]
      %v6019 = vld [vmem:[#allocation10 + $0x120] sm:$0xff]
      %v6020 = vld [vmem:[#allocation10 + $0x128] sm:$0xff]
      %v6021 = vld [vmem:[#allocation10 + $0x130] sm:$0xff]
      %v6022 = vld [vmem:[#allocation10 + $0x138] sm:$0xff]
      %v6023 = vld [vmem:[#allocation10 + $0x140] sm:$0xff]
      %v6024 = vld [vmem:[#allocation10 + $0x148] sm:$0xff]
      %v6025 = vld [vmem:[#allocation10 + $0x150] sm:$0xff]
      %v6026 = vld [vmem:[#allocation10 + $0x158] sm:$0xff]
      %v6027 = vld [vmem:[#allocation10 + $0x160] sm:$0xff]
      %v6028 = vld [vmem:[#allocation10 + $0x168] sm:$0xff]
      %v6029 = vld [vmem:[#allocation10 + $0x170] sm:$0xff]
      %v6030 = vld [vmem:[#allocation10 + $0x178] sm:$0xff]
      %v6031 = vld [vmem:[#allocation10 + $0x180] sm:$0xff]
      %v6032 = vld [vmem:[#allocation10 + $0x188] sm:$0xff]
      %v6033 = vld [vmem:[#allocation10 + $0x190] sm:$0xff]
      %v6034 = vld [vmem:[#allocation10 + $0x198] sm:$0xff]
      %v6035 = vld [vmem:[#allocation10 + $0x1a0] sm:$0xff]
      %v6036 = vld [vmem:[#allocation10 + $0x1a8] sm:$0xff]
      %v6037 = vld [vmem:[#allocation10 + $0x1b0] sm:$0xff]
      %v6038 = vld [vmem:[#allocation10 + $0x1b8] sm:$0xff]
      %v6039 = vld [vmem:[#allocation10 + $0x1c0] sm:$0xff]
      %v6040 = vld [vmem:[#allocation10 + $0x1c8] sm:$0xff]
      %v6041 = vld [vmem:[#allocation10 + $0x1d0] sm:$0xff]
      %v6042 = vld [vmem:[#allocation10 + $0x1d8] sm:$0xff]
      %v6043 = vld [vmem:[#allocation10 + $0x1e0] sm:$0xff]
      %v6044 = vld [vmem:[#allocation10 + $0x1e8] sm:$0xff]
      %v6045 = vld [vmem:[#allocation10 + $0x1f0] sm:$0xff]
      %v6046 = vld [vmem:[#allocation10 + $0x1f8] sm:$0xff]
      %v6047 = vld [vmem:[#allocation10 + $0x200] sm:$0xff]
      %v6048 = vld [vmem:[#allocation10 + $0x208] sm:$0xff]
      %v6049 = vld [vmem:[#allocation10 + $0x210] sm:$0xff]
      %v6050 = vld [vmem:[#allocation10 + $0x218] sm:$0xff]
      %v6051 = vld [vmem:[#allocation10 + $0x220] sm:$0xff]
      %v6052 = vld [vmem:[#allocation10 + $0x228] sm:$0xff]
      %v6053 = vld [vmem:[#allocation10 + $0x230] sm:$0xff]
      %v6054 = vld [vmem:[#allocation10 + $0x238] sm:$0xff]
      %v6055 = vld [vmem:[#allocation10 + $0x240] sm:$0xff]
      %v6056 = vld [vmem:[#allocation10 + $0x248] sm:$0xff]
      %v6057 = vld [vmem:[#allocation10 + $0x250] sm:$0xff]
      %v6058 = vld [vmem:[#allocation10 + $0x258] sm:$0xff]
      %v6059 = vld [vmem:[#allocation10 + $0x260] sm:$0xff]
      %v6060 = vld [vmem:[#allocation10 + $0x268] sm:$0xff]
      %v6061 = vld [vmem:[#allocation10 + $0x270] sm:$0xff]
      %v6062 = vld [vmem:[#allocation10 + $0x278] sm:$0xff]
      %v6063 = vld [vmem:[#allocation10 + $0x280] sm:$0xff]
      %v6064 = vld [vmem:[#allocation10 + $0x288] sm:$0xff]
      %v6065 = vld [vmem:[#allocation10 + $0x290] sm:$0xff]
      %v6066 = vld [vmem:[#allocation10 + $0x298] sm:$0xff]
      %v6067 = vld [vmem:[#allocation10 + $0x2a0] sm:$0xff]
      %v6068 = vld [vmem:[#allocation10 + $0x2a8] sm:$0xff]
      %v6069 = vld [vmem:[#allocation10 + $0x2b0] sm:$0xff]
      %v6070 = vld [vmem:[#allocation10 + $0x2b8] sm:$0xff]
      %v6071 = vld [vmem:[#allocation10 + $0x2c0] sm:$0xff]
      %v6072 = vld [vmem:[#allocation10 + $0x2c8] sm:$0xff]
      %v6073 = vld [vmem:[#allocation10 + $0x2d0] sm:$0xff]
      %v6074 = vld [vmem:[#allocation10 + $0x2d8] sm:$0xff]
      %v6075 = vld [vmem:[#allocation10 + $0x2e0] sm:$0xff]
      %v6076 = vld [vmem:[#allocation10 + $0x2e8] sm:$0xff]
      %v6077 = vld [vmem:[#allocation10 + $0x2f0] sm:$0xff]
      %v6078 = vld [vmem:[#allocation10 + $0x2f8] sm:$0xff]
      %v6079 = vld [vmem:[#allocation10 + $0x300] sm:$0xff]
      %v6080 = vld [vmem:[#allocation10 + $0x308] sm:$0xff]
      %v6081 = vld [vmem:[#allocation10 + $0x310] sm:$0xff]
      %v6082 = vld [vmem:[#allocation10 + $0x318] sm:$0xff]
      %v6083 = vld [vmem:[#allocation10 + $0x320] sm:$0xff]
      %v6084 = vld [vmem:[#allocation10 + $0x328] sm:$0xff]
      %v6085 = vld [vmem:[#allocation10 + $0x330] sm:$0xff]
      %v6086 = vld [vmem:[#allocation10 + $0x338] sm:$0xff]
      %v6087 = vld [vmem:[#allocation10 + $0x340] sm:$0xff]
      %v6088 = vld [vmem:[#allocation10 + $0x348] sm:$0xff]
      %v6089 = vld [vmem:[#allocation10 + $0x350] sm:$0xff]
      %v6090 = vld [vmem:[#allocation10 + $0x358] sm:$0xff]
      %v6091 = vld [vmem:[#allocation10 + $0x360] sm:$0xff]
      %v6092 = vld [vmem:[#allocation10 + $0x368] sm:$0xff]
      %v6093 = vld [vmem:[#allocation10 + $0x370] sm:$0xff]
      %v6094 = vld [vmem:[#allocation10 + $0x378] sm:$0xff]
      %v6095 = vld [vmem:[#allocation10 + $0x380] sm:$0xff]
      %v6096 = vld [vmem:[#allocation10 + $0x388] sm:$0xff]
      %v6097 = vld [vmem:[#allocation10 + $0x390] sm:$0xff]
      %v6098 = vld [vmem:[#allocation10 + $0x398] sm:$0xff]
      %v6099 = vld [vmem:[#allocation10 + $0x3a0] sm:$0xff]
      %v6100 = vld [vmem:[#allocation10 + $0x3a8] sm:$0xff]
      %v6101 = vld [vmem:[#allocation10 + $0x3b0] sm:$0xff]
      %v6102 = vld [vmem:[#allocation10 + $0x3b8] sm:$0xff]
      %v6103 = vld [vmem:[#allocation10 + $0x3c0] sm:$0xff]
      %v6104 = vld [vmem:[#allocation10 + $0x3c8] sm:$0xff]
      %v6105 = vld [vmem:[#allocation10 + $0x3d0] sm:$0xff]
      %v6106 = vld [vmem:[#allocation10 + $0x3d8] sm:$0xff]
      %v6107 = vld [vmem:[#allocation10 + $0x3e0] sm:$0xff]
      %v6108 = vld [vmem:[#allocation10 + $0x3e8] sm:$0xff]
      %v6109 = vld [vmem:[#allocation10 + $0x3f0] sm:$0xff]
      %v6110 = vld [vmem:[#allocation10 + $0x3f8] sm:$0xff]
      %v6111 = vld [vmem:[#allocation10 + $0x400] sm:$0xff]
      %v6112 = vld [vmem:[#allocation10 + $0x408] sm:$0xff]
      %v6113 = vld [vmem:[#allocation10 + $0x410] sm:$0xff]
      %v6114 = vld [vmem:[#allocation10 + $0x418] sm:$0xff]
      %v6115 = vld [vmem:[#allocation10 + $0x420] sm:$0xff]
      %v6116 = vld [vmem:[#allocation10 + $0x428] sm:$0xff]
      %v6117 = vld [vmem:[#allocation10 + $0x430] sm:$0xff]
      %v6118 = vld [vmem:[#allocation10 + $0x438] sm:$0xff]
      %v6119 = vld [vmem:[#allocation10 + $0x440] sm:$0xff]
      %v6120 = vld [vmem:[#allocation10 + $0x448] sm:$0xff]
      %v6121 = vld [vmem:[#allocation10 + $0x450] sm:$0xff]
      %v6122 = vld [vmem:[#allocation10 + $0x458] sm:$0xff]
      %v6123 = vld [vmem:[#allocation10 + $0x460] sm:$0xff]
      %v6124 = vld [vmem:[#allocation10 + $0x468] sm:$0xff]
      %v6125 = vld [vmem:[#allocation10 + $0x470] sm:$0xff]
      %v6126 = vld [vmem:[#allocation10 + $0x478] sm:$0xff]
      %v6127 = vld [vmem:[#allocation10 + $0x480] sm:$0xff]
      %v6128 = vld [vmem:[#allocation10 + $0x488] sm:$0xff]
      %v6129 = vld [vmem:[#allocation10 + $0x490] sm:$0xff]
      %v6130 = vld [vmem:[#allocation10 + $0x498] sm:$0xff]
      %v6131 = vld [vmem:[#allocation10 + $0x4a0] sm:$0xff]
      %v6132 = vld [vmem:[#allocation10 + $0x4a8] sm:$0xff]
      %v6133 = vld [vmem:[#allocation10 + $0x4b0] sm:$0xff]
      %v6134 = vld [vmem:[#allocation10 + $0x4b8] sm:$0xff]
      %v6135 = vld [vmem:[#allocation10 + $0x4c0] sm:$0xff]
      %v6136 = vld [vmem:[#allocation10 + $0x4c8] sm:$0xff]
      %v6137 = vld [vmem:[#allocation10 + $0x4d0] sm:$0xff]
      %v6138 = vld [vmem:[#allocation10 + $0x4d8] sm:$0xff]
      %v6139 = vld [vmem:[#allocation10 + $0x4e0] sm:$0xff]
      %v6140 = vld [vmem:[#allocation10 + $0x4e8] sm:$0xff]
      %v6141 = vld [vmem:[#allocation10 + $0x4f0] sm:$0xff]
      %v6142 = vld [vmem:[#allocation10 + $0x4f8] sm:$0xff]
      %v6143 = vld [vmem:[#allocation10 + $0x500] sm:$0xff]
      %v6144 = vld [vmem:[#allocation10 + $0x508] sm:$0xff]
      %v6145 = vld [vmem:[#allocation10 + $0x510] sm:$0xff]
      %v6146 = vld [vmem:[#allocation10 + $0x518] sm:$0xff]
      %v6147 = vld [vmem:[#allocation10 + $0x520] sm:$0xff]
      %v6148 = vld [vmem:[#allocation10 + $0x528] sm:$0xff]
      %v6149 = vld [vmem:[#allocation10 + $0x530] sm:$0xff]
      %v6150 = vld [vmem:[#allocation10 + $0x538] sm:$0xff]
      %v6151 = vld [vmem:[#allocation10 + $0x540] sm:$0xff]
      %v6152 = vld [vmem:[#allocation10 + $0x548] sm:$0xff]
      %v6153 = vld [vmem:[#allocation10 + $0x550] sm:$0xff]
      %v6154 = vld [vmem:[#allocation10 + $0x558] sm:$0xff]
      %v6155 = vld [vmem:[#allocation10 + $0x560] sm:$0xff]
      %v6156 = vld [vmem:[#allocation10 + $0x568] sm:$0xff]
      %v6157 = vld [vmem:[#allocation10 + $0x570] sm:$0xff]
      %v6158 = vld [vmem:[#allocation10 + $0x578] sm:$0xff]
      %v6159 = vld [vmem:[#allocation10 + $0x580] sm:$0xff]
      %v6160 = vld [vmem:[#allocation10 + $0x588] sm:$0xff]
      %v6161 = vld [vmem:[#allocation10 + $0x590] sm:$0xff]
      %v6162 = vld [vmem:[#allocation10 + $0x598] sm:$0xff]
      %v6163 = vld [vmem:[#allocation10 + $0x5a0] sm:$0xff]
      %v6164 = vld [vmem:[#allocation10 + $0x5a8] sm:$0xff]
      %v6165 = vld [vmem:[#allocation10 + $0x5b0] sm:$0xff]
      %v6166 = vld [vmem:[#allocation10 + $0x5b8] sm:$0xff]
      %v6167 = vld [vmem:[#allocation10 + $0x5c0] sm:$0xff]
      %v6168 = vld [vmem:[#allocation10 + $0x5c8] sm:$0xff]
      %v6169 = vld [vmem:[#allocation10 + $0x5d0] sm:$0xff]
      %v6170 = vld [vmem:[#allocation10 + $0x5d8] sm:$0xff]
      %v6171 = vld [vmem:[#allocation10 + $0x5e0] sm:$0xff]
      %v6172 = vld [vmem:[#allocation10 + $0x5e8] sm:$0xff]
      %v6173 = vld [vmem:[#allocation10 + $0x5f0] sm:$0xff]
      %v6174 = vld [vmem:[#allocation10 + $0x5f8] sm:$0xff]
      %v6175 = vld [vmem:[#allocation10 + $0x600] sm:$0xff]
      %v6176 = vld [vmem:[#allocation10 + $0x608] sm:$0xff]
      %v6177 = vld [vmem:[#allocation10 + $0x610] sm:$0xff]
      %v6178 = vld [vmem:[#allocation10 + $0x618] sm:$0xff]
      %v6179 = vld [vmem:[#allocation10 + $0x620] sm:$0xff]
      %v6180 = vld [vmem:[#allocation10 + $0x628] sm:$0xff]
      %v6181 = vld [vmem:[#allocation10 + $0x630] sm:$0xff]
      %v6182 = vld [vmem:[#allocation10 + $0x638] sm:$0xff]
      %v6183 = vld [vmem:[#allocation10 + $0x640] sm:$0xff]
      %v6184 = vld [vmem:[#allocation10 + $0x648] sm:$0xff]
      %v6185 = vld [vmem:[#allocation10 + $0x650] sm:$0xff]
      %v6186 = vld [vmem:[#allocation10 + $0x658] sm:$0xff]
      %v6187 = vld [vmem:[#allocation10 + $0x660] sm:$0xff]
      %v6188 = vld [vmem:[#allocation10 + $0x668] sm:$0xff]
      %v6189 = vld [vmem:[#allocation10 + $0x670] sm:$0xff]
      %v6190 = vld [vmem:[#allocation10 + $0x678] sm:$0xff]
      %v6191 = vld [vmem:[#allocation10 + $0x680] sm:$0xff]
      %v6192 = vld [vmem:[#allocation10 + $0x688] sm:$0xff]
      %v6193 = vld [vmem:[#allocation10 + $0x690] sm:$0xff]
      %v6194 = vld [vmem:[#allocation10 + $0x698] sm:$0xff]
      %v6195 = vld [vmem:[#allocation10 + $0x6a0] sm:$0xff]
      %v6196 = vld [vmem:[#allocation10 + $0x6a8] sm:$0xff]
      %v6197 = vld [vmem:[#allocation10 + $0x6b0] sm:$0xff]
      %v6198 = vld [vmem:[#allocation10 + $0x6b8] sm:$0xff]
      %v6199 = vld [vmem:[#allocation10 + $0x6c0] sm:$0xff]
      %v6200 = vld [vmem:[#allocation10 + $0x6c8] sm:$0xff]
      %v6201 = vld [vmem:[#allocation10 + $0x6d0] sm:$0xff]
      %v6202 = vld [vmem:[#allocation10 + $0x6d8] sm:$0xff]
      %v6203 = vld [vmem:[#allocation10 + $0x6e0] sm:$0xff]
      %v6204 = vld [vmem:[#allocation10 + $0x6e8] sm:$0xff]
      %v6205 = vld [vmem:[#allocation10 + $0x6f0] sm:$0xff]
      %v6206 = vld [vmem:[#allocation10 + $0x6f8] sm:$0xff]
      %v6207 = vld [vmem:[#allocation10 + $0x700] sm:$0xff]
      %v6208 = vld [vmem:[#allocation10 + $0x708] sm:$0xff]
      %v6209 = vld [vmem:[#allocation10 + $0x710] sm:$0xff]
      %v6210 = vld [vmem:[#allocation10 + $0x718] sm:$0xff]
      %v6211 = vld [vmem:[#allocation10 + $0x720] sm:$0xff]
      %v6212 = vld [vmem:[#allocation10 + $0x728] sm:$0xff]
      %v6213 = vld [vmem:[#allocation10 + $0x730] sm:$0xff]
      %v6214 = vld [vmem:[#allocation10 + $0x738] sm:$0xff]
      %v6215 = vld [vmem:[#allocation10 + $0x740] sm:$0xff]
      %v6216 = vld [vmem:[#allocation10 + $0x748] sm:$0xff]
      %v6217 = vld [vmem:[#allocation10 + $0x750] sm:$0xff]
      %v6218 = vld [vmem:[#allocation10 + $0x758] sm:$0xff]
      %v6219 = vld [vmem:[#allocation10 + $0x760] sm:$0xff]
      %v6220 = vld [vmem:[#allocation10 + $0x768] sm:$0xff]
      %v6221 = vld [vmem:[#allocation10 + $0x770] sm:$0xff]
      %v6222 = vld [vmem:[#allocation10 + $0x778] sm:$0xff]
      %v6223 = vld [vmem:[#allocation10 + $0x780] sm:$0xff]
      %v6224 = vld [vmem:[#allocation10 + $0x788] sm:$0xff]
      %v6225 = vld [vmem:[#allocation10 + $0x790] sm:$0xff]
      %v6226 = vld [vmem:[#allocation10 + $0x798] sm:$0xff]
      %v6227 = vld [vmem:[#allocation10 + $0x7a0] sm:$0xff]
      %v6228 = vld [vmem:[#allocation10 + $0x7a8] sm:$0xff]
      %v6229 = vld [vmem:[#allocation10 + $0x7b0] sm:$0xff]
      %v6230 = vld [vmem:[#allocation10 + $0x7b8] sm:$0xff]
      %v6231 = vld [vmem:[#allocation10 + $0x7c0] sm:$0xff]
      %v6232 = vld [vmem:[#allocation10 + $0x7c8] sm:$0xff]
      %v6233 = vld [vmem:[#allocation10 + $0x7d0] sm:$0xff]
      %v6234 = vld [vmem:[#allocation10 + $0x7d8] sm:$0xff]
      %v6235 = vld [vmem:[#allocation10 + $0x7e0] sm:$0xff]
      %v6236 = vld [vmem:[#allocation10 + $0x7e8] sm:$0xff]
      %v6237 = vld [vmem:[#allocation10 + $0x7f0] sm:$0xff]
      %v6238 = vld [vmem:[#allocation10 + $0x7f8] sm:$0xff]
      %v6239 = vld [vmem:[#allocation10 + $0x800] sm:$0xff]
      %v6240 = vld [vmem:[#allocation10 + $0x808] sm:$0xff]
      %v6241 = vld [vmem:[#allocation10 + $0x810] sm:$0xff]
      %v6242 = vld [vmem:[#allocation10 + $0x818] sm:$0xff]
      %v6243 = vld [vmem:[#allocation10 + $0x820] sm:$0xff]
      %v6244 = vld [vmem:[#allocation10 + $0x828] sm:$0xff]
      %v6245 = vld [vmem:[#allocation10 + $0x830] sm:$0xff]
      %v6246 = vld [vmem:[#allocation10 + $0x838] sm:$0xff]
      %v6247 = vld [vmem:[#allocation10 + $0x840] sm:$0xff]
      %v6248 = vld [vmem:[#allocation10 + $0x848] sm:$0xff]
      %v6249 = vld [vmem:[#allocation10 + $0x850] sm:$0xff]
      %v6250 = vld [vmem:[#allocation10 + $0x858] sm:$0xff]
      %v6251 = vld [vmem:[#allocation10 + $0x860] sm:$0xff]
      %v6252 = vld [vmem:[#allocation10 + $0x868] sm:$0xff]
      %v6253 = vld [vmem:[#allocation10 + $0x870] sm:$0xff]
      %v6254 = vld [vmem:[#allocation10 + $0x878] sm:$0xff]
      %v6255 = vld [vmem:[#allocation10 + $0x880] sm:$0xff]
      %v6256 = vld [vmem:[#allocation10 + $0x888] sm:$0xff]
      %v6257 = vld [vmem:[#allocation10 + $0x890] sm:$0xff]
      %v6258 = vld [vmem:[#allocation10 + $0x898] sm:$0xff]
      %v6259 = vld [vmem:[#allocation10 + $0x8a0] sm:$0xff]
      %v6260 = vld [vmem:[#allocation10 + $0x8a8] sm:$0xff]
      %v6261 = vld [vmem:[#allocation10 + $0x8b0] sm:$0xff]
      %v6262 = vld [vmem:[#allocation10 + $0x8b8] sm:$0xff]
      %v6263 = vld [vmem:[#allocation10 + $0x8c0] sm:$0xff]
      %v6264 = vld [vmem:[#allocation10 + $0x8c8] sm:$0xff]
      %v6265 = vld [vmem:[#allocation10 + $0x8d0] sm:$0xff]
      %v6266 = vld [vmem:[#allocation10 + $0x8d8] sm:$0xff]
      %v6267 = vld [vmem:[#allocation10 + $0x8e0] sm:$0xff]
      %v6268 = vld [vmem:[#allocation10 + $0x8e8] sm:$0xff]
      %v6269 = vld [vmem:[#allocation10 + $0x8f0] sm:$0xff]
      %v6270 = vld [vmem:[#allocation10 + $0x8f8] sm:$0xff]
      %v6271 = vld [vmem:[#allocation10 + $0x900] sm:$0xff]
      %v6272 = vld [vmem:[#allocation10 + $0x908] sm:$0xff]
      %v6273 = vld [vmem:[#allocation10 + $0x910] sm:$0xff]
      %v6274 = vld [vmem:[#allocation10 + $0x918] sm:$0xff]
      %v6275 = vld [vmem:[#allocation10 + $0x920] sm:$0xff]
      %v6276 = vld [vmem:[#allocation10 + $0x928] sm:$0xff]
      %v6277 = vld [vmem:[#allocation10 + $0x930] sm:$0xff]
      %v6278 = vld [vmem:[#allocation10 + $0x938] sm:$0xff]
      %v6279 = vld [vmem:[#allocation10 + $0x940] sm:$0xff]
      %v6280 = vld [vmem:[#allocation10 + $0x948] sm:$0xff]
      %v6281 = vld [vmem:[#allocation10 + $0x950] sm:$0xff]
      %v6282 = vld [vmem:[#allocation10 + $0x958] sm:$0xff]
      %v6283 = vld [vmem:[#allocation10 + $0x960] sm:$0xff]
      %v6284 = vld [vmem:[#allocation10 + $0x968] sm:$0xff]
      %v6285 = vld [vmem:[#allocation10 + $0x970] sm:$0xff]
      %v6286 = vld [vmem:[#allocation10 + $0x978] sm:$0xff]
      %v6287 = vld [vmem:[#allocation10 + $0x980] sm:$0xff]
      %v6288 = vld [vmem:[#allocation10 + $0x988] sm:$0xff]
      %v6289 = vld [vmem:[#allocation10 + $0x990] sm:$0xff]
      %v6290 = vld [vmem:[#allocation10 + $0x998] sm:$0xff]
      %v6291 = vld [vmem:[#allocation10 + $0x9a0] sm:$0xff]
      %v6292 = vld [vmem:[#allocation10 + $0x9a8] sm:$0xff]
      %v6293 = vld [vmem:[#allocation10 + $0x9b0] sm:$0xff]
      %v6294 = vld [vmem:[#allocation10 + $0x9b8] sm:$0xff]
      %v6295 = vld [vmem:[#allocation10 + $0x9c0] sm:$0xff]
      %v6296 = vld [vmem:[#allocation10 + $0x9c8] sm:$0xff]
      %v6297 = vld [vmem:[#allocation10 + $0x9d0] sm:$0xff]
      %v6298 = vld [vmem:[#allocation10 + $0x9d8] sm:$0xff]
      %v6299 = vld [vmem:[#allocation10 + $0x9e0] sm:$0xff]
      %v6300 = vld [vmem:[#allocation10 + $0x9e8] sm:$0xff]
      %v6301 = vld [vmem:[#allocation10 + $0x9f0] sm:$0xff]
      %v6302 = vld [vmem:[#allocation10 + $0x9f8] sm:$0xff]
      %v6303 = vld [vmem:[#allocation10 + $0xa00] sm:$0xff]
      %v6304 = vld [vmem:[#allocation10 + $0xa08] sm:$0xff]
      %v6305 = vld [vmem:[#allocation10 + $0xa10] sm:$0xff]
      %v6306 = vld [vmem:[#allocation10 + $0xa18] sm:$0xff]
      %v6307 = vld [vmem:[#allocation10 + $0xa20] sm:$0xff]
      %v6308 = vld [vmem:[#allocation10 + $0xa28] sm:$0xff]
      %v6309 = vld [vmem:[#allocation10 + $0xa30] sm:$0xff]
      %v6310 = vld [vmem:[#allocation10 + $0xa38] sm:$0xff]
      %v6311 = vld [vmem:[#allocation10 + $0xa40] sm:$0xff]
      %v6312 = vld [vmem:[#allocation10 + $0xa48] sm:$0xff]
      %v6313 = vld [vmem:[#allocation10 + $0xa50] sm:$0xff]
      %v6314 = vld [vmem:[#allocation10 + $0xa58] sm:$0xff]
      %v6315 = vld [vmem:[#allocation10 + $0xa60] sm:$0xff]
      %v6316 = vld [vmem:[#allocation10 + $0xa68] sm:$0xff]
      %v6317 = vld [vmem:[#allocation10 + $0xa70] sm:$0xff]
      %v6318 = vld [vmem:[#allocation10 + $0xa78] sm:$0xff]
      %v6319 = vld [vmem:[#allocation10 + $0xa80] sm:$0xff]
      %v6320 = vld [vmem:[#allocation10 + $0xa88] sm:$0xff]
      %v6321 = vld [vmem:[#allocation10 + $0xa90] sm:$0xff]
      %v6322 = vld [vmem:[#allocation10 + $0xa98] sm:$0xff]
      %v6323 = vld [vmem:[#allocation10 + $0xaa0] sm:$0xff]
      %v6324 = vld [vmem:[#allocation10 + $0xaa8] sm:$0xff]
      %v6325 = vld [vmem:[#allocation10 + $0xab0] sm:$0xff]
      %v6326 = vld [vmem:[#allocation10 + $0xab8] sm:$0xff]
      %v6327 = vld [vmem:[#allocation10 + $0xac0] sm:$0xff]
      %v6328 = vld [vmem:[#allocation10 + $0xac8] sm:$0xff]
      %v6329 = vld [vmem:[#allocation10 + $0xad0] sm:$0xff]
      %v6330 = vld [vmem:[#allocation10 + $0xad8] sm:$0xff]
      %v6331 = vld [vmem:[#allocation10 + $0xae0] sm:$0xff]
      %v6332 = vld [vmem:[#allocation10 + $0xae8] sm:$0xff]
      %v6333 = vld [vmem:[#allocation10 + $0xaf0] sm:$0xff]
      %v6334 = vld [vmem:[#allocation10 + $0xaf8] sm:$0xff]
      %v6335 = vld [vmem:[#allocation10 + $0xb00] sm:$0xff]
      %v6336 = vld [vmem:[#allocation10 + $0xb08] sm:$0xff]
      %v6337 = vld [vmem:[#allocation10 + $0xb10] sm:$0xff]
      %v6338 = vld [vmem:[#allocation10 + $0xb18] sm:$0xff]
      %v6339 = vld [vmem:[#allocation10 + $0xb20] sm:$0xff]
      %v6340 = vld [vmem:[#allocation10 + $0xb28] sm:$0xff]
      %v6341 = vld [vmem:[#allocation10 + $0xb30] sm:$0xff]
      %v6342 = vld [vmem:[#allocation10 + $0xb38] sm:$0xff]
      %v6343 = vld [vmem:[#allocation10 + $0xb40] sm:$0xff]
      %v6344 = vld [vmem:[#allocation10 + $0xb48] sm:$0xff]
      %v6345 = vld [vmem:[#allocation10 + $0xb50] sm:$0xff]
      %v6346 = vld [vmem:[#allocation10 + $0xb58] sm:$0xff]
      %v6347 = vld [vmem:[#allocation10 + $0xb60] sm:$0xff]
      %v6348 = vld [vmem:[#allocation10 + $0xb68] sm:$0xff]
      %v6349 = vld [vmem:[#allocation10 + $0xb70] sm:$0xff]
      %v6350 = vld [vmem:[#allocation10 + $0xb78] sm:$0xff]
      %v6351 = vld [vmem:[#allocation10 + $0xb80] sm:$0xff]
      %v6352 = vld [vmem:[#allocation10 + $0xb88] sm:$0xff]
      %v6353 = vld [vmem:[#allocation10 + $0xb90] sm:$0xff]
      %v6354 = vld [vmem:[#allocation10 + $0xb98] sm:$0xff]
      %v6355 = vld [vmem:[#allocation10 + $0xba0] sm:$0xff]
      %v6356 = vld [vmem:[#allocation10 + $0xba8] sm:$0xff]
      %v6357 = vld [vmem:[#allocation10 + $0xbb0] sm:$0xff]
      %v6358 = vld [vmem:[#allocation10 + $0xbb8] sm:$0xff]
      %v6359 = vld [vmem:[#allocation10 + $0xbc0] sm:$0xff]
      %v6360 = vld [vmem:[#allocation10 + $0xbc8] sm:$0xff]
      %v6361 = vld [vmem:[#allocation10 + $0xbd0] sm:$0xff]
      %v6362 = vld [vmem:[#allocation10 + $0xbd8] sm:$0xff]
      %v6363 = vld [vmem:[#allocation10 + $0xbe0] sm:$0xff]
      %v6364 = vld [vmem:[#allocation10 + $0xbe8] sm:$0xff]
      %v6365 = vld [vmem:[#allocation10 + $0xbf0] sm:$0xff]
      %v6366 = vld [vmem:[#allocation10 + $0xbf8] sm:$0xff]
      %v6367 = vld [vmem:[#allocation10 + $0xc00] sm:$0xff]
      %v6368 = vld [vmem:[#allocation10 + $0xc08] sm:$0xff]
      %v6369 = vld [vmem:[#allocation10 + $0xc10] sm:$0xff]
      %v6370 = vld [vmem:[#allocation10 + $0xc18] sm:$0xff]
      %v6371 = vld [vmem:[#allocation10 + $0xc20] sm:$0xff]
      %v6372 = vld [vmem:[#allocation10 + $0xc28] sm:$0xff]
      %v6373 = vld [vmem:[#allocation10 + $0xc30] sm:$0xff]
      %v6374 = vld [vmem:[#allocation10 + $0xc38] sm:$0xff]
      %v6375 = vld [vmem:[#allocation10 + $0xc40] sm:$0xff]
      %v6376 = vld [vmem:[#allocation10 + $0xc48] sm:$0xff]
      %v6377 = vld [vmem:[#allocation10 + $0xc50] sm:$0xff]
      %v6378 = vld [vmem:[#allocation10 + $0xc58] sm:$0xff]
      %v6379 = vld [vmem:[#allocation10 + $0xc60] sm:$0xff]
      %v6380 = vld [vmem:[#allocation10 + $0xc68] sm:$0xff]
      %v6381 = vld [vmem:[#allocation10 + $0xc70] sm:$0xff]
      %v6382 = vld [vmem:[#allocation10 + $0xc78] sm:$0xff]
      %v6383 = vld [vmem:[#allocation10 + $0xc80] sm:$0xff]
      %v6384 = vld [vmem:[#allocation10 + $0xc88] sm:$0xff]
      %v6385 = vld [vmem:[#allocation10 + $0xc90] sm:$0xff]
      %v6386 = vld [vmem:[#allocation10 + $0xc98] sm:$0xff]
      %v6387 = vld [vmem:[#allocation10 + $0xca0] sm:$0xff]
      %v6388 = vld [vmem:[#allocation10 + $0xca8] sm:$0xff]
      %v6389 = vld [vmem:[#allocation10 + $0xcb0] sm:$0xff]
      %v6390 = vld [vmem:[#allocation10 + $0xcb8] sm:$0xff]
      %v6391 = vld [vmem:[#allocation10 + $0xcc0] sm:$0xff]
      %v6392 = vld [vmem:[#allocation10 + $0xcc8] sm:$0xff]
      %v6393 = vld [vmem:[#allocation10 + $0xcd0] sm:$0xff]
      %v6394 = vld [vmem:[#allocation10 + $0xcd8] sm:$0xff]
      %v6395 = vld [vmem:[#allocation10 + $0xce0] sm:$0xff]
      %v6396 = vld [vmem:[#allocation10 + $0xce8] sm:$0xff]
      %v6397 = vld [vmem:[#allocation10 + $0xcf0] sm:$0xff]
      %v6398 = vld [vmem:[#allocation10 + $0xcf8] sm:$0xff]
      %v6399 = vld [vmem:[#allocation10 + $0xd00] sm:$0xff]
      %v6400 = vld [vmem:[#allocation10 + $0xd08] sm:$0xff]
      %v6401 = vld [vmem:[#allocation10 + $0xd10] sm:$0xff]
      %v6402 = vld [vmem:[#allocation10 + $0xd18] sm:$0xff]
      %v6403 = vld [vmem:[#allocation10 + $0xd20] sm:$0xff]
      %v6404 = vld [vmem:[#allocation10 + $0xd28] sm:$0xff]
      %v6405 = vld [vmem:[#allocation10 + $0xd30] sm:$0xff]
      %v6406 = vld [vmem:[#allocation10 + $0xd38] sm:$0xff]
      %v6407 = vld [vmem:[#allocation10 + $0xd40] sm:$0xff]
      %v6408 = vld [vmem:[#allocation10 + $0xd48] sm:$0xff]
      %v6409 = vld [vmem:[#allocation10 + $0xd50] sm:$0xff]
      %v6410 = vld [vmem:[#allocation10 + $0xd58] sm:$0xff]
      %v6411 = vld [vmem:[#allocation10 + $0xd60] sm:$0xff]
      %v6412 = vld [vmem:[#allocation10 + $0xd68] sm:$0xff]
      %v6413 = vld [vmem:[#allocation10 + $0xd70] sm:$0xff]
      %v6414 = vld [vmem:[#allocation10 + $0xd78] sm:$0xff]
      %v6415 = vld [vmem:[#allocation10 + $0xd80] sm:$0xff]
      %v6416 = vld [vmem:[#allocation10 + $0xd88] sm:$0xff]
      %v6417 = vld [vmem:[#allocation10 + $0xd90] sm:$0xff]
      %v6418 = vld [vmem:[#allocation10 + $0xd98] sm:$0xff]
      %v6419 = vld [vmem:[#allocation10 + $0xda0] sm:$0xff]
      %v6420 = vld [vmem:[#allocation10 + $0xda8] sm:$0xff]
      %v6421 = vld [vmem:[#allocation10 + $0xdb0] sm:$0xff]
      %v6422 = vld [vmem:[#allocation10 + $0xdb8] sm:$0xff]
      %v6423 = vld [vmem:[#allocation10 + $0xdc0] sm:$0xff]
      %v6424 = vld [vmem:[#allocation10 + $0xdc8] sm:$0xff]
      %v6425 = vld [vmem:[#allocation10 + $0xdd0] sm:$0xff]
      %v6426 = vld [vmem:[#allocation10 + $0xdd8] sm:$0xff]
      %v6427 = vld [vmem:[#allocation10 + $0xde0] sm:$0xff]
      %v6428 = vld [vmem:[#allocation10 + $0xde8] sm:$0xff]
      %v6429 = vld [vmem:[#allocation10 + $0xdf0] sm:$0xff]
      %v6430 = vld [vmem:[#allocation10 + $0xdf8] sm:$0xff]
      %v6431 = vld [vmem:[#allocation10 + $0xe00] sm:$0xff]
      %v6432 = vld [vmem:[#allocation10 + $0xe08] sm:$0xff]
      %v6433 = vld [vmem:[#allocation10 + $0xe10] sm:$0xff]
      %v6434 = vld [vmem:[#allocation10 + $0xe18] sm:$0xff]
      %v6435 = vld [vmem:[#allocation10 + $0xe20] sm:$0xff]
      %v6436 = vld [vmem:[#allocation10 + $0xe28] sm:$0xff]
      %v6437 = vld [vmem:[#allocation10 + $0xe30] sm:$0xff]
      %v6438 = vld [vmem:[#allocation10 + $0xe38] sm:$0xff]
      %v6439 = vld [vmem:[#allocation10 + $0xe40] sm:$0xff]
      %v6440 = vld [vmem:[#allocation10 + $0xe48] sm:$0xff]
      %v6441 = vld [vmem:[#allocation10 + $0xe50] sm:$0xff]
      %v6442 = vld [vmem:[#allocation10 + $0xe58] sm:$0xff]
      %v6443 = vld [vmem:[#allocation10 + $0xe60] sm:$0xff]
      %v6444 = vld [vmem:[#allocation10 + $0xe68] sm:$0xff]
      %v6445 = vld [vmem:[#allocation10 + $0xe70] sm:$0xff]
      %v6446 = vld [vmem:[#allocation10 + $0xe78] sm:$0xff]
      %v6447 = vld [vmem:[#allocation10 + $0xe80] sm:$0xff]
      %v6448 = vld [vmem:[#allocation10 + $0xe88] sm:$0xff]
      %v6449 = vld [vmem:[#allocation10 + $0xe90] sm:$0xff]
      %v6450 = vld [vmem:[#allocation10 + $0xe98] sm:$0xff]
      %v6451 = vld [vmem:[#allocation10 + $0xea0] sm:$0xff]
      %v6452 = vld [vmem:[#allocation10 + $0xea8] sm:$0xff]
      %v6453 = vld [vmem:[#allocation10 + $0xeb0] sm:$0xff]
      %v6454 = vld [vmem:[#allocation10 + $0xeb8] sm:$0xff]
      %v6455 = vld [vmem:[#allocation10 + $0xec0] sm:$0xff]
      %v6456 = vld [vmem:[#allocation10 + $0xec8] sm:$0xff]
      %v6457 = vld [vmem:[#allocation10 + $0xed0] sm:$0xff]
      %v6458 = vld [vmem:[#allocation10 + $0xed8] sm:$0xff]
      %v6459 = vld [vmem:[#allocation10 + $0xee0] sm:$0xff]
      %v6460 = vld [vmem:[#allocation10 + $0xee8] sm:$0xff]
      %v6461 = vld [vmem:[#allocation10 + $0xef0] sm:$0xff]
      %v6462 = vld [vmem:[#allocation10 + $0xef8] sm:$0xff]
      %v6463 = vld [vmem:[#allocation10 + $0xf00] sm:$0xff]
      %v6464 = vld [vmem:[#allocation10 + $0xf08] sm:$0xff]
      %v6465 = vld [vmem:[#allocation10 + $0xf10] sm:$0xff]
      %v6466 = vld [vmem:[#allocation10 + $0xf18] sm:$0xff]
      %v6467 = vld [vmem:[#allocation10 + $0xf20] sm:$0xff]
      %v6468 = vld [vmem:[#allocation10 + $0xf28] sm:$0xff]
      %v6469 = vld [vmem:[#allocation10 + $0xf30] sm:$0xff]
      %v6470 = vld [vmem:[#allocation10 + $0xf38] sm:$0xff]
      %v6471 = vld [vmem:[#allocation10 + $0xf40] sm:$0xff]
      %v6472 = vld [vmem:[#allocation10 + $0xf48] sm:$0xff]
      %v6473 = vld [vmem:[#allocation10 + $0xf50] sm:$0xff]
      %v6474 = vld [vmem:[#allocation10 + $0xf58] sm:$0xff]
      %v6475 = vld [vmem:[#allocation10 + $0xf60] sm:$0xff]
      %v6476 = vld [vmem:[#allocation10 + $0xf68] sm:$0xff]
      %v6477 = vld [vmem:[#allocation10 + $0xf70] sm:$0xff]
      %v6478 = vld [vmem:[#allocation10 + $0xf78] sm:$0xff]
      %v6479 = vld [vmem:[#allocation10 + $0xf80] sm:$0xff]
      %v6480 = vld [vmem:[#allocation10 + $0xf88] sm:$0xff]
      %v6481 = vld [vmem:[#allocation10 + $0xf90] sm:$0xff]
      %v6482 = vld [vmem:[#allocation10 + $0xf98] sm:$0xff]
      %v6483 = vld [vmem:[#allocation10 + $0xfa0] sm:$0xff]
      %v6484 = vld [vmem:[#allocation10 + $0xfa8] sm:$0xff]
      %v6485 = vld [vmem:[#allocation10 + $0xfb0] sm:$0xff]
      %v6486 = vld [vmem:[#allocation10 + $0xfb8] sm:$0xff]
      %v6487 = vld [vmem:[#allocation10 + $0xfc0] sm:$0xff]
      %v6488 = vld [vmem:[#allocation10 + $0xfc8] sm:$0xff]
      %v6489 = vld [vmem:[#allocation10 + $0xfd0] sm:$0xff]
      %v6490 = vld [vmem:[#allocation10 + $0xfd8] sm:$0xff]
      %v6491 = vld [vmem:[#allocation10 + $0xfe0] sm:$0xff]
      %v6492 = vld [vmem:[#allocation10 + $0xfe8] sm:$0xff]
      %v6493 = vld [vmem:[#allocation10 + $0xff0] sm:$0xff]
      %v6494 = vld [vmem:[#allocation10 + $0xff8] sm:$0xff]
      %v6495 = vld [vmem:[#allocation12] sm:$0xf]
      %v6497 = vlaneseq
      %v6498 = vshrl.u32 %v6497, 7
      %v6499 = vsub.s32 0, %v6498
      %v6500 = vrot.slane %v6495, %v6499
      %v6501 = vlaneseq
      %v6502 = vshrl.u32 %v6501, 7
      %v6503 = vsub.s32 1, %v6502
      %v6504 = vrot.slane %v6495, %v6503
      %v6505 = vlaneseq
      %v6506 = vshrl.u32 %v6505, 7
      %v6507 = vsub.s32 2, %v6506
      %v6508 = vrot.slane %v6495, %v6507
      %v6509 = vlaneseq
      %v6510 = vshrl.u32 %v6509, 7
      %v6511 = vsub.s32 3, %v6510
      %v6512 = vrot.slane %v6495, %v6511
      %v7029 = vunpack.c.l.b16 %v5983
      %v7030 = vunpack.c.h.b16 %v5983
      %v7031 = vunpack.c.l.b16 %v5984
      %v7032 = vunpack.c.h.b16 %v5984
      %v7033 = vunpack.c.l.b16 %v5985
      %v7034 = vunpack.c.h.b16 %v5985
      %v7035 = vunpack.c.l.b16 %v5986
      %v7036 = vunpack.c.h.b16 %v5986
      %v7037 = vunpack.c.l.b16 %v5987
      %v7038 = vunpack.c.h.b16 %v5987
      %v7039 = vunpack.c.l.b16 %v5988
      %v7040 = vunpack.c.h.b16 %v5988
      %v7041 = vunpack.c.l.b16 %v5989
      %v7042 = vunpack.c.h.b16 %v5989
      %v7043 = vunpack.c.l.b16 %v5990
      %v7044 = vunpack.c.h.b16 %v5990
      %v7045 = vunpack.c.l.b16 %v5991
      %v7046 = vunpack.c.h.b16 %v5991
      %v7047 = vunpack.c.l.b16 %v5992
      %v7048 = vunpack.c.h.b16 %v5992
      %v7049 = vunpack.c.l.b16 %v5993
      %v7050 = vunpack.c.h.b16 %v5993
      %v7051 = vunpack.c.l.b16 %v5994
      %v7052 = vunpack.c.h.b16 %v5994
      %v7053 = vunpack.c.l.b16 %v5995
      %v7054 = vunpack.c.h.b16 %v5995
      %v7055 = vunpack.c.l.b16 %v5996
      %v7056 = vunpack.c.h.b16 %v5996
      %v7057 = vunpack.c.l.b16 %v5997
      %v7058 = vunpack.c.h.b16 %v5997
      %v7059 = vunpack.c.l.b16 %v5998
      %v7060 = vunpack.c.h.b16 %v5998
      %v7061 = vunpack.c.l.b16 %v5999
      %v7062 = vunpack.c.h.b16 %v5999
      %v7063 = vunpack.c.l.b16 %v6000
      %v7064 = vunpack.c.h.b16 %v6000
      %v7065 = vunpack.c.l.b16 %v6001
      %v7066 = vunpack.c.h.b16 %v6001
      %v7067 = vunpack.c.l.b16 %v6002
      %v7068 = vunpack.c.h.b16 %v6002
      %v7069 = vunpack.c.l.b16 %v6003
      %v7070 = vunpack.c.h.b16 %v6003
      %v7071 = vunpack.c.l.b16 %v6004
      %v7072 = vunpack.c.h.b16 %v6004
      %v7073 = vunpack.c.l.b16 %v6005
      %v7074 = vunpack.c.h.b16 %v6005
      %v7075 = vunpack.c.l.b16 %v6006
      %v7076 = vunpack.c.h.b16 %v6006
      %v7077 = vunpack.c.l.b16 %v6007
      %v7078 = vunpack.c.h.b16 %v6007
      %v7079 = vunpack.c.l.b16 %v6008
      %v7080 = vunpack.c.h.b16 %v6008
      %v7081 = vunpack.c.l.b16 %v6009
      %v7082 = vunpack.c.h.b16 %v6009
      %v7083 = vunpack.c.l.b16 %v6010
      %v7084 = vunpack.c.h.b16 %v6010
      %v7085 = vunpack.c.l.b16 %v6011
      %v7086 = vunpack.c.h.b16 %v6011
      %v7087 = vunpack.c.l.b16 %v6012
      %v7088 = vunpack.c.h.b16 %v6012
      %v7089 = vunpack.c.l.b16 %v6013
      %v7090 = vunpack.c.h.b16 %v6013
      %v7091 = vunpack.c.l.b16 %v6014
      %v7092 = vunpack.c.h.b16 %v6014
      %v7093 = vunpack.c.l.b16 %v6015
      %v7094 = vunpack.c.h.b16 %v6015
      %v7095 = vunpack.c.l.b16 %v6016
      %v7096 = vunpack.c.h.b16 %v6016
      %v7097 = vunpack.c.l.b16 %v6017
      %v7098 = vunpack.c.h.b16 %v6017
      %v7099 = vunpack.c.l.b16 %v6018
      %v7100 = vunpack.c.h.b16 %v6018
      %v7101 = vunpack.c.l.b16 %v6019
      %v7102 = vunpack.c.h.b16 %v6019
      %v7103 = vunpack.c.l.b16 %v6020
      %v7104 = vunpack.c.h.b16 %v6020
      %v7105 = vunpack.c.l.b16 %v6021
      %v7106 = vunpack.c.h.b16 %v6021
      %v7107 = vunpack.c.l.b16 %v6022
      %v7108 = vunpack.c.h.b16 %v6022
      %v7109 = vunpack.c.l.b16 %v6023
      %v7110 = vunpack.c.h.b16 %v6023
      %v7111 = vunpack.c.l.b16 %v6024
      %v7112 = vunpack.c.h.b16 %v6024
      %v7113 = vunpack.c.l.b16 %v6025
      %v7114 = vunpack.c.h.b16 %v6025
      %v7115 = vunpack.c.l.b16 %v6026
      %v7116 = vunpack.c.h.b16 %v6026
      %v7117 = vunpack.c.l.b16 %v6027
      %v7118 = vunpack.c.h.b16 %v6027
      %v7119 = vunpack.c.l.b16 %v6028
      %v7120 = vunpack.c.h.b16 %v6028
      %v7121 = vunpack.c.l.b16 %v6029
      %v7122 = vunpack.c.h.b16 %v6029
      %v7123 = vunpack.c.l.b16 %v6030
      %v7124 = vunpack.c.h.b16 %v6030
      %v7125 = vunpack.c.l.b16 %v6031
      %v7126 = vunpack.c.h.b16 %v6031
      %v7127 = vunpack.c.l.b16 %v6032
      %v7128 = vunpack.c.h.b16 %v6032
      %v7129 = vunpack.c.l.b16 %v6033
      %v7130 = vunpack.c.h.b16 %v6033
      %v7131 = vunpack.c.l.b16 %v6034
      %v7132 = vunpack.c.h.b16 %v6034
      %v7133 = vunpack.c.l.b16 %v6035
      %v7134 = vunpack.c.h.b16 %v6035
      %v7135 = vunpack.c.l.b16 %v6036
      %v7136 = vunpack.c.h.b16 %v6036
      %v7137 = vunpack.c.l.b16 %v6037
      %v7138 = vunpack.c.h.b16 %v6037
      %v7139 = vunpack.c.l.b16 %v6038
      %v7140 = vunpack.c.h.b16 %v6038
      %v7141 = vunpack.c.l.b16 %v6039
      %v7142 = vunpack.c.h.b16 %v6039
      %v7143 = vunpack.c.l.b16 %v6040
      %v7144 = vunpack.c.h.b16 %v6040
      %v7145 = vunpack.c.l.b16 %v6041
      %v7146 = vunpack.c.h.b16 %v6041
      %v7147 = vunpack.c.l.b16 %v6042
      %v7148 = vunpack.c.h.b16 %v6042
      %v7149 = vunpack.c.l.b16 %v6043
      %v7150 = vunpack.c.h.b16 %v6043
      %v7151 = vunpack.c.l.b16 %v6044
      %v7152 = vunpack.c.h.b16 %v6044
      %v7153 = vunpack.c.l.b16 %v6045
      %v7154 = vunpack.c.h.b16 %v6045
      %v7155 = vunpack.c.l.b16 %v6046
      %v7156 = vunpack.c.h.b16 %v6046
      %v7157 = vunpack.c.l.b16 %v6047
      %v7158 = vunpack.c.h.b16 %v6047
      %v7159 = vunpack.c.l.b16 %v6048
      %v7160 = vunpack.c.h.b16 %v6048
      %v7161 = vunpack.c.l.b16 %v6049
      %v7162 = vunpack.c.h.b16 %v6049
      %v7163 = vunpack.c.l.b16 %v6050
      %v7164 = vunpack.c.h.b16 %v6050
      %v7165 = vunpack.c.l.b16 %v6051
      %v7166 = vunpack.c.h.b16 %v6051
      %v7167 = vunpack.c.l.b16 %v6052
      %v7168 = vunpack.c.h.b16 %v6052
      %v7169 = vunpack.c.l.b16 %v6053
      %v7170 = vunpack.c.h.b16 %v6053
      %v7171 = vunpack.c.l.b16 %v6054
      %v7172 = vunpack.c.h.b16 %v6054
      %v7173 = vunpack.c.l.b16 %v6055
      %v7174 = vunpack.c.h.b16 %v6055
      %v7175 = vunpack.c.l.b16 %v6056
      %v7176 = vunpack.c.h.b16 %v6056
      %v7177 = vunpack.c.l.b16 %v6057
      %v7178 = vunpack.c.h.b16 %v6057
      %v7179 = vunpack.c.l.b16 %v6058
      %v7180 = vunpack.c.h.b16 %v6058
      %v7181 = vunpack.c.l.b16 %v6059
      %v7182 = vunpack.c.h.b16 %v6059
      %v7183 = vunpack.c.l.b16 %v6060
      %v7184 = vunpack.c.h.b16 %v6060
      %v7185 = vunpack.c.l.b16 %v6061
      %v7186 = vunpack.c.h.b16 %v6061
      %v7187 = vunpack.c.l.b16 %v6062
      %v7188 = vunpack.c.h.b16 %v6062
      %v7189 = vunpack.c.l.b16 %v6063
      %v7190 = vunpack.c.h.b16 %v6063
      %v7191 = vunpack.c.l.b16 %v6064
      %v7192 = vunpack.c.h.b16 %v6064
      %v7193 = vunpack.c.l.b16 %v6065
      %v7194 = vunpack.c.h.b16 %v6065
      %v7195 = vunpack.c.l.b16 %v6066
      %v7196 = vunpack.c.h.b16 %v6066
      %v7197 = vunpack.c.l.b16 %v6067
      %v7198 = vunpack.c.h.b16 %v6067
      %v7199 = vunpack.c.l.b16 %v6068
      %v7200 = vunpack.c.h.b16 %v6068
      %v7201 = vunpack.c.l.b16 %v6069
      %v7202 = vunpack.c.h.b16 %v6069
      %v7203 = vunpack.c.l.b16 %v6070
      %v7204 = vunpack.c.h.b16 %v6070
      %v7205 = vunpack.c.l.b16 %v6071
      %v7206 = vunpack.c.h.b16 %v6071
      %v7207 = vunpack.c.l.b16 %v6072
      %v7208 = vunpack.c.h.b16 %v6072
      %v7209 = vunpack.c.l.b16 %v6073
      %v7210 = vunpack.c.h.b16 %v6073
      %v7211 = vunpack.c.l.b16 %v6074
      %v7212 = vunpack.c.h.b16 %v6074
      %v7213 = vunpack.c.l.b16 %v6075
      %v7214 = vunpack.c.h.b16 %v6075
      %v7215 = vunpack.c.l.b16 %v6076
      %v7216 = vunpack.c.h.b16 %v6076
      %v7217 = vunpack.c.l.b16 %v6077
      %v7218 = vunpack.c.h.b16 %v6077
      %v7219 = vunpack.c.l.b16 %v6078
      %v7220 = vunpack.c.h.b16 %v6078
      %v7221 = vunpack.c.l.b16 %v6079
      %v7222 = vunpack.c.h.b16 %v6079
      %v7223 = vunpack.c.l.b16 %v6080
      %v7224 = vunpack.c.h.b16 %v6080
      %v7225 = vunpack.c.l.b16 %v6081
      %v7226 = vunpack.c.h.b16 %v6081
      %v7227 = vunpack.c.l.b16 %v6082
      %v7228 = vunpack.c.h.b16 %v6082
      %v7229 = vunpack.c.l.b16 %v6083
      %v7230 = vunpack.c.h.b16 %v6083
      %v7231 = vunpack.c.l.b16 %v6084
      %v7232 = vunpack.c.h.b16 %v6084
      %v7233 = vunpack.c.l.b16 %v6085
      %v7234 = vunpack.c.h.b16 %v6085
      %v7235 = vunpack.c.l.b16 %v6086
      %v7236 = vunpack.c.h.b16 %v6086
      %v7237 = vunpack.c.l.b16 %v6087
      %v7238 = vunpack.c.h.b16 %v6087
      %v7239 = vunpack.c.l.b16 %v6088
      %v7240 = vunpack.c.h.b16 %v6088
      %v7241 = vunpack.c.l.b16 %v6089
      %v7242 = vunpack.c.h.b16 %v6089
      %v7243 = vunpack.c.l.b16 %v6090
      %v7244 = vunpack.c.h.b16 %v6090
      %v7245 = vunpack.c.l.b16 %v6091
      %v7246 = vunpack.c.h.b16 %v6091
      %v7247 = vunpack.c.l.b16 %v6092
      %v7248 = vunpack.c.h.b16 %v6092
      %v7249 = vunpack.c.l.b16 %v6093
      %v7250 = vunpack.c.h.b16 %v6093
      %v7251 = vunpack.c.l.b16 %v6094
      %v7252 = vunpack.c.h.b16 %v6094
      %v7253 = vunpack.c.l.b16 %v6095
      %v7254 = vunpack.c.h.b16 %v6095
      %v7255 = vunpack.c.l.b16 %v6096
      %v7256 = vunpack.c.h.b16 %v6096
      %v7257 = vunpack.c.l.b16 %v6097
      %v7258 = vunpack.c.h.b16 %v6097
      %v7259 = vunpack.c.l.b16 %v6098
      %v7260 = vunpack.c.h.b16 %v6098
      %v7261 = vunpack.c.l.b16 %v6099
      %v7262 = vunpack.c.h.b16 %v6099
      %v7263 = vunpack.c.l.b16 %v6100
      %v7264 = vunpack.c.h.b16 %v6100
      %v7265 = vunpack.c.l.b16 %v6101
      %v7266 = vunpack.c.h.b16 %v6101
      %v7267 = vunpack.c.l.b16 %v6102
      %v7268 = vunpack.c.h.b16 %v6102
      %v7269 = vunpack.c.l.b16 %v6103
      %v7270 = vunpack.c.h.b16 %v6103
      %v7271 = vunpack.c.l.b16 %v6104
      %v7272 = vunpack.c.h.b16 %v6104
      %v7273 = vunpack.c.l.b16 %v6105
      %v7274 = vunpack.c.h.b16 %v6105
      %v7275 = vunpack.c.l.b16 %v6106
      %v7276 = vunpack.c.h.b16 %v6106
      %v7277 = vunpack.c.l.b16 %v6107
      %v7278 = vunpack.c.h.b16 %v6107
      %v7279 = vunpack.c.l.b16 %v6108
      %v7280 = vunpack.c.h.b16 %v6108
      %v7281 = vunpack.c.l.b16 %v6109
      %v7282 = vunpack.c.h.b16 %v6109
      %v7283 = vunpack.c.l.b16 %v6110
      %v7284 = vunpack.c.h.b16 %v6110
      %v7285 = vunpack.c.l.b16 %v6111
      %v7286 = vunpack.c.h.b16 %v6111
      %v7287 = vunpack.c.l.b16 %v6112
      %v7288 = vunpack.c.h.b16 %v6112
      %v7289 = vunpack.c.l.b16 %v6113
      %v7290 = vunpack.c.h.b16 %v6113
      %v7291 = vunpack.c.l.b16 %v6114
      %v7292 = vunpack.c.h.b16 %v6114
      %v7293 = vunpack.c.l.b16 %v6115
      %v7294 = vunpack.c.h.b16 %v6115
      %v7295 = vunpack.c.l.b16 %v6116
      %v7296 = vunpack.c.h.b16 %v6116
      %v7297 = vunpack.c.l.b16 %v6117
      %v7298 = vunpack.c.h.b16 %v6117
      %v7299 = vunpack.c.l.b16 %v6118
      %v7300 = vunpack.c.h.b16 %v6118
      %v7301 = vunpack.c.l.b16 %v6119
      %v7302 = vunpack.c.h.b16 %v6119
      %v7303 = vunpack.c.l.b16 %v6120
      %v7304 = vunpack.c.h.b16 %v6120
      %v7305 = vunpack.c.l.b16 %v6121
      %v7306 = vunpack.c.h.b16 %v6121
      %v7307 = vunpack.c.l.b16 %v6122
      %v7308 = vunpack.c.h.b16 %v6122
      %v7309 = vunpack.c.l.b16 %v6123
      %v7310 = vunpack.c.h.b16 %v6123
      %v7311 = vunpack.c.l.b16 %v6124
      %v7312 = vunpack.c.h.b16 %v6124
      %v7313 = vunpack.c.l.b16 %v6125
      %v7314 = vunpack.c.h.b16 %v6125
      %v7315 = vunpack.c.l.b16 %v6126
      %v7316 = vunpack.c.h.b16 %v6126
      %v7317 = vunpack.c.l.b16 %v6127
      %v7318 = vunpack.c.h.b16 %v6127
      %v7319 = vunpack.c.l.b16 %v6128
      %v7320 = vunpack.c.h.b16 %v6128
      %v7321 = vunpack.c.l.b16 %v6129
      %v7322 = vunpack.c.h.b16 %v6129
      %v7323 = vunpack.c.l.b16 %v6130
      %v7324 = vunpack.c.h.b16 %v6130
      %v7325 = vunpack.c.l.b16 %v6131
      %v7326 = vunpack.c.h.b16 %v6131
      %v7327 = vunpack.c.l.b16 %v6132
      %v7328 = vunpack.c.h.b16 %v6132
      %v7329 = vunpack.c.l.b16 %v6133
      %v7330 = vunpack.c.h.b16 %v6133
      %v7331 = vunpack.c.l.b16 %v6134
      %v7332 = vunpack.c.h.b16 %v6134
      %v7333 = vunpack.c.l.b16 %v6135
      %v7334 = vunpack.c.h.b16 %v6135
      %v7335 = vunpack.c.l.b16 %v6136
      %v7336 = vunpack.c.h.b16 %v6136
      %v7337 = vunpack.c.l.b16 %v6137
      %v7338 = vunpack.c.h.b16 %v6137
      %v7339 = vunpack.c.l.b16 %v6138
      %v7340 = vunpack.c.h.b16 %v6138
      %v7341 = vunpack.c.l.b16 %v6139
      %v7342 = vunpack.c.h.b16 %v6139
      %v7343 = vunpack.c.l.b16 %v6140
      %v7344 = vunpack.c.h.b16 %v6140
      %v7345 = vunpack.c.l.b16 %v6141
      %v7346 = vunpack.c.h.b16 %v6141
      %v7347 = vunpack.c.l.b16 %v6142
      %v7348 = vunpack.c.h.b16 %v6142
      %v7349 = vunpack.c.l.b16 %v6143
      %v7350 = vunpack.c.h.b16 %v6143
      %v7351 = vunpack.c.l.b16 %v6144
      %v7352 = vunpack.c.h.b16 %v6144
      %v7353 = vunpack.c.l.b16 %v6145
      %v7354 = vunpack.c.h.b16 %v6145
      %v7355 = vunpack.c.l.b16 %v6146
      %v7356 = vunpack.c.h.b16 %v6146
      %v7357 = vunpack.c.l.b16 %v6147
      %v7358 = vunpack.c.h.b16 %v6147
      %v7359 = vunpack.c.l.b16 %v6148
      %v7360 = vunpack.c.h.b16 %v6148
      %v7361 = vunpack.c.l.b16 %v6149
      %v7362 = vunpack.c.h.b16 %v6149
      %v7363 = vunpack.c.l.b16 %v6150
      %v7364 = vunpack.c.h.b16 %v6150
      %v7365 = vunpack.c.l.b16 %v6151
      %v7366 = vunpack.c.h.b16 %v6151
      %v7367 = vunpack.c.l.b16 %v6152
      %v7368 = vunpack.c.h.b16 %v6152
      %v7369 = vunpack.c.l.b16 %v6153
      %v7370 = vunpack.c.h.b16 %v6153
      %v7371 = vunpack.c.l.b16 %v6154
      %v7372 = vunpack.c.h.b16 %v6154
      %v7373 = vunpack.c.l.b16 %v6155
      %v7374 = vunpack.c.h.b16 %v6155
      %v7375 = vunpack.c.l.b16 %v6156
      %v7376 = vunpack.c.h.b16 %v6156
      %v7377 = vunpack.c.l.b16 %v6157
      %v7378 = vunpack.c.h.b16 %v6157
      %v7379 = vunpack.c.l.b16 %v6158
      %v7380 = vunpack.c.h.b16 %v6158
      %v7381 = vunpack.c.l.b16 %v6159
      %v7382 = vunpack.c.h.b16 %v6159
      %v7383 = vunpack.c.l.b16 %v6160
      %v7384 = vunpack.c.h.b16 %v6160
      %v7385 = vunpack.c.l.b16 %v6161
      %v7386 = vunpack.c.h.b16 %v6161
      %v7387 = vunpack.c.l.b16 %v6162
      %v7388 = vunpack.c.h.b16 %v6162
      %v7389 = vunpack.c.l.b16 %v6163
      %v7390 = vunpack.c.h.b16 %v6163
      %v7391 = vunpack.c.l.b16 %v6164
      %v7392 = vunpack.c.h.b16 %v6164
      %v7393 = vunpack.c.l.b16 %v6165
      %v7394 = vunpack.c.h.b16 %v6165
      %v7395 = vunpack.c.l.b16 %v6166
      %v7396 = vunpack.c.h.b16 %v6166
      %v7397 = vunpack.c.l.b16 %v6167
      %v7398 = vunpack.c.h.b16 %v6167
      %v7399 = vunpack.c.l.b16 %v6168
      %v7400 = vunpack.c.h.b16 %v6168
      %v7401 = vunpack.c.l.b16 %v6169
      %v7402 = vunpack.c.h.b16 %v6169
      %v7403 = vunpack.c.l.b16 %v6170
      %v7404 = vunpack.c.h.b16 %v6170
      %v7405 = vunpack.c.l.b16 %v6171
      %v7406 = vunpack.c.h.b16 %v6171
      %v7407 = vunpack.c.l.b16 %v6172
      %v7408 = vunpack.c.h.b16 %v6172
      %v7409 = vunpack.c.l.b16 %v6173
      %v7410 = vunpack.c.h.b16 %v6173
      %v7411 = vunpack.c.l.b16 %v6174
      %v7412 = vunpack.c.h.b16 %v6174
      %v7413 = vunpack.c.l.b16 %v6175
      %v7414 = vunpack.c.h.b16 %v6175
      %v7415 = vunpack.c.l.b16 %v6176
      %v7416 = vunpack.c.h.b16 %v6176
      %v7417 = vunpack.c.l.b16 %v6177
      %v7418 = vunpack.c.h.b16 %v6177
      %v7419 = vunpack.c.l.b16 %v6178
      %v7420 = vunpack.c.h.b16 %v6178
      %v7421 = vunpack.c.l.b16 %v6179
      %v7422 = vunpack.c.h.b16 %v6179
      %v7423 = vunpack.c.l.b16 %v6180
      %v7424 = vunpack.c.h.b16 %v6180
      %v7425 = vunpack.c.l.b16 %v6181
      %v7426 = vunpack.c.h.b16 %v6181
      %v7427 = vunpack.c.l.b16 %v6182
      %v7428 = vunpack.c.h.b16 %v6182
      %v7429 = vunpack.c.l.b16 %v6183
      %v7430 = vunpack.c.h.b16 %v6183
      %v7431 = vunpack.c.l.b16 %v6184
      %v7432 = vunpack.c.h.b16 %v6184
      %v7433 = vunpack.c.l.b16 %v6185
      %v7434 = vunpack.c.h.b16 %v6185
      %v7435 = vunpack.c.l.b16 %v6186
      %v7436 = vunpack.c.h.b16 %v6186
      %v7437 = vunpack.c.l.b16 %v6187
      %v7438 = vunpack.c.h.b16 %v6187
      %v7439 = vunpack.c.l.b16 %v6188
      %v7440 = vunpack.c.h.b16 %v6188
      %v7441 = vunpack.c.l.b16 %v6189
      %v7442 = vunpack.c.h.b16 %v6189
      %v7443 = vunpack.c.l.b16 %v6190
      %v7444 = vunpack.c.h.b16 %v6190
      %v7445 = vunpack.c.l.b16 %v6191
      %v7446 = vunpack.c.h.b16 %v6191
      %v7447 = vunpack.c.l.b16 %v6192
      %v7448 = vunpack.c.h.b16 %v6192
      %v7449 = vunpack.c.l.b16 %v6193
      %v7450 = vunpack.c.h.b16 %v6193
      %v7451 = vunpack.c.l.b16 %v6194
      %v7452 = vunpack.c.h.b16 %v6194
      %v7453 = vunpack.c.l.b16 %v6195
      %v7454 = vunpack.c.h.b16 %v6195
      %v7455 = vunpack.c.l.b16 %v6196
      %v7456 = vunpack.c.h.b16 %v6196
      %v7457 = vunpack.c.l.b16 %v6197
      %v7458 = vunpack.c.h.b16 %v6197
      %v7459 = vunpack.c.l.b16 %v6198
      %v7460 = vunpack.c.h.b16 %v6198
      %v7461 = vunpack.c.l.b16 %v6199
      %v7462 = vunpack.c.h.b16 %v6199
      %v7463 = vunpack.c.l.b16 %v6200
      %v7464 = vunpack.c.h.b16 %v6200
      %v7465 = vunpack.c.l.b16 %v6201
      %v7466 = vunpack.c.h.b16 %v6201
      %v7467 = vunpack.c.l.b16 %v6202
      %v7468 = vunpack.c.h.b16 %v6202
      %v7469 = vunpack.c.l.b16 %v6203
      %v7470 = vunpack.c.h.b16 %v6203
      %v7471 = vunpack.c.l.b16 %v6204
      %v7472 = vunpack.c.h.b16 %v6204
      %v7473 = vunpack.c.l.b16 %v6205
      %v7474 = vunpack.c.h.b16 %v6205
      %v7475 = vunpack.c.l.b16 %v6206
      %v7476 = vunpack.c.h.b16 %v6206
      %v7477 = vunpack.c.l.b16 %v6207
      %v7478 = vunpack.c.h.b16 %v6207
      %v7479 = vunpack.c.l.b16 %v6208
      %v7480 = vunpack.c.h.b16 %v6208
      %v7481 = vunpack.c.l.b16 %v6209
      %v7482 = vunpack.c.h.b16 %v6209
      %v7483 = vunpack.c.l.b16 %v6210
      %v7484 = vunpack.c.h.b16 %v6210
      %v7485 = vunpack.c.l.b16 %v6211
      %v7486 = vunpack.c.h.b16 %v6211
      %v7487 = vunpack.c.l.b16 %v6212
      %v7488 = vunpack.c.h.b16 %v6212
      %v7489 = vunpack.c.l.b16 %v6213
      %v7490 = vunpack.c.h.b16 %v6213
      %v7491 = vunpack.c.l.b16 %v6214
      %v7492 = vunpack.c.h.b16 %v6214
      %v7493 = vunpack.c.l.b16 %v6215
      %v7494 = vunpack.c.h.b16 %v6215
      %v7495 = vunpack.c.l.b16 %v6216
      %v7496 = vunpack.c.h.b16 %v6216
      %v7497 = vunpack.c.l.b16 %v6217
      %v7498 = vunpack.c.h.b16 %v6217
      %v7499 = vunpack.c.l.b16 %v6218
      %v7500 = vunpack.c.h.b16 %v6218
      %v7501 = vunpack.c.l.b16 %v6219
      %v7502 = vunpack.c.h.b16 %v6219
      %v7503 = vunpack.c.l.b16 %v6220
      %v7504 = vunpack.c.h.b16 %v6220
      %v7505 = vunpack.c.l.b16 %v6221
      %v7506 = vunpack.c.h.b16 %v6221
      %v7507 = vunpack.c.l.b16 %v6222
      %v7508 = vunpack.c.h.b16 %v6222
      %v7509 = vunpack.c.l.b16 %v6223
      %v7510 = vunpack.c.h.b16 %v6223
      %v7511 = vunpack.c.l.b16 %v6224
      %v7512 = vunpack.c.h.b16 %v6224
      %v7513 = vunpack.c.l.b16 %v6225
      %v7514 = vunpack.c.h.b16 %v6225
      %v7515 = vunpack.c.l.b16 %v6226
      %v7516 = vunpack.c.h.b16 %v6226
      %v7517 = vunpack.c.l.b16 %v6227
      %v7518 = vunpack.c.h.b16 %v6227
      %v7519 = vunpack.c.l.b16 %v6228
      %v7520 = vunpack.c.h.b16 %v6228
      %v7521 = vunpack.c.l.b16 %v6229
      %v7522 = vunpack.c.h.b16 %v6229
      %v7523 = vunpack.c.l.b16 %v6230
      %v7524 = vunpack.c.h.b16 %v6230
      %v7525 = vunpack.c.l.b16 %v6231
      %v7526 = vunpack.c.h.b16 %v6231
      %v7527 = vunpack.c.l.b16 %v6232
      %v7528 = vunpack.c.h.b16 %v6232
      %v7529 = vunpack.c.l.b16 %v6233
      %v7530 = vunpack.c.h.b16 %v6233
      %v7531 = vunpack.c.l.b16 %v6234
      %v7532 = vunpack.c.h.b16 %v6234
      %v7533 = vunpack.c.l.b16 %v6235
      %v7534 = vunpack.c.h.b16 %v6235
      %v7535 = vunpack.c.l.b16 %v6236
      %v7536 = vunpack.c.h.b16 %v6236
      %v7537 = vunpack.c.l.b16 %v6237
      %v7538 = vunpack.c.h.b16 %v6237
      %v7539 = vunpack.c.l.b16 %v6238
      %v7540 = vunpack.c.h.b16 %v6238
      %v7541 = vunpack.c.l.b16 %v6239
      %v7542 = vunpack.c.h.b16 %v6239
      %v7543 = vunpack.c.l.b16 %v6240
      %v7544 = vunpack.c.h.b16 %v6240
      %v7545 = vunpack.c.l.b16 %v6241
      %v7546 = vunpack.c.h.b16 %v6241
      %v7547 = vunpack.c.l.b16 %v6242
      %v7548 = vunpack.c.h.b16 %v6242
      %v7549 = vunpack.c.l.b16 %v6243
      %v7550 = vunpack.c.h.b16 %v6243
      %v7551 = vunpack.c.l.b16 %v6244
      %v7552 = vunpack.c.h.b16 %v6244
      %v7553 = vunpack.c.l.b16 %v6245
      %v7554 = vunpack.c.h.b16 %v6245
      %v7555 = vunpack.c.l.b16 %v6246
      %v7556 = vunpack.c.h.b16 %v6246
      %v7557 = vunpack.c.l.b16 %v6247
      %v7558 = vunpack.c.h.b16 %v6247
      %v7559 = vunpack.c.l.b16 %v6248
      %v7560 = vunpack.c.h.b16 %v6248
      %v7561 = vunpack.c.l.b16 %v6249
      %v7562 = vunpack.c.h.b16 %v6249
      %v7563 = vunpack.c.l.b16 %v6250
      %v7564 = vunpack.c.h.b16 %v6250
      %v7565 = vunpack.c.l.b16 %v6251
      %v7566 = vunpack.c.h.b16 %v6251
      %v7567 = vunpack.c.l.b16 %v6252
      %v7568 = vunpack.c.h.b16 %v6252
      %v7569 = vunpack.c.l.b16 %v6253
      %v7570 = vunpack.c.h.b16 %v6253
      %v7571 = vunpack.c.l.b16 %v6254
      %v7572 = vunpack.c.h.b16 %v6254
      %v7573 = vunpack.c.l.b16 %v6255
      %v7574 = vunpack.c.h.b16 %v6255
      %v7575 = vunpack.c.l.b16 %v6256
      %v7576 = vunpack.c.h.b16 %v6256
      %v7577 = vunpack.c.l.b16 %v6257
      %v7578 = vunpack.c.h.b16 %v6257
      %v7579 = vunpack.c.l.b16 %v6258
      %v7580 = vunpack.c.h.b16 %v6258
      %v7581 = vunpack.c.l.b16 %v6259
      %v7582 = vunpack.c.h.b16 %v6259
      %v7583 = vunpack.c.l.b16 %v6260
      %v7584 = vunpack.c.h.b16 %v6260
      %v7585 = vunpack.c.l.b16 %v6261
      %v7586 = vunpack.c.h.b16 %v6261
      %v7587 = vunpack.c.l.b16 %v6262
      %v7588 = vunpack.c.h.b16 %v6262
      %v7589 = vunpack.c.l.b16 %v6263
      %v7590 = vunpack.c.h.b16 %v6263
      %v7591 = vunpack.c.l.b16 %v6264
      %v7592 = vunpack.c.h.b16 %v6264
      %v7593 = vunpack.c.l.b16 %v6265
      %v7594 = vunpack.c.h.b16 %v6265
      %v7595 = vunpack.c.l.b16 %v6266
      %v7596 = vunpack.c.h.b16 %v6266
      %v7597 = vunpack.c.l.b16 %v6267
      %v7598 = vunpack.c.h.b16 %v6267
      %v7599 = vunpack.c.l.b16 %v6268
      %v7600 = vunpack.c.h.b16 %v6268
      %v7601 = vunpack.c.l.b16 %v6269
      %v7602 = vunpack.c.h.b16 %v6269
      %v7603 = vunpack.c.l.b16 %v6270
      %v7604 = vunpack.c.h.b16 %v6270
      %v7605 = vunpack.c.l.b16 %v6271
      %v7606 = vunpack.c.h.b16 %v6271
      %v7607 = vunpack.c.l.b16 %v6272
      %v7608 = vunpack.c.h.b16 %v6272
      %v7609 = vunpack.c.l.b16 %v6273
      %v7610 = vunpack.c.h.b16 %v6273
      %v7611 = vunpack.c.l.b16 %v6274
      %v7612 = vunpack.c.h.b16 %v6274
      %v7613 = vunpack.c.l.b16 %v6275
      %v7614 = vunpack.c.h.b16 %v6275
      %v7615 = vunpack.c.l.b16 %v6276
      %v7616 = vunpack.c.h.b16 %v6276
      %v7617 = vunpack.c.l.b16 %v6277
      %v7618 = vunpack.c.h.b16 %v6277
      %v7619 = vunpack.c.l.b16 %v6278
      %v7620 = vunpack.c.h.b16 %v6278
      %v7621 = vunpack.c.l.b16 %v6279
      %v7622 = vunpack.c.h.b16 %v6279
      %v7623 = vunpack.c.l.b16 %v6280
      %v7624 = vunpack.c.h.b16 %v6280
      %v7625 = vunpack.c.l.b16 %v6281
      %v7626 = vunpack.c.h.b16 %v6281
      %v7627 = vunpack.c.l.b16 %v6282
      %v7628 = vunpack.c.h.b16 %v6282
      %v7629 = vunpack.c.l.b16 %v6283
      %v7630 = vunpack.c.h.b16 %v6283
      %v7631 = vunpack.c.l.b16 %v6284
      %v7632 = vunpack.c.h.b16 %v6284
      %v7633 = vunpack.c.l.b16 %v6285
      %v7634 = vunpack.c.h.b16 %v6285
      %v7635 = vunpack.c.l.b16 %v6286
      %v7636 = vunpack.c.h.b16 %v6286
      %v7637 = vunpack.c.l.b16 %v6287
      %v7638 = vunpack.c.h.b16 %v6287
      %v7639 = vunpack.c.l.b16 %v6288
      %v7640 = vunpack.c.h.b16 %v6288
      %v7641 = vunpack.c.l.b16 %v6289
      %v7642 = vunpack.c.h.b16 %v6289
      %v7643 = vunpack.c.l.b16 %v6290
      %v7644 = vunpack.c.h.b16 %v6290
      %v7645 = vunpack.c.l.b16 %v6291
      %v7646 = vunpack.c.h.b16 %v6291
      %v7647 = vunpack.c.l.b16 %v6292
      %v7648 = vunpack.c.h.b16 %v6292
      %v7649 = vunpack.c.l.b16 %v6293
      %v7650 = vunpack.c.h.b16 %v6293
      %v7651 = vunpack.c.l.b16 %v6294
      %v7652 = vunpack.c.h.b16 %v6294
      %v7653 = vunpack.c.l.b16 %v6295
      %v7654 = vunpack.c.h.b16 %v6295
      %v7655 = vunpack.c.l.b16 %v6296
      %v7656 = vunpack.c.h.b16 %v6296
      %v7657 = vunpack.c.l.b16 %v6297
      %v7658 = vunpack.c.h.b16 %v6297
      %v7659 = vunpack.c.l.b16 %v6298
      %v7660 = vunpack.c.h.b16 %v6298
      %v7661 = vunpack.c.l.b16 %v6299
      %v7662 = vunpack.c.h.b16 %v6299
      %v7663 = vunpack.c.l.b16 %v6300
      %v7664 = vunpack.c.h.b16 %v6300
      %v7665 = vunpack.c.l.b16 %v6301
      %v7666 = vunpack.c.h.b16 %v6301
      %v7667 = vunpack.c.l.b16 %v6302
      %v7668 = vunpack.c.h.b16 %v6302
      %v7669 = vunpack.c.l.b16 %v6303
      %v7670 = vunpack.c.h.b16 %v6303
      %v7671 = vunpack.c.l.b16 %v6304
      %v7672 = vunpack.c.h.b16 %v6304
      %v7673 = vunpack.c.l.b16 %v6305
      %v7674 = vunpack.c.h.b16 %v6305
      %v7675 = vunpack.c.l.b16 %v6306
      %v7676 = vunpack.c.h.b16 %v6306
      %v7677 = vunpack.c.l.b16 %v6307
      %v7678 = vunpack.c.h.b16 %v6307
      %v7679 = vunpack.c.l.b16 %v6308
      %v7680 = vunpack.c.h.b16 %v6308
      %v7681 = vunpack.c.l.b16 %v6309
      %v7682 = vunpack.c.h.b16 %v6309
      %v7683 = vunpack.c.l.b16 %v6310
      %v7684 = vunpack.c.h.b16 %v6310
      %v7685 = vunpack.c.l.b16 %v6311
      %v7686 = vunpack.c.h.b16 %v6311
      %v7687 = vunpack.c.l.b16 %v6312
      %v7688 = vunpack.c.h.b16 %v6312
      %v7689 = vunpack.c.l.b16 %v6313
      %v7690 = vunpack.c.h.b16 %v6313
      %v7691 = vunpack.c.l.b16 %v6314
      %v7692 = vunpack.c.h.b16 %v6314
      %v7693 = vunpack.c.l.b16 %v6315
      %v7694 = vunpack.c.h.b16 %v6315
      %v7695 = vunpack.c.l.b16 %v6316
      %v7696 = vunpack.c.h.b16 %v6316
      %v7697 = vunpack.c.l.b16 %v6317
      %v7698 = vunpack.c.h.b16 %v6317
      %v7699 = vunpack.c.l.b16 %v6318
      %v7700 = vunpack.c.h.b16 %v6318
      %v7701 = vunpack.c.l.b16 %v6319
      %v7702 = vunpack.c.h.b16 %v6319
      %v7703 = vunpack.c.l.b16 %v6320
      %v7704 = vunpack.c.h.b16 %v6320
      %v7705 = vunpack.c.l.b16 %v6321
      %v7706 = vunpack.c.h.b16 %v6321
      %v7707 = vunpack.c.l.b16 %v6322
      %v7708 = vunpack.c.h.b16 %v6322
      %v7709 = vunpack.c.l.b16 %v6323
      %v7710 = vunpack.c.h.b16 %v6323
      %v7711 = vunpack.c.l.b16 %v6324
      %v7712 = vunpack.c.h.b16 %v6324
      %v7713 = vunpack.c.l.b16 %v6325
      %v7714 = vunpack.c.h.b16 %v6325
      %v7715 = vunpack.c.l.b16 %v6326
      %v7716 = vunpack.c.h.b16 %v6326
      %v7717 = vunpack.c.l.b16 %v6327
      %v7718 = vunpack.c.h.b16 %v6327
      %v7719 = vunpack.c.l.b16 %v6328
      %v7720 = vunpack.c.h.b16 %v6328
      %v7721 = vunpack.c.l.b16 %v6329
      %v7722 = vunpack.c.h.b16 %v6329
      %v7723 = vunpack.c.l.b16 %v6330
      %v7724 = vunpack.c.h.b16 %v6330
      %v7725 = vunpack.c.l.b16 %v6331
      %v7726 = vunpack.c.h.b16 %v6331
      %v7727 = vunpack.c.l.b16 %v6332
      %v7728 = vunpack.c.h.b16 %v6332
      %v7729 = vunpack.c.l.b16 %v6333
      %v7730 = vunpack.c.h.b16 %v6333
      %v7731 = vunpack.c.l.b16 %v6334
      %v7732 = vunpack.c.h.b16 %v6334
      %v7733 = vunpack.c.l.b16 %v6335
      %v7734 = vunpack.c.h.b16 %v6335
      %v7735 = vunpack.c.l.b16 %v6336
      %v7736 = vunpack.c.h.b16 %v6336
      %v7737 = vunpack.c.l.b16 %v6337
      %v7738 = vunpack.c.h.b16 %v6337
      %v7739 = vunpack.c.l.b16 %v6338
      %v7740 = vunpack.c.h.b16 %v6338
      %v7741 = vunpack.c.l.b16 %v6339
      %v7742 = vunpack.c.h.b16 %v6339
      %v7743 = vunpack.c.l.b16 %v6340
      %v7744 = vunpack.c.h.b16 %v6340
      %v7745 = vunpack.c.l.b16 %v6341
      %v7746 = vunpack.c.h.b16 %v6341
      %v7747 = vunpack.c.l.b16 %v6342
      %v7748 = vunpack.c.h.b16 %v6342
      %v7749 = vunpack.c.l.b16 %v6343
      %v7750 = vunpack.c.h.b16 %v6343
      %v7751 = vunpack.c.l.b16 %v6344
      %v7752 = vunpack.c.h.b16 %v6344
      %v7753 = vunpack.c.l.b16 %v6345
      %v7754 = vunpack.c.h.b16 %v6345
      %v7755 = vunpack.c.l.b16 %v6346
      %v7756 = vunpack.c.h.b16 %v6346
      %v7757 = vunpack.c.l.b16 %v6347
      %v7758 = vunpack.c.h.b16 %v6347
      %v7759 = vunpack.c.l.b16 %v6348
      %v7760 = vunpack.c.h.b16 %v6348
      %v7761 = vunpack.c.l.b16 %v6349
      %v7762 = vunpack.c.h.b16 %v6349
      %v7763 = vunpack.c.l.b16 %v6350
      %v7764 = vunpack.c.h.b16 %v6350
      %v7765 = vunpack.c.l.b16 %v6351
      %v7766 = vunpack.c.h.b16 %v6351
      %v7767 = vunpack.c.l.b16 %v6352
      %v7768 = vunpack.c.h.b16 %v6352
      %v7769 = vunpack.c.l.b16 %v6353
      %v7770 = vunpack.c.h.b16 %v6353
      %v7771 = vunpack.c.l.b16 %v6354
      %v7772 = vunpack.c.h.b16 %v6354
      %v7773 = vunpack.c.l.b16 %v6355
      %v7774 = vunpack.c.h.b16 %v6355
      %v7775 = vunpack.c.l.b16 %v6356
      %v7776 = vunpack.c.h.b16 %v6356
      %v7777 = vunpack.c.l.b16 %v6357
      %v7778 = vunpack.c.h.b16 %v6357
      %v7779 = vunpack.c.l.b16 %v6358
      %v7780 = vunpack.c.h.b16 %v6358
      %v7781 = vunpack.c.l.b16 %v6359
      %v7782 = vunpack.c.h.b16 %v6359
      %v7783 = vunpack.c.l.b16 %v6360
      %v7784 = vunpack.c.h.b16 %v6360
      %v7785 = vunpack.c.l.b16 %v6361
      %v7786 = vunpack.c.h.b16 %v6361
      %v7787 = vunpack.c.l.b16 %v6362
      %v7788 = vunpack.c.h.b16 %v6362
      %v7789 = vunpack.c.l.b16 %v6363
      %v7790 = vunpack.c.h.b16 %v6363
      %v7791 = vunpack.c.l.b16 %v6364
      %v7792 = vunpack.c.h.b16 %v6364
      %v7793 = vunpack.c.l.b16 %v6365
      %v7794 = vunpack.c.h.b16 %v6365
      %v7795 = vunpack.c.l.b16 %v6366
      %v7796 = vunpack.c.h.b16 %v6366
      %v7797 = vunpack.c.l.b16 %v6367
      %v7798 = vunpack.c.h.b16 %v6367
      %v7799 = vunpack.c.l.b16 %v6368
      %v7800 = vunpack.c.h.b16 %v6368
      %v7801 = vunpack.c.l.b16 %v6369
      %v7802 = vunpack.c.h.b16 %v6369
      %v7803 = vunpack.c.l.b16 %v6370
      %v7804 = vunpack.c.h.b16 %v6370
      %v7805 = vunpack.c.l.b16 %v6371
      %v7806 = vunpack.c.h.b16 %v6371
      %v7807 = vunpack.c.l.b16 %v6372
      %v7808 = vunpack.c.h.b16 %v6372
      %v7809 = vunpack.c.l.b16 %v6373
      %v7810 = vunpack.c.h.b16 %v6373
      %v7811 = vunpack.c.l.b16 %v6374
      %v7812 = vunpack.c.h.b16 %v6374
      %v7813 = vunpack.c.l.b16 %v6375
      %v7814 = vunpack.c.h.b16 %v6375
      %v7815 = vunpack.c.l.b16 %v6376
      %v7816 = vunpack.c.h.b16 %v6376
      %v7817 = vunpack.c.l.b16 %v6377
      %v7818 = vunpack.c.h.b16 %v6377
      %v7819 = vunpack.c.l.b16 %v6378
      %v7820 = vunpack.c.h.b16 %v6378
      %v7821 = vunpack.c.l.b16 %v6379
      %v7822 = vunpack.c.h.b16 %v6379
      %v7823 = vunpack.c.l.b16 %v6380
      %v7824 = vunpack.c.h.b16 %v6380
      %v7825 = vunpack.c.l.b16 %v6381
      %v7826 = vunpack.c.h.b16 %v6381
      %v7827 = vunpack.c.l.b16 %v6382
      %v7828 = vunpack.c.h.b16 %v6382
      %v7829 = vunpack.c.l.b16 %v6383
      %v7830 = vunpack.c.h.b16 %v6383
      %v7831 = vunpack.c.l.b16 %v6384
      %v7832 = vunpack.c.h.b16 %v6384
      %v7833 = vunpack.c.l.b16 %v6385
      %v7834 = vunpack.c.h.b16 %v6385
      %v7835 = vunpack.c.l.b16 %v6386
      %v7836 = vunpack.c.h.b16 %v6386
      %v7837 = vunpack.c.l.b16 %v6387
      %v7838 = vunpack.c.h.b16 %v6387
      %v7839 = vunpack.c.l.b16 %v6388
      %v7840 = vunpack.c.h.b16 %v6388
      %v7841 = vunpack.c.l.b16 %v6389
      %v7842 = vunpack.c.h.b16 %v6389
      %v7843 = vunpack.c.l.b16 %v6390
      %v7844 = vunpack.c.h.b16 %v6390
      %v7845 = vunpack.c.l.b16 %v6391
      %v7846 = vunpack.c.h.b16 %v6391
      %v7847 = vunpack.c.l.b16 %v6392
      %v7848 = vunpack.c.h.b16 %v6392
      %v7849 = vunpack.c.l.b16 %v6393
      %v7850 = vunpack.c.h.b16 %v6393
      %v7851 = vunpack.c.l.b16 %v6394
      %v7852 = vunpack.c.h.b16 %v6394
      %v7853 = vunpack.c.l.b16 %v6395
      %v7854 = vunpack.c.h.b16 %v6395
      %v7855 = vunpack.c.l.b16 %v6396
      %v7856 = vunpack.c.h.b16 %v6396
      %v7857 = vunpack.c.l.b16 %v6397
      %v7858 = vunpack.c.h.b16 %v6397
      %v7859 = vunpack.c.l.b16 %v6398
      %v7860 = vunpack.c.h.b16 %v6398
      %v7861 = vunpack.c.l.b16 %v6399
      %v7862 = vunpack.c.h.b16 %v6399
      %v7863 = vunpack.c.l.b16 %v6400
      %v7864 = vunpack.c.h.b16 %v6400
      %v7865 = vunpack.c.l.b16 %v6401
      %v7866 = vunpack.c.h.b16 %v6401
      %v7867 = vunpack.c.l.b16 %v6402
      %v7868 = vunpack.c.h.b16 %v6402
      %v7869 = vunpack.c.l.b16 %v6403
      %v7870 = vunpack.c.h.b16 %v6403
      %v7871 = vunpack.c.l.b16 %v6404
      %v7872 = vunpack.c.h.b16 %v6404
      %v7873 = vunpack.c.l.b16 %v6405
      %v7874 = vunpack.c.h.b16 %v6405
      %v7875 = vunpack.c.l.b16 %v6406
      %v7876 = vunpack.c.h.b16 %v6406
      %v7877 = vunpack.c.l.b16 %v6407
      %v7878 = vunpack.c.h.b16 %v6407
      %v7879 = vunpack.c.l.b16 %v6408
      %v7880 = vunpack.c.h.b16 %v6408
      %v7881 = vunpack.c.l.b16 %v6409
      %v7882 = vunpack.c.h.b16 %v6409
      %v7883 = vunpack.c.l.b16 %v6410
      %v7884 = vunpack.c.h.b16 %v6410
      %v7885 = vunpack.c.l.b16 %v6411
      %v7886 = vunpack.c.h.b16 %v6411
      %v7887 = vunpack.c.l.b16 %v6412
      %v7888 = vunpack.c.h.b16 %v6412
      %v7889 = vunpack.c.l.b16 %v6413
      %v7890 = vunpack.c.h.b16 %v6413
      %v7891 = vunpack.c.l.b16 %v6414
      %v7892 = vunpack.c.h.b16 %v6414
      %v7893 = vunpack.c.l.b16 %v6415
      %v7894 = vunpack.c.h.b16 %v6415
      %v7895 = vunpack.c.l.b16 %v6416
      %v7896 = vunpack.c.h.b16 %v6416
      %v7897 = vunpack.c.l.b16 %v6417
      %v7898 = vunpack.c.h.b16 %v6417
      %v7899 = vunpack.c.l.b16 %v6418
      %v7900 = vunpack.c.h.b16 %v6418
      %v7901 = vunpack.c.l.b16 %v6419
      %v7902 = vunpack.c.h.b16 %v6419
      %v7903 = vunpack.c.l.b16 %v6420
      %v7904 = vunpack.c.h.b16 %v6420
      %v7905 = vunpack.c.l.b16 %v6421
      %v7906 = vunpack.c.h.b16 %v6421
      %v7907 = vunpack.c.l.b16 %v6422
      %v7908 = vunpack.c.h.b16 %v6422
      %v7909 = vunpack.c.l.b16 %v6423
      %v7910 = vunpack.c.h.b16 %v6423
      %v7911 = vunpack.c.l.b16 %v6424
      %v7912 = vunpack.c.h.b16 %v6424
      %v7913 = vunpack.c.l.b16 %v6425
      %v7914 = vunpack.c.h.b16 %v6425
      %v7915 = vunpack.c.l.b16 %v6426
      %v7916 = vunpack.c.h.b16 %v6426
      %v7917 = vunpack.c.l.b16 %v6427
      %v7918 = vunpack.c.h.b16 %v6427
      %v7919 = vunpack.c.l.b16 %v6428
      %v7920 = vunpack.c.h.b16 %v6428
      %v7921 = vunpack.c.l.b16 %v6429
      %v7922 = vunpack.c.h.b16 %v6429
      %v7923 = vunpack.c.l.b16 %v6430
      %v7924 = vunpack.c.h.b16 %v6430
      %v7925 = vunpack.c.l.b16 %v6431
      %v7926 = vunpack.c.h.b16 %v6431
      %v7927 = vunpack.c.l.b16 %v6432
      %v7928 = vunpack.c.h.b16 %v6432
      %v7929 = vunpack.c.l.b16 %v6433
      %v7930 = vunpack.c.h.b16 %v6433
      %v7931 = vunpack.c.l.b16 %v6434
      %v7932 = vunpack.c.h.b16 %v6434
      %v7933 = vunpack.c.l.b16 %v6435
      %v7934 = vunpack.c.h.b16 %v6435
      %v7935 = vunpack.c.l.b16 %v6436
      %v7936 = vunpack.c.h.b16 %v6436
      %v7937 = vunpack.c.l.b16 %v6437
      %v7938 = vunpack.c.h.b16 %v6437
      %v7939 = vunpack.c.l.b16 %v6438
      %v7940 = vunpack.c.h.b16 %v6438
      %v7941 = vunpack.c.l.b16 %v6439
      %v7942 = vunpack.c.h.b16 %v6439
      %v7943 = vunpack.c.l.b16 %v6440
      %v7944 = vunpack.c.h.b16 %v6440
      %v7945 = vunpack.c.l.b16 %v6441
      %v7946 = vunpack.c.h.b16 %v6441
      %v7947 = vunpack.c.l.b16 %v6442
      %v7948 = vunpack.c.h.b16 %v6442
      %v7949 = vunpack.c.l.b16 %v6443
      %v7950 = vunpack.c.h.b16 %v6443
      %v7951 = vunpack.c.l.b16 %v6444
      %v7952 = vunpack.c.h.b16 %v6444
      %v7953 = vunpack.c.l.b16 %v6445
      %v7954 = vunpack.c.h.b16 %v6445
      %v7955 = vunpack.c.l.b16 %v6446
      %v7956 = vunpack.c.h.b16 %v6446
      %v7957 = vunpack.c.l.b16 %v6447
      %v7958 = vunpack.c.h.b16 %v6447
      %v7959 = vunpack.c.l.b16 %v6448
      %v7960 = vunpack.c.h.b16 %v6448
      %v7961 = vunpack.c.l.b16 %v6449
      %v7962 = vunpack.c.h.b16 %v6449
      %v7963 = vunpack.c.l.b16 %v6450
      %v7964 = vunpack.c.h.b16 %v6450
      %v7965 = vunpack.c.l.b16 %v6451
      %v7966 = vunpack.c.h.b16 %v6451
      %v7967 = vunpack.c.l.b16 %v6452
      %v7968 = vunpack.c.h.b16 %v6452
      %v7969 = vunpack.c.l.b16 %v6453
      %v7970 = vunpack.c.h.b16 %v6453
      %v7971 = vunpack.c.l.b16 %v6454
      %v7972 = vunpack.c.h.b16 %v6454
      %v7973 = vunpack.c.l.b16 %v6455
      %v7974 = vunpack.c.h.b16 %v6455
      %v7975 = vunpack.c.l.b16 %v6456
      %v7976 = vunpack.c.h.b16 %v6456
      %v7977 = vunpack.c.l.b16 %v6457
      %v7978 = vunpack.c.h.b16 %v6457
      %v7979 = vunpack.c.l.b16 %v6458
      %v7980 = vunpack.c.h.b16 %v6458
      %v7981 = vunpack.c.l.b16 %v6459
      %v7982 = vunpack.c.h.b16 %v6459
      %v7983 = vunpack.c.l.b16 %v6460
      %v7984 = vunpack.c.h.b16 %v6460
      %v7985 = vunpack.c.l.b16 %v6461
      %v7986 = vunpack.c.h.b16 %v6461
      %v7987 = vunpack.c.l.b16 %v6462
      %v7988 = vunpack.c.h.b16 %v6462
      %v7989 = vunpack.c.l.b16 %v6463
      %v7990 = vunpack.c.h.b16 %v6463
      %v7991 = vunpack.c.l.b16 %v6464
      %v7992 = vunpack.c.h.b16 %v6464
      %v7993 = vunpack.c.l.b16 %v6465
      %v7994 = vunpack.c.h.b16 %v6465
      %v7995 = vunpack.c.l.b16 %v6466
      %v7996 = vunpack.c.h.b16 %v6466
      %v7997 = vunpack.c.l.b16 %v6467
      %v7998 = vunpack.c.h.b16 %v6467
      %v7999 = vunpack.c.l.b16 %v6468
      %v8000 = vunpack.c.h.b16 %v6468
      %v8001 = vunpack.c.l.b16 %v6469
      %v8002 = vunpack.c.h.b16 %v6469
      %v8003 = vunpack.c.l.b16 %v6470
      %v8004 = vunpack.c.h.b16 %v6470
      %v8005 = vunpack.c.l.b16 %v6471
      %v8006 = vunpack.c.h.b16 %v6471
      %v8007 = vunpack.c.l.b16 %v6472
      %v8008 = vunpack.c.h.b16 %v6472
      %v8009 = vunpack.c.l.b16 %v6473
      %v8010 = vunpack.c.h.b16 %v6473
      %v8011 = vunpack.c.l.b16 %v6474
      %v8012 = vunpack.c.h.b16 %v6474
      %v8013 = vunpack.c.l.b16 %v6475
      %v8014 = vunpack.c.h.b16 %v6475
      %v8015 = vunpack.c.l.b16 %v6476
      %v8016 = vunpack.c.h.b16 %v6476
      %v8017 = vunpack.c.l.b16 %v6477
      %v8018 = vunpack.c.h.b16 %v6477
      %v8019 = vunpack.c.l.b16 %v6478
      %v8020 = vunpack.c.h.b16 %v6478
      %v8021 = vunpack.c.l.b16 %v6479
      %v8022 = vunpack.c.h.b16 %v6479
      %v8023 = vunpack.c.l.b16 %v6480
      %v8024 = vunpack.c.h.b16 %v6480
      %v8025 = vunpack.c.l.b16 %v6481
      %v8026 = vunpack.c.h.b16 %v6481
      %v8027 = vunpack.c.l.b16 %v6482
      %v8028 = vunpack.c.h.b16 %v6482
      %v8029 = vunpack.c.l.b16 %v6483
      %v8030 = vunpack.c.h.b16 %v6483
      %v8031 = vunpack.c.l.b16 %v6484
      %v8032 = vunpack.c.h.b16 %v6484
      %v8033 = vunpack.c.l.b16 %v6485
      %v8034 = vunpack.c.h.b16 %v6485
      %v8035 = vunpack.c.l.b16 %v6486
      %v8036 = vunpack.c.h.b16 %v6486
      %v8037 = vunpack.c.l.b16 %v6487
      %v8038 = vunpack.c.h.b16 %v6487
      %v8039 = vunpack.c.l.b16 %v6488
      %v8040 = vunpack.c.h.b16 %v6488
      %v8041 = vunpack.c.l.b16 %v6489
      %v8042 = vunpack.c.h.b16 %v6489
      %v8043 = vunpack.c.l.b16 %v6490
      %v8044 = vunpack.c.h.b16 %v6490
      %v8045 = vunpack.c.l.b16 %v6491
      %v8046 = vunpack.c.h.b16 %v6491
      %v8047 = vunpack.c.l.b16 %v6492
      %v8048 = vunpack.c.h.b16 %v6492
      %v8049 = vunpack.c.l.b16 %v6493
      %v8050 = vunpack.c.h.b16 %v6493
      %v8051 = vunpack.c.l.b16 %v6494
      %v8052 = vunpack.c.h.b16 %v6494
      %v8053 = vpack.c.b16 %v7033, %v7029
      %v8054 = vpack.c.b16 %v7034, %v7030
      %v8055 = vpack.c.b16 %v7035, %v7031
      %v8056 = vpack.c.b16 %v7036, %v7032
      %v8057 = vpack.c.b16 %v7041, %v7037
      %v8058 = vpack.c.b16 %v7042, %v7038
      %v8059 = vpack.c.b16 %v7043, %v7039
      %v8060 = vpack.c.b16 %v7044, %v7040
      %v8061 = vpack.c.b16 %v7049, %v7045
      %v8062 = vpack.c.b16 %v7050, %v7046
      %v8063 = vpack.c.b16 %v7051, %v7047
      %v8064 = vpack.c.b16 %v7052, %v7048
      %v8065 = vpack.c.b16 %v7057, %v7053
      %v8066 = vpack.c.b16 %v7058, %v7054
      %v8067 = vpack.c.b16 %v7059, %v7055
      %v8068 = vpack.c.b16 %v7060, %v7056
      %v8069 = vpack.c.b16 %v7065, %v7061
      %v8070 = vpack.c.b16 %v7066, %v7062
      %v8071 = vpack.c.b16 %v7067, %v7063
      %v8072 = vpack.c.b16 %v7068, %v7064
      %v8073 = vpack.c.b16 %v7073, %v7069
      %v8074 = vpack.c.b16 %v7074, %v7070
      %v8075 = vpack.c.b16 %v7075, %v7071
      %v8076 = vpack.c.b16 %v7076, %v7072
      %v8077 = vpack.c.b16 %v7081, %v7077
      %v8078 = vpack.c.b16 %v7082, %v7078
      %v8079 = vpack.c.b16 %v7083, %v7079
      %v8080 = vpack.c.b16 %v7084, %v7080
      %v8081 = vpack.c.b16 %v7089, %v7085
      %v8082 = vpack.c.b16 %v7090, %v7086
      %v8083 = vpack.c.b16 %v7091, %v7087
      %v8084 = vpack.c.b16 %v7092, %v7088
      %v8085 = vpack.c.b16 %v7097, %v7093
      %v8086 = vpack.c.b16 %v7098, %v7094
      %v8087 = vpack.c.b16 %v7099, %v7095
      %v8088 = vpack.c.b16 %v7100, %v7096
      %v8089 = vpack.c.b16 %v7105, %v7101
      %v8090 = vpack.c.b16 %v7106, %v7102
      %v8091 = vpack.c.b16 %v7107, %v7103
      %v8092 = vpack.c.b16 %v7108, %v7104
      %v8093 = vpack.c.b16 %v7113, %v7109
      %v8094 = vpack.c.b16 %v7114, %v7110
      %v8095 = vpack.c.b16 %v7115, %v7111
      %v8096 = vpack.c.b16 %v7116, %v7112
      %v8097 = vpack.c.b16 %v7121, %v7117
      %v8098 = vpack.c.b16 %v7122, %v7118
      %v8099 = vpack.c.b16 %v7123, %v7119
      %v8100 = vpack.c.b16 %v7124, %v7120
      %v8101 = vpack.c.b16 %v7129, %v7125
      %v8102 = vpack.c.b16 %v7130, %v7126
      %v8103 = vpack.c.b16 %v7131, %v7127
      %v8104 = vpack.c.b16 %v7132, %v7128
      %v8105 = vpack.c.b16 %v7137, %v7133
      %v8106 = vpack.c.b16 %v7138, %v7134
      %v8107 = vpack.c.b16 %v7139, %v7135
      %v8108 = vpack.c.b16 %v7140, %v7136
      %v8109 = vpack.c.b16 %v7145, %v7141
      %v8110 = vpack.c.b16 %v7146, %v7142
      %v8111 = vpack.c.b16 %v7147, %v7143
      %v8112 = vpack.c.b16 %v7148, %v7144
      %v8113 = vpack.c.b16 %v7153, %v7149
      %v8114 = vpack.c.b16 %v7154, %v7150
      %v8115 = vpack.c.b16 %v7155, %v7151
      %v8116 = vpack.c.b16 %v7156, %v7152
      %v8117 = vpack.c.b16 %v7161, %v7157
      %v8118 = vpack.c.b16 %v7162, %v7158
      %v8119 = vpack.c.b16 %v7163, %v7159
      %v8120 = vpack.c.b16 %v7164, %v7160
      %v8121 = vpack.c.b16 %v7169, %v7165
      %v8122 = vpack.c.b16 %v7170, %v7166
      %v8123 = vpack.c.b16 %v7171, %v7167
      %v8124 = vpack.c.b16 %v7172, %v7168
      %v8125 = vpack.c.b16 %v7177, %v7173
      %v8126 = vpack.c.b16 %v7178, %v7174
      %v8127 = vpack.c.b16 %v7179, %v7175
      %v8128 = vpack.c.b16 %v7180, %v7176
      %v8129 = vpack.c.b16 %v7185, %v7181
      %v8130 = vpack.c.b16 %v7186, %v7182
      %v8131 = vpack.c.b16 %v7187, %v7183
      %v8132 = vpack.c.b16 %v7188, %v7184
      %v8133 = vpack.c.b16 %v7193, %v7189
      %v8134 = vpack.c.b16 %v7194, %v7190
      %v8135 = vpack.c.b16 %v7195, %v7191
      %v8136 = vpack.c.b16 %v7196, %v7192
      %v8137 = vpack.c.b16 %v7201, %v7197
      %v8138 = vpack.c.b16 %v7202, %v7198
      %v8139 = vpack.c.b16 %v7203, %v7199
      %v8140 = vpack.c.b16 %v7204, %v7200
      %v8141 = vpack.c.b16 %v7209, %v7205
      %v8142 = vpack.c.b16 %v7210, %v7206
      %v8143 = vpack.c.b16 %v7211, %v7207
      %v8144 = vpack.c.b16 %v7212, %v7208
      %v8145 = vpack.c.b16 %v7217, %v7213
      %v8146 = vpack.c.b16 %v7218, %v7214
      %v8147 = vpack.c.b16 %v7219, %v7215
      %v8148 = vpack.c.b16 %v7220, %v7216
      %v8149 = vpack.c.b16 %v7225, %v7221
      %v8150 = vpack.c.b16 %v7226, %v7222
      %v8151 = vpack.c.b16 %v7227, %v7223
      %v8152 = vpack.c.b16 %v7228, %v7224
      %v8153 = vpack.c.b16 %v7233, %v7229
      %v8154 = vpack.c.b16 %v7234, %v7230
      %v8155 = vpack.c.b16 %v7235, %v7231
      %v8156 = vpack.c.b16 %v7236, %v7232
      %v8157 = vpack.c.b16 %v7241, %v7237
      %v8158 = vpack.c.b16 %v7242, %v7238
      %v8159 = vpack.c.b16 %v7243, %v7239
      %v8160 = vpack.c.b16 %v7244, %v7240
      %v8161 = vpack.c.b16 %v7249, %v7245
      %v8162 = vpack.c.b16 %v7250, %v7246
      %v8163 = vpack.c.b16 %v7251, %v7247
      %v8164 = vpack.c.b16 %v7252, %v7248
      %v8165 = vpack.c.b16 %v7257, %v7253
      %v8166 = vpack.c.b16 %v7258, %v7254
      %v8167 = vpack.c.b16 %v7259, %v7255
      %v8168 = vpack.c.b16 %v7260, %v7256
      %v8169 = vpack.c.b16 %v7265, %v7261
      %v8170 = vpack.c.b16 %v7266, %v7262
      %v8171 = vpack.c.b16 %v7267, %v7263
      %v8172 = vpack.c.b16 %v7268, %v7264
      %v8173 = vpack.c.b16 %v7273, %v7269
      %v8174 = vpack.c.b16 %v7274, %v7270
      %v8175 = vpack.c.b16 %v7275, %v7271
      %v8176 = vpack.c.b16 %v7276, %v7272
      %v8177 = vpack.c.b16 %v7281, %v7277
      %v8178 = vpack.c.b16 %v7282, %v7278
      %v8179 = vpack.c.b16 %v7283, %v7279
      %v8180 = vpack.c.b16 %v7284, %v7280
      %v8181 = vpack.c.b16 %v7289, %v7285
      %v8182 = vpack.c.b16 %v7290, %v7286
      %v8183 = vpack.c.b16 %v7291, %v7287
      %v8184 = vpack.c.b16 %v7292, %v7288
      %v8185 = vpack.c.b16 %v7297, %v7293
      %v8186 = vpack.c.b16 %v7298, %v7294
      %v8187 = vpack.c.b16 %v7299, %v7295
      %v8188 = vpack.c.b16 %v7300, %v7296
      %v8189 = vpack.c.b16 %v7305, %v7301
      %v8190 = vpack.c.b16 %v7306, %v7302
      %v8191 = vpack.c.b16 %v7307, %v7303
      %v8192 = vpack.c.b16 %v7308, %v7304
      %v8193 = vpack.c.b16 %v7313, %v7309
      %v8194 = vpack.c.b16 %v7314, %v7310
      %v8195 = vpack.c.b16 %v7315, %v7311
      %v8196 = vpack.c.b16 %v7316, %v7312
      %v8197 = vpack.c.b16 %v7321, %v7317
      %v8198 = vpack.c.b16 %v7322, %v7318
      %v8199 = vpack.c.b16 %v7323, %v7319
      %v8200 = vpack.c.b16 %v7324, %v7320
      %v8201 = vpack.c.b16 %v7329, %v7325
      %v8202 = vpack.c.b16 %v7330, %v7326
      %v8203 = vpack.c.b16 %v7331, %v7327
      %v8204 = vpack.c.b16 %v7332, %v7328
      %v8205 = vpack.c.b16 %v7337, %v7333
      %v8206 = vpack.c.b16 %v7338, %v7334
      %v8207 = vpack.c.b16 %v7339, %v7335
      %v8208 = vpack.c.b16 %v7340, %v7336
      %v8209 = vpack.c.b16 %v7345, %v7341
      %v8210 = vpack.c.b16 %v7346, %v7342
      %v8211 = vpack.c.b16 %v7347, %v7343
      %v8212 = vpack.c.b16 %v7348, %v7344
      %v8213 = vpack.c.b16 %v7353, %v7349
      %v8214 = vpack.c.b16 %v7354, %v7350
      %v8215 = vpack.c.b16 %v7355, %v7351
      %v8216 = vpack.c.b16 %v7356, %v7352
      %v8217 = vpack.c.b16 %v7361, %v7357
      %v8218 = vpack.c.b16 %v7362, %v7358
      %v8219 = vpack.c.b16 %v7363, %v7359
      %v8220 = vpack.c.b16 %v7364, %v7360
      %v8221 = vpack.c.b16 %v7369, %v7365
      %v8222 = vpack.c.b16 %v7370, %v7366
      %v8223 = vpack.c.b16 %v7371, %v7367
      %v8224 = vpack.c.b16 %v7372, %v7368
      %v8225 = vpack.c.b16 %v7377, %v7373
      %v8226 = vpack.c.b16 %v7378, %v7374
      %v8227 = vpack.c.b16 %v7379, %v7375
      %v8228 = vpack.c.b16 %v7380, %v7376
      %v8229 = vpack.c.b16 %v7385, %v7381
      %v8230 = vpack.c.b16 %v7386, %v7382
      %v8231 = vpack.c.b16 %v7387, %v7383
      %v8232 = vpack.c.b16 %v7388, %v7384
      %v8233 = vpack.c.b16 %v7393, %v7389
      %v8234 = vpack.c.b16 %v7394, %v7390
      %v8235 = vpack.c.b16 %v7395, %v7391
      %v8236 = vpack.c.b16 %v7396, %v7392
      %v8237 = vpack.c.b16 %v7401, %v7397
      %v8238 = vpack.c.b16 %v7402, %v7398
      %v8239 = vpack.c.b16 %v7403, %v7399
      %v8240 = vpack.c.b16 %v7404, %v7400
      %v8241 = vpack.c.b16 %v7409, %v7405
      %v8242 = vpack.c.b16 %v7410, %v7406
      %v8243 = vpack.c.b16 %v7411, %v7407
      %v8244 = vpack.c.b16 %v7412, %v7408
      %v8245 = vpack.c.b16 %v7417, %v7413
      %v8246 = vpack.c.b16 %v7418, %v7414
      %v8247 = vpack.c.b16 %v7419, %v7415
      %v8248 = vpack.c.b16 %v7420, %v7416
      %v8249 = vpack.c.b16 %v7425, %v7421
      %v8250 = vpack.c.b16 %v7426, %v7422
      %v8251 = vpack.c.b16 %v7427, %v7423
      %v8252 = vpack.c.b16 %v7428, %v7424
      %v8253 = vpack.c.b16 %v7433, %v7429
      %v8254 = vpack.c.b16 %v7434, %v7430
      %v8255 = vpack.c.b16 %v7435, %v7431
      %v8256 = vpack.c.b16 %v7436, %v7432
      %v8257 = vpack.c.b16 %v7441, %v7437
      %v8258 = vpack.c.b16 %v7442, %v7438
      %v8259 = vpack.c.b16 %v7443, %v7439
      %v8260 = vpack.c.b16 %v7444, %v7440
      %v8261 = vpack.c.b16 %v7449, %v7445
      %v8262 = vpack.c.b16 %v7450, %v7446
      %v8263 = vpack.c.b16 %v7451, %v7447
      %v8264 = vpack.c.b16 %v7452, %v7448
      %v8265 = vpack.c.b16 %v7457, %v7453
      %v8266 = vpack.c.b16 %v7458, %v7454
      %v8267 = vpack.c.b16 %v7459, %v7455
      %v8268 = vpack.c.b16 %v7460, %v7456
      %v8269 = vpack.c.b16 %v7465, %v7461
      %v8270 = vpack.c.b16 %v7466, %v7462
      %v8271 = vpack.c.b16 %v7467, %v7463
      %v8272 = vpack.c.b16 %v7468, %v7464
      %v8273 = vpack.c.b16 %v7473, %v7469
      %v8274 = vpack.c.b16 %v7474, %v7470
      %v8275 = vpack.c.b16 %v7475, %v7471
      %v8276 = vpack.c.b16 %v7476, %v7472
      %v8277 = vpack.c.b16 %v7481, %v7477
      %v8278 = vpack.c.b16 %v7482, %v7478
      %v8279 = vpack.c.b16 %v7483, %v7479
      %v8280 = vpack.c.b16 %v7484, %v7480
      %v8281 = vpack.c.b16 %v7489, %v7485
      %v8282 = vpack.c.b16 %v7490, %v7486
      %v8283 = vpack.c.b16 %v7491, %v7487
      %v8284 = vpack.c.b16 %v7492, %v7488
      %v8285 = vpack.c.b16 %v7497, %v7493
      %v8286 = vpack.c.b16 %v7498, %v7494
      %v8287 = vpack.c.b16 %v7499, %v7495
      %v8288 = vpack.c.b16 %v7500, %v7496
      %v8289 = vpack.c.b16 %v7505, %v7501
      %v8290 = vpack.c.b16 %v7506, %v7502
      %v8291 = vpack.c.b16 %v7507, %v7503
      %v8292 = vpack.c.b16 %v7508, %v7504
      %v8293 = vpack.c.b16 %v7513, %v7509
      %v8294 = vpack.c.b16 %v7514, %v7510
      %v8295 = vpack.c.b16 %v7515, %v7511
      %v8296 = vpack.c.b16 %v7516, %v7512
      %v8297 = vpack.c.b16 %v7521, %v7517
      %v8298 = vpack.c.b16 %v7522, %v7518
      %v8299 = vpack.c.b16 %v7523, %v7519
      %v8300 = vpack.c.b16 %v7524, %v7520
      %v8301 = vpack.c.b16 %v7529, %v7525
      %v8302 = vpack.c.b16 %v7530, %v7526
      %v8303 = vpack.c.b16 %v7531, %v7527
      %v8304 = vpack.c.b16 %v7532, %v7528
      %v8305 = vpack.c.b16 %v7537, %v7533
      %v8306 = vpack.c.b16 %v7538, %v7534
      %v8307 = vpack.c.b16 %v7539, %v7535
      %v8308 = vpack.c.b16 %v7540, %v7536
      %v8309 = vpack.c.b16 %v7545, %v7541
      %v8310 = vpack.c.b16 %v7546, %v7542
      %v8311 = vpack.c.b16 %v7547, %v7543
      %v8312 = vpack.c.b16 %v7548, %v7544
      %v8313 = vpack.c.b16 %v7553, %v7549
      %v8314 = vpack.c.b16 %v7554, %v7550
      %v8315 = vpack.c.b16 %v7555, %v7551
      %v8316 = vpack.c.b16 %v7556, %v7552
      %v8317 = vpack.c.b16 %v7561, %v7557
      %v8318 = vpack.c.b16 %v7562, %v7558
      %v8319 = vpack.c.b16 %v7563, %v7559
      %v8320 = vpack.c.b16 %v7564, %v7560
      %v8321 = vpack.c.b16 %v7569, %v7565
      %v8322 = vpack.c.b16 %v7570, %v7566
      %v8323 = vpack.c.b16 %v7571, %v7567
      %v8324 = vpack.c.b16 %v7572, %v7568
      %v8325 = vpack.c.b16 %v7577, %v7573
      %v8326 = vpack.c.b16 %v7578, %v7574
      %v8327 = vpack.c.b16 %v7579, %v7575
      %v8328 = vpack.c.b16 %v7580, %v7576
      %v8329 = vpack.c.b16 %v7585, %v7581
      %v8330 = vpack.c.b16 %v7586, %v7582
      %v8331 = vpack.c.b16 %v7587, %v7583
      %v8332 = vpack.c.b16 %v7588, %v7584
      %v8333 = vpack.c.b16 %v7593, %v7589
      %v8334 = vpack.c.b16 %v7594, %v7590
      %v8335 = vpack.c.b16 %v7595, %v7591
      %v8336 = vpack.c.b16 %v7596, %v7592
      %v8337 = vpack.c.b16 %v7601, %v7597
      %v8338 = vpack.c.b16 %v7602, %v7598
      %v8339 = vpack.c.b16 %v7603, %v7599
      %v8340 = vpack.c.b16 %v7604, %v7600
      %v8341 = vpack.c.b16 %v7609, %v7605
      %v8342 = vpack.c.b16 %v7610, %v7606
      %v8343 = vpack.c.b16 %v7611, %v7607
      %v8344 = vpack.c.b16 %v7612, %v7608
      %v8345 = vpack.c.b16 %v7617, %v7613
      %v8346 = vpack.c.b16 %v7618, %v7614
      %v8347 = vpack.c.b16 %v7619, %v7615
      %v8348 = vpack.c.b16 %v7620, %v7616
      %v8349 = vpack.c.b16 %v7625, %v7621
      %v8350 = vpack.c.b16 %v7626, %v7622
      %v8351 = vpack.c.b16 %v7627, %v7623
      %v8352 = vpack.c.b16 %v7628, %v7624
      %v8353 = vpack.c.b16 %v7633, %v7629
      %v8354 = vpack.c.b16 %v7634, %v7630
      %v8355 = vpack.c.b16 %v7635, %v7631
      %v8356 = vpack.c.b16 %v7636, %v7632
      %v8357 = vpack.c.b16 %v7641, %v7637
      %v8358 = vpack.c.b16 %v7642, %v7638
      %v8359 = vpack.c.b16 %v7643, %v7639
      %v8360 = vpack.c.b16 %v7644, %v7640
      %v8361 = vpack.c.b16 %v7649, %v7645
      %v8362 = vpack.c.b16 %v7650, %v7646
      %v8363 = vpack.c.b16 %v7651, %v7647
      %v8364 = vpack.c.b16 %v7652, %v7648
      %v8365 = vpack.c.b16 %v7657, %v7653
      %v8366 = vpack.c.b16 %v7658, %v7654
      %v8367 = vpack.c.b16 %v7659, %v7655
      %v8368 = vpack.c.b16 %v7660, %v7656
      %v8369 = vpack.c.b16 %v7665, %v7661
      %v8370 = vpack.c.b16 %v7666, %v7662
      %v8371 = vpack.c.b16 %v7667, %v7663
      %v8372 = vpack.c.b16 %v7668, %v7664
      %v8373 = vpack.c.b16 %v7673, %v7669
      %v8374 = vpack.c.b16 %v7674, %v7670
      %v8375 = vpack.c.b16 %v7675, %v7671
      %v8376 = vpack.c.b16 %v7676, %v7672
      %v8377 = vpack.c.b16 %v7681, %v7677
      %v8378 = vpack.c.b16 %v7682, %v7678
      %v8379 = vpack.c.b16 %v7683, %v7679
      %v8380 = vpack.c.b16 %v7684, %v7680
      %v8381 = vpack.c.b16 %v7689, %v7685
      %v8382 = vpack.c.b16 %v7690, %v7686
      %v8383 = vpack.c.b16 %v7691, %v7687
      %v8384 = vpack.c.b16 %v7692, %v7688
      %v8385 = vpack.c.b16 %v7697, %v7693
      %v8386 = vpack.c.b16 %v7698, %v7694
      %v8387 = vpack.c.b16 %v7699, %v7695
      %v8388 = vpack.c.b16 %v7700, %v7696
      %v8389 = vpack.c.b16 %v7705, %v7701
      %v8390 = vpack.c.b16 %v7706, %v7702
      %v8391 = vpack.c.b16 %v7707, %v7703
      %v8392 = vpack.c.b16 %v7708, %v7704
      %v8393 = vpack.c.b16 %v7713, %v7709
      %v8394 = vpack.c.b16 %v7714, %v7710
      %v8395 = vpack.c.b16 %v7715, %v7711
      %v8396 = vpack.c.b16 %v7716, %v7712
      %v8397 = vpack.c.b16 %v7721, %v7717
      %v8398 = vpack.c.b16 %v7722, %v7718
      %v8399 = vpack.c.b16 %v7723, %v7719
      %v8400 = vpack.c.b16 %v7724, %v7720
      %v8401 = vpack.c.b16 %v7729, %v7725
      %v8402 = vpack.c.b16 %v7730, %v7726
      %v8403 = vpack.c.b16 %v7731, %v7727
      %v8404 = vpack.c.b16 %v7732, %v7728
      %v8405 = vpack.c.b16 %v7737, %v7733
      %v8406 = vpack.c.b16 %v7738, %v7734
      %v8407 = vpack.c.b16 %v7739, %v7735
      %v8408 = vpack.c.b16 %v7740, %v7736
      %v8409 = vpack.c.b16 %v7745, %v7741
      %v8410 = vpack.c.b16 %v7746, %v7742
      %v8411 = vpack.c.b16 %v7747, %v7743
      %v8412 = vpack.c.b16 %v7748, %v7744
      %v8413 = vpack.c.b16 %v7753, %v7749
      %v8414 = vpack.c.b16 %v7754, %v7750
      %v8415 = vpack.c.b16 %v7755, %v7751
      %v8416 = vpack.c.b16 %v7756, %v7752
      %v8417 = vpack.c.b16 %v7761, %v7757
      %v8418 = vpack.c.b16 %v7762, %v7758
      %v8419 = vpack.c.b16 %v7763, %v7759
      %v8420 = vpack.c.b16 %v7764, %v7760
      %v8421 = vpack.c.b16 %v7769, %v7765
      %v8422 = vpack.c.b16 %v7770, %v7766
      %v8423 = vpack.c.b16 %v7771, %v7767
      %v8424 = vpack.c.b16 %v7772, %v7768
      %v8425 = vpack.c.b16 %v7777, %v7773
      %v8426 = vpack.c.b16 %v7778, %v7774
      %v8427 = vpack.c.b16 %v7779, %v7775
      %v8428 = vpack.c.b16 %v7780, %v7776
      %v8429 = vpack.c.b16 %v7785, %v7781
      %v8430 = vpack.c.b16 %v7786, %v7782
      %v8431 = vpack.c.b16 %v7787, %v7783
      %v8432 = vpack.c.b16 %v7788, %v7784
      %v8433 = vpack.c.b16 %v7793, %v7789
      %v8434 = vpack.c.b16 %v7794, %v7790
      %v8435 = vpack.c.b16 %v7795, %v7791
      %v8436 = vpack.c.b16 %v7796, %v7792
      %v8437 = vpack.c.b16 %v7801, %v7797
      %v8438 = vpack.c.b16 %v7802, %v7798
      %v8439 = vpack.c.b16 %v7803, %v7799
      %v8440 = vpack.c.b16 %v7804, %v7800
      %v8441 = vpack.c.b16 %v7809, %v7805
      %v8442 = vpack.c.b16 %v7810, %v7806
      %v8443 = vpack.c.b16 %v7811, %v7807
      %v8444 = vpack.c.b16 %v7812, %v7808
      %v8445 = vpack.c.b16 %v7817, %v7813
      %v8446 = vpack.c.b16 %v7818, %v7814
      %v8447 = vpack.c.b16 %v7819, %v7815
      %v8448 = vpack.c.b16 %v7820, %v7816
      %v8449 = vpack.c.b16 %v7825, %v7821
      %v8450 = vpack.c.b16 %v7826, %v7822
      %v8451 = vpack.c.b16 %v7827, %v7823
      %v8452 = vpack.c.b16 %v7828, %v7824
      %v8453 = vpack.c.b16 %v7833, %v7829
      %v8454 = vpack.c.b16 %v7834, %v7830
      %v8455 = vpack.c.b16 %v7835, %v7831
      %v8456 = vpack.c.b16 %v7836, %v7832
      %v8457 = vpack.c.b16 %v7841, %v7837
      %v8458 = vpack.c.b16 %v7842, %v7838
      %v8459 = vpack.c.b16 %v7843, %v7839
      %v8460 = vpack.c.b16 %v7844, %v7840
      %v8461 = vpack.c.b16 %v7849, %v7845
      %v8462 = vpack.c.b16 %v7850, %v7846
      %v8463 = vpack.c.b16 %v7851, %v7847
      %v8464 = vpack.c.b16 %v7852, %v7848
      %v8465 = vpack.c.b16 %v7857, %v7853
      %v8466 = vpack.c.b16 %v7858, %v7854
      %v8467 = vpack.c.b16 %v7859, %v7855
      %v8468 = vpack.c.b16 %v7860, %v7856
      %v8469 = vpack.c.b16 %v7865, %v7861
      %v8470 = vpack.c.b16 %v7866, %v7862
      %v8471 = vpack.c.b16 %v7867, %v7863
      %v8472 = vpack.c.b16 %v7868, %v7864
      %v8473 = vpack.c.b16 %v7873, %v7869
      %v8474 = vpack.c.b16 %v7874, %v7870
      %v8475 = vpack.c.b16 %v7875, %v7871
      %v8476 = vpack.c.b16 %v7876, %v7872
      %v8477 = vpack.c.b16 %v7881, %v7877
      %v8478 = vpack.c.b16 %v7882, %v7878
      %v8479 = vpack.c.b16 %v7883, %v7879
      %v8480 = vpack.c.b16 %v7884, %v7880
      %v8481 = vpack.c.b16 %v7889, %v7885
      %v8482 = vpack.c.b16 %v7890, %v7886
      %v8483 = vpack.c.b16 %v7891, %v7887
      %v8484 = vpack.c.b16 %v7892, %v7888
      %v8485 = vpack.c.b16 %v7897, %v7893
      %v8486 = vpack.c.b16 %v7898, %v7894
      %v8487 = vpack.c.b16 %v7899, %v7895
      %v8488 = vpack.c.b16 %v7900, %v7896
      %v8489 = vpack.c.b16 %v7905, %v7901
      %v8490 = vpack.c.b16 %v7906, %v7902
      %v8491 = vpack.c.b16 %v7907, %v7903
      %v8492 = vpack.c.b16 %v7908, %v7904
      %v8493 = vpack.c.b16 %v7913, %v7909
      %v8494 = vpack.c.b16 %v7914, %v7910
      %v8495 = vpack.c.b16 %v7915, %v7911
      %v8496 = vpack.c.b16 %v7916, %v7912
      %v8497 = vpack.c.b16 %v7921, %v7917
      %v8498 = vpack.c.b16 %v7922, %v7918
      %v8499 = vpack.c.b16 %v7923, %v7919
      %v8500 = vpack.c.b16 %v7924, %v7920
      %v8501 = vpack.c.b16 %v7929, %v7925
      %v8502 = vpack.c.b16 %v7930, %v7926
      %v8503 = vpack.c.b16 %v7931, %v7927
      %v8504 = vpack.c.b16 %v7932, %v7928
      %v8505 = vpack.c.b16 %v7937, %v7933
      %v8506 = vpack.c.b16 %v7938, %v7934
      %v8507 = vpack.c.b16 %v7939, %v7935
      %v8508 = vpack.c.b16 %v7940, %v7936
      %v8509 = vpack.c.b16 %v7945, %v7941
      %v8510 = vpack.c.b16 %v7946, %v7942
      %v8511 = vpack.c.b16 %v7947, %v7943
      %v8512 = vpack.c.b16 %v7948, %v7944
      %v8513 = vpack.c.b16 %v7953, %v7949
      %v8514 = vpack.c.b16 %v7954, %v7950
      %v8515 = vpack.c.b16 %v7955, %v7951
      %v8516 = vpack.c.b16 %v7956, %v7952
      %v8517 = vpack.c.b16 %v7961, %v7957
      %v8518 = vpack.c.b16 %v7962, %v7958
      %v8519 = vpack.c.b16 %v7963, %v7959
      %v8520 = vpack.c.b16 %v7964, %v7960
      %v8521 = vpack.c.b16 %v7969, %v7965
      %v8522 = vpack.c.b16 %v7970, %v7966
      %v8523 = vpack.c.b16 %v7971, %v7967
      %v8524 = vpack.c.b16 %v7972, %v7968
      %v8525 = vpack.c.b16 %v7977, %v7973
      %v8526 = vpack.c.b16 %v7978, %v7974
      %v8527 = vpack.c.b16 %v7979, %v7975
      %v8528 = vpack.c.b16 %v7980, %v7976
      %v8529 = vpack.c.b16 %v7985, %v7981
      %v8530 = vpack.c.b16 %v7986, %v7982
      %v8531 = vpack.c.b16 %v7987, %v7983
      %v8532 = vpack.c.b16 %v7988, %v7984
      %v8533 = vpack.c.b16 %v7993, %v7989
      %v8534 = vpack.c.b16 %v7994, %v7990
      %v8535 = vpack.c.b16 %v7995, %v7991
      %v8536 = vpack.c.b16 %v7996, %v7992
      %v8537 = vpack.c.b16 %v8001, %v7997
      %v8538 = vpack.c.b16 %v8002, %v7998
      %v8539 = vpack.c.b16 %v8003, %v7999
      %v8540 = vpack.c.b16 %v8004, %v8000
      %v8541 = vpack.c.b16 %v8009, %v8005
      %v8542 = vpack.c.b16 %v8010, %v8006
      %v8543 = vpack.c.b16 %v8011, %v8007
      %v8544 = vpack.c.b16 %v8012, %v8008
      %v8545 = vpack.c.b16 %v8017, %v8013
      %v8546 = vpack.c.b16 %v8018, %v8014
      %v8547 = vpack.c.b16 %v8019, %v8015
      %v8548 = vpack.c.b16 %v8020, %v8016
      %v8549 = vpack.c.b16 %v8025, %v8021
      %v8550 = vpack.c.b16 %v8026, %v8022
      %v8551 = vpack.c.b16 %v8027, %v8023
      %v8552 = vpack.c.b16 %v8028, %v8024
      %v8553 = vpack.c.b16 %v8033, %v8029
      %v8554 = vpack.c.b16 %v8034, %v8030
      %v8555 = vpack.c.b16 %v8035, %v8031
      %v8556 = vpack.c.b16 %v8036, %v8032
      %v8557 = vpack.c.b16 %v8041, %v8037
      %v8558 = vpack.c.b16 %v8042, %v8038
      %v8559 = vpack.c.b16 %v8043, %v8039
      %v8560 = vpack.c.b16 %v8044, %v8040
      %v8561 = vpack.c.b16 %v8049, %v8045
      %v8562 = vpack.c.b16 %v8050, %v8046
      %v8563 = vpack.c.b16 %v8051, %v8047
      %v8564 = vpack.c.b16 %v8052, %v8048
      %9077 = vmatprep.subr.bf16.mxu0 %v8082
      %9078 = vmatpush1.bf16.msra.mxu0 %v8081
      %9079 = vmatprep.subr.bf16.mxu0 %v8078
      %9080 = vmatpush1.bf16.msra.mxu0 %v8077
      %9081 = vmatprep.subr.bf16.mxu0 %v8074
      %9082 = vmatpush1.bf16.msra.mxu0 %v8073
      %9083 = vmatprep.subr.bf16.mxu0 %v8070
      %9084 = vmatpush1.bf16.msra.mxu0 %v8069
      %9085 = vmatprep.subr.bf16.mxu0 %v8066
      %9086 = vmatpush1.bf16.msra.mxu0 %v8065
      %9087 = vmatprep.subr.bf16.mxu0 %v8062
      %9088 = vmatpush1.bf16.msra.mxu0 %v8061
      %9089 = vmatprep.subr.bf16.mxu0 %v8058
      %9090 = vmatpush1.bf16.msra.mxu0 %v8057
      %9091 = vmatprep.subr.bf16.mxu0 %v8054
      %9092 = vmatpush1.bf16.msra.mxu0 %v8053
      %9093 = vmatprep.subr.bf16.mxu0 %v8114
      %9094 = vmatpush2.bf16.msra.mxu0 %v8113
      %9095 = vmatprep.subr.bf16.mxu0 %v8110
      %9096 = vmatpush2.bf16.msra.mxu0 %v8109
      %9097 = vmatprep.subr.bf16.mxu0 %v8106
      %9098 = vmatpush2.bf16.msra.mxu0 %v8105
      %9099 = vmatprep.subr.bf16.mxu0 %v8102
      %9100 = vmatpush2.bf16.msra.mxu0 %v8101
      %9101 = vmatprep.subr.bf16.mxu0 %v8098
      %9102 = vmatpush2.bf16.msra.mxu0 %v8097
      %9103 = vmatprep.subr.bf16.mxu0 %v8094
      %9104 = vmatpush2.bf16.msra.mxu0 %v8093
      %9105 = vmatprep.subr.bf16.mxu0 %v8090
      %9106 = vmatpush2.bf16.msra.mxu0 %v8089
      %9107 = vmatprep.subr.bf16.mxu0 %v8086
      %9108 = vmatpush2.bf16.msra.mxu0 %v8085
      %9109 = vmatprep.mubr.bf16.mxu0 %v5968
      %9110 = vmatmul.mubr.bf16.gmra.mxu0 %v5967
      %v9111 = vpop.f32.mrf.mxu0
      %v9112 = vadd.f32 %v6500, %v9111
      %v9113 = vpop.f32.mrf.mxu0
      %v9114 = vadd.f32 %v6504, %v9113
      %v9115 = vpop.f32.mrf.mxu0
      %v9116 = vpop.f32.mrf.mxu0
      %9117 = vdwg.mxu0
      %9118 = vmatprep.subr.bf16.mxu0 %v8146
      %9119 = vmatpush1.bf16.msra.mxu0 %v8145
      %9120 = vmatprep.subr.bf16.mxu0 %v8142
      %9121 = vmatpush1.bf16.msra.mxu0 %v8141
      %9122 = vmatprep.subr.bf16.mxu0 %v8138
      %9123 = vmatpush1.bf16.msra.mxu0 %v8137
      %9124 = vmatprep.subr.bf16.mxu0 %v8134
      %9125 = vmatpush1.bf16.msra.mxu0 %v8133
      %9126 = vmatprep.subr.bf16.mxu0 %v8130
      %9127 = vmatpush1.bf16.msra.mxu0 %v8129
      %9128 = vmatprep.subr.bf16.mxu0 %v8126
      %9129 = vmatpush1.bf16.msra.mxu0 %v8125
      %9130 = vmatprep.subr.bf16.mxu0 %v8122
      %9131 = vmatpush1.bf16.msra.mxu0 %v8121
      %9132 = vmatprep.subr.bf16.mxu0 %v8118
      %9133 = vmatpush1.bf16.msra.mxu0 %v8117
      %9134 = vmatprep.subr.bf16.mxu0 %v8178
      %9135 = vmatpush2.bf16.msra.mxu0 %v8177
      %9136 = vmatprep.subr.bf16.mxu0 %v8174
      %9137 = vmatpush2.bf16.msra.mxu0 %v8173
      %9138 = vmatprep.subr.bf16.mxu0 %v8170
      %9139 = vmatpush2.bf16.msra.mxu0 %v8169
      %9140 = vmatprep.subr.bf16.mxu0 %v8166
      %9141 = vmatpush2.bf16.msra.mxu0 %v8165
      %9142 = vmatprep.subr.bf16.mxu0 %v8162
      %9143 = vmatpush2.bf16.msra.mxu0 %v8161
      %9144 = vmatprep.subr.bf16.mxu0 %v8158
      %9145 = vmatpush2.bf16.msra.mxu0 %v8157
      %9146 = vmatprep.subr.bf16.mxu0 %v8154
      %9147 = vmatpush2.bf16.msra.mxu0 %v8153
      %9148 = vmatprep.subr.bf16.mxu0 %v8150
      %9149 = vmatpush2.bf16.msra.mxu0 %v8149
      %9150 = vmatprep.mubr.bf16.mxu0 %v5970
      %9151 = vmatmul.mubr.bf16.gmra.mxu0 %v5969
      %v9152 = vpop.f32.mrf.mxu0
      %v9153 = vadd.f32 %v9112, %v9152
      %v9154 = vpop.f32.mrf.mxu0
      %v9155 = vadd.f32 %v9114, %v9154
      %v9156 = vpop.f32.mrf.mxu0
      %v9157 = vpop.f32.mrf.mxu0
      %9158 = vdwg.mxu0
      %9159 = vmatprep.subr.bf16.mxu0 %v8210
      %9160 = vmatpush1.bf16.msra.mxu0 %v8209
      %9161 = vmatprep.subr.bf16.mxu0 %v8206
      %9162 = vmatpush1.bf16.msra.mxu0 %v8205
      %9163 = vmatprep.subr.bf16.mxu0 %v8202
      %9164 = vmatpush1.bf16.msra.mxu0 %v8201
      %9165 = vmatprep.subr.bf16.mxu0 %v8198
      %9166 = vmatpush1.bf16.msra.mxu0 %v8197
      %9167 = vmatprep.subr.bf16.mxu0 %v8194
      %9168 = vmatpush1.bf16.msra.mxu0 %v8193
      %9169 = vmatprep.subr.bf16.mxu0 %v8190
      %9170 = vmatpush1.bf16.msra.mxu0 %v8189
      %9171 = vmatprep.subr.bf16.mxu0 %v8186
      %9172 = vmatpush1.bf16.msra.mxu0 %v8185
      %9173 = vmatprep.subr.bf16.mxu0 %v8182
      %9174 = vmatpush1.bf16.msra.mxu0 %v8181
      %9175 = vmatprep.subr.bf16.mxu0 %v8242
      %9176 = vmatpush2.bf16.msra.mxu0 %v8241
      %9177 = vmatprep.subr.bf16.mxu0 %v8238
      %9178 = vmatpush2.bf16.msra.mxu0 %v8237
      %9179 = vmatprep.subr.bf16.mxu0 %v8234
      %9180 = vmatpush2.bf16.msra.mxu0 %v8233
      %9181 = vmatprep.subr.bf16.mxu0 %v8230
      %9182 = vmatpush2.bf16.msra.mxu0 %v8229
      %9183 = vmatprep.subr.bf16.mxu0 %v8226
      %9184 = vmatpush2.bf16.msra.mxu0 %v8225
      %9185 = vmatprep.subr.bf16.mxu0 %v8222
      %9186 = vmatpush2.bf16.msra.mxu0 %v8221
      %9187 = vmatprep.subr.bf16.mxu0 %v8218
      %9188 = vmatpush2.bf16.msra.mxu0 %v8217
      %9189 = vmatprep.subr.bf16.mxu0 %v8214
      %9190 = vmatpush2.bf16.msra.mxu0 %v8213
      %9191 = vmatprep.mubr.bf16.mxu0 %v5972
      %9192 = vmatmul.mubr.bf16.gmra.mxu0 %v5971
      %v9193 = vpop.f32.mrf.mxu0
      %v9194 = vadd.f32 %v9153, %v9193
      %v9195 = vpop.f32.mrf.mxu0
      %v9196 = vadd.f32 %v9155, %v9195
      %v9197 = vpop.f32.mrf.mxu0
      %v9198 = vpop.f32.mrf.mxu0
      %9199 = vdwg.mxu0
      %9200 = vmatprep.subr.bf16.mxu0 %v8274
      %9201 = vmatpush1.bf16.msra.mxu0 %v8273
      %9202 = vmatprep.subr.bf16.mxu0 %v8270
      %9203 = vmatpush1.bf16.msra.mxu0 %v8269
      %9204 = vmatprep.subr.bf16.mxu0 %v8266
      %9205 = vmatpush1.bf16.msra.mxu0 %v8265
      %9206 = vmatprep.subr.bf16.mxu0 %v8262
      %9207 = vmatpush1.bf16.msra.mxu0 %v8261
      %9208 = vmatprep.subr.bf16.mxu0 %v8258
      %9209 = vmatpush1.bf16.msra.mxu0 %v8257
      %9210 = vmatprep.subr.bf16.mxu0 %v8254
      %9211 = vmatpush1.bf16.msra.mxu0 %v8253
      %9212 = vmatprep.subr.bf16.mxu0 %v8250
      %9213 = vmatpush1.bf16.msra.mxu0 %v8249
      %9214 = vmatprep.subr.bf16.mxu0 %v8246
      %9215 = vmatpush1.bf16.msra.mxu0 %v8245
      %9216 = vmatprep.subr.bf16.mxu0 %v8306
      %9217 = vmatpush2.bf16.msra.mxu0 %v8305
      %9218 = vmatprep.subr.bf16.mxu0 %v8302
      %9219 = vmatpush2.bf16.msra.mxu0 %v8301
      %9220 = vmatprep.subr.bf16.mxu0 %v8298
      %9221 = vmatpush2.bf16.msra.mxu0 %v8297
      %9222 = vmatprep.subr.bf16.mxu0 %v8294
      %9223 = vmatpush2.bf16.msra.mxu0 %v8293
      %9224 = vmatprep.subr.bf16.mxu0 %v8290
      %9225 = vmatpush2.bf16.msra.mxu0 %v8289
      %9226 = vmatprep.subr.bf16.mxu0 %v8286
      %9227 = vmatpush2.bf16.msra.mxu0 %v8285
      %9228 = vmatprep.subr.bf16.mxu0 %v8282
      %9229 = vmatpush2.bf16.msra.mxu0 %v8281
      %9230 = vmatprep.subr.bf16.mxu0 %v8278
      %9231 = vmatpush2.bf16.msra.mxu0 %v8277
      %9232 = vmatprep.mubr.bf16.mxu0 %v5974
      %9233 = vmatmul.mubr.bf16.gmra.mxu0 %v5973
      %v9234 = vpop.f32.mrf.mxu0
      %v9235 = vadd.f32 %v9194, %v9234
      %v9236 = vpop.f32.mrf.mxu0
      %v9237 = vadd.f32 %v9196, %v9236
      %v9238 = vpop.f32.mrf.mxu0
      %v9239 = vpop.f32.mrf.mxu0
      %9240 = vdwg.mxu0
      %9241 = vmatprep.subr.bf16.mxu0 %v8338
      %9242 = vmatpush1.bf16.msra.mxu0 %v8337
      %9243 = vmatprep.subr.bf16.mxu0 %v8334
      %9244 = vmatpush1.bf16.msra.mxu0 %v8333
      %9245 = vmatprep.subr.bf16.mxu0 %v8330
      %9246 = vmatpush1.bf16.msra.mxu0 %v8329
      %9247 = vmatprep.subr.bf16.mxu0 %v8326
      %9248 = vmatpush1.bf16.msra.mxu0 %v8325
      %9249 = vmatprep.subr.bf16.mxu0 %v8322
      %9250 = vmatpush1.bf16.msra.mxu0 %v8321
      %9251 = vmatprep.subr.bf16.mxu0 %v8318
      %9252 = vmatpush1.bf16.msra.mxu0 %v8317
      %9253 = vmatprep.subr.bf16.mxu0 %v8314
      %9254 = vmatpush1.bf16.msra.mxu0 %v8313
      %9255 = vmatprep.subr.bf16.mxu0 %v8310
      %9256 = vmatpush1.bf16.msra.mxu0 %v8309
      %9257 = vmatprep.subr.bf16.mxu0 %v8370
      %9258 = vmatpush2.bf16.msra.mxu0 %v8369
      %9259 = vmatprep.subr.bf16.mxu0 %v8366
      %9260 = vmatpush2.bf16.msra.mxu0 %v8365
      %9261 = vmatprep.subr.bf16.mxu0 %v8362
      %9262 = vmatpush2.bf16.msra.mxu0 %v8361
      %9263 = vmatprep.subr.bf16.mxu0 %v8358
      %9264 = vmatpush2.bf16.msra.mxu0 %v8357
      %9265 = vmatprep.subr.bf16.mxu0 %v8354
      %9266 = vmatpush2.bf16.msra.mxu0 %v8353
      %9267 = vmatprep.subr.bf16.mxu0 %v8350
      %9268 = vmatpush2.bf16.msra.mxu0 %v8349
      %9269 = vmatprep.subr.bf16.mxu0 %v8346
      %9270 = vmatpush2.bf16.msra.mxu0 %v8345
      %9271 = vmatprep.subr.bf16.mxu0 %v8342
      %9272 = vmatpush2.bf16.msra.mxu0 %v8341
      %9273 = vmatprep.mubr.bf16.mxu0 %v5976
      %9274 = vmatmul.mubr.bf16.gmra.mxu0 %v5975
      %v9275 = vpop.f32.mrf.mxu0
      %v9276 = vadd.f32 %v9235, %v9275
      %v9277 = vpop.f32.mrf.mxu0
      %v9278 = vadd.f32 %v9237, %v9277
      %v9279 = vpop.f32.mrf.mxu0
      %v9280 = vpop.f32.mrf.mxu0
      %9281 = vdwg.mxu0
      %9282 = vmatprep.subr.bf16.mxu0 %v8402
      %9283 = vmatpush1.bf16.msra.mxu0 %v8401
      %9284 = vmatprep.subr.bf16.mxu0 %v8398
      %9285 = vmatpush1.bf16.msra.mxu0 %v8397
      %9286 = vmatprep.subr.bf16.mxu0 %v8394
      %9287 = vmatpush1.bf16.msra.mxu0 %v8393
      %9288 = vmatprep.subr.bf16.mxu0 %v8390
      %9289 = vmatpush1.bf16.msra.mxu0 %v8389
      %9290 = vmatprep.subr.bf16.mxu0 %v8386
      %9291 = vmatpush1.bf16.msra.mxu0 %v8385
      %9292 = vmatprep.subr.bf16.mxu0 %v8382
      %9293 = vmatpush1.bf16.msra.mxu0 %v8381
      %9294 = vmatprep.subr.bf16.mxu0 %v8378
      %9295 = vmatpush1.bf16.msra.mxu0 %v8377
      %9296 = vmatprep.subr.bf16.mxu0 %v8374
      %9297 = vmatpush1.bf16.msra.mxu0 %v8373
      %9298 = vmatprep.subr.bf16.mxu0 %v8434
      %9299 = vmatpush2.bf16.msra.mxu0 %v8433
      %9300 = vmatprep.subr.bf16.mxu0 %v8430
      %9301 = vmatpush2.bf16.msra.mxu0 %v8429
      %9302 = vmatprep.subr.bf16.mxu0 %v8426
      %9303 = vmatpush2.bf16.msra.mxu0 %v8425
      %9304 = vmatprep.subr.bf16.mxu0 %v8422
      %9305 = vmatpush2.bf16.msra.mxu0 %v8421
      %9306 = vmatprep.subr.bf16.mxu0 %v8418
      %9307 = vmatpush2.bf16.msra.mxu0 %v8417
      %9308 = vmatprep.subr.bf16.mxu0 %v8414
      %9309 = vmatpush2.bf16.msra.mxu0 %v8413
      %9310 = vmatprep.subr.bf16.mxu0 %v8410
      %9311 = vmatpush2.bf16.msra.mxu0 %v8409
      %9312 = vmatprep.subr.bf16.mxu0 %v8406
      %9313 = vmatpush2.bf16.msra.mxu0 %v8405
      %9314 = vmatprep.mubr.bf16.mxu0 %v5978
      %9315 = vmatmul.mubr.bf16.gmra.mxu0 %v5977
      %v9316 = vpop.f32.mrf.mxu0
      %v9317 = vadd.f32 %v9276, %v9316
      %v9318 = vpop.f32.mrf.mxu0
      %v9319 = vadd.f32 %v9278, %v9318
      %v9320 = vpop.f32.mrf.mxu0
      %v9321 = vpop.f32.mrf.mxu0
      %9322 = vdwg.mxu0
      %9323 = vmatprep.subr.bf16.mxu0 %v8466
      %9324 = vmatpush1.bf16.msra.mxu0 %v8465
      %9325 = vmatprep.subr.bf16.mxu0 %v8462
      %9326 = vmatpush1.bf16.msra.mxu0 %v8461
      %9327 = vmatprep.subr.bf16.mxu0 %v8458
      %9328 = vmatpush1.bf16.msra.mxu0 %v8457
      %9329 = vmatprep.subr.bf16.mxu0 %v8454
      %9330 = vmatpush1.bf16.msra.mxu0 %v8453
      %9331 = vmatprep.subr.bf16.mxu0 %v8450
      %9332 = vmatpush1.bf16.msra.mxu0 %v8449
      %9333 = vmatprep.subr.bf16.mxu0 %v8446
      %9334 = vmatpush1.bf16.msra.mxu0 %v8445
      %9335 = vmatprep.subr.bf16.mxu0 %v8442
      %9336 = vmatpush1.bf16.msra.mxu0 %v8441
      %9337 = vmatprep.subr.bf16.mxu0 %v8438
      %9338 = vmatpush1.bf16.msra.mxu0 %v8437
      %9339 = vmatprep.subr.bf16.mxu0 %v8498
      %9340 = vmatpush2.bf16.msra.mxu0 %v8497
      %9341 = vmatprep.subr.bf16.mxu0 %v8494
      %9342 = vmatpush2.bf16.msra.mxu0 %v8493
      %9343 = vmatprep.subr.bf16.mxu0 %v8490
      %9344 = vmatpush2.bf16.msra.mxu0 %v8489
      %9345 = vmatprep.subr.bf16.mxu0 %v8486
      %9346 = vmatpush2.bf16.msra.mxu0 %v8485
      %9347 = vmatprep.subr.bf16.mxu0 %v8482
      %9348 = vmatpush2.bf16.msra.mxu0 %v8481
      %9349 = vmatprep.subr.bf16.mxu0 %v8478
      %9350 = vmatpush2.bf16.msra.mxu0 %v8477
      %9351 = vmatprep.subr.bf16.mxu0 %v8474
      %9352 = vmatpush2.bf16.msra.mxu0 %v8473
      %9353 = vmatprep.subr.bf16.mxu0 %v8470
      %9354 = vmatpush2.bf16.msra.mxu0 %v8469
      %9355 = vmatprep.mubr.bf16.mxu0 %v5980
      %9356 = vmatmul.mubr.bf16.gmra.mxu0 %v5979
      %v9357 = vpop.f32.mrf.mxu0
      %v9358 = vadd.f32 %v9317, %v9357
      %v9359 = vpop.f32.mrf.mxu0
      %v9360 = vadd.f32 %v9319, %v9359
      %v9361 = vpop.f32.mrf.mxu0
      %v9362 = vpop.f32.mrf.mxu0
      %9363 = vdwg.mxu0
      %9364 = vmatprep.subr.bf16.mxu0 %v8530
      %9365 = vmatpush1.bf16.msra.mxu0 %v8529
      %9366 = vmatprep.subr.bf16.mxu0 %v8526
      %9367 = vmatpush1.bf16.msra.mxu0 %v8525
      %9368 = vmatprep.subr.bf16.mxu0 %v8522
      %9369 = vmatpush1.bf16.msra.mxu0 %v8521
      %9370 = vmatprep.subr.bf16.mxu0 %v8518
      %9371 = vmatpush1.bf16.msra.mxu0 %v8517
      %9372 = vmatprep.subr.bf16.mxu0 %v8514
      %9373 = vmatpush1.bf16.msra.mxu0 %v8513
      %9374 = vmatprep.subr.bf16.mxu0 %v8510
      %9375 = vmatpush1.bf16.msra.mxu0 %v8509
      %9376 = vmatprep.subr.bf16.mxu0 %v8506
      %9377 = vmatpush1.bf16.msra.mxu0 %v8505
      %9378 = vmatprep.subr.bf16.mxu0 %v8502
      %9379 = vmatpush1.bf16.msra.mxu0 %v8501
      %9380 = vmatprep.subr.bf16.mxu0 %v8562
      %9381 = vmatpush2.bf16.msra.mxu0 %v8561
      %9382 = vmatprep.subr.bf16.mxu0 %v8558
      %9383 = vmatpush2.bf16.msra.mxu0 %v8557
      %9384 = vmatprep.subr.bf16.mxu0 %v8554
      %9385 = vmatpush2.bf16.msra.mxu0 %v8553
      %9386 = vmatprep.subr.bf16.mxu0 %v8550
      %9387 = vmatpush2.bf16.msra.mxu0 %v8549
      %9388 = vmatprep.subr.bf16.mxu0 %v8546
      %9389 = vmatpush2.bf16.msra.mxu0 %v8545
      %9390 = vmatprep.subr.bf16.mxu0 %v8542
      %9391 = vmatpush2.bf16.msra.mxu0 %v8541
      %9392 = vmatprep.subr.bf16.mxu0 %v8538
      %9393 = vmatpush2.bf16.msra.mxu0 %v8537
      %9394 = vmatprep.subr.bf16.mxu0 %v8534
      %9395 = vmatpush2.bf16.msra.mxu0 %v8533
      %9396 = vmatprep.mubr.bf16.mxu0 %v5982
      %9397 = vmatmul.mubr.bf16.gmra.mxu0 %v5981
      %v9398 = vpop.f32.mrf.mxu0
      %v9399 = vadd.f32 %v9358, %v9398
      %v9400 = vpop.f32.mrf.mxu0
      %v9401 = vadd.f32 %v9360, %v9400
      %v9402 = vpop.f32.mrf.mxu0
      %v9403 = vpop.f32.mrf.mxu0
      %9404 = vdwg.mxu0
      %9405 = vmatprep.subr.bf16.mxu0 %v8084
      %9406 = vmatpush1.bf16.msra.mxu0 %v8083
      %9407 = vmatprep.subr.bf16.mxu0 %v8080
      %9408 = vmatpush1.bf16.msra.mxu0 %v8079
      %9409 = vmatprep.subr.bf16.mxu0 %v8076
      %9410 = vmatpush1.bf16.msra.mxu0 %v8075
      %9411 = vmatprep.subr.bf16.mxu0 %v8072
      %9412 = vmatpush1.bf16.msra.mxu0 %v8071
      %9413 = vmatprep.subr.bf16.mxu0 %v8068
      %9414 = vmatpush1.bf16.msra.mxu0 %v8067
      %9415 = vmatprep.subr.bf16.mxu0 %v8064
      %9416 = vmatpush1.bf16.msra.mxu0 %v8063
      %9417 = vmatprep.subr.bf16.mxu0 %v8060
      %9418 = vmatpush1.bf16.msra.mxu0 %v8059
      %9419 = vmatprep.subr.bf16.mxu0 %v8056
      %9420 = vmatpush1.bf16.msra.mxu0 %v8055
      %9421 = vmatprep.subr.bf16.mxu0 %v8116
      %9422 = vmatpush2.bf16.msra.mxu0 %v8115
      %9423 = vmatprep.subr.bf16.mxu0 %v8112
      %9424 = vmatpush2.bf16.msra.mxu0 %v8111
      %9425 = vmatprep.subr.bf16.mxu0 %v8108
      %9426 = vmatpush2.bf16.msra.mxu0 %v8107
      %9427 = vmatprep.subr.bf16.mxu0 %v8104
      %9428 = vmatpush2.bf16.msra.mxu0 %v8103
      %9429 = vmatprep.subr.bf16.mxu0 %v8100
      %9430 = vmatpush2.bf16.msra.mxu0 %v8099
      %9431 = vmatprep.subr.bf16.mxu0 %v8096
      %9432 = vmatpush2.bf16.msra.mxu0 %v8095
      %9433 = vmatprep.subr.bf16.mxu0 %v8092
      %9434 = vmatpush2.bf16.msra.mxu0 %v8091
      %9435 = vmatprep.subr.bf16.mxu0 %v8088
      %9436 = vmatpush2.bf16.msra.mxu0 %v8087
      %9437 = vmatprep.mubr.bf16.mxu0 %v5968
      %9438 = vmatmul.mubr.bf16.gmra.mxu0 %v5967
      %v9439 = vpop.f32.mrf.mxu0
      %v9440 = vadd.f32 %v6508, %v9439
      %v9441 = vpop.f32.mrf.mxu0
      %v9442 = vadd.f32 %v6512, %v9441
      %v9443 = vpop.f32.mrf.mxu0
      %v9444 = vpop.f32.mrf.mxu0
      %9445 = vdwg.mxu0
      %9446 = vmatprep.subr.bf16.mxu0 %v8148
      %9447 = vmatpush1.bf16.msra.mxu0 %v8147
      %9448 = vmatprep.subr.bf16.mxu0 %v8144
      %9449 = vmatpush1.bf16.msra.mxu0 %v8143
      %9450 = vmatprep.subr.bf16.mxu0 %v8140
      %9451 = vmatpush1.bf16.msra.mxu0 %v8139
      %9452 = vmatprep.subr.bf16.mxu0 %v8136
      %9453 = vmatpush1.bf16.msra.mxu0 %v8135
      %9454 = vmatprep.subr.bf16.mxu0 %v8132
      %9455 = vmatpush1.bf16.msra.mxu0 %v8131
      %9456 = vmatprep.subr.bf16.mxu0 %v8128
      %9457 = vmatpush1.bf16.msra.mxu0 %v8127
      %9458 = vmatprep.subr.bf16.mxu0 %v8124
      %9459 = vmatpush1.bf16.msra.mxu0 %v8123
      %9460 = vmatprep.subr.bf16.mxu0 %v8120
      %9461 = vmatpush1.bf16.msra.mxu0 %v8119
      %9462 = vmatprep.subr.bf16.mxu0 %v8180
      %9463 = vmatpush2.bf16.msra.mxu0 %v8179
      %9464 = vmatprep.subr.bf16.mxu0 %v8176
      %9465 = vmatpush2.bf16.msra.mxu0 %v8175
      %9466 = vmatprep.subr.bf16.mxu0 %v8172
      %9467 = vmatpush2.bf16.msra.mxu0 %v8171
      %9468 = vmatprep.subr.bf16.mxu0 %v8168
      %9469 = vmatpush2.bf16.msra.mxu0 %v8167
      %9470 = vmatprep.subr.bf16.mxu0 %v8164
      %9471 = vmatpush2.bf16.msra.mxu0 %v8163
      %9472 = vmatprep.subr.bf16.mxu0 %v8160
      %9473 = vmatpush2.bf16.msra.mxu0 %v8159
      %9474 = vmatprep.subr.bf16.mxu0 %v8156
      %9475 = vmatpush2.bf16.msra.mxu0 %v8155
      %9476 = vmatprep.subr.bf16.mxu0 %v8152
      %9477 = vmatpush2.bf16.msra.mxu0 %v8151
      %9478 = vmatprep.mubr.bf16.mxu0 %v5970
      %9479 = vmatmul.mubr.bf16.gmra.mxu0 %v5969
      %v9480 = vpop.f32.mrf.mxu0
      %v9481 = vadd.f32 %v9440, %v9480
      %v9482 = vpop.f32.mrf.mxu0
      %v9483 = vadd.f32 %v9442, %v9482
      %v9484 = vpop.f32.mrf.mxu0
      %v9485 = vpop.f32.mrf.mxu0
      %9486 = vdwg.mxu0
      %9487 = vmatprep.subr.bf16.mxu0 %v8212
      %9488 = vmatpush1.bf16.msra.mxu0 %v8211
      %9489 = vmatprep.subr.bf16.mxu0 %v8208
      %9490 = vmatpush1.bf16.msra.mxu0 %v8207
      %9491 = vmatprep.subr.bf16.mxu0 %v8204
      %9492 = vmatpush1.bf16.msra.mxu0 %v8203
      %9493 = vmatprep.subr.bf16.mxu0 %v8200
      %9494 = vmatpush1.bf16.msra.mxu0 %v8199
      %9495 = vmatprep.subr.bf16.mxu0 %v8196
      %9496 = vmatpush1.bf16.msra.mxu0 %v8195
      %9497 = vmatprep.subr.bf16.mxu0 %v8192
      %9498 = vmatpush1.bf16.msra.mxu0 %v8191
      %9499 = vmatprep.subr.bf16.mxu0 %v8188
      %9500 = vmatpush1.bf16.msra.mxu0 %v8187
      %9501 = vmatprep.subr.bf16.mxu0 %v8184
      %9502 = vmatpush1.bf16.msra.mxu0 %v8183
      %9503 = vmatprep.subr.bf16.mxu0 %v8244
      %9504 = vmatpush2.bf16.msra.mxu0 %v8243
      %9505 = vmatprep.subr.bf16.mxu0 %v8240
      %9506 = vmatpush2.bf16.msra.mxu0 %v8239
      %9507 = vmatprep.subr.bf16.mxu0 %v8236
      %9508 = vmatpush2.bf16.msra.mxu0 %v8235
      %9509 = vmatprep.subr.bf16.mxu0 %v8232
      %9510 = vmatpush2.bf16.msra.mxu0 %v8231
      %9511 = vmatprep.subr.bf16.mxu0 %v8228
      %9512 = vmatpush2.bf16.msra.mxu0 %v8227
      %9513 = vmatprep.subr.bf16.mxu0 %v8224
      %9514 = vmatpush2.bf16.msra.mxu0 %v8223
      %9515 = vmatprep.subr.bf16.mxu0 %v8220
      %9516 = vmatpush2.bf16.msra.mxu0 %v8219
      %9517 = vmatprep.subr.bf16.mxu0 %v8216
      %9518 = vmatpush2.bf16.msra.mxu0 %v8215
      %9519 = vmatprep.mubr.bf16.mxu0 %v5972
      %9520 = vmatmul.mubr.bf16.gmra.mxu0 %v5971
      %v9521 = vpop.f32.mrf.mxu0
      %v9522 = vadd.f32 %v9481, %v9521
      %v9523 = vpop.f32.mrf.mxu0
      %v9524 = vadd.f32 %v9483, %v9523
      %v9525 = vpop.f32.mrf.mxu0
      %v9526 = vpop.f32.mrf.mxu0
      %9527 = vdwg.mxu0
      %9528 = vmatprep.subr.bf16.mxu0 %v8276
      %9529 = vmatpush1.bf16.msra.mxu0 %v8275
      %9530 = vmatprep.subr.bf16.mxu0 %v8272
      %9531 = vmatpush1.bf16.msra.mxu0 %v8271
      %9532 = vmatprep.subr.bf16.mxu0 %v8268
      %9533 = vmatpush1.bf16.msra.mxu0 %v8267
      %9534 = vmatprep.subr.bf16.mxu0 %v8264
      %9535 = vmatpush1.bf16.msra.mxu0 %v8263
      %9536 = vmatprep.subr.bf16.mxu0 %v8260
      %9537 = vmatpush1.bf16.msra.mxu0 %v8259
      %9538 = vmatprep.subr.bf16.mxu0 %v8256
      %9539 = vmatpush1.bf16.msra.mxu0 %v8255
      %9540 = vmatprep.subr.bf16.mxu0 %v8252
      %9541 = vmatpush1.bf16.msra.mxu0 %v8251
      %9542 = vmatprep.subr.bf16.mxu0 %v8248
      %9543 = vmatpush1.bf16.msra.mxu0 %v8247
      %9544 = vmatprep.subr.bf16.mxu0 %v8308
      %9545 = vmatpush2.bf16.msra.mxu0 %v8307
      %9546 = vmatprep.subr.bf16.mxu0 %v8304
      %9547 = vmatpush2.bf16.msra.mxu0 %v8303
      %9548 = vmatprep.subr.bf16.mxu0 %v8300
      %9549 = vmatpush2.bf16.msra.mxu0 %v8299
      %9550 = vmatprep.subr.bf16.mxu0 %v8296
      %9551 = vmatpush2.bf16.msra.mxu0 %v8295
      %9552 = vmatprep.subr.bf16.mxu0 %v8292
      %9553 = vmatpush2.bf16.msra.mxu0 %v8291
      %9554 = vmatprep.subr.bf16.mxu0 %v8288
      %9555 = vmatpush2.bf16.msra.mxu0 %v8287
      %9556 = vmatprep.subr.bf16.mxu0 %v8284
      %9557 = vmatpush2.bf16.msra.mxu0 %v8283
      %9558 = vmatprep.subr.bf16.mxu0 %v8280
      %9559 = vmatpush2.bf16.msra.mxu0 %v8279
      %9560 = vmatprep.mubr.bf16.mxu0 %v5974
      %9561 = vmatmul.mubr.bf16.gmra.mxu0 %v5973
      %v9562 = vpop.f32.mrf.mxu0
      %v9563 = vadd.f32 %v9522, %v9562
      %v9564 = vpop.f32.mrf.mxu0
      %v9565 = vadd.f32 %v9524, %v9564
      %v9566 = vpop.f32.mrf.mxu0
      %v9567 = vpop.f32.mrf.mxu0
      %9568 = vdwg.mxu0
      %9569 = vmatprep.subr.bf16.mxu0 %v8340
      %9570 = vmatpush1.bf16.msra.mxu0 %v8339
      %9571 = vmatprep.subr.bf16.mxu0 %v8336
      %9572 = vmatpush1.bf16.msra.mxu0 %v8335
      %9573 = vmatprep.subr.bf16.mxu0 %v8332
      %9574 = vmatpush1.bf16.msra.mxu0 %v8331
      %9575 = vmatprep.subr.bf16.mxu0 %v8328
      %9576 = vmatpush1.bf16.msra.mxu0 %v8327
      %9577 = vmatprep.subr.bf16.mxu0 %v8324
      %9578 = vmatpush1.bf16.msra.mxu0 %v8323
      %9579 = vmatprep.subr.bf16.mxu0 %v8320
      %9580 = vmatpush1.bf16.msra.mxu0 %v8319
      %9581 = vmatprep.subr.bf16.mxu0 %v8316
      %9582 = vmatpush1.bf16.msra.mxu0 %v8315
      %9583 = vmatprep.subr.bf16.mxu0 %v8312
      %9584 = vmatpush1.bf16.msra.mxu0 %v8311
      %9585 = vmatprep.subr.bf16.mxu0 %v8372
      %9586 = vmatpush2.bf16.msra.mxu0 %v8371
      %9587 = vmatprep.subr.bf16.mxu0 %v8368
      %9588 = vmatpush2.bf16.msra.mxu0 %v8367
      %9589 = vmatprep.subr.bf16.mxu0 %v8364
      %9590 = vmatpush2.bf16.msra.mxu0 %v8363
      %9591 = vmatprep.subr.bf16.mxu0 %v8360
      %9592 = vmatpush2.bf16.msra.mxu0 %v8359
      %9593 = vmatprep.subr.bf16.mxu0 %v8356
      %9594 = vmatpush2.bf16.msra.mxu0 %v8355
      %9595 = vmatprep.subr.bf16.mxu0 %v8352
      %9596 = vmatpush2.bf16.msra.mxu0 %v8351
      %9597 = vmatprep.subr.bf16.mxu0 %v8348
      %9598 = vmatpush2.bf16.msra.mxu0 %v8347
      %9599 = vmatprep.subr.bf16.mxu0 %v8344
      %9600 = vmatpush2.bf16.msra.mxu0 %v8343
      %9601 = vmatprep.mubr.bf16.mxu0 %v5976
      %9602 = vmatmul.mubr.bf16.gmra.mxu0 %v5975
      %v9603 = vpop.f32.mrf.mxu0
      %v9604 = vadd.f32 %v9563, %v9603
      %v9605 = vpop.f32.mrf.mxu0
      %v9606 = vadd.f32 %v9565, %v9605
      %v9607 = vpop.f32.mrf.mxu0
      %v9608 = vpop.f32.mrf.mxu0
      %9609 = vdwg.mxu0
      %9610 = vmatprep.subr.bf16.mxu0 %v8404
      %9611 = vmatpush1.bf16.msra.mxu0 %v8403
      %9612 = vmatprep.subr.bf16.mxu0 %v8400
      %9613 = vmatpush1.bf16.msra.mxu0 %v8399
      %9614 = vmatprep.subr.bf16.mxu0 %v8396
      %9615 = vmatpush1.bf16.msra.mxu0 %v8395
      %9616 = vmatprep.subr.bf16.mxu0 %v8392
      %9617 = vmatpush1.bf16.msra.mxu0 %v8391
      %9618 = vmatprep.subr.bf16.mxu0 %v8388
      %9619 = vmatpush1.bf16.msra.mxu0 %v8387
      %9620 = vmatprep.subr.bf16.mxu0 %v8384
      %9621 = vmatpush1.bf16.msra.mxu0 %v8383
      %9622 = vmatprep.subr.bf16.mxu0 %v8380
      %9623 = vmatpush1.bf16.msra.mxu0 %v8379
      %9624 = vmatprep.subr.bf16.mxu0 %v8376
      %9625 = vmatpush1.bf16.msra.mxu0 %v8375
      %9626 = vmatprep.subr.bf16.mxu0 %v8436
      %9627 = vmatpush2.bf16.msra.mxu0 %v8435
      %9628 = vmatprep.subr.bf16.mxu0 %v8432
      %9629 = vmatpush2.bf16.msra.mxu0 %v8431
      %9630 = vmatprep.subr.bf16.mxu0 %v8428
      %9631 = vmatpush2.bf16.msra.mxu0 %v8427
      %9632 = vmatprep.subr.bf16.mxu0 %v8424
      %9633 = vmatpush2.bf16.msra.mxu0 %v8423
      %9634 = vmatprep.subr.bf16.mxu0 %v8420
      %9635 = vmatpush2.bf16.msra.mxu0 %v8419
      %9636 = vmatprep.subr.bf16.mxu0 %v8416
      %9637 = vmatpush2.bf16.msra.mxu0 %v8415
      %9638 = vmatprep.subr.bf16.mxu0 %v8412
      %9639 = vmatpush2.bf16.msra.mxu0 %v8411
      %9640 = vmatprep.subr.bf16.mxu0 %v8408
      %9641 = vmatpush2.bf16.msra.mxu0 %v8407
      %9642 = vmatprep.mubr.bf16.mxu0 %v5978
      %9643 = vmatmul.mubr.bf16.gmra.mxu0 %v5977
      %v9644 = vpop.f32.mrf.mxu0
      %v9645 = vadd.f32 %v9604, %v9644
      %v9646 = vpop.f32.mrf.mxu0
      %v9647 = vadd.f32 %v9606, %v9646
      %v9648 = vpop.f32.mrf.mxu0
      %v9649 = vpop.f32.mrf.mxu0
      %9650 = vdwg.mxu0
      %9651 = vmatprep.subr.bf16.mxu0 %v8468
      %9652 = vmatpush1.bf16.msra.mxu0 %v8467
      %9653 = vmatprep.subr.bf16.mxu0 %v8464
      %9654 = vmatpush1.bf16.msra.mxu0 %v8463
      %9655 = vmatprep.subr.bf16.mxu0 %v8460
      %9656 = vmatpush1.bf16.msra.mxu0 %v8459
      %9657 = vmatprep.subr.bf16.mxu0 %v8456
      %9658 = vmatpush1.bf16.msra.mxu0 %v8455
      %9659 = vmatprep.subr.bf16.mxu0 %v8452
      %9660 = vmatpush1.bf16.msra.mxu0 %v8451
      %9661 = vmatprep.subr.bf16.mxu0 %v8448
      %9662 = vmatpush1.bf16.msra.mxu0 %v8447
      %9663 = vmatprep.subr.bf16.mxu0 %v8444
      %9664 = vmatpush1.bf16.msra.mxu0 %v8443
      %9665 = vmatprep.subr.bf16.mxu0 %v8440
      %9666 = vmatpush1.bf16.msra.mxu0 %v8439
      %9667 = vmatprep.subr.bf16.mxu0 %v8500
      %9668 = vmatpush2.bf16.msra.mxu0 %v8499
      %9669 = vmatprep.subr.bf16.mxu0 %v8496
      %9670 = vmatpush2.bf16.msra.mxu0 %v8495
      %9671 = vmatprep.subr.bf16.mxu0 %v8492
      %9672 = vmatpush2.bf16.msra.mxu0 %v8491
      %9673 = vmatprep.subr.bf16.mxu0 %v8488
      %9674 = vmatpush2.bf16.msra.mxu0 %v8487
      %9675 = vmatprep.subr.bf16.mxu0 %v8484
      %9676 = vmatpush2.bf16.msra.mxu0 %v8483
      %9677 = vmatprep.subr.bf16.mxu0 %v8480
      %9678 = vmatpush2.bf16.msra.mxu0 %v8479
      %9679 = vmatprep.subr.bf16.mxu0 %v8476
      %9680 = vmatpush2.bf16.msra.mxu0 %v8475
      %9681 = vmatprep.subr.bf16.mxu0 %v8472
      %9682 = vmatpush2.bf16.msra.mxu0 %v8471
      %9683 = vmatprep.mubr.bf16.mxu0 %v5980
      %9684 = vmatmul.mubr.bf16.gmra.mxu0 %v5979
      %v9685 = vpop.f32.mrf.mxu0
      %v9686 = vadd.f32 %v9645, %v9685
      %v9687 = vpop.f32.mrf.mxu0
      %v9688 = vadd.f32 %v9647, %v9687
      %v9689 = vpop.f32.mrf.mxu0
      %v9690 = vpop.f32.mrf.mxu0
      %9691 = vdwg.mxu0
      %9692 = vmatprep.subr.bf16.mxu0 %v8532
      %9693 = vmatpush1.bf16.msra.mxu0 %v8531
      %9694 = vmatprep.subr.bf16.mxu0 %v8528
      %9695 = vmatpush1.bf16.msra.mxu0 %v8527
      %9696 = vmatprep.subr.bf16.mxu0 %v8524
      %9697 = vmatpush1.bf16.msra.mxu0 %v8523
      %9698 = vmatprep.subr.bf16.mxu0 %v8520
      %9699 = vmatpush1.bf16.msra.mxu0 %v8519
      %9700 = vmatprep.subr.bf16.mxu0 %v8516
      %9701 = vmatpush1.bf16.msra.mxu0 %v8515
      %9702 = vmatprep.subr.bf16.mxu0 %v8512
      %9703 = vmatpush1.bf16.msra.mxu0 %v8511
      %9704 = vmatprep.subr.bf16.mxu0 %v8508
      %9705 = vmatpush1.bf16.msra.mxu0 %v8507
      %9706 = vmatprep.subr.bf16.mxu0 %v8504
      %9707 = vmatpush1.bf16.msra.mxu0 %v8503
      %9708 = vmatprep.subr.bf16.mxu0 %v8564
      %9709 = vmatpush2.bf16.msra.mxu0 %v8563
      %9710 = vmatprep.subr.bf16.mxu0 %v8560
      %9711 = vmatpush2.bf16.msra.mxu0 %v8559
      %9712 = vmatprep.subr.bf16.mxu0 %v8556
      %9713 = vmatpush2.bf16.msra.mxu0 %v8555
      %9714 = vmatprep.subr.bf16.mxu0 %v8552
      %9715 = vmatpush2.bf16.msra.mxu0 %v8551
      %9716 = vmatprep.subr.bf16.mxu0 %v8548
      %9717 = vmatpush2.bf16.msra.mxu0 %v8547
      %9718 = vmatprep.subr.bf16.mxu0 %v8544
      %9719 = vmatpush2.bf16.msra.mxu0 %v8543
      %9720 = vmatprep.subr.bf16.mxu0 %v8540
      %9721 = vmatpush2.bf16.msra.mxu0 %v8539
      %9722 = vmatprep.subr.bf16.mxu0 %v8536
      %9723 = vmatpush2.bf16.msra.mxu0 %v8535
      %9724 = vmatprep.mubr.bf16.mxu0 %v5982
      %9725 = vmatmul.mubr.bf16.gmra.mxu0 %v5981
      %v9726 = vpop.f32.mrf.mxu0
      %v9727 = vadd.f32 %v9686, %v9726
      %v9728 = vpop.f32.mrf.mxu0
      %v9729 = vadd.f32 %v9688, %v9728
      %v9730 = vpop.f32.mrf.mxu0
      %v9731 = vpop.f32.mrf.mxu0
      %9732 = vdwg.mxu0
      %v9733 = vmax.f32 %v9399, 0.0
      %v9734 = vmax.f32 %v9401, 0.0
      %v9735 = vmax.f32 %v9727, 0.0
      %v9736 = vmax.f32 %v9729, 0.0
      %v9737 = vpack.c.bf16 %v9733, %v9733
      %v9738 = vpack.c.bf16 %v9734, %v9734
      %v9739 = vpack.c.bf16 %v9735, %v9735
      %v9740 = vpack.c.bf16 %v9736, %v9736
      %v9741 = vld [vmem:[#allocation13] sm:$0xff]
      %v9742 = vld [vmem:[#allocation13 + $0x8] sm:$0xff]
      %v9743 = vld [vmem:[#allocation13 + $0x10] sm:$0xff]
      %v9744 = vld [vmem:[#allocation13 + $0x18] sm:$0xff]
      %v9745 = vld [vmem:[#allocation13 + $0x20] sm:$0xff]
      %v9746 = vld [vmem:[#allocation13 + $0x28] sm:$0xff]
      %v9747 = vld [vmem:[#allocation13 + $0x30] sm:$0xff]
      %v9748 = vld [vmem:[#allocation13 + $0x38] sm:$0xff]
      %v9749 = vld [vmem:[#allocation13 + $0x40] sm:$0xff]
      %v9750 = vld [vmem:[#allocation13 + $0x48] sm:$0xff]
      %v9751 = vld [vmem:[#allocation13 + $0x50] sm:$0xff]
      %v9752 = vld [vmem:[#allocation13 + $0x58] sm:$0xff]
      %v9753 = vld [vmem:[#allocation13 + $0x60] sm:$0xff]
      %v9754 = vld [vmem:[#allocation13 + $0x68] sm:$0xff]
      %v9755 = vld [vmem:[#allocation13 + $0x70] sm:$0xff]
      %v9756 = vld [vmem:[#allocation13 + $0x78] sm:$0xff]
      %v9757 = vld [vmem:[#allocation13 + $0x80] sm:$0xff]
      %v9758 = vld [vmem:[#allocation13 + $0x88] sm:$0xff]
      %v9759 = vld [vmem:[#allocation13 + $0x90] sm:$0xff]
      %v9760 = vld [vmem:[#allocation13 + $0x98] sm:$0xff]
      %v9761 = vld [vmem:[#allocation13 + $0xa0] sm:$0xff]
      %v9762 = vld [vmem:[#allocation13 + $0xa8] sm:$0xff]
      %v9763 = vld [vmem:[#allocation13 + $0xb0] sm:$0xff]
      %v9764 = vld [vmem:[#allocation13 + $0xb8] sm:$0xff]
      %v9765 = vld [vmem:[#allocation13 + $0xc0] sm:$0xff]
      %v9766 = vld [vmem:[#allocation13 + $0xc8] sm:$0xff]
      %v9767 = vld [vmem:[#allocation13 + $0xd0] sm:$0xff]
      %v9768 = vld [vmem:[#allocation13 + $0xd8] sm:$0xff]
      %v9769 = vld [vmem:[#allocation13 + $0xe0] sm:$0xff]
      %v9770 = vld [vmem:[#allocation13 + $0xe8] sm:$0xff]
      %v9771 = vld [vmem:[#allocation13 + $0xf0] sm:$0xff]
      %v9772 = vld [vmem:[#allocation13 + $0xf8] sm:$0xff]
      %v9773 = vld [vmem:[#allocation13 + $0x100] sm:$0xff]
      %v9774 = vld [vmem:[#allocation13 + $0x108] sm:$0xff]
      %v9775 = vld [vmem:[#allocation13 + $0x110] sm:$0xff]
      %v9776 = vld [vmem:[#allocation13 + $0x118] sm:$0xff]
      %v9777 = vld [vmem:[#allocation13 + $0x120] sm:$0xff]
      %v9778 = vld [vmem:[#allocation13 + $0x128] sm:$0xff]
      %v9779 = vld [vmem:[#allocation13 + $0x130] sm:$0xff]
      %v9780 = vld [vmem:[#allocation13 + $0x138] sm:$0xff]
      %v9781 = vld [vmem:[#allocation13 + $0x140] sm:$0xff]
      %v9782 = vld [vmem:[#allocation13 + $0x148] sm:$0xff]
      %v9783 = vld [vmem:[#allocation13 + $0x150] sm:$0xff]
      %v9784 = vld [vmem:[#allocation13 + $0x158] sm:$0xff]
      %v9785 = vld [vmem:[#allocation13 + $0x160] sm:$0xff]
      %v9786 = vld [vmem:[#allocation13 + $0x168] sm:$0xff]
      %v9787 = vld [vmem:[#allocation13 + $0x170] sm:$0xff]
      %v9788 = vld [vmem:[#allocation13 + $0x178] sm:$0xff]
      %v9789 = vld [vmem:[#allocation13 + $0x180] sm:$0xff]
      %v9790 = vld [vmem:[#allocation13 + $0x188] sm:$0xff]
      %v9791 = vld [vmem:[#allocation13 + $0x190] sm:$0xff]
      %v9792 = vld [vmem:[#allocation13 + $0x198] sm:$0xff]
      %v9793 = vld [vmem:[#allocation13 + $0x1a0] sm:$0xff]
      %v9794 = vld [vmem:[#allocation13 + $0x1a8] sm:$0xff]
      %v9795 = vld [vmem:[#allocation13 + $0x1b0] sm:$0xff]
      %v9796 = vld [vmem:[#allocation13 + $0x1b8] sm:$0xff]
      %v9797 = vld [vmem:[#allocation13 + $0x1c0] sm:$0xff]
      %v9798 = vld [vmem:[#allocation13 + $0x1c8] sm:$0xff]
      %v9799 = vld [vmem:[#allocation13 + $0x1d0] sm:$0xff]
      %v9800 = vld [vmem:[#allocation13 + $0x1d8] sm:$0xff]
      %v9801 = vld [vmem:[#allocation13 + $0x1e0] sm:$0xff]
      %v9802 = vld [vmem:[#allocation13 + $0x1e8] sm:$0xff]
      %v9803 = vld [vmem:[#allocation13 + $0x1f0] sm:$0xff]
      %v9804 = vld [vmem:[#allocation13 + $0x1f8] sm:$0xff]
      %v9805 = vld [vmem:[#allocation15] sm:$0x3]
      %v9807 = vlaneseq
      %v9808 = vshrl.u32 %v9807, 7
      %v9809 = vsub.s32 0, %v9808
      %v9810 = vrot.slane %v9805, %v9809
      %v9811 = vlaneseq
      %v9812 = vshrl.u32 %v9811, 7
      %v9813 = vsub.s32 1, %v9812
      %v9814 = vrot.slane %v9805, %v9813
      %v9881 = vunpack.c.l.b16 %v9741
      %v9882 = vunpack.c.h.b16 %v9741
      %v9883 = vunpack.c.l.b16 %v9742
      %v9884 = vunpack.c.h.b16 %v9742
      %v9885 = vunpack.c.l.b16 %v9743
      %v9886 = vunpack.c.h.b16 %v9743
      %v9887 = vunpack.c.l.b16 %v9744
      %v9888 = vunpack.c.h.b16 %v9744
      %v9889 = vunpack.c.l.b16 %v9745
      %v9890 = vunpack.c.h.b16 %v9745
      %v9891 = vunpack.c.l.b16 %v9746
      %v9892 = vunpack.c.h.b16 %v9746
      %v9893 = vunpack.c.l.b16 %v9747
      %v9894 = vunpack.c.h.b16 %v9747
      %v9895 = vunpack.c.l.b16 %v9748
      %v9896 = vunpack.c.h.b16 %v9748
      %v9897 = vunpack.c.l.b16 %v9749
      %v9898 = vunpack.c.h.b16 %v9749
      %v9899 = vunpack.c.l.b16 %v9750
      %v9900 = vunpack.c.h.b16 %v9750
      %v9901 = vunpack.c.l.b16 %v9751
      %v9902 = vunpack.c.h.b16 %v9751
      %v9903 = vunpack.c.l.b16 %v9752
      %v9904 = vunpack.c.h.b16 %v9752
      %v9905 = vunpack.c.l.b16 %v9753
      %v9906 = vunpack.c.h.b16 %v9753
      %v9907 = vunpack.c.l.b16 %v9754
      %v9908 = vunpack.c.h.b16 %v9754
      %v9909 = vunpack.c.l.b16 %v9755
      %v9910 = vunpack.c.h.b16 %v9755
      %v9911 = vunpack.c.l.b16 %v9756
      %v9912 = vunpack.c.h.b16 %v9756
      %v9913 = vunpack.c.l.b16 %v9757
      %v9914 = vunpack.c.h.b16 %v9757
      %v9915 = vunpack.c.l.b16 %v9758
      %v9916 = vunpack.c.h.b16 %v9758
      %v9917 = vunpack.c.l.b16 %v9759
      %v9918 = vunpack.c.h.b16 %v9759
      %v9919 = vunpack.c.l.b16 %v9760
      %v9920 = vunpack.c.h.b16 %v9760
      %v9921 = vunpack.c.l.b16 %v9761
      %v9922 = vunpack.c.h.b16 %v9761
      %v9923 = vunpack.c.l.b16 %v9762
      %v9924 = vunpack.c.h.b16 %v9762
      %v9925 = vunpack.c.l.b16 %v9763
      %v9926 = vunpack.c.h.b16 %v9763
      %v9927 = vunpack.c.l.b16 %v9764
      %v9928 = vunpack.c.h.b16 %v9764
      %v9929 = vunpack.c.l.b16 %v9765
      %v9930 = vunpack.c.h.b16 %v9765
      %v9931 = vunpack.c.l.b16 %v9766
      %v9932 = vunpack.c.h.b16 %v9766
      %v9933 = vunpack.c.l.b16 %v9767
      %v9934 = vunpack.c.h.b16 %v9767
      %v9935 = vunpack.c.l.b16 %v9768
      %v9936 = vunpack.c.h.b16 %v9768
      %v9937 = vunpack.c.l.b16 %v9769
      %v9938 = vunpack.c.h.b16 %v9769
      %v9939 = vunpack.c.l.b16 %v9770
      %v9940 = vunpack.c.h.b16 %v9770
      %v9941 = vunpack.c.l.b16 %v9771
      %v9942 = vunpack.c.h.b16 %v9771
      %v9943 = vunpack.c.l.b16 %v9772
      %v9944 = vunpack.c.h.b16 %v9772
      %v9945 = vunpack.c.l.b16 %v9773
      %v9946 = vunpack.c.h.b16 %v9773
      %v9947 = vunpack.c.l.b16 %v9774
      %v9948 = vunpack.c.h.b16 %v9774
      %v9949 = vunpack.c.l.b16 %v9775
      %v9950 = vunpack.c.h.b16 %v9775
      %v9951 = vunpack.c.l.b16 %v9776
      %v9952 = vunpack.c.h.b16 %v9776
      %v9953 = vunpack.c.l.b16 %v9777
      %v9954 = vunpack.c.h.b16 %v9777
      %v9955 = vunpack.c.l.b16 %v9778
      %v9956 = vunpack.c.h.b16 %v9778
      %v9957 = vunpack.c.l.b16 %v9779
      %v9958 = vunpack.c.h.b16 %v9779
      %v9959 = vunpack.c.l.b16 %v9780
      %v9960 = vunpack.c.h.b16 %v9780
      %v9961 = vunpack.c.l.b16 %v9781
      %v9962 = vunpack.c.h.b16 %v9781
      %v9963 = vunpack.c.l.b16 %v9782
      %v9964 = vunpack.c.h.b16 %v9782
      %v9965 = vunpack.c.l.b16 %v9783
      %v9966 = vunpack.c.h.b16 %v9783
      %v9967 = vunpack.c.l.b16 %v9784
      %v9968 = vunpack.c.h.b16 %v9784
      %v9969 = vunpack.c.l.b16 %v9785
      %v9970 = vunpack.c.h.b16 %v9785
      %v9971 = vunpack.c.l.b16 %v9786
      %v9972 = vunpack.c.h.b16 %v9786
      %v9973 = vunpack.c.l.b16 %v9787
      %v9974 = vunpack.c.h.b16 %v9787
      %v9975 = vunpack.c.l.b16 %v9788
      %v9976 = vunpack.c.h.b16 %v9788
      %v9977 = vunpack.c.l.b16 %v9789
      %v9978 = vunpack.c.h.b16 %v9789
      %v9979 = vunpack.c.l.b16 %v9790
      %v9980 = vunpack.c.h.b16 %v9790
      %v9981 = vunpack.c.l.b16 %v9791
      %v9982 = vunpack.c.h.b16 %v9791
      %v9983 = vunpack.c.l.b16 %v9792
      %v9984 = vunpack.c.h.b16 %v9792
      %v9985 = vunpack.c.l.b16 %v9793
      %v9986 = vunpack.c.h.b16 %v9793
      %v9987 = vunpack.c.l.b16 %v9794
      %v9988 = vunpack.c.h.b16 %v9794
      %v9989 = vunpack.c.l.b16 %v9795
      %v9990 = vunpack.c.h.b16 %v9795
      %v9991 = vunpack.c.l.b16 %v9796
      %v9992 = vunpack.c.h.b16 %v9796
      %v9993 = vunpack.c.l.b16 %v9797
      %v9994 = vunpack.c.h.b16 %v9797
      %v9995 = vunpack.c.l.b16 %v9798
      %v9996 = vunpack.c.h.b16 %v9798
      %v9997 = vunpack.c.l.b16 %v9799
      %v9998 = vunpack.c.h.b16 %v9799
      %v9999 = vunpack.c.l.b16 %v9800
      %v10000 = vunpack.c.h.b16 %v9800
      %v10001 = vunpack.c.l.b16 %v9801
      %v10002 = vunpack.c.h.b16 %v9801
      %v10003 = vunpack.c.l.b16 %v9802
      %v10004 = vunpack.c.h.b16 %v9802
      %v10005 = vunpack.c.l.b16 %v9803
      %v10006 = vunpack.c.h.b16 %v9803
      %v10007 = vunpack.c.l.b16 %v9804
      %v10008 = vunpack.c.h.b16 %v9804
      %v10009 = vpack.c.b16 %v9883, %v9881
      %v10010 = vpack.c.b16 %v9884, %v9882
      %v10011 = vpack.c.b16 %v9887, %v9885
      %v10012 = vpack.c.b16 %v9888, %v9886
      %v10013 = vpack.c.b16 %v9891, %v9889
      %v10014 = vpack.c.b16 %v9892, %v9890
      %v10015 = vpack.c.b16 %v9895, %v9893
      %v10016 = vpack.c.b16 %v9896, %v9894
      %v10017 = vpack.c.b16 %v9899, %v9897
      %v10018 = vpack.c.b16 %v9900, %v9898
      %v10019 = vpack.c.b16 %v9903, %v9901
      %v10020 = vpack.c.b16 %v9904, %v9902
      %v10021 = vpack.c.b16 %v9907, %v9905
      %v10022 = vpack.c.b16 %v9908, %v9906
      %v10023 = vpack.c.b16 %v9911, %v9909
      %v10024 = vpack.c.b16 %v9912, %v9910
      %v10025 = vpack.c.b16 %v9915, %v9913
      %v10026 = vpack.c.b16 %v9916, %v9914
      %v10027 = vpack.c.b16 %v9919, %v9917
      %v10028 = vpack.c.b16 %v9920, %v9918
      %v10029 = vpack.c.b16 %v9923, %v9921
      %v10030 = vpack.c.b16 %v9924, %v9922
      %v10031 = vpack.c.b16 %v9927, %v9925
      %v10032 = vpack.c.b16 %v9928, %v9926
      %v10033 = vpack.c.b16 %v9931, %v9929
      %v10034 = vpack.c.b16 %v9932, %v9930
      %v10035 = vpack.c.b16 %v9935, %v9933
      %v10036 = vpack.c.b16 %v9936, %v9934
      %v10037 = vpack.c.b16 %v9939, %v9937
      %v10038 = vpack.c.b16 %v9940, %v9938
      %v10039 = vpack.c.b16 %v9943, %v9941
      %v10040 = vpack.c.b16 %v9944, %v9942
      %v10041 = vpack.c.b16 %v9947, %v9945
      %v10042 = vpack.c.b16 %v9948, %v9946
      %v10043 = vpack.c.b16 %v9951, %v9949
      %v10044 = vpack.c.b16 %v9952, %v9950
      %v10045 = vpack.c.b16 %v9955, %v9953
      %v10046 = vpack.c.b16 %v9956, %v9954
      %v10047 = vpack.c.b16 %v9959, %v9957
      %v10048 = vpack.c.b16 %v9960, %v9958
      %v10049 = vpack.c.b16 %v9963, %v9961
      %v10050 = vpack.c.b16 %v9964, %v9962
      %v10051 = vpack.c.b16 %v9967, %v9965
      %v10052 = vpack.c.b16 %v9968, %v9966
      %v10053 = vpack.c.b16 %v9971, %v9969
      %v10054 = vpack.c.b16 %v9972, %v9970
      %v10055 = vpack.c.b16 %v9975, %v9973
      %v10056 = vpack.c.b16 %v9976, %v9974
      %v10057 = vpack.c.b16 %v9979, %v9977
      %v10058 = vpack.c.b16 %v9980, %v9978
      %v10059 = vpack.c.b16 %v9983, %v9981
      %v10060 = vpack.c.b16 %v9984, %v9982
      %v10061 = vpack.c.b16 %v9987, %v9985
      %v10062 = vpack.c.b16 %v9988, %v9986
      %v10063 = vpack.c.b16 %v9991, %v9989
      %v10064 = vpack.c.b16 %v9992, %v9990
      %v10065 = vpack.c.b16 %v9995, %v9993
      %v10066 = vpack.c.b16 %v9996, %v9994
      %v10067 = vpack.c.b16 %v9999, %v9997
      %v10068 = vpack.c.b16 %v10000, %v9998
      %v10069 = vpack.c.b16 %v10003, %v10001
      %v10070 = vpack.c.b16 %v10004, %v10002
      %v10071 = vpack.c.b16 %v10007, %v10005
      %v10072 = vpack.c.b16 %v10008, %v10006
      %10137 = vmatprep.subr.bf16.mxu0 %v10024
      %10138 = vmatpush1.bf16.msra.mxu0 %v10023
      %10139 = vmatprep.subr.bf16.mxu0 %v10022
      %10140 = vmatpush1.bf16.msra.mxu0 %v10021
      %10141 = vmatprep.subr.bf16.mxu0 %v10020
      %10142 = vmatpush1.bf16.msra.mxu0 %v10019
      %10143 = vmatprep.subr.bf16.mxu0 %v10018
      %10144 = vmatpush1.bf16.msra.mxu0 %v10017
      %10145 = vmatprep.subr.bf16.mxu0 %v10016
      %10146 = vmatpush1.bf16.msra.mxu0 %v10015
      %10147 = vmatprep.subr.bf16.mxu0 %v10014
      %10148 = vmatpush1.bf16.msra.mxu0 %v10013
      %10149 = vmatprep.subr.bf16.mxu0 %v10012
      %10150 = vmatpush1.bf16.msra.mxu0 %v10011
      %10151 = vmatprep.subr.bf16.mxu0 %v10010
      %10152 = vmatpush1.bf16.msra.mxu0 %v10009
      %10153 = vmatprep.subr.bf16.mxu0 %v10040
      %10154 = vmatpush2.bf16.msra.mxu0 %v10039
      %10155 = vmatprep.subr.bf16.mxu0 %v10038
      %10156 = vmatpush2.bf16.msra.mxu0 %v10037
      %10157 = vmatprep.subr.bf16.mxu0 %v10036
      %10158 = vmatpush2.bf16.msra.mxu0 %v10035
      %10159 = vmatprep.subr.bf16.mxu0 %v10034
      %10160 = vmatpush2.bf16.msra.mxu0 %v10033
      %10161 = vmatprep.subr.bf16.mxu0 %v10032
      %10162 = vmatpush2.bf16.msra.mxu0 %v10031
      %10163 = vmatprep.subr.bf16.mxu0 %v10030
      %10164 = vmatpush2.bf16.msra.mxu0 %v10029
      %10165 = vmatprep.subr.bf16.mxu0 %v10028
      %10166 = vmatpush2.bf16.msra.mxu0 %v10027
      %10167 = vmatprep.subr.bf16.mxu0 %v10026
      %10168 = vmatpush2.bf16.msra.mxu0 %v10025
      %10169 = vmatprep.mubr.bf16.mxu0 %v9738
      %10170 = vmatmul.mubr.bf16.gmra.mxu0 %v9737
      %v10171 = vpop.f32.mrf.mxu0
      %v10172 = vadd.f32 %v9810, %v10171
      %v10173 = vpop.f32.mrf.mxu0
      %v10174 = vadd.f32 %v9814, %v10173
      %v10175 = vpop.f32.mrf.mxu0
      %v10176 = vpop.f32.mrf.mxu0
      %10177 = vdwg.mxu0
      %10178 = vmatprep.subr.bf16.mxu0 %v10056
      %10179 = vmatpush1.bf16.msra.mxu0 %v10055
      %10180 = vmatprep.subr.bf16.mxu0 %v10054
      %10181 = vmatpush1.bf16.msra.mxu0 %v10053
      %10182 = vmatprep.subr.bf16.mxu0 %v10052
      %10183 = vmatpush1.bf16.msra.mxu0 %v10051
      %10184 = vmatprep.subr.bf16.mxu0 %v10050
      %10185 = vmatpush1.bf16.msra.mxu0 %v10049
      %10186 = vmatprep.subr.bf16.mxu0 %v10048
      %10187 = vmatpush1.bf16.msra.mxu0 %v10047
      %10188 = vmatprep.subr.bf16.mxu0 %v10046
      %10189 = vmatpush1.bf16.msra.mxu0 %v10045
      %10190 = vmatprep.subr.bf16.mxu0 %v10044
      %10191 = vmatpush1.bf16.msra.mxu0 %v10043
      %10192 = vmatprep.subr.bf16.mxu0 %v10042
      %10193 = vmatpush1.bf16.msra.mxu0 %v10041
      %10194 = vmatprep.subr.bf16.mxu0 %v10072
      %10195 = vmatpush2.bf16.msra.mxu0 %v10071
      %10196 = vmatprep.subr.bf16.mxu0 %v10070
      %10197 = vmatpush2.bf16.msra.mxu0 %v10069
      %10198 = vmatprep.subr.bf16.mxu0 %v10068
      %10199 = vmatpush2.bf16.msra.mxu0 %v10067
      %10200 = vmatprep.subr.bf16.mxu0 %v10066
      %10201 = vmatpush2.bf16.msra.mxu0 %v10065
      %10202 = vmatprep.subr.bf16.mxu0 %v10064
      %10203 = vmatpush2.bf16.msra.mxu0 %v10063
      %10204 = vmatprep.subr.bf16.mxu0 %v10062
      %10205 = vmatpush2.bf16.msra.mxu0 %v10061
      %10206 = vmatprep.subr.bf16.mxu0 %v10060
      %10207 = vmatpush2.bf16.msra.mxu0 %v10059
      %10208 = vmatprep.subr.bf16.mxu0 %v10058
      %10209 = vmatpush2.bf16.msra.mxu0 %v10057
      %10210 = vmatprep.mubr.bf16.mxu0 %v9740
      %10211 = vmatmul.mubr.bf16.gmra.mxu0 %v9739
      %v10212 = vpop.f32.mrf.mxu0
      %v10213 = vadd.f32 %v10172, %v10212
      %v10214 = vpop.f32.mrf.mxu0
      %v10215 = vadd.f32 %v10174, %v10214
      %v10216 = vpop.f32.mrf.mxu0
      %v10217 = vpop.f32.mrf.mxu0
      %10218 = vdwg.mxu0
      %v10219 = vmax.f32 %v10213, 0.0
      %v10220 = vmax.f32 %v10215, 0.0
      %v10221 = vld [vmem:[#allocation16] sm:$0xff]
      %v10222 = vld [vmem:[#allocation16 + $0x8] sm:$0xff]
      %v10223 = vld [vmem:[#allocation16 + $0x10] sm:$0xff]
      %v10224 = vld [vmem:[#allocation16 + $0x18] sm:$0xff]
      %v10225 = vld [vmem:[#allocation16 + $0x20] sm:$0xff]
      %v10226 = vld [vmem:[#allocation16 + $0x28] sm:$0xff]
      %v10227 = vld [vmem:[#allocation16 + $0x30] sm:$0xff]
      %v10228 = vld [vmem:[#allocation16 + $0x38] sm:$0xff]
      %v10229 = vld [vmem:[#allocation16 + $0x40] sm:$0xff]
      %v10230 = vld [vmem:[#allocation16 + $0x48] sm:$0xff]
      %v10231 = vld [vmem:[#allocation16 + $0x50] sm:$0xff]
      %v10232 = vld [vmem:[#allocation16 + $0x58] sm:$0xff]
      %v10233 = vld [vmem:[#allocation16 + $0x60] sm:$0xff]
      %v10234 = vld [vmem:[#allocation16 + $0x68] sm:$0xff]
      %v10235 = vld [vmem:[#allocation16 + $0x70] sm:$0xff]
      %v10236 = vld [vmem:[#allocation16 + $0x78] sm:$0xff]
      %v10237 = vld [vmem:[#allocation16 + $0x80] sm:$0xff]
      %v10238 = vld [vmem:[#allocation16 + $0x88] sm:$0xff]
      %v10239 = vld [vmem:[#allocation16 + $0x90] sm:$0xff]
      %v10240 = vld [vmem:[#allocation16 + $0x98] sm:$0xff]
      %v10241 = vld [vmem:[#allocation16 + $0xa0] sm:$0xff]
      %v10242 = vld [vmem:[#allocation16 + $0xa8] sm:$0xff]
      %v10243 = vld [vmem:[#allocation16 + $0xb0] sm:$0xff]
      %v10244 = vld [vmem:[#allocation16 + $0xb8] sm:$0xff]
      %v10245 = vld [vmem:[#allocation16 + $0xc0] sm:$0xff]
      %v10246 = vld [vmem:[#allocation16 + $0xc8] sm:$0xff]
      %v10247 = vld [vmem:[#allocation16 + $0xd0] sm:$0xff]
      %v10248 = vld [vmem:[#allocation16 + $0xd8] sm:$0xff]
      %v10249 = vld [vmem:[#allocation16 + $0xe0] sm:$0xff]
      %v10250 = vld [vmem:[#allocation16 + $0xe8] sm:$0xff]
      %v10251 = vld [vmem:[#allocation16 + $0xf0] sm:$0xff]
      %v10252 = vld [vmem:[#allocation16 + $0xf8] sm:$0xff]
      %v10253 = vld [vmem:[#allocation18] sm:$0x1]
      %v10255 = vlaneseq
      %v10256 = vshrl.u32 %v10255, 7
      %v10257 = vsub.s32 0, %v10256
      %v10258 = vrot.slane %v10253, %v10257
      %10260 = vmatprep.subr.mxu0 0.0
      %10261 = vmatpush1.msra.mxu0 %v10236
      %10262 = vmatprep.subr.mxu0 0.0
      %10263 = vmatpush1.msra.mxu0 %v10235
      %10264 = vmatprep.subr.mxu0 0.0
      %10265 = vmatpush1.msra.mxu0 %v10234
      %10266 = vmatprep.subr.mxu0 0.0
      %10267 = vmatpush1.msra.mxu0 %v10233
      %10268 = vmatprep.subr.mxu0 0.0
      %10269 = vmatpush1.msra.mxu0 %v10232
      %10270 = vmatprep.subr.mxu0 0.0
      %10271 = vmatpush1.msra.mxu0 %v10231
      %10272 = vmatprep.subr.mxu0 0.0
      %10273 = vmatpush1.msra.mxu0 %v10230
      %10274 = vmatprep.subr.mxu0 0.0
      %10275 = vmatpush1.msra.mxu0 %v10229
      %10276 = vmatprep.subr.mxu0 0.0
      %10277 = vmatpush1.msra.mxu0 %v10228
      %10278 = vmatprep.subr.mxu0 0.0
      %10279 = vmatpush1.msra.mxu0 %v10227
      %10280 = vmatprep.subr.mxu0 0.0
      %10281 = vmatpush1.msra.mxu0 %v10226
      %10282 = vmatprep.subr.mxu0 0.0
      %10283 = vmatpush1.msra.mxu0 %v10225
      %10284 = vmatprep.subr.mxu0 0.0
      %10285 = vmatpush1.msra.mxu0 %v10224
      %10286 = vmatprep.subr.mxu0 0.0
      %10287 = vmatpush1.msra.mxu0 %v10223
      %10288 = vmatprep.subr.mxu0 0.0
      %10289 = vmatpush1.msra.mxu0 %v10222
      %10290 = vmatprep.subr.mxu0 0.0
      %10291 = vmatpush1.msra.mxu0 %v10221
      %10292 = vmatprep.subr.mxu0 0.0
      %10293 = vmatpush2.msra.mxu0 %v10252
      %10294 = vmatprep.subr.mxu0 0.0
      %10295 = vmatpush2.msra.mxu0 %v10251
      %10296 = vmatprep.subr.mxu0 0.0
      %10297 = vmatpush2.msra.mxu0 %v10250
      %10298 = vmatprep.subr.mxu0 0.0
      %10299 = vmatpush2.msra.mxu0 %v10249
      %10300 = vmatprep.subr.mxu0 0.0
      %10301 = vmatpush2.msra.mxu0 %v10248
      %10302 = vmatprep.subr.mxu0 0.0
      %10303 = vmatpush2.msra.mxu0 %v10247
      %10304 = vmatprep.subr.mxu0 0.0
      %10305 = vmatpush2.msra.mxu0 %v10246
      %10306 = vmatprep.subr.mxu0 0.0
      %10307 = vmatpush2.msra.mxu0 %v10245
      %10308 = vmatprep.subr.mxu0 0.0
      %10309 = vmatpush2.msra.mxu0 %v10244
      %10310 = vmatprep.subr.mxu0 0.0
      %10311 = vmatpush2.msra.mxu0 %v10243
      %10312 = vmatprep.subr.mxu0 0.0
      %10313 = vmatpush2.msra.mxu0 %v10242
      %10314 = vmatprep.subr.mxu0 0.0
      %10315 = vmatpush2.msra.mxu0 %v10241
      %10316 = vmatprep.subr.mxu0 0.0
      %10317 = vmatpush2.msra.mxu0 %v10240
      %10318 = vmatprep.subr.mxu0 0.0
      %10319 = vmatpush2.msra.mxu0 %v10239
      %10320 = vmatprep.subr.mxu0 0.0
      %10321 = vmatpush2.msra.mxu0 %v10238
      %10322 = vmatprep.subr.mxu0 0.0
      %10323 = vmatpush2.msra.mxu0 %v10237
      %10324 = vmatprep.mubr.f32.mxu0 %v10220
      %10325 = vmatmul.mubr.f32.gmra.mxu0 %v10219
      %v10326 = vpop.f32.mrf.mxu0
      %v10327 = vadd.f32 %v10258, %v10326
      %v10328 = vpop.f32.mrf.mxu0
      %10329 = vdwg.mxu0
      %v10330 = vlaneseq
      %v10331 = vand.u32 %v10330, 127
      %vm10332 = vcmp.lt.s32.totalorder %v10331, 6
      %v10333 = vsel %vm10332, %v10327, -1e+30
      %10334 = vmax.xlane.f32.xlu0 %v10333
      %v10335 = vpop.xlane.xlu0 %10334
      %v10336 = vsub.f32 %v10333, %v10335
      %v10337 = vmul.f32 %v10336, 1.442695
      %v10338 = vpow.pop %v10337
      %10339 = vadd.xlane.f32.xlu0 %v10338
      %v10340 = vpop.xlane.xlu0 %10339
      %v10341 = vrcp.pop %v10340
      %v10342 = vmul.f32 %v10338, %v10341
      %v10343 = vld [vmem:[#allocation19] sm:$0xff]
      %10345 = vrot.lane.b32.xlu0 %v10343, 127
      %v10346 = vpop.permute.xlu0 %10345
      %v10348 = vadd.f32 %v10343, %v10346
      %10349 = vrot.lane.b32.xlu0 %v10343, 126
      %v10350 = vpop.permute.xlu0 %10349
      %v10352 = vadd.f32 %v10348, %v10350
      %v10353 = vmul.f32 %v10352, 0.33333334
      %v10354 = vsub.f32 %v10343, %v10353
      %v10355 = vmul.f32 %v10354, %v10354
      %10357 = vrot.lane.b32.xlu0 %v10353, 1
      %v10358 = vpop.permute.xlu0 %10357
      %v10360 = vsub.f32 %v10343, %v10358
      %v10361 = vmul.f32 %v10360, %v10360
      %10363 = vrot.lane.b32.xlu0 %v10361, 127
      %v10364 = vpop.permute.xlu0 %10363
      %v10366 = vadd.f32 %v10355, %v10364
      %10367 = vrot.lane.b32.xlu0 %v10353, 2
      %v10368 = vpop.permute.xlu0 %10367
      %v10370 = vsub.f32 %v10343, %v10368
      %v10371 = vmul.f32 %v10370, %v10370
      %10373 = vrot.lane.b32.xlu0 %v10371, 126
      %v10374 = vpop.permute.xlu0 %10373
      %v10376 = vadd.f32 %v10366, %v10374
      %v10377 = vmul.f32 %v10376, 0.33333334
      %10378 = vst [vmem:[#allocation3] sm:$0xff] 0.0
      %vm10379 = vcmp.lt.f32.partialorder %v10377, 0.05
      %v10380 = vsel %vm10379, 0.2, 0.0
      %vm10381 = vcmask 7168
      %10382 = vst.msk [vmem:[#allocation3] sm:$0xff] %vm10381, %v10380
      %10383 = vrot.lane.b32.xlu0 %v10343, 2
      %v10384 = vpop.permute.xlu0 %10383
      %vm10386 = vcmp.gt.f32.partialorder %v10343, %v10384
      %10387 = vrot.lane.b32.xlu0 %v10343, 1
      %v10388 = vpop.permute.xlu0 %10387
      %vm10390 = vcmp.gt.f32.partialorder %v10343, %v10388
      %vm10391 = vmand %vm10386, %vm10390
      %v10392 = vsel %vm10391, 0.3, 0.0
      %10394 = vrot.lane.b32.xlu0 %v10392, 127
      %v10395 = vpop.permute.xlu0 %10394
      %vm10397 = vcmask 15368
      %10398 = vst.msk [vmem:[#allocation3] sm:$0xff] %vm10397, %v10395
      %vm10399 = vcmp.gt.f32.partialorder %v10343, %v10346
      %vm10400 = vmand %vm10390, %vm10399
      %v10401 = vsel %vm10400, 0.3, 0.0
      %10403 = vrot.lane.b32.xlu0 %v10401, 1
      %v10404 = vpop.permute.xlu0 %10403
      %vm10406 = vcmask 23568
      %10407 = vst.msk [vmem:[#allocation3] sm:$0xff] %vm10406, %v10404
      %vm10408 = vcmp.gt.f32.partialorder %v10343, 0.3
      %vm10409 = vcmp.lt.f32.partialorder %v10343, 0.7
      %vm10410 = vmand %vm10408, %vm10409
      %vm10411 = vmand %vm10410, %vm10399
      %v10412 = vsel %vm10411, 0.2, 0.0
      %10414 = vrot.lane.b32.xlu0 %v10412, 2
      %v10415 = vpop.permute.xlu0 %10414
      %vm10417 = vcmask 31768
      %10418 = vst.msk [vmem:[#allocation3] sm:$0xff] %vm10417, %v10415
      %v10419 = vsel %vm10408, 1, 0
      %10420 = vrot.lane.b32.xlu0 %v10419, 127
      %v10421 = vpop.permute.xlu0 %10420
      %vm10422 = vcmp.ne.s32.totalorder %v10421, 0
      %vm10423 = vmand %vm10408, %vm10422
      %10424 = vrot.lane.b32.xlu0 %v10419, 126
      %v10425 = vpop.permute.xlu0 %10424
      %vm10426 = vcmp.ne.s32.totalorder %v10425, 0
      %vm10427 = vmand %vm10423, %vm10426
      %vm10428 = vmand %vm10427, %vm10409
      %v10429 = vsel %vm10409, 1, 0
      %10430 = vrot.lane.b32.xlu0 %v10429, 127
      %v10431 = vpop.permute.xlu0 %10430
      %vm10432 = vcmp.ne.s32.totalorder %v10431, 0
      %vm10433 = vmand %vm10428, %vm10432
      %10434 = vrot.lane.b32.xlu0 %v10429, 126
      %v10435 = vpop.permute.xlu0 %10434
      %vm10436 = vcmp.ne.s32.totalorder %v10435, 0
      %vm10437 = vmand %vm10433, %vm10436
      %v10438 = vsel %vm10437, 0.2, 0.0
      %10440 = vrot.lane.b32.xlu0 %v10438, 4
      %v10441 = vpop.permute.xlu0 %10440
      %vm10443 = vcmask 39968
      %10444 = vst.msk [vmem:[#allocation3] sm:$0xff] %vm10443, %v10441
      %vm10445 = vcmp.gt.f32.partialorder %v10353, 0.6
      %v10446 = vsel %vm10445, 0.2, 0.0
      %10448 = vrot.lane.b32.xlu0 %v10446, 5
      %v10449 = vpop.permute.xlu0 %10448
      %vm10451 = vcmask 48168
      %10452 = vst.msk [vmem:[#allocation3] sm:$0xff] %vm10451, %v10449
      %v10453 = vld [vmem:[#allocation3] sm:$0xff]
      %v10454 = vmul.f32 %v10342, 0.8
      %v10455 = vmul.f32 %v10453, 0.2
      %v10456 = vadd.f32 %v10454, %v10455
      %v10457 = vsel %vm10332, %v10456, -1e+30
      %10458 = vmax.xlane.f32.xlu0 %v10457
      %v10459 = vpop.xlane.xlu0 %10458
      %v10460 = vsub.f32 %v10457, %v10459
      %v10461 = vmul.f32 %v10460, 1.442695
      %v10462 = vpow.pop %v10461
      %10463 = vadd.xlane.f32.xlu0 %v10462
      %v10464 = vpop.xlane.xlu0 %10463
      %v10465 = vrcp.pop %v10464
      %v10466 = vmul.f32 %v10462, %v10465
      %10467 = vst [vmem:[#allocation21] sm:$0xff] %v10466
    $region89: #{tpu_custom_call.1} parent=1 // pred_fallthru
      _
    // Predicated region
    $region90: #{tpu_custom_call.1} parent=1 // pred_check
      _
    $region91: #{tpu_custom_call.1} parent=1 // pred_check_branch
      %10469 = sbr.rel (0) target = $region93
    $region92: #{tpu_custom_call.1} parent=1 // pred_region
      %s10471 = ssub.s32 128, 128
      %10472 = vsyncadd [#allocation6], %s10471
      %s10474 = sshll.u32 [#allocation21], 4
      %s10475 = int_to_ptr.vmem [resolvable:$true] %s10474
      %10477 = dma.vmem_to_hbm [thread:$0]  %s10475, 128, %s10, [#allocation6]
    $region93: #{tpu_custom_call.1} parent=1 // pred_fallthru
      _
    // Predicated region
    $region94: #{tpu_custom_call.1} parent=1 // pred_check
      _
    $region95: #{tpu_custom_call.1} parent=1 // pred_check_branch
      %10479 = sbr.rel (0) target = $region97
    $region96: #{tpu_custom_call.1} parent=1 // pred_region
      %10480 = dma.done [#allocation6], 128
    $region97: #{tpu_custom_call.1} parent=1 // pred_fallthru
      _
    %10481 = vsyncpa [#allocation5], 1
    %10482 = vsyncpa [#allocation8], 1
    %10483 = vsyncpa [#allocation11], 1
    %10484 = vsyncpa [#allocation14], 1
    %10485 = vsyncpa [#allocation17], 1
    %10486 = vsyncpa [#allocation20], 1
    %10487 = vsyncpa [#allocation6], 1

</llo_original>
